<compile_context>
chip_gen: v7x
topology: tpu7x:2x2x1
jax: 0.10.0
libtpu: 0.0.40
codegen_flags: <defaults>
</compile_context>

<pallas_src>
import functools
import math

import jax
import jax.numpy as jnp
from jax.experimental import pallas as pl
from jax.experimental.pallas import tpu as pltpu


# ---------------------------------------------------------------------------
# helpers
# ---------------------------------------------------------------------------
def _round_up(x, m):
    return (x + m - 1) // m * m


def _pick_tile(total, candidates):
    for c in candidates:
        if total % c == 0:
            return c
    return total


# ---------------------------------------------------------------------------
# Pallas kernel 1: tiled matmul + bias (+ optional activation)
#   bf16 operands, f32 accumulator, lane-dense padded N/K
# ---------------------------------------------------------------------------
def _mm_bias_kernel(x_ref, w_ref, b_ref, o_ref, acc_ref, *, activation):
    @pl.when(pl.program_id(2) == 0)
    def _init():
        acc_ref[...] = jnp.zeros_like(acc_ref)

    acc_ref[...] += jnp.dot(x_ref[...], w_ref[...],
                            preferred_element_type=jnp.float32)

    @pl.when(pl.program_id(2) == pl.num_programs(2) - 1)
    def _finalize():
        out = acc_ref[...] + b_ref[...]          # (1, tn) broadcasts over tm
        if activation == "silu":
            out = out * jax.nn.sigmoid(out)
        elif activation == "relu":
            out = jnp.maximum(out, 0.0)
        o_ref[...] = out.astype(o_ref.dtype)


def matmul_bias(x2d, w2d, bias, *, activation=None):
    """(M, K) @ (K, N) + bias. Operands bf16, accumulate f32, output f32."""
    M, K = x2d.shape
    K2, N = w2d.shape
    assert K == K2, (K, K2)

    Kp = _round_up(K, 128)
    Np = _round_up(N, 128)
    Mp = _round_up(M, 8)
    tm = Mp if Mp <= 512 else 512
    Mp = _round_up(Mp, tm)
    tn = _pick_tile(Np, (256, 128))
    tk = _pick_tile(Kp, (512, 256, 128))

    x_p = jnp.pad(x2d.astype(jnp.bfloat16), ((0, Mp - M), (0, Kp - K)))
    w_p = jnp.pad(w2d.astype(jnp.bfloat16), ((0, Kp - K), (0, Np - N)))
    b_p = jnp.pad(bias.astype(jnp.float32).reshape(1, N), ((0, 0), (0, Np - N)))

    grid = (Mp // tm, Np // tn, Kp // tk)
    kernel = functools.partial(_mm_bias_kernel, activation=activation)

    out = pl.pallas_call(
        kernel,
        out_shape=jax.ShapeDtypeStruct((Mp, Np), jnp.float32),
        grid_spec=pltpu.PrefetchScalarGridSpec(
            num_scalar_prefetch=0,
            grid=grid,
            in_specs=[
                pl.BlockSpec((tm, tk), lambda i, j, k: (i, k)),
                pl.BlockSpec((tk, tn), lambda i, j, k: (k, j)),
                pl.BlockSpec((1, tn), lambda i, j, k: (0, j)),  # bias: per-N tile only
            ],
            out_specs=pl.BlockSpec((tm, tn), lambda i, j, k: (i, j)),
            scratch_shapes=[pltpu.VMEM((tm, tn), jnp.float32)],
        ),
        compiler_params=pltpu.CompilerParams(
            dimension_semantics=("parallel", "parallel", "arbitrary"),
            vmem_limit_bytes=32 * 1024 * 1024,
        ),
    )(x_p, w_p, b_p)
    return out[:M, :N]


# ---------------------------------------------------------------------------
# Pallas kernel 2: GroupNorm (+ fused SiLU), channel-last
#   per-sample group stats via one-hot group matrix matmuls (MXU-friendly)
# ---------------------------------------------------------------------------
def _gn_silu_kernel(x_ref, g_ref, b_ref, a_ref, at_ref, o_ref, *,
                    inv_count, eps, apply_silu):
    x = x_ref[0]                                   # (HW, C) f32
    a = a_ref[...]                                 # (C, G)
    at = at_ref[...]                               # (G, C)
    s1 = jnp.sum(x, axis=0, keepdims=True)         # (1, C)
    s2 = jnp.sum(x * x, axis=0, keepdims=True)     # (1, C)
    mean_g = jnp.dot(s1, a, preferred_element_type=jnp.float32) * inv_count
    msq_g = jnp.dot(s2, a, preferred_element_type=jnp.float32) * inv_count
    var_g = msq_g - mean_g * mean_g
    rstd_g = jax.lax.rsqrt(var_g + eps)
    mean_c = jnp.dot(mean_g, at, preferred_element_type=jnp.float32)  # (1, C)
    rstd_c = jnp.dot(rstd_g, at, preferred_element_type=jnp.float32)  # (1, C)
    y = (x - mean_c) * rstd_c * g_ref[...] + b_ref[...]
    if apply_silu:
        y = y * jax.nn.sigmoid(y)
    o_ref[0] = y


def group_norm_silu(x_nhwc, gamma, beta, *, groups=32, eps=1e-5, silu=True):
    n, h, w, c = x_nhwc.shape
    hw = h * w
    cg = c // groups
    x3 = x_nhwc.reshape(n, hw, c).astype(jnp.float32)
    grp = jnp.arange(c) // cg
    a = (grp[:, None] == jnp.arange(groups)[None, :]).astype(jnp.float32)  # (C, G)
    at = jnp.transpose(a)                                                  # (G, C)
    g2 = gamma.reshape(1, c).astype(jnp.float32)
    b2 = beta.reshape(1, c).astype(jnp.float32)
    kernel = functools.partial(_gn_silu_kernel, inv_count=1.0 / (hw * cg),
                               eps=eps, apply_silu=silu)
    out = pl.pallas_call(
        kernel,
        out_shape=jax.ShapeDtypeStruct((n, hw, c), jnp.float32),
        grid=(n,),
        in_specs=[
            pl.BlockSpec((1, hw, c), lambda i: (i, 0, 0)),
            pl.BlockSpec((1, c), lambda i: (0, 0)),
            pl.BlockSpec((1, c), lambda i: (0, 0)),
            pl.BlockSpec((c, groups), lambda i: (0, 0)),
            pl.BlockSpec((groups, c), lambda i: (0, 0)),
        ],
        out_specs=pl.BlockSpec((1, hw, c), lambda i: (i, 0, 0)),
        compiler_params=pltpu.CompilerParams(
            dimension_semantics=("parallel",)),
    )(x3, g2, b2, a, at)
    return out.reshape(n, h, w, c)


# ---------------------------------------------------------------------------
# Pallas kernel 3: LayerNorm over the channel (last) dim
# ---------------------------------------------------------------------------
def _ln_kernel(x_ref, g_ref, b_ref, o_ref, *, eps):
    x = x_ref[...]
    mean = jnp.mean(x, axis=-1, keepdims=True)
    xc = x - mean
    var = jnp.mean(xc * xc, axis=-1, keepdims=True)
    o_ref[...] = xc * jax.lax.rsqrt(var + eps) * g_ref[...] + b_ref[...]


def layer_norm(x2d, gamma, beta, *, eps=1e-5):
    m, c = x2d.shape
    mp = _round_up(m, 8)
    tm = mp if mp <= 512 else 512
    mp = _round_up(mp, tm)
    xp = jnp.pad(x2d.astype(jnp.float32), ((0, mp - m), (0, 0)))
    out = pl.pallas_call(
        functools.partial(_ln_kernel, eps=eps),
        out_shape=jax.ShapeDtypeStruct((mp, c), jnp.float32),
        grid=(mp // tm,),
        in_specs=[
            pl.BlockSpec((tm, c), lambda i: (i, 0)),
            pl.BlockSpec((1, c), lambda i: (0, 0)),
            pl.BlockSpec((1, c), lambda i: (0, 0)),
        ],
        out_specs=pl.BlockSpec((tm, c), lambda i: (i, 0)),
        compiler_params=pltpu.CompilerParams(
            dimension_semantics=("parallel",)),
    )(xp, gamma.reshape(1, c).astype(jnp.float32),
      beta.reshape(1, c).astype(jnp.float32))
    return out[:m]


# ---------------------------------------------------------------------------
# Pallas kernel 4: multi-head self-attention core (one (batch, head) per step)
# ---------------------------------------------------------------------------
def _attn_kernel(q_ref, k_ref, v_ref, o_ref, *, scale):
    q = q_ref[0].astype(jnp.float32)                       # (T, dh)
    k = k_ref[0].astype(jnp.float32)
    v = v_ref[0].astype(jnp.float32)
    s = jax.lax.dot_general(q, k, (((1,), (1,)), ((), ())),
                            preferred_element_type=jnp.float32) * scale
    s = s - jnp.max(s, axis=-1, keepdims=True)
    p = jnp.exp(s)
    p = p / jnp.sum(p, axis=-1, keepdims=True)
    o_ref[0] = jnp.dot(p, v, preferred_element_type=jnp.float32).astype(o_ref.dtype)


def mha_attention(q, k, v):
    """q, k, v: (B*heads, T, dh) f32 -> (B*heads, T, dh) f32."""
    bh, t, dh = q.shape
    kernel = functools.partial(_attn_kernel, scale=1.0 / math.sqrt(dh))
    return pl.pallas_call(
        kernel,
        out_shape=jax.ShapeDtypeStruct((bh, t, dh), jnp.float32),
        grid=(bh,),
        in_specs=[pl.BlockSpec((1, t, dh), lambda i: (i, 0, 0))] * 3,
        out_specs=pl.BlockSpec((1, t, dh), lambda i: (i, 0, 0)),
        compiler_params=pltpu.CompilerParams(
            dimension_semantics=("parallel",)),
    )(q, k, v)


# ---------------------------------------------------------------------------
# Convolutions (NHWC), im2col glue in JAX + Pallas matmul hot path
# ---------------------------------------------------------------------------
def conv2d_nhwc(x, weight, bias, *, stride=1, pad=0, activation=None):
    """x: (N, H, W, Cin); weight: PyTorch Conv2d layout (Cout, Cin, kh, kw)."""
    cout, cin, kh, kw = weight.shape
    n, h, w, _ = x.shape
    if kh == 1 and kw == 1 and stride == 1 and pad == 0:
        patches = x.reshape(n * h * w, cin)
        ho, wo = h, w
    else:
        xp = jnp.pad(x, ((0, 0), (pad, pad), (pad, pad), (0, 0)))
        ho = (h + 2 * pad - kh) // stride + 1
        wo = (w + 2 * pad - kw) // stride + 1
        cols = []
        for i in range(kh):
            for j in range(kw):
                cols.append(xp[:, i:i + stride * ho:stride,
                               j:j + stride * wo:stride, :])
        cols = jnp.stack(cols, axis=3)          # (n, ho, wo, kh*kw, cin)
        patches = cols.reshape(n * ho * wo, kh * kw * cin)
    # K ordering (kh, kw, cin) matches the patch layout above
    w2d = jnp.transpose(weight, (2, 3, 1, 0)).reshape(kh * kw * cin, cout)
    out = matmul_bias(patches, w2d, bias, activation=activation)
    return out.reshape(n, ho, wo, cout)


def conv_transpose2d_nhwc(x, weight_t, bias, *, stride=2, pad=1):
    """ConvTranspose2d; weight_t: PyTorch layout (Cin, Cout, kh, kw)."""
    cin, cout, kh, kw = weight_t.shape
    n, h, w, _ = x.shape
    # zero-dilate by stride
    xd = jnp.zeros((n, (h - 1) * stride + 1, (w - 1) * stride + 1, cin),
                   x.dtype)
    xd = xd.at[:, ::stride, ::stride, :].set(x)
    # equivalent regular conv: in/out swapped, spatially flipped kernel
    w_conv = jnp.flip(jnp.transpose(weight_t, (1, 0, 2, 3)), axis=(2, 3))
    return conv2d_nhwc(xd, w_conv, bias, stride=1, pad=kh - 1 - pad)


# ---------------------------------------------------------------------------
# Decoder blocks
# ---------------------------------------------------------------------------
def residual_block(x, p):
    h = group_norm_silu(x, p["gn1_g"], p["gn1_b"])
    h = conv2d_nhwc(h, p["w1"], p["b1"], pad=1)
    h = group_norm_silu(h, p["gn2_g"], p["gn2_b"])
    h = conv2d_nhwc(h, p["w2"], p["b2"], pad=1)
    return x + h


def nonlocal_block(x, p, *, num_heads=4):
    n, hh, ww, c = x.shape
    t = hh * ww
    dh = c // num_heads
    tokens = x.reshape(n * t, c)

    # fused QKV projection (PyTorch in_proj: x @ W_in^T + b_in, rows [q; k; v])
    qkv = matmul_bias(tokens, jnp.transpose(p["in_w"]), p["in_b"])  # (n*t, 3c)
    qkv = qkv.reshape(n, t, 3, num_heads, dh)
    qkv = jnp.transpose(qkv, (2, 0, 3, 1, 4)).reshape(3, n * num_heads, t, dh)
    q, k, v = qkv[0], qkv[1], qkv[2]

    o = mha_attention(q, k, v)                                      # (n*h, t, dh)
    o = o.reshape(n, num_heads, t, dh).transpose(0, 2, 1, 3).reshape(n * t, c)
    o = matmul_bias(o, jnp.transpose(p["out_w"]), p["out_b"])       # out_proj

    y = layer_norm(o + tokens, p["ln_g"], p["ln_b"])                # norm(attn + x)
    return y.reshape(n, hh, ww, c)


def decoder_forward(params, x_nchw):
    x = jnp.transpose(x_nchw, (0, 2, 3, 1)).astype(jnp.float32)  # NHWC internal

    # initial: GroupNorm -> SiLU -> Conv1x1(z_dim -> C2)
    h = group_norm_silu(x, params["init_gn_g"], params["init_gn_b"])
    h = conv2d_nhwc(h, params["init_w"], params["init_b"])

    # middle
    h = residual_block(h, params["res_m1"])
    h = nonlocal_block(h, params["attn"])
    h = residual_block(h, params["res_m2"])

    # up blocks
    h = residual_block(h, params["res_u1"])
    h = residual_block(h, params["res_u2"])
    h = conv_transpose2d_nhwc(h, params["up_w"], params["up_b"],
                              stride=2, pad=1)

    # final: Conv3x3(C2 -> out_channels)
    h = conv2d_nhwc(h, params["final_w"], params["final_b"], pad=1)

    return jnp.transpose(h, (0, 3, 1, 2))                          # back to NCHW


# ---------------------------------------------------------------------------
# parameter init (deterministic, PyTorch layouts)
# ---------------------------------------------------------------------------
def init_decoder_params(key, *, out_channels=3, C2=64, z_dim=64):
    keys = iter(jax.random.split(key, 40))

    def conv_w(cout, cin, k):
        fan_in = cin * k * k
        return (jax.random.normal(next(keys), (cout, cin, k, k), jnp.float32)
                / math.sqrt(fan_in))

    def vec(c, scale=0.01):
        return jax.random.normal(next(keys), (c,), jnp.float32) * scale

    def res_params(c):
        return {
            "gn1_g": jnp.ones((c,), jnp.float32),
            "gn1_b": jnp.zeros((c,), jnp.float32),
            "w1": conv_w(c, c, 3), "b1": vec(c),
            "gn2_g": jnp.ones((c,), jnp.float32),
            "gn2_b": jnp.zeros((c,), jnp.float32),
            "w2": conv_w(c, c, 3), "b2": vec(c),
        }

    params = {
        "init_gn_g": jnp.ones((z_dim,), jnp.float32),
        "init_gn_b": jnp.zeros((z_dim,), jnp.float32),
        "init_w": conv_w(C2, z_dim, 1), "init_b": vec(C2),
        "res_m1": res_params(C2),
        "attn": {
            "in_w": jax.random.normal(next(keys), (3 * C2, C2), jnp.float32)
                    / math.sqrt(C2),
            "in_b": vec(3 * C2),
            "out_w": jax.random.normal(next(keys), (C2, C2), jnp.float32)
                     / math.sqrt(C2),
            "out_b": vec(C2),
            "ln_g": jnp.ones((C2,), jnp.float32),
            "ln_b": jnp.zeros((C2,), jnp.float32),
        },
        "res_m2": res_params(C2),
        "res_u1": res_params(C2),
        "res_u2": res_params(C2),
        # ConvTranspose2d weight layout: (in_channels, out_channels, kh, kw)
        "up_w": jax.random.normal(next(keys), (C2, C2, 4, 4), jnp.float32)
                / math.sqrt(C2 * 16),
        "up_b": vec(C2),
        "final_w": conv_w(out_channels, C2, 3), "final_b": vec(out_channels),
    }
    return params


if __name__ == "__main__":
    key = jax.random.PRNGKey(0)
    kx, kp = jax.random.split(key)

    # Small shapes consistent with the module: GroupNorm(32, .) and 4 heads
    # require channels divisible by 32 and 4 -> use 64 channels, 8x8 latents.
    batch, z_dim, C2, out_channels, spatial = 2, 64, 64, 3, 8

    x = jax.random.normal(kx, (batch, z_dim, spatial, spatial), jnp.float32)
    params = init_decoder_params(kp, out_channels=out_channels, C2=C2,
                                 z_dim=z_dim)

    fwd = jax.jit(decoder_forward)
    out = fwd(params, x)
    out = jax.block_until_ready(out)

    expected_shape = (batch, out_channels, spatial * 2, spatial * 2)
    assert out.shape == expected_shape, (out.shape, expected_shape)
    assert bool(jnp.all(jnp.isfinite(out))), "non-finite values in output"
    print("KERNEL_OK")
</pallas_src>

<mosaic_0001>
module attributes {stable_mosaic.version = 11 : i64} {
  func.func @_mm_bias_kernel(%arg0: i32, %arg1: i32, %arg2: i32, %arg3: memref<128x128xbf16, #tpu.memory_space<vmem>>, %arg4: memref<128x128xbf16, #tpu.memory_space<vmem>>, %arg5: memref<1x128xf32, #tpu.memory_space<vmem>>, %arg6: memref<128x128xf32, #tpu.memory_space<vmem>>, %arg7: memref<128x128xf32, #tpu.memory_space<vmem>>) attributes {dimension_semantics = [#tpu.dimension_semantics<parallel>, #tpu.dimension_semantics<parallel>, #tpu.dimension_semantics<arbitrary>], iteration_bounds = array<i64: 1, 1, 1>, scalar_prefetch = 0 : i64, scratch_operands = 1 : i64, tpu.core_type = #tpu.core_type<tc>, window_params = [{transform_indices = @transform_0, window_bounds = array<i64: 128, 128>}, {transform_indices = @transform_1, window_bounds = array<i64: 128, 128>}, {transform_indices = @transform_2, window_bounds = array<i64: 1, 128>}, {transform_indices = @transform_3, window_bounds = array<i64: 128, 128>}]} {
    %c0_i32 = arith.constant 0 : i32
    %0 = arith.cmpi eq, %arg2, %c0_i32 : i32
    %1 = arith.extui %0 : i1 to i32
    %c0_i32_0 = arith.constant 0 : i32
    %2 = arith.cmpi ne, %1, %c0_i32_0 : i32
    scf.if %2 {
      %cst_10 = arith.constant 0.000000e+00 : f32
      %12 = vector.broadcast %cst_10 : f32 to vector<128x128xf32>
      %c0_11 = arith.constant 0 : index
      %c0_12 = arith.constant 0 : index
      %13 = vector.load %arg7[%c0_11, %c0_12] : memref<128x128xf32, #tpu.memory_space<vmem>>, vector<128x128xf32>
      tpu.vector_store %arg7[%c0_11, %c0_12], %12 {strides = array<i32>} : memref<128x128xf32, #tpu.memory_space<vmem>>, vector<128x128xf32>,
    } else {
    }
    %c0 = arith.constant 0 : index
    %c0_1 = arith.constant 0 : index
    %3 = vector.load %arg7[%c0, %c0_1] : memref<128x128xf32, #tpu.memory_space<vmem>>, vector<128x128xf32>
    %c0_2 = arith.constant 0 : index
    %c0_3 = arith.constant 0 : index
    %4 = vector.load %arg3[%c0_2, %c0_3] : memref<128x128xbf16, #tpu.memory_space<vmem>>, vector<128x128xbf16>
    %c0_4 = arith.constant 0 : index
    %c0_5 = arith.constant 0 : index
    %5 = vector.load %arg4[%c0_4, %c0_5] : memref<128x128xbf16, #tpu.memory_space<vmem>>, vector<128x128xbf16>
    %cst = arith.constant dense<0.000000e+00> : vector<128x128xf32>
    %6 = tpu.matmul %4, %5, %cst {dimension_numbers = #tpu.dot_dimension_numbers<[1], [0], [0], [1], [0, 0, 1, 1], [], []>} : vector<128x128xbf16>, vector<128x128xbf16>, vector<128x128xf32> -> vector<128x128xf32>
    %7 = arith.addf %3, %6 : vector<128x128xf32>
    %c0_6 = arith.constant 0 : index
    %c0_7 = arith.constant 0 : index
    %8 = vector.load %arg7[%c0_6, %c0_7] : memref<128x128xf32, #tpu.memory_space<vmem>>, vector<128x128xf32>
    tpu.vector_store %arg7[%c0_6, %c0_7], %7 {strides = array<i32>} : memref<128x128xf32, #tpu.memory_space<vmem>>, vector<128x128xf32>,
    %c0_i32_8 = arith.constant 0 : i32
    %9 = arith.cmpi eq, %arg2, %c0_i32_8 : i32
    %10 = arith.extui %9 : i1 to i32
    %c0_i32_9 = arith.constant 0 : i32
    %11 = arith.cmpi ne, %10, %c0_i32_9 : i32
    scf.if %11 {
      %c0_10 = arith.constant 0 : index
      %c0_11 = arith.constant 0 : index
      %12 = vector.load %arg7[%c0_10, %c0_11] : memref<128x128xf32, #tpu.memory_space<vmem>>, vector<128x128xf32>
      %c0_12 = arith.constant 0 : index
      %c0_13 = arith.constant 0 : index
      %13 = vector.load %arg5[%c0_12, %c0_13] : memref<1x128xf32, #tpu.memory_space<vmem>>, vector<1x128xf32>
      %14 = vector.broadcast %13 : vector<1x128xf32> to vector<128x128xf32>
      %15 = arith.addf %12, %14 : vector<128x128xf32>
      %c0_14 = arith.constant 0 : index
      %c0_15 = arith.constant 0 : index
      %16 = vector.load %arg6[%c0_14, %c0_15] : memref<128x128xf32, #tpu.memory_space<vmem>>, vector<128x128xf32>
      tpu.vector_store %arg6[%c0_14, %c0_15], %15 {strides = array<i32>} : memref<128x128xf32, #tpu.memory_space<vmem>>, vector<128x128xf32>,
    } else {
    }
    return
  }
  func.func @transform_0(%arg0: i32, %arg1: i32, %arg2: i32) -> (i32, i32) {
    %c0_i32 = arith.constant 0 : i32
    return %arg0, %arg2 : i32, i32
  }
  func.func @transform_1(%arg0: i32, %arg1: i32, %arg2: i32) -> (i32, i32) {
    %c0_i32 = arith.constant 0 : i32
    return %arg2, %arg1 : i32, i32
  }
  func.func @transform_2(%arg0: i32, %arg1: i32, %arg2: i32) -> (i32, i32) {
    %c0_i32 = arith.constant 0 : i32
    %c0_i32_0 = arith.constant 0 : i32
    return %c0_i32, %arg1 : i32, i32
  }
  func.func @transform_3(%arg0: i32, %arg1: i32, %arg2: i32) -> (i32, i32) {
    %c0_i32 = arith.constant 0 : i32
    return %arg0, %arg1 : i32, i32
  }
}

module attributes {stable_mosaic.version = 11 : i64} {
  func.func @_gn_silu_kernel(%arg0: i32, %arg1: memref<1x64x64xf32, #tpu.memory_space<vmem>>, %arg2: memref<1x64xf32, #tpu.memory_space<vmem>>, %arg3: memref<1x64xf32, #tpu.memory_space<vmem>>, %arg4: memref<64x32xf32, #tpu.memory_space<vmem>>, %arg5: memref<32x64xf32, #tpu.memory_space<vmem>>, %arg6: memref<1x64x64xf32, #tpu.memory_space<vmem>>) attributes {dimension_semantics = [#tpu.dimension_semantics<parallel>], iteration_bounds = array<i64: 2>, scalar_prefetch = 0 : i64, scratch_operands = 0 : i64, tpu.core_type = #tpu.core_type<tc>, window_params = [{transform_indices = @transform_0, window_bounds = array<i64: 1, 64, 64>}, {pipeline_mode = #tpu.pipeline_mode<synchronous>, transform_indices = @transform_1, window_bounds = array<i64: 1, 64>}, {pipeline_mode = #tpu.pipeline_mode<synchronous>, transform_indices = @transform_2, window_bounds = array<i64: 1, 64>}, {pipeline_mode = #tpu.pipeline_mode<synchronous>, transform_indices = @transform_3, window_bounds = array<i64: 64, 32>}, {pipeline_mode = #tpu.pipeline_mode<synchronous>, transform_indices = @transform_4, window_bounds = array<i64: 32, 64>}, {transform_indices = @transform_5, window_bounds = array<i64: 1, 64, 64>}]} {
    %c0 = arith.constant 0 : index
    %c0_0 = arith.constant 0 : index
    %c0_1 = arith.constant 0 : index
    %0 = vector.load %arg1[%c0, %c0_0, %c0_1] : memref<1x64x64xf32, #tpu.memory_space<vmem>>, vector<1x64x64xf32>
    %1 = vector.shape_cast %0 : vector<1x64x64xf32> to vector<64x64xf32>
    %c0_2 = arith.constant 0 : index
    %c0_3 = arith.constant 0 : index
    %2 = vector.load %arg4[%c0_2, %c0_3] : memref<64x32xf32, #tpu.memory_space<vmem>>, vector<64x32xf32>
    %c0_4 = arith.constant 0 : index
    %c0_5 = arith.constant 0 : index
    %3 = vector.load %arg5[%c0_4, %c0_5] : memref<32x64xf32, #tpu.memory_space<vmem>>, vector<32x64xf32>
    %cst = arith.constant dense<0.000000e+00> : vector<64xf32>
    %4 = vector.multi_reduction <add>, %1, %cst [0] : vector<64x64xf32> to vector<64xf32>
    %5 = vector.shape_cast %4 : vector<64xf32> to vector<1x64xf32>
    %6 = arith.mulf %1, %1 : vector<64x64xf32>
    %cst_6 = arith.constant dense<0.000000e+00> : vector<64xf32>
    %7 = vector.multi_reduction <add>, %6, %cst_6 [0] : vector<64x64xf32> to vector<64xf32>
    %8 = vector.shape_cast %7 : vector<64xf32> to vector<1x64xf32>
    %cst_7 = arith.constant dense<0.000000e+00> : vector<1x32xf32>
    %9 = tpu.matmul %5, %2, %cst_7 {dimension_numbers = #tpu.dot_dimension_numbers<[1], [0], [0], [1], [0, 0, 1, 1], [], []>} : vector<1x64xf32>, vector<64x32xf32>, vector<1x32xf32> -> vector<1x32xf32>
    %cst_8 = arith.constant 7.812500e-03 : f32
    %10 = vector.broadcast %cst_8 : f32 to vector<1x32xf32>
    %11 = arith.mulf %9, %10 : vector<1x32xf32>
    %cst_9 = arith.constant dense<0.000000e+00> : vector<1x32xf32>
    %12 = tpu.matmul %8, %2, %cst_9 {dimension_numbers = #tpu.dot_dimension_numbers<[1], [0], [0], [1], [0, 0, 1, 1], [], []>} : vector<1x64xf32>, vector<64x32xf32>, vector<1x32xf32> -> vector<1x32xf32>
    %cst_10 = arith.constant 7.812500e-03 : f32
    %13 = vector.broadcast %cst_10 : f32 to vector<1x32xf32>
    %14 = arith.mulf %12, %13 : vector<1x32xf32>
    %15 = arith.mulf %11, %11 : vector<1x32xf32>
    %16 = arith.subf %14, %15 : vector<1x32xf32>
    %cst_11 = arith.constant 9.99999974E-6 : f32
    %17 = vector.broadcast %cst_11 : f32 to vector<1x32xf32>
    %18 = arith.addf %16, %17 : vector<1x32xf32>
    %19 = math.rsqrt %18 : vector<1x32xf32>
    %cst_12 = arith.constant dense<0.000000e+00> : vector<1x64xf32>
    %20 = tpu.matmul %11, %3, %cst_12 {dimension_numbers = #tpu.dot_dimension_numbers<[1], [0], [0], [1], [0, 0, 1, 1], [], []>} : vector<1x32xf32>, vector<32x64xf32>, vector<1x64xf32> -> vector<1x64xf32>
    %cst_13 = arith.constant dense<0.000000e+00> : vector<1x64xf32>
    %21 = tpu.matmul %19, %3, %cst_13 {dimension_numbers = #tpu.dot_dimension_numbers<[1], [0], [0], [1], [0, 0, 1, 1], [], []>} : vector<1x32xf32>, vector<32x64xf32>, vector<1x64xf32> -> vector<1x64xf32>
    %22 = vector.broadcast %20 : vector<1x64xf32> to vector<64x64xf32>
    %23 = arith.subf %1, %22 : vector<64x64xf32>
    %24 = vector.broadcast %21 : vector<1x64xf32> to vector<64x64xf32>
    %25 = arith.mulf %23, %24 : vector<64x64xf32>
    %c0_14 = arith.constant 0 : index
    %c0_15 = arith.constant 0 : index
    %26 = vector.load %arg2[%c0_14, %c0_15] : memref<1x64xf32, #tpu.memory_space<vmem>>, vector<1x64xf32>
    %27 = vector.broadcast %26 : vector<1x64xf32> to vector<64x64xf32>
    %28 = arith.mulf %25, %27 : vector<64x64xf32>
    %c0_16 = arith.constant 0 : index
    %c0_17 = arith.constant 0 : index
    %29 = vector.load %arg3[%c0_16, %c0_17] : memref<1x64xf32, #tpu.memory_space<vmem>>, vector<1x64xf32>
    %30 = vector.broadcast %29 : vector<1x64xf32> to vector<64x64xf32>
    %31 = arith.addf %28, %30 : vector<64x64xf32>
    %32 = arith.negf %31 : vector<64x64xf32>
    %33 = math.exp %32 : vector<64x64xf32>
    %cst_18 = arith.constant 1.000000e+00 : f32
    %34 = vector.broadcast %cst_18 : f32 to vector<64x64xf32>
    %35 = arith.addf %34, %33 : vector<64x64xf32>
    %36 = arith.divf %34, %35 : vector<64x64xf32>
    %37 = arith.mulf %31, %36 : vector<64x64xf32>
    %c0_19 = arith.constant 0 : index
    %c0_20 = arith.constant 0 : index
    %c0_21 = arith.constant 0 : index
    %38 = vector.load %arg6[%c0_19, %c0_20, %c0_21] : memref<1x64x64xf32, #tpu.memory_space<vmem>>, vector<1x64x64xf32>
    %39 = vector.shape_cast %38 : vector<1x64x64xf32> to vector<64x64xf32>
    %40 = vector.shape_cast %37 : vector<64x64xf32> to vector<1x64x64xf32>
    tpu.vector_store %arg6[%c0_19, %c0_20, %c0_21], %40 {strides = array<i32>} : memref<1x64x64xf32, #tpu.memory_space<vmem>>, vector<1x64x64xf32>,
    return
  }
  func.func @transform_0(%arg0: i32) -> (i32, i32, i32) {
    %c0_i32 = arith.constant 0 : i32
    %c0_i32_0 = arith.constant 0 : i32
    %c0_i32_1 = arith.constant 0 : i32
    return %arg0, %c0_i32, %c0_i32_0 : i32, i32, i32
  }
  func.func @transform_1(%arg0: i32) -> (i32, i32) {
    %c0_i32 = arith.constant 0 : i32
    %c0_i32_0 = arith.constant 0 : i32
    %c0_i32_1 = arith.constant 0 : i32
    return %c0_i32, %c0_i32_0 : i32, i32
  }
  func.func @transform_2(%arg0: i32) -> (i32, i32) {
    %c0_i32 = arith.constant 0 : i32
    %c0_i32_0 = arith.constant 0 : i32
    %c0_i32_1 = arith.constant 0 : i32
    return %c0_i32, %c0_i32_0 : i32, i32
  }
  func.func @transform_3(%arg0: i32) -> (i32, i32) {
    %c0_i32 = arith.constant 0 : i32
    %c0_i32_0 = arith.constant 0 : i32
    %c0_i32_1 = arith.constant 0 : i32
    return %c0_i32, %c0_i32_0 : i32, i32
  }
  func.func @transform_4(%arg0: i32) -> (i32, i32) {
    %c0_i32 = arith.constant 0 : i32
    %c0_i32_0 = arith.constant 0 : i32
    %c0_i32_1 = arith.constant 0 : i32
    return %c0_i32, %c0_i32_0 : i32, i32
  }
  func.func @transform_5(%arg0: i32) -> (i32, i32, i32) {
    %c0_i32 = arith.constant 0 : i32
    %c0_i32_0 = arith.constant 0 : i32
    %c0_i32_1 = arith.constant 0 : i32
    return %arg0, %c0_i32, %c0_i32_0 : i32, i32, i32
  }
}

module attributes {stable_mosaic.version = 11 : i64} {
  func.func @_gn_silu_kernel(%arg0: i32, %arg1: memref<1x64x64xf32, #tpu.memory_space<vmem>>, %arg2: memref<1x64xf32, #tpu.memory_space<vmem>>, %arg3: memref<1x64xf32, #tpu.memory_space<vmem>>, %arg4: memref<64x32xf32, #tpu.memory_space<vmem>>, %arg5: memref<32x64xf32, #tpu.memory_space<vmem>>, %arg6: memref<1x64x64xf32, #tpu.memory_space<vmem>>) attributes {dimension_semantics = [#tpu.dimension_semantics<parallel>], iteration_bounds = array<i64: 2>, scalar_prefetch = 0 : i64, scratch_operands = 0 : i64, tpu.core_type = #tpu.core_type<tc>, window_params = [{transform_indices = @transform_0, window_bounds = array<i64: 1, 64, 64>}, {pipeline_mode = #tpu.pipeline_mode<synchronous>, transform_indices = @transform_1, window_bounds = array<i64: 1, 64>}, {pipeline_mode = #tpu.pipeline_mode<synchronous>, transform_indices = @transform_2, window_bounds = array<i64: 1, 64>}, {pipeline_mode = #tpu.pipeline_mode<synchronous>, transform_indices = @transform_3, window_bounds = array<i64: 64, 32>}, {pipeline_mode = #tpu.pipeline_mode<synchronous>, transform_indices = @transform_4, window_bounds = array<i64: 32, 64>}, {transform_indices = @transform_5, window_bounds = array<i64: 1, 64, 64>}]} {
    %c0 = arith.constant 0 : index
    %c0_0 = arith.constant 0 : index
    %c0_1 = arith.constant 0 : index
    %0 = vector.load %arg1[%c0, %c0_0, %c0_1] : memref<1x64x64xf32, #tpu.memory_space<vmem>>, vector<1x64x64xf32>
    %1 = vector.shape_cast %0 : vector<1x64x64xf32> to vector<64x64xf32>
    %c0_2 = arith.constant 0 : index
    %c0_3 = arith.constant 0 : index
    %2 = vector.load %arg4[%c0_2, %c0_3] : memref<64x32xf32, #tpu.memory_space<vmem>>, vector<64x32xf32>
    %c0_4 = arith.constant 0 : index
    %c0_5 = arith.constant 0 : index
    %3 = vector.load %arg5[%c0_4, %c0_5] : memref<32x64xf32, #tpu.memory_space<vmem>>, vector<32x64xf32>
    %cst = arith.constant dense<0.000000e+00> : vector<64xf32>
    %4 = vector.multi_reduction <add>, %1, %cst [0] : vector<64x64xf32> to vector<64xf32>
    %5 = vector.shape_cast %4 : vector<64xf32> to vector<1x64xf32>
    %6 = arith.mulf %1, %1 : vector<64x64xf32>
    %cst_6 = arith.constant dense<0.000000e+00> : vector<64xf32>
    %7 = vector.multi_reduction <add>, %6, %cst_6 [0] : vector<64x64xf32> to vector<64xf32>
    %8 = vector.shape_cast %7 : vector<64xf32> to vector<1x64xf32>
    %cst_7 = arith.constant dense<0.000000e+00> : vector<1x32xf32>
    %9 = tpu.matmul %5, %2, %cst_7 {dimension_numbers = #tpu.dot_dimension_numbers<[1], [0], [0], [1], [0, 0, 1, 1], [], []>} : vector<1x64xf32>, vector<64x32xf32>, vector<1x32xf32> -> vector<1x32xf32>
    %cst_8 = arith.constant 7.812500e-03 : f32
    %10 = vector.broadcast %cst_8 : f32 to vector<1x32xf32>
    %11 = arith.mulf %9, %10 : vector<1x32xf32>
    %cst_9 = arith.constant dense<0.000000e+00> : vector<1x32xf32>
    %12 = tpu.matmul %8, %2, %cst_9 {dimension_numbers = #tpu.dot_dimension_numbers<[1], [0], [0], [1], [0, 0, 1, 1], [], []>} : vector<1x64xf32>, vector<64x32xf32>, vector<1x32xf32> -> vector<1x32xf32>
    %cst_10 = arith.constant 7.812500e-03 : f32
    %13 = vector.broadcast %cst_10 : f32 to vector<1x32xf32>
    %14 = arith.mulf %12, %13 : vector<1x32xf32>
    %15 = arith.mulf %11, %11 : vector<1x32xf32>
    %16 = arith.subf %14, %15 : vector<1x32xf32>
    %cst_11 = arith.constant 9.99999974E-6 : f32
    %17 = vector.broadcast %cst_11 : f32 to vector<1x32xf32>
    %18 = arith.addf %16, %17 : vector<1x32xf32>
    %19 = math.rsqrt %18 : vector<1x32xf32>
    %cst_12 = arith.constant dense<0.000000e+00> : vector<1x64xf32>
    %20 = tpu.matmul %11, %3, %cst_12 {dimension_numbers = #tpu.dot_dimension_numbers<[1], [0], [0], [1], [0, 0, 1, 1], [], []>} : vector<1x32xf32>, vector<32x64xf32>, vector<1x64xf32> -> vector<1x64xf32>
    %cst_13 = arith.constant dense<0.000000e+00> : vector<1x64xf32>
    %21 = tpu.matmul %19, %3, %cst_13 {dimension_numbers = #tpu.dot_dimension_numbers<[1], [0], [0], [1], [0, 0, 1, 1], [], []>} : vector<1x32xf32>, vector<32x64xf32>, vector<1x64xf32> -> vector<1x64xf32>
    %22 = vector.broadcast %20 : vector<1x64xf32> to vector<64x64xf32>
    %23 = arith.subf %1, %22 : vector<64x64xf32>
    %24 = vector.broadcast %21 : vector<1x64xf32> to vector<64x64xf32>
    %25 = arith.mulf %23, %24 : vector<64x64xf32>
    %c0_14 = arith.constant 0 : index
    %c0_15 = arith.constant 0 : index
    %26 = vector.load %arg2[%c0_14, %c0_15] : memref<1x64xf32, #tpu.memory_space<vmem>>, vector<1x64xf32>
    %27 = vector.broadcast %26 : vector<1x64xf32> to vector<64x64xf32>
    %28 = arith.mulf %25, %27 : vector<64x64xf32>
    %c0_16 = arith.constant 0 : index
    %c0_17 = arith.constant 0 : index
    %29 = vector.load %arg3[%c0_16, %c0_17] : memref<1x64xf32, #tpu.memory_space<vmem>>, vector<1x64xf32>
    %30 = vector.broadcast %29 : vector<1x64xf32> to vector<64x64xf32>
    %31 = arith.addf %28, %30 : vector<64x64xf32>
    %32 = arith.negf %31 : vector<64x64xf32>
    %33 = math.exp %32 : vector<64x64xf32>
    %cst_18 = arith.constant 1.000000e+00 : f32
    %34 = vector.broadcast %cst_18 : f32 to vector<64x64xf32>
    %35 = arith.addf %34, %33 : vector<64x64xf32>
    %36 = arith.divf %34, %35 : vector<64x64xf32>
    %37 = arith.mulf %31, %36 : vector<64x64xf32>
    %c0_19 = arith.constant 0 : index
    %c0_20 = arith.constant 0 : index
    %c0_21 = arith.constant 0 : index
    %38 = vector.load %arg6[%c0_19, %c0_20, %c0_21] : memref<1x64x64xf32, #tpu.memory_space<vmem>>, vector<1x64x64xf32>
    %39 = vector.shape_cast %38 : vector<1x64x64xf32> to vector<64x64xf32>
    %40 = vector.shape_cast %37 : vector<64x64xf32> to vector<1x64x64xf32>
    tpu.vector_store %arg6[%c0_19, %c0_20, %c0_21], %40 {strides = array<i32>} : memref<1x64x64xf32, #tpu.memory_space<vmem>>, vector<1x64x64xf32>,
    return
  }
  func.func @transform_0(%arg0: i32) -> (i32, i32, i32) {
    %c0_i32 = arith.constant 0 : i32
    %c0_i32_0 = arith.constant 0 : i32
    %c0_i32_1 = arith.constant 0 : i32
    return %arg0, %c0_i32, %c0_i32_0 : i32, i32, i32
  }
  func.func @transform_1(%arg0: i32) -> (i32, i32) {
    %c0_i32 = arith.constant 0 : i32
    %c0_i32_0 = arith.constant 0 : i32
    %c0_i32_1 = arith.constant 0 : i32
    return %c0_i32, %c0_i32_0 : i32, i32
  }
  func.func @transform_2(%arg0: i32) -> (i32, i32) {
    %c0_i32 = arith.constant 0 : i32
    %c0_i32_0 = arith.constant 0 : i32
    %c0_i32_1 = arith.constant 0 : i32
    return %c0_i32, %c0_i32_0 : i32, i32
  }
  func.func @transform_3(%arg0: i32) -> (i32, i32) {
    %c0_i32 = arith.constant 0 : i32
    %c0_i32_0 = arith.constant 0 : i32
    %c0_i32_1 = arith.constant 0 : i32
    return %c0_i32, %c0_i32_0 : i32, i32
  }
  func.func @transform_4(%arg0: i32) -> (i32, i32) {
    %c0_i32 = arith.constant 0 : i32
    %c0_i32_0 = arith.constant 0 : i32
    %c0_i32_1 = arith.constant 0 : i32
    return %c0_i32, %c0_i32_0 : i32, i32
  }
  func.func @transform_5(%arg0: i32) -> (i32, i32, i32) {
    %c0_i32 = arith.constant 0 : i32
    %c0_i32_0 = arith.constant 0 : i32
    %c0_i32_1 = arith.constant 0 : i32
    return %arg0, %c0_i32, %c0_i32_0 : i32, i32, i32
  }
}

module attributes {stable_mosaic.version = 11 : i64} {
  func.func @_mm_bias_kernel(%arg0: i32, %arg1: i32, %arg2: i32, %arg3: memref<128x128xbf16, #tpu.memory_space<vmem>>, %arg4: memref<128x128xbf16, #tpu.memory_space<vmem>>, %arg5: memref<1x128xf32, #tpu.memory_space<vmem>>, %arg6: memref<128x128xf32, #tpu.memory_space<vmem>>, %arg7: memref<128x128xf32, #tpu.memory_space<vmem>>) attributes {dimension_semantics = [#tpu.dimension_semantics<parallel>, #tpu.dimension_semantics<parallel>, #tpu.dimension_semantics<arbitrary>], iteration_bounds = array<i64: 1, 1, 5>, scalar_prefetch = 0 : i64, scratch_operands = 1 : i64, tpu.core_type = #tpu.core_type<tc>, window_params = [{transform_indices = @transform_0, window_bounds = array<i64: 128, 128>}, {transform_indices = @transform_1, window_bounds = array<i64: 128, 128>}, {transform_indices = @transform_2, window_bounds = array<i64: 1, 128>}, {transform_indices = @transform_3, window_bounds = array<i64: 128, 128>}]} {
    %c0_i32 = arith.constant 0 : i32
    %0 = arith.cmpi eq, %arg2, %c0_i32 : i32
    %1 = arith.extui %0 : i1 to i32
    %c0_i32_0 = arith.constant 0 : i32
    %2 = arith.cmpi ne, %1, %c0_i32_0 : i32
    scf.if %2 {
      %cst_9 = arith.constant 0.000000e+00 : f32
      %12 = vector.broadcast %cst_9 : f32 to vector<128x128xf32>
      %c0_10 = arith.constant 0 : index
      %c0_11 = arith.constant 0 : index
      %13 = vector.load %arg7[%c0_10, %c0_11] : memref<128x128xf32, #tpu.memory_space<vmem>>, vector<128x128xf32>
      tpu.vector_store %arg7[%c0_10, %c0_11], %12 {strides = array<i32>} : memref<128x128xf32, #tpu.memory_space<vmem>>, vector<128x128xf32>,
    } else {
    }
    %c0 = arith.constant 0 : index
    %c0_1 = arith.constant 0 : index
    %3 = vector.load %arg7[%c0, %c0_1] : memref<128x128xf32, #tpu.memory_space<vmem>>, vector<128x128xf32>
    %c0_2 = arith.constant 0 : index
    %c0_3 = arith.constant 0 : index
    %4 = vector.load %arg3[%c0_2, %c0_3] : memref<128x128xbf16, #tpu.memory_space<vmem>>, vector<128x128xbf16>
    %c0_4 = arith.constant 0 : index
    %c0_5 = arith.constant 0 : index
    %5 = vector.load %arg4[%c0_4, %c0_5] : memref<128x128xbf16, #tpu.memory_space<vmem>>, vector<128x128xbf16>
    %cst = arith.constant dense<0.000000e+00> : vector<128x128xf32>
    %6 = tpu.matmul %4, %5, %cst {dimension_numbers = #tpu.dot_dimension_numbers<[1], [0], [0], [1], [0, 0, 1, 1], [], []>} : vector<128x128xbf16>, vector<128x128xbf16>, vector<128x128xf32> -> vector<128x128xf32>
    %7 = arith.addf %3, %6 : vector<128x128xf32>
    %c0_6 = arith.constant 0 : index
    %c0_7 = arith.constant 0 : index
    %8 = vector.load %arg7[%c0_6, %c0_7] : memref<128x128xf32, #tpu.memory_space<vmem>>, vector<128x128xf32>
    tpu.vector_store %arg7[%c0_6, %c0_7], %7 {strides = array<i32>} : memref<128x128xf32, #tpu.memory_space<vmem>>, vector<128x128xf32>,
    %c4_i32 = arith.constant 4 : i32
    %9 = arith.cmpi eq, %arg2, %c4_i32 : i32
    %10 = arith.extui %9 : i1 to i32
    %c0_i32_8 = arith.constant 0 : i32
    %11 = arith.cmpi ne, %10, %c0_i32_8 : i32
    scf.if %11 {
      %c0_9 = arith.constant 0 : index
      %c0_10 = arith.constant 0 : index
      %12 = vector.load %arg7[%c0_9, %c0_10] : memref<128x128xf32, #tpu.memory_space<vmem>>, vector<128x128xf32>
      %c0_11 = arith.constant 0 : index
      %c0_12 = arith.constant 0 : index
      %13 = vector.load %arg5[%c0_11, %c0_12] : memref<1x128xf32, #tpu.memory_space<vmem>>, vector<1x128xf32>
      %14 = vector.broadcast %13 : vector<1x128xf32> to vector<128x128xf32>
      %15 = arith.addf %12, %14 : vector<128x128xf32>
      %c0_13 = arith.constant 0 : index
      %c0_14 = arith.constant 0 : index
      %16 = vector.load %arg6[%c0_13, %c0_14] : memref<128x128xf32, #tpu.memory_space<vmem>>, vector<128x128xf32>
      tpu.vector_store %arg6[%c0_13, %c0_14], %15 {strides = array<i32>} : memref<128x128xf32, #tpu.memory_space<vmem>>, vector<128x128xf32>,
    } else {
    }
    return
  }
  func.func @transform_0(%arg0: i32, %arg1: i32, %arg2: i32) -> (i32, i32) {
    %c0_i32 = arith.constant 0 : i32
    return %arg0, %arg2 : i32, i32
  }
  func.func @transform_1(%arg0: i32, %arg1: i32, %arg2: i32) -> (i32, i32) {
    %c0_i32 = arith.constant 0 : i32
    return %arg2, %arg1 : i32, i32
  }
  func.func @transform_2(%arg0: i32, %arg1: i32, %arg2: i32) -> (i32, i32) {
    %c0_i32 = arith.constant 0 : i32
    %c0_i32_0 = arith.constant 0 : i32
    return %c0_i32, %arg1 : i32, i32
  }
  func.func @transform_3(%arg0: i32, %arg1: i32, %arg2: i32) -> (i32, i32) {
    %c0_i32 = arith.constant 0 : i32
    return %arg0, %arg1 : i32, i32
  }
}

module attributes {stable_mosaic.version = 11 : i64} {
  func.func @_gn_silu_kernel(%arg0: i32, %arg1: memref<1x64x64xf32, #tpu.memory_space<vmem>>, %arg2: memref<1x64xf32, #tpu.memory_space<vmem>>, %arg3: memref<1x64xf32, #tpu.memory_space<vmem>>, %arg4: memref<64x32xf32, #tpu.memory_space<vmem>>, %arg5: memref<32x64xf32, #tpu.memory_space<vmem>>, %arg6: memref<1x64x64xf32, #tpu.memory_space<vmem>>) attributes {dimension_semantics = [#tpu.dimension_semantics<parallel>], iteration_bounds = array<i64: 2>, scalar_prefetch = 0 : i64, scratch_operands = 0 : i64, tpu.core_type = #tpu.core_type<tc>, window_params = [{transform_indices = @transform_0, window_bounds = array<i64: 1, 64, 64>}, {pipeline_mode = #tpu.pipeline_mode<synchronous>, transform_indices = @transform_1, window_bounds = array<i64: 1, 64>}, {pipeline_mode = #tpu.pipeline_mode<synchronous>, transform_indices = @transform_2, window_bounds = array<i64: 1, 64>}, {pipeline_mode = #tpu.pipeline_mode<synchronous>, transform_indices = @transform_3, window_bounds = array<i64: 64, 32>}, {pipeline_mode = #tpu.pipeline_mode<synchronous>, transform_indices = @transform_4, window_bounds = array<i64: 32, 64>}, {transform_indices = @transform_5, window_bounds = array<i64: 1, 64, 64>}]} {
    %c0 = arith.constant 0 : index
    %c0_0 = arith.constant 0 : index
    %c0_1 = arith.constant 0 : index
    %0 = vector.load %arg1[%c0, %c0_0, %c0_1] : memref<1x64x64xf32, #tpu.memory_space<vmem>>, vector<1x64x64xf32>
    %1 = vector.shape_cast %0 : vector<1x64x64xf32> to vector<64x64xf32>
    %c0_2 = arith.constant 0 : index
    %c0_3 = arith.constant 0 : index
    %2 = vector.load %arg4[%c0_2, %c0_3] : memref<64x32xf32, #tpu.memory_space<vmem>>, vector<64x32xf32>
    %c0_4 = arith.constant 0 : index
    %c0_5 = arith.constant 0 : index
    %3 = vector.load %arg5[%c0_4, %c0_5] : memref<32x64xf32, #tpu.memory_space<vmem>>, vector<32x64xf32>
    %cst = arith.constant dense<0.000000e+00> : vector<64xf32>
    %4 = vector.multi_reduction <add>, %1, %cst [0] : vector<64x64xf32> to vector<64xf32>
    %5 = vector.shape_cast %4 : vector<64xf32> to vector<1x64xf32>
    %6 = arith.mulf %1, %1 : vector<64x64xf32>
    %cst_6 = arith.constant dense<0.000000e+00> : vector<64xf32>
    %7 = vector.multi_reduction <add>, %6, %cst_6 [0] : vector<64x64xf32> to vector<64xf32>
    %8 = vector.shape_cast %7 : vector<64xf32> to vector<1x64xf32>
    %cst_7 = arith.constant dense<0.000000e+00> : vector<1x32xf32>
    %9 = tpu.matmul %5, %2, %cst_7 {dimension_numbers = #tpu.dot_dimension_numbers<[1], [0], [0], [1], [0, 0, 1, 1], [], []>} : vector<1x64xf32>, vector<64x32xf32>, vector<1x32xf32> -> vector<1x32xf32>
    %cst_8 = arith.constant 7.812500e-03 : f32
    %10 = vector.broadcast %cst_8 : f32 to vector<1x32xf32>
    %11 = arith.mulf %9, %10 : vector<1x32xf32>
    %cst_9 = arith.constant dense<0.000000e+00> : vector<1x32xf32>
    %12 = tpu.matmul %8, %2, %cst_9 {dimension_numbers = #tpu.dot_dimension_numbers<[1], [0], [0], [1], [0, 0, 1, 1], [], []>} : vector<1x64xf32>, vector<64x32xf32>, vector<1x32xf32> -> vector<1x32xf32>
    %cst_10 = arith.constant 7.812500e-03 : f32
    %13 = vector.broadcast %cst_10 : f32 to vector<1x32xf32>
    %14 = arith.mulf %12, %13 : vector<1x32xf32>
    %15 = arith.mulf %11, %11 : vector<1x32xf32>
    %16 = arith.subf %14, %15 : vector<1x32xf32>
    %cst_11 = arith.constant 9.99999974E-6 : f32
    %17 = vector.broadcast %cst_11 : f32 to vector<1x32xf32>
    %18 = arith.addf %16, %17 : vector<1x32xf32>
    %19 = math.rsqrt %18 : vector<1x32xf32>
    %cst_12 = arith.constant dense<0.000000e+00> : vector<1x64xf32>
    %20 = tpu.matmul %11, %3, %cst_12 {dimension_numbers = #tpu.dot_dimension_numbers<[1], [0], [0], [1], [0, 0, 1, 1], [], []>} : vector<1x32xf32>, vector<32x64xf32>, vector<1x64xf32> -> vector<1x64xf32>
    %cst_13 = arith.constant dense<0.000000e+00> : vector<1x64xf32>
    %21 = tpu.matmul %19, %3, %cst_13 {dimension_numbers = #tpu.dot_dimension_numbers<[1], [0], [0], [1], [0, 0, 1, 1], [], []>} : vector<1x32xf32>, vector<32x64xf32>, vector<1x64xf32> -> vector<1x64xf32>
    %22 = vector.broadcast %20 : vector<1x64xf32> to vector<64x64xf32>
    %23 = arith.subf %1, %22 : vector<64x64xf32>
    %24 = vector.broadcast %21 : vector<1x64xf32> to vector<64x64xf32>
    %25 = arith.mulf %23, %24 : vector<64x64xf32>
    %c0_14 = arith.constant 0 : index
    %c0_15 = arith.constant 0 : index
    %26 = vector.load %arg2[%c0_14, %c0_15] : memref<1x64xf32, #tpu.memory_space<vmem>>, vector<1x64xf32>
    %27 = vector.broadcast %26 : vector<1x64xf32> to vector<64x64xf32>
    %28 = arith.mulf %25, %27 : vector<64x64xf32>
    %c0_16 = arith.constant 0 : index
    %c0_17 = arith.constant 0 : index
    %29 = vector.load %arg3[%c0_16, %c0_17] : memref<1x64xf32, #tpu.memory_space<vmem>>, vector<1x64xf32>
    %30 = vector.broadcast %29 : vector<1x64xf32> to vector<64x64xf32>
    %31 = arith.addf %28, %30 : vector<64x64xf32>
    %32 = arith.negf %31 : vector<64x64xf32>
    %33 = math.exp %32 : vector<64x64xf32>
    %cst_18 = arith.constant 1.000000e+00 : f32
    %34 = vector.broadcast %cst_18 : f32 to vector<64x64xf32>
    %35 = arith.addf %34, %33 : vector<64x64xf32>
    %36 = arith.divf %34, %35 : vector<64x64xf32>
    %37 = arith.mulf %31, %36 : vector<64x64xf32>
    %c0_19 = arith.constant 0 : index
    %c0_20 = arith.constant 0 : index
    %c0_21 = arith.constant 0 : index
    %38 = vector.load %arg6[%c0_19, %c0_20, %c0_21] : memref<1x64x64xf32, #tpu.memory_space<vmem>>, vector<1x64x64xf32>
    %39 = vector.shape_cast %38 : vector<1x64x64xf32> to vector<64x64xf32>
    %40 = vector.shape_cast %37 : vector<64x64xf32> to vector<1x64x64xf32>
    tpu.vector_store %arg6[%c0_19, %c0_20, %c0_21], %40 {strides = array<i32>} : memref<1x64x64xf32, #tpu.memory_space<vmem>>, vector<1x64x64xf32>,
    return
  }
  func.func @transform_0(%arg0: i32) -> (i32, i32, i32) {
    %c0_i32 = arith.constant 0 : i32
    %c0_i32_0 = arith.constant 0 : i32
    %c0_i32_1 = arith.constant 0 : i32
    return %arg0, %c0_i32, %c0_i32_0 : i32, i32, i32
  }
  func.func @transform_1(%arg0: i32) -> (i32, i32) {
    %c0_i32 = arith.constant 0 : i32
    %c0_i32_0 = arith.constant 0 : i32
    %c0_i32_1 = arith.constant 0 : i32
    return %c0_i32, %c0_i32_0 : i32, i32
  }
  func.func @transform_2(%arg0: i32) -> (i32, i32) {
    %c0_i32 = arith.constant 0 : i32
    %c0_i32_0 = arith.constant 0 : i32
    %c0_i32_1 = arith.constant 0 : i32
    return %c0_i32, %c0_i32_0 : i32, i32
  }
  func.func @transform_3(%arg0: i32) -> (i32, i32) {
    %c0_i32 = arith.constant 0 : i32
    %c0_i32_0 = arith.constant 0 : i32
    %c0_i32_1 = arith.constant 0 : i32
    return %c0_i32, %c0_i32_0 : i32, i32
  }
  func.func @transform_4(%arg0: i32) -> (i32, i32) {
    %c0_i32 = arith.constant 0 : i32
    %c0_i32_0 = arith.constant 0 : i32
    %c0_i32_1 = arith.constant 0 : i32
    return %c0_i32, %c0_i32_0 : i32, i32
  }
  func.func @transform_5(%arg0: i32) -> (i32, i32, i32) {
    %c0_i32 = arith.constant 0 : i32
    %c0_i32_0 = arith.constant 0 : i32
    %c0_i32_1 = arith.constant 0 : i32
    return %arg0, %c0_i32, %c0_i32_0 : i32, i32, i32
  }
}

module attributes {stable_mosaic.version = 11 : i64} {
  func.func @_mm_bias_kernel(%arg0: i32, %arg1: i32, %arg2: i32, %arg3: memref<128x128xbf16, #tpu.memory_space<vmem>>, %arg4: memref<128x256xbf16, #tpu.memory_space<vmem>>, %arg5: memref<1x256xf32, #tpu.memory_space<vmem>>, %arg6: memref<128x256xf32, #tpu.memory_space<vmem>>, %arg7: memref<128x256xf32, #tpu.memory_space<vmem>>) attributes {dimension_semantics = [#tpu.dimension_semantics<parallel>, #tpu.dimension_semantics<parallel>, #tpu.dimension_semantics<arbitrary>], iteration_bounds = array<i64: 1, 1, 1>, scalar_prefetch = 0 : i64, scratch_operands = 1 : i64, tpu.core_type = #tpu.core_type<tc>, window_params = [{transform_indices = @transform_0, window_bounds = array<i64: 128, 128>}, {transform_indices = @transform_1, window_bounds = array<i64: 128, 256>}, {transform_indices = @transform_2, window_bounds = array<i64: 1, 256>}, {transform_indices = @transform_3, window_bounds = array<i64: 128, 256>}]} {
    %c0_i32 = arith.constant 0 : i32
    %0 = arith.cmpi eq, %arg2, %c0_i32 : i32
    %1 = arith.extui %0 : i1 to i32
    %c0_i32_0 = arith.constant 0 : i32
    %2 = arith.cmpi ne, %1, %c0_i32_0 : i32
    scf.if %2 {
      %cst_10 = arith.constant 0.000000e+00 : f32
      %12 = vector.broadcast %cst_10 : f32 to vector<128x256xf32>
      %c0_11 = arith.constant 0 : index
      %c0_12 = arith.constant 0 : index
      %13 = vector.load %arg7[%c0_11, %c0_12] : memref<128x256xf32, #tpu.memory_space<vmem>>, vector<128x256xf32>
      tpu.vector_store %arg7[%c0_11, %c0_12], %12 {strides = array<i32>} : memref<128x256xf32, #tpu.memory_space<vmem>>, vector<128x256xf32>,
    } else {
    }
    %c0 = arith.constant 0 : index
    %c0_1 = arith.constant 0 : index
    %3 = vector.load %arg7[%c0, %c0_1] : memref<128x256xf32, #tpu.memory_space<vmem>>, vector<128x256xf32>
    %c0_2 = arith.constant 0 : index
    %c0_3 = arith.constant 0 : index
    %4 = vector.load %arg3[%c0_2, %c0_3] : memref<128x128xbf16, #tpu.memory_space<vmem>>, vector<128x128xbf16>
    %c0_4 = arith.constant 0 : index
    %c0_5 = arith.constant 0 : index
    %5 = vector.load %arg4[%c0_4, %c0_5] : memref<128x256xbf16, #tpu.memory_space<vmem>>, vector<128x256xbf16>
    %cst = arith.constant dense<0.000000e+00> : vector<128x256xf32>
    %6 = tpu.matmul %4, %5, %cst {dimension_numbers = #tpu.dot_dimension_numbers<[1], [0], [0], [1], [0, 0, 1, 1], [], []>} : vector<128x128xbf16>, vector<128x256xbf16>, vector<128x256xf32> -> vector<128x256xf32>
    %7 = arith.addf %3, %6 : vector<128x256xf32>
    %c0_6 = arith.constant 0 : index
    %c0_7 = arith.constant 0 : index
    %8 = vector.load %arg7[%c0_6, %c0_7] : memref<128x256xf32, #tpu.memory_space<vmem>>, vector<128x256xf32>
    tpu.vector_store %arg7[%c0_6, %c0_7], %7 {strides = array<i32>} : memref<128x256xf32, #tpu.memory_space<vmem>>, vector<128x256xf32>,
    %c0_i32_8 = arith.constant 0 : i32
    %9 = arith.cmpi eq, %arg2, %c0_i32_8 : i32
    %10 = arith.extui %9 : i1 to i32
    %c0_i32_9 = arith.constant 0 : i32
    %11 = arith.cmpi ne, %10, %c0_i32_9 : i32
    scf.if %11 {
      %c0_10 = arith.constant 0 : index
      %c0_11 = arith.constant 0 : index
      %12 = vector.load %arg7[%c0_10, %c0_11] : memref<128x256xf32, #tpu.memory_space<vmem>>, vector<128x256xf32>
      %c0_12 = arith.constant 0 : index
      %c0_13 = arith.constant 0 : index
      %13 = vector.load %arg5[%c0_12, %c0_13] : memref<1x256xf32, #tpu.memory_space<vmem>>, vector<1x256xf32>
      %14 = vector.broadcast %13 : vector<1x256xf32> to vector<128x256xf32>
      %15 = arith.addf %12, %14 : vector<128x256xf32>
      %c0_14 = arith.constant 0 : index
      %c0_15 = arith.constant 0 : index
      %16 = vector.load %arg6[%c0_14, %c0_15] : memref<128x256xf32, #tpu.memory_space<vmem>>, vector<128x256xf32>
      tpu.vector_store %arg6[%c0_14, %c0_15], %15 {strides = array<i32>} : memref<128x256xf32, #tpu.memory_space<vmem>>, vector<128x256xf32>,
    } else {
    }
    return
  }
  func.func @transform_0(%arg0: i32, %arg1: i32, %arg2: i32) -> (i32, i32) {
    %c0_i32 = arith.constant 0 : i32
    return %arg0, %arg2 : i32, i32
  }
  func.func @transform_1(%arg0: i32, %arg1: i32, %arg2: i32) -> (i32, i32) {
    %c0_i32 = arith.constant 0 : i32
    return %arg2, %arg1 : i32, i32
  }
  func.func @transform_2(%arg0: i32, %arg1: i32, %arg2: i32) -> (i32, i32) {
    %c0_i32 = arith.constant 0 : i32
    %c0_i32_0 = arith.constant 0 : i32
    return %c0_i32, %arg1 : i32, i32
  }
  func.func @transform_3(%arg0: i32, %arg1: i32, %arg2: i32) -> (i32, i32) {
    %c0_i32 = arith.constant 0 : i32
    return %arg0, %arg1 : i32, i32
  }
}

module attributes {stable_mosaic.version = 11 : i64} {
  func.func @_attn_kernel(%arg0: i32, %arg1: memref<1x64x16xf32, #tpu.memory_space<vmem>>, %arg2: memref<1x64x16xf32, #tpu.memory_space<vmem>>, %arg3: memref<1x64x16xf32, #tpu.memory_space<vmem>>, %arg4: memref<1x64x16xf32, #tpu.memory_space<vmem>>) attributes {dimension_semantics = [#tpu.dimension_semantics<parallel>], iteration_bounds = array<i64: 8>, scalar_prefetch = 0 : i64, scratch_operands = 0 : i64, tpu.core_type = #tpu.core_type<tc>, window_params = [{transform_indices = @transform_0, window_bounds = array<i64: 1, 64, 16>}, {transform_indices = @transform_1, window_bounds = array<i64: 1, 64, 16>}, {transform_indices = @transform_2, window_bounds = array<i64: 1, 64, 16>}, {transform_indices = @transform_3, window_bounds = array<i64: 1, 64, 16>}]} {
    %c0 = arith.constant 0 : index
    %c0_0 = arith.constant 0 : index
    %c0_1 = arith.constant 0 : index
    %0 = vector.load %arg1[%c0, %c0_0, %c0_1] : memref<1x64x16xf32, #tpu.memory_space<vmem>>, vector<1x64x16xf32>
    %1 = vector.shape_cast %0 : vector<1x64x16xf32> to vector<64x16xf32>
    %c0_2 = arith.constant 0 : index
    %c0_3 = arith.constant 0 : index
    %c0_4 = arith.constant 0 : index
    %2 = vector.load %arg2[%c0_2, %c0_3, %c0_4] : memref<1x64x16xf32, #tpu.memory_space<vmem>>, vector<1x64x16xf32>
    %3 = vector.shape_cast %2 : vector<1x64x16xf32> to vector<64x16xf32>
    %c0_5 = arith.constant 0 : index
    %c0_6 = arith.constant 0 : index
    %c0_7 = arith.constant 0 : index
    %4 = vector.load %arg3[%c0_5, %c0_6, %c0_7] : memref<1x64x16xf32, #tpu.memory_space<vmem>>, vector<1x64x16xf32>
    %5 = vector.shape_cast %4 : vector<1x64x16xf32> to vector<64x16xf32>
    %cst = arith.constant dense<0.000000e+00> : vector<64x64xf32>
    %6 = tpu.matmul %1, %3, %cst {dimension_numbers = #tpu.dot_dimension_numbers<[1], [1], [0], [0], [0, 0, 1, 0], [], []>} : vector<64x16xf32>, vector<64x16xf32>, vector<64x64xf32> -> vector<64x64xf32>
    %cst_8 = arith.constant 2.500000e-01 : f32
    %7 = vector.broadcast %cst_8 : f32 to vector<64x64xf32>
    %8 = arith.mulf %6, %7 : vector<64x64xf32>
    %cst_9 = arith.constant dense<0xFF800000> : vector<64xf32>
    %9 = vector.multi_reduction <maximumf>, %8, %cst_9 [1] : vector<64x64xf32> to vector<64xf32>
    %10 = vector.shape_cast %9 : vector<64xf32> to vector<64x1xf32>
    %11 = vector.broadcast %10 : vector<64x1xf32> to vector<64x64xf32>
    %12 = arith.subf %8, %11 : vector<64x64xf32>
    %13 = math.exp %12 : vector<64x64xf32>
    %cst_10 = arith.constant dense<0.000000e+00> : vector<64xf32>
    %14 = vector.multi_reduction <add>, %13, %cst_10 [1] : vector<64x64xf32> to vector<64xf32>
    %15 = vector.shape_cast %14 : vector<64xf32> to vector<64x1xf32>
    %16 = vector.broadcast %15 : vector<64x1xf32> to vector<64x64xf32>
    %17 = arith.divf %13, %16 : vector<64x64xf32>
    %cst_11 = arith.constant dense<0.000000e+00> : vector<64x16xf32>
    %18 = tpu.matmul %17, %5, %cst_11 {dimension_numbers = #tpu.dot_dimension_numbers<[1], [0], [0], [1], [0, 0, 1, 1], [], []>} : vector<64x64xf32>, vector<64x16xf32>, vector<64x16xf32> -> vector<64x16xf32>
    %c0_12 = arith.constant 0 : index
    %c0_13 = arith.constant 0 : index
    %c0_14 = arith.constant 0 : index
    %19 = vector.load %arg4[%c0_12, %c0_13, %c0_14] : memref<1x64x16xf32, #tpu.memory_space<vmem>>, vector<1x64x16xf32>
    %20 = vector.shape_cast %19 : vector<1x64x16xf32> to vector<64x16xf32>
    %21 = vector.shape_cast %18 : vector<64x16xf32> to vector<1x64x16xf32>
    tpu.vector_store %arg4[%c0_12, %c0_13, %c0_14], %21 {strides = array<i32>} : memref<1x64x16xf32, #tpu.memory_space<vmem>>, vector<1x64x16xf32>,
    return
  }
  func.func @transform_0(%arg0: i32) -> (i32, i32, i32) {
    %c0_i32 = arith.constant 0 : i32
    %c0_i32_0 = arith.constant 0 : i32
    %c0_i32_1 = arith.constant 0 : i32
    return %arg0, %c0_i32, %c0_i32_0 : i32, i32, i32
  }
  func.func @transform_1(%arg0: i32) -> (i32, i32, i32) {
    %c0_i32 = arith.constant 0 : i32
    %c0_i32_0 = arith.constant 0 : i32
    %c0_i32_1 = arith.constant 0 : i32
    return %arg0, %c0_i32, %c0_i32_0 : i32, i32, i32
  }
  func.func @transform_2(%arg0: i32) -> (i32, i32, i32) {
    %c0_i32 = arith.constant 0 : i32
    %c0_i32_0 = arith.constant 0 : i32
    %c0_i32_1 = arith.constant 0 : i32
    return %arg0, %c0_i32, %c0_i32_0 : i32, i32, i32
  }
  func.func @transform_3(%arg0: i32) -> (i32, i32, i32) {
    %c0_i32 = arith.constant 0 : i32
    %c0_i32_0 = arith.constant 0 : i32
    %c0_i32_1 = arith.constant 0 : i32
    return %arg0, %c0_i32, %c0_i32_0 : i32, i32, i32
  }
}

module attributes {stable_mosaic.version = 11 : i64} {
  func.func @_ln_kernel(%arg0: i32, %arg1: memref<128x64xf32, #tpu.memory_space<vmem>>, %arg2: memref<1x64xf32, #tpu.memory_space<vmem>>, %arg3: memref<1x64xf32, #tpu.memory_space<vmem>>, %arg4: memref<128x64xf32, #tpu.memory_space<vmem>>) attributes {dimension_semantics = [#tpu.dimension_semantics<parallel>], iteration_bounds = array<i64: 1>, scalar_prefetch = 0 : i64, scratch_operands = 0 : i64, tpu.core_type = #tpu.core_type<tc>, window_params = [{transform_indices = @transform_0, window_bounds = array<i64: 128, 64>}, {pipeline_mode = #tpu.pipeline_mode<synchronous>, transform_indices = @transform_1, window_bounds = array<i64: 1, 64>}, {pipeline_mode = #tpu.pipeline_mode<synchronous>, transform_indices = @transform_2, window_bounds = array<i64: 1, 64>}, {transform_indices = @transform_3, window_bounds = array<i64: 128, 64>}]} {
    %c0 = arith.constant 0 : index
    %c0_0 = arith.constant 0 : index
    %0 = vector.load %arg1[%c0, %c0_0] : memref<128x64xf32, #tpu.memory_space<vmem>>, vector<128x64xf32>
    %cst = arith.constant dense<0.000000e+00> : vector<128xf32>
    %1 = vector.multi_reduction <add>, %0, %cst [1] : vector<128x64xf32> to vector<128xf32>
    %2 = vector.shape_cast %1 : vector<128xf32> to vector<128x1xf32>
    %cst_1 = arith.constant 6.400000e+01 : f32
    %3 = vector.broadcast %cst_1 : f32 to vector<128x1xf32>
    %4 = arith.divf %2, %3 : vector<128x1xf32>
    %5 = vector.broadcast %4 : vector<128x1xf32> to vector<128x64xf32>
    %6 = arith.subf %0, %5 : vector<128x64xf32>
    %7 = arith.mulf %6, %6 : vector<128x64xf32>
    %cst_2 = arith.constant dense<0.000000e+00> : vector<128xf32>
    %8 = vector.multi_reduction <add>, %7, %cst_2 [1] : vector<128x64xf32> to vector<128xf32>
    %9 = vector.shape_cast %8 : vector<128xf32> to vector<128x1xf32>
    %cst_3 = arith.constant 6.400000e+01 : f32
    %10 = vector.broadcast %cst_3 : f32 to vector<128x1xf32>
    %11 = arith.divf %9, %10 : vector<128x1xf32>
    %cst_4 = arith.constant 9.99999974E-6 : f32
    %12 = vector.broadcast %cst_4 : f32 to vector<128x1xf32>
    %13 = arith.addf %11, %12 : vector<128x1xf32>
    %14 = math.rsqrt %13 : vector<128x1xf32>
    %15 = vector.broadcast %14 : vector<128x1xf32> to vector<128x64xf32>
    %16 = arith.mulf %6, %15 : vector<128x64xf32>
    %c0_5 = arith.constant 0 : index
    %c0_6 = arith.constant 0 : index
    %17 = vector.load %arg2[%c0_5, %c0_6] : memref<1x64xf32, #tpu.memory_space<vmem>>, vector<1x64xf32>
    %18 = vector.broadcast %17 : vector<1x64xf32> to vector<128x64xf32>
    %19 = arith.mulf %16, %18 : vector<128x64xf32>
    %c0_7 = arith.constant 0 : index
    %c0_8 = arith.constant 0 : index
    %20 = vector.load %arg3[%c0_7, %c0_8] : memref<1x64xf32, #tpu.memory_space<vmem>>, vector<1x64xf32>
    %21 = vector.broadcast %20 : vector<1x64xf32> to vector<128x64xf32>
    %22 = arith.addf %19, %21 : vector<128x64xf32>
    %c0_9 = arith.constant 0 : index
    %c0_10 = arith.constant 0 : index
    %23 = vector.load %arg4[%c0_9, %c0_10] : memref<128x64xf32, #tpu.memory_space<vmem>>, vector<128x64xf32>
    tpu.vector_store %arg4[%c0_9, %c0_10], %22 {strides = array<i32>} : memref<128x64xf32, #tpu.memory_space<vmem>>, vector<128x64xf32>,
    return
  }
  func.func @transform_0(%arg0: i32) -> (i32, i32) {
    %c0_i32 = arith.constant 0 : i32
    %c0_i32_0 = arith.constant 0 : i32
    return %arg0, %c0_i32 : i32, i32
  }
  func.func @transform_1(%arg0: i32) -> (i32, i32) {
    %c0_i32 = arith.constant 0 : i32
    %c0_i32_0 = arith.constant 0 : i32
    %c0_i32_1 = arith.constant 0 : i32
    return %c0_i32, %c0_i32_0 : i32, i32
  }
  func.func @transform_2(%arg0: i32) -> (i32, i32) {
    %c0_i32 = arith.constant 0 : i32
    %c0_i32_0 = arith.constant 0 : i32
    %c0_i32_1 = arith.constant 0 : i32
    return %c0_i32, %c0_i32_0 : i32, i32
  }
  func.func @transform_3(%arg0: i32) -> (i32, i32) {
    %c0_i32 = arith.constant 0 : i32
    %c0_i32_0 = arith.constant 0 : i32
    return %arg0, %c0_i32 : i32, i32
  }
}

module attributes {stable_mosaic.version = 11 : i64} {
  func.func @_mm_bias_kernel(%arg0: i32, %arg1: i32, %arg2: i32, %arg3: memref<512x512xbf16, #tpu.memory_space<vmem>>, %arg4: memref<512x128xbf16, #tpu.memory_space<vmem>>, %arg5: memref<1x128xf32, #tpu.memory_space<vmem>>, %arg6: memref<512x128xf32, #tpu.memory_space<vmem>>, %arg7: memref<512x128xf32, #tpu.memory_space<vmem>>) attributes {dimension_semantics = [#tpu.dimension_semantics<parallel>, #tpu.dimension_semantics<parallel>, #tpu.dimension_semantics<arbitrary>], iteration_bounds = array<i64: 1, 1, 2>, scalar_prefetch = 0 : i64, scratch_operands = 1 : i64, tpu.core_type = #tpu.core_type<tc>, window_params = [{transform_indices = @transform_0, window_bounds = array<i64: 512, 512>}, {transform_indices = @transform_1, window_bounds = array<i64: 512, 128>}, {transform_indices = @transform_2, window_bounds = array<i64: 1, 128>}, {transform_indices = @transform_3, window_bounds = array<i64: 512, 128>}]} {
    %c0_i32 = arith.constant 0 : i32
    %0 = arith.cmpi eq, %arg2, %c0_i32 : i32
    %1 = arith.extui %0 : i1 to i32
    %c0_i32_0 = arith.constant 0 : i32
    %2 = arith.cmpi ne, %1, %c0_i32_0 : i32
    scf.if %2 {
      %cst_9 = arith.constant 0.000000e+00 : f32
      %12 = vector.broadcast %cst_9 : f32 to vector<512x128xf32>
      %c0_10 = arith.constant 0 : index
      %c0_11 = arith.constant 0 : index
      %13 = vector.load %arg7[%c0_10, %c0_11] : memref<512x128xf32, #tpu.memory_space<vmem>>, vector<512x128xf32>
      tpu.vector_store %arg7[%c0_10, %c0_11], %12 {strides = array<i32>} : memref<512x128xf32, #tpu.memory_space<vmem>>, vector<512x128xf32>,
    } else {
    }
    %c0 = arith.constant 0 : index
    %c0_1 = arith.constant 0 : index
    %3 = vector.load %arg7[%c0, %c0_1] : memref<512x128xf32, #tpu.memory_space<vmem>>, vector<512x128xf32>
    %c0_2 = arith.constant 0 : index
    %c0_3 = arith.constant 0 : index
    %4 = vector.load %arg3[%c0_2, %c0_3] : memref<512x512xbf16, #tpu.memory_space<vmem>>, vector<512x512xbf16>
    %c0_4 = arith.constant 0 : index
    %c0_5 = arith.constant 0 : index
    %5 = vector.load %arg4[%c0_4, %c0_5] : memref<512x128xbf16, #tpu.memory_space<vmem>>, vector<512x128xbf16>
    %cst = arith.constant dense<0.000000e+00> : vector<512x128xf32>
    %6 = tpu.matmul %4, %5, %cst {dimension_numbers = #tpu.dot_dimension_numbers<[1], [0], [0], [1], [0, 0, 1, 1], [], []>} : vector<512x512xbf16>, vector<512x128xbf16>, vector<512x128xf32> -> vector<512x128xf32>
    %7 = arith.addf %3, %6 : vector<512x128xf32>
    %c0_6 = arith.constant 0 : index
    %c0_7 = arith.constant 0 : index
    %8 = vector.load %arg7[%c0_6, %c0_7] : memref<512x128xf32, #tpu.memory_space<vmem>>, vector<512x128xf32>
    tpu.vector_store %arg7[%c0_6, %c0_7], %7 {strides = array<i32>} : memref<512x128xf32, #tpu.memory_space<vmem>>, vector<512x128xf32>,
    %c1_i32 = arith.constant 1 : i32
    %9 = arith.cmpi eq, %arg2, %c1_i32 : i32
    %10 = arith.extui %9 : i1 to i32
    %c0_i32_8 = arith.constant 0 : i32
    %11 = arith.cmpi ne, %10, %c0_i32_8 : i32
    scf.if %11 {
      %c0_9 = arith.constant 0 : index
      %c0_10 = arith.constant 0 : index
      %12 = vector.load %arg7[%c0_9, %c0_10] : memref<512x128xf32, #tpu.memory_space<vmem>>, vector<512x128xf32>
      %c0_11 = arith.constant 0 : index
      %c0_12 = arith.constant 0 : index
      %13 = vector.load %arg5[%c0_11, %c0_12] : memref<1x128xf32, #tpu.memory_space<vmem>>, vector<1x128xf32>
      %14 = vector.broadcast %13 : vector<1x128xf32> to vector<512x128xf32>
      %15 = arith.addf %12, %14 : vector<512x128xf32>
      %c0_13 = arith.constant 0 : index
      %c0_14 = arith.constant 0 : index
      %16 = vector.load %arg6[%c0_13, %c0_14] : memref<512x128xf32, #tpu.memory_space<vmem>>, vector<512x128xf32>
      tpu.vector_store %arg6[%c0_13, %c0_14], %15 {strides = array<i32>} : memref<512x128xf32, #tpu.memory_space<vmem>>, vector<512x128xf32>,
    } else {
    }
    return
  }
  func.func @transform_0(%arg0: i32, %arg1: i32, %arg2: i32) -> (i32, i32) {
    %c0_i32 = arith.constant 0 : i32
    return %arg0, %arg2 : i32, i32
  }
  func.func @transform_1(%arg0: i32, %arg1: i32, %arg2: i32) -> (i32, i32) {
    %c0_i32 = arith.constant 0 : i32
    return %arg2, %arg1 : i32, i32
  }
  func.func @transform_2(%arg0: i32, %arg1: i32, %arg2: i32) -> (i32, i32) {
    %c0_i32 = arith.constant 0 : i32
    %c0_i32_0 = arith.constant 0 : i32
    return %c0_i32, %arg1 : i32, i32
  }
  func.func @transform_3(%arg0: i32, %arg1: i32, %arg2: i32) -> (i32, i32) {
    %c0_i32 = arith.constant 0 : i32
    return %arg0, %arg1 : i32, i32
  }
}

module attributes {stable_mosaic.version = 11 : i64} {
  func.func @_mm_bias_kernel(%arg0: i32, %arg1: i32, %arg2: i32, %arg3: memref<512x128xbf16, #tpu.memory_space<vmem>>, %arg4: memref<128x128xbf16, #tpu.memory_space<vmem>>, %arg5: memref<1x128xf32, #tpu.memory_space<vmem>>, %arg6: memref<512x128xf32, #tpu.memory_space<vmem>>, %arg7: memref<512x128xf32, #tpu.memory_space<vmem>>) attributes {dimension_semantics = [#tpu.dimension_semantics<parallel>, #tpu.dimension_semantics<parallel>, #tpu.dimension_semantics<arbitrary>], iteration_bounds = array<i64: 1, 1, 5>, scalar_prefetch = 0 : i64, scratch_operands = 1 : i64, tpu.core_type = #tpu.core_type<tc>, window_params = [{transform_indices = @transform_0, window_bounds = array<i64: 512, 128>}, {transform_indices = @transform_1, window_bounds = array<i64: 128, 128>}, {transform_indices = @transform_2, window_bounds = array<i64: 1, 128>}, {transform_indices = @transform_3, window_bounds = array<i64: 512, 128>}]} {
    %c0_i32 = arith.constant 0 : i32
    %0 = arith.cmpi eq, %arg2, %c0_i32 : i32
    %1 = arith.extui %0 : i1 to i32
    %c0_i32_0 = arith.constant 0 : i32
    %2 = arith.cmpi ne, %1, %c0_i32_0 : i32
    scf.if %2 {
      %cst_9 = arith.constant 0.000000e+00 : f32
      %12 = vector.broadcast %cst_9 : f32 to vector<512x128xf32>
      %c0_10 = arith.constant 0 : index
      %c0_11 = arith.constant 0 : index
      %13 = vector.load %arg7[%c0_10, %c0_11] : memref<512x128xf32, #tpu.memory_space<vmem>>, vector<512x128xf32>
      tpu.vector_store %arg7[%c0_10, %c0_11], %12 {strides = array<i32>} : memref<512x128xf32, #tpu.memory_space<vmem>>, vector<512x128xf32>,
    } else {
    }
    %c0 = arith.constant 0 : index
    %c0_1 = arith.constant 0 : index
    %3 = vector.load %arg7[%c0, %c0_1] : memref<512x128xf32, #tpu.memory_space<vmem>>, vector<512x128xf32>
    %c0_2 = arith.constant 0 : index
    %c0_3 = arith.constant 0 : index
    %4 = vector.load %arg3[%c0_2, %c0_3] : memref<512x128xbf16, #tpu.memory_space<vmem>>, vector<512x128xbf16>
    %c0_4 = arith.constant 0 : index
    %c0_5 = arith.constant 0 : index
    %5 = vector.load %arg4[%c0_4, %c0_5] : memref<128x128xbf16, #tpu.memory_space<vmem>>, vector<128x128xbf16>
    %cst = arith.constant dense<0.000000e+00> : vector<512x128xf32>
    %6 = tpu.matmul %4, %5, %cst {dimension_numbers = #tpu.dot_dimension_numbers<[1], [0], [0], [1], [0, 0, 1, 1], [], []>} : vector<512x128xbf16>, vector<128x128xbf16>, vector<512x128xf32> -> vector<512x128xf32>
    %7 = arith.addf %3, %6 : vector<512x128xf32>
    %c0_6 = arith.constant 0 : index
    %c0_7 = arith.constant 0 : index
    %8 = vector.load %arg7[%c0_6, %c0_7] : memref<512x128xf32, #tpu.memory_space<vmem>>, vector<512x128xf32>
    tpu.vector_store %arg7[%c0_6, %c0_7], %7 {strides = array<i32>} : memref<512x128xf32, #tpu.memory_space<vmem>>, vector<512x128xf32>,
    %c4_i32 = arith.constant 4 : i32
    %9 = arith.cmpi eq, %arg2, %c4_i32 : i32
    %10 = arith.extui %9 : i1 to i32
    %c0_i32_8 = arith.constant 0 : i32
    %11 = arith.cmpi ne, %10, %c0_i32_8 : i32
    scf.if %11 {
      %c0_9 = arith.constant 0 : index
      %c0_10 = arith.constant 0 : index
      %12 = vector.load %arg7[%c0_9, %c0_10] : memref<512x128xf32, #tpu.memory_space<vmem>>, vector<512x128xf32>
      %c0_11 = arith.constant 0 : index
      %c0_12 = arith.constant 0 : index
      %13 = vector.load %arg5[%c0_11, %c0_12] : memref<1x128xf32, #tpu.memory_space<vmem>>, vector<1x128xf32>
      %14 = vector.broadcast %13 : vector<1x128xf32> to vector<512x128xf32>
      %15 = arith.addf %12, %14 : vector<512x128xf32>
      %c0_13 = arith.constant 0 : index
      %c0_14 = arith.constant 0 : index
      %16 = vector.load %arg6[%c0_13, %c0_14] : memref<512x128xf32, #tpu.memory_space<vmem>>, vector<512x128xf32>
      tpu.vector_store %arg6[%c0_13, %c0_14], %15 {strides = array<i32>} : memref<512x128xf32, #tpu.memory_space<vmem>>, vector<512x128xf32>,
    } else {
    }
    return
  }
  func.func @transform_0(%arg0: i32, %arg1: i32, %arg2: i32) -> (i32, i32) {
    %c0_i32 = arith.constant 0 : i32
    return %arg0, %arg2 : i32, i32
  }
  func.func @transform_1(%arg0: i32, %arg1: i32, %arg2: i32) -> (i32, i32) {
    %c0_i32 = arith.constant 0 : i32
    return %arg2, %arg1 : i32, i32
  }
  func.func @transform_2(%arg0: i32, %arg1: i32, %arg2: i32) -> (i32, i32) {
    %c0_i32 = arith.constant 0 : i32
    %c0_i32_0 = arith.constant 0 : i32
    return %c0_i32, %arg1 : i32, i32
  }
  func.func @transform_3(%arg0: i32, %arg1: i32, %arg2: i32) -> (i32, i32) {
    %c0_i32 = arith.constant 0 : i32
    return %arg0, %arg1 : i32, i32
  }
}

</mosaic_0001>

<llo_original>
// kernel: decoder_forward.25
$region0: #{decoder_forward.25}
  #allocation0 [shape = 'u32[]', space=smem, size = 0x4, offset = 0x4, fixed_abs, tag = 'smem constant byte address 0x4 - core index']
  #allocation1 [shape = 'u32[144,128]{1,0:T(1,128)}', space=vmem, size = 0x12000, scoped, tag = 'internal scratch']
  #allocation2 [shape = 'f32[128,128]{1,0:T(8,128)}', space=vmem, size = 0x10000, scoped, tag = 'scratch operand']
  %s0 = inlined_call_operand.vmem [shape: bf16[128,128], index: 0, kind: input, shape index: {}]
  %s1 = inlined_call_operand.vmem [shape: bf16[128,128], index: 1, kind: input, shape index: {}]
  %s2 = inlined_call_operand.vmem [shape: f32[1,128], index: 2, kind: input, shape index: {}]
  %s3 = inlined_call_operand.vmem [shape: f32[128,128], index: 3, kind: output, shape index: {}]
  %s4 = sld [smem:[#allocation0]]
  $region30: #{decoder_forward.25} parent=0
    _
  %s6 = ssub.s32 1, %s4
  %s7 = scalar_select 0, %s6, %s4
  // Predicated region
  $region2: #{decoder_forward.25} parent=0 // pred_check
    _
  $region3: #{decoder_forward.25} parent=0 // pred_check_branch
    %9 = sbr.rel (0) target = $region5
  $region4: #{decoder_forward.25} parent=0 // pred_region
    _
  $region5: #{decoder_forward.25} parent=0 // pred_fallthru
    _
  // Predicated region
  $region6: #{decoder_forward.25} parent=0 // pred_check
    _
  $region7: #{decoder_forward.25} parent=0 // pred_check_branch
    %11 = sbr.rel (0) target = $region9
  $region8: #{decoder_forward.25} parent=0 // pred_region
    _
  $region9: #{decoder_forward.25} parent=0 // pred_fallthru
    _
  // Predicated region
  $region10: #{decoder_forward.25} parent=0 // pred_check
    _
  $region11: #{decoder_forward.25} parent=0 // pred_check_branch
    %13 = sbr.rel (0) target = $region13
  $region12: #{decoder_forward.25} parent=0 // pred_region
    _
  $region13: #{decoder_forward.25} parent=0 // pred_fallthru
    _
  %p15 = scmp.eq.s32.totalorder 0, 0
  // Predicated region
  $region14: #{decoder_forward.25} parent=0 // pred_check
    %p16 = pneg %p15
  $region15: #{decoder_forward.25} parent=0 // pred_check_branch
    %18 = sbr.rel (%p16) target = $region17
  $region16: #{decoder_forward.25} parent=0 // pred_region
    %19 = vst [vmem:[#allocation2] sm:$0xff] 0.0
    %20 = vst [vmem:[#allocation2 + $0x8] sm:$0xff] 0.0
    %21 = vst [vmem:[#allocation2 + $0x10] sm:$0xff] 0.0
    %22 = vst [vmem:[#allocation2 + $0x18] sm:$0xff] 0.0
    %23 = vst [vmem:[#allocation2 + $0x20] sm:$0xff] 0.0
    %24 = vst [vmem:[#allocation2 + $0x28] sm:$0xff] 0.0
    %25 = vst [vmem:[#allocation2 + $0x30] sm:$0xff] 0.0
    %26 = vst [vmem:[#allocation2 + $0x38] sm:$0xff] 0.0
    %27 = vst [vmem:[#allocation2 + $0x40] sm:$0xff] 0.0
    %28 = vst [vmem:[#allocation2 + $0x48] sm:$0xff] 0.0
    %29 = vst [vmem:[#allocation2 + $0x50] sm:$0xff] 0.0
    %30 = vst [vmem:[#allocation2 + $0x58] sm:$0xff] 0.0
    %31 = vst [vmem:[#allocation2 + $0x60] sm:$0xff] 0.0
    %32 = vst [vmem:[#allocation2 + $0x68] sm:$0xff] 0.0
    %33 = vst [vmem:[#allocation2 + $0x70] sm:$0xff] 0.0
    %34 = vst [vmem:[#allocation2 + $0x78] sm:$0xff] 0.0
  $region17: #{decoder_forward.25} parent=0 // pred_fallthru
    _
  %v35 = vld [vmem:[#allocation2] sm:$0xff]
  %v36 = vld [vmem:[#allocation2 + $0x8] sm:$0xff]
  %v37 = vld [vmem:[#allocation2 + $0x10] sm:$0xff]
  %v38 = vld [vmem:[#allocation2 + $0x18] sm:$0xff]
  %v39 = vld [vmem:[#allocation2 + $0x20] sm:$0xff]
  %v40 = vld [vmem:[#allocation2 + $0x28] sm:$0xff]
  %v41 = vld [vmem:[#allocation2 + $0x30] sm:$0xff]
  %v42 = vld [vmem:[#allocation2 + $0x38] sm:$0xff]
  %v43 = vld [vmem:[#allocation2 + $0x40] sm:$0xff]
  %v44 = vld [vmem:[#allocation2 + $0x48] sm:$0xff]
  %v45 = vld [vmem:[#allocation2 + $0x50] sm:$0xff]
  %v46 = vld [vmem:[#allocation2 + $0x58] sm:$0xff]
  %v47 = vld [vmem:[#allocation2 + $0x60] sm:$0xff]
  %v48 = vld [vmem:[#allocation2 + $0x68] sm:$0xff]
  %v49 = vld [vmem:[#allocation2 + $0x70] sm:$0xff]
  %v50 = vld [vmem:[#allocation2 + $0x78] sm:$0xff]
  %v51 = vld [vmem:[%s0] sm:$0xf]
  %v52 = vld [vmem:[%s0 + $0x4] sm:$0xf]
  %v53 = vld [vmem:[%s0 + $0x8] sm:$0xf]
  %v54 = vld [vmem:[%s0 + $0xc] sm:$0xf]
  %v55 = vld [vmem:[%s0 + $0x10] sm:$0xf]
  %v56 = vld [vmem:[%s0 + $0x14] sm:$0xf]
  %v57 = vld [vmem:[%s0 + $0x18] sm:$0xf]
  %v58 = vld [vmem:[%s0 + $0x1c] sm:$0xf]
  %v59 = vld [vmem:[%s0 + $0x20] sm:$0xf]
  %v60 = vld [vmem:[%s0 + $0x24] sm:$0xf]
  %v61 = vld [vmem:[%s0 + $0x28] sm:$0xf]
  %v62 = vld [vmem:[%s0 + $0x2c] sm:$0xf]
  %v63 = vld [vmem:[%s0 + $0x30] sm:$0xf]
  %v64 = vld [vmem:[%s0 + $0x34] sm:$0xf]
  %v65 = vld [vmem:[%s0 + $0x38] sm:$0xf]
  %v66 = vld [vmem:[%s0 + $0x3c] sm:$0xf]
  %v67 = vld [vmem:[%s1] sm:$0xf]
  %v68 = vld [vmem:[%s1 + $0x4] sm:$0xf]
  %v69 = vld [vmem:[%s1 + $0x8] sm:$0xf]
  %v70 = vld [vmem:[%s1 + $0xc] sm:$0xf]
  %v71 = vld [vmem:[%s1 + $0x10] sm:$0xf]
  %v72 = vld [vmem:[%s1 + $0x14] sm:$0xf]
  %v73 = vld [vmem:[%s1 + $0x18] sm:$0xf]
  %v74 = vld [vmem:[%s1 + $0x1c] sm:$0xf]
  %v75 = vld [vmem:[%s1 + $0x20] sm:$0xf]
  %v76 = vld [vmem:[%s1 + $0x24] sm:$0xf]
  %v77 = vld [vmem:[%s1 + $0x28] sm:$0xf]
  %v78 = vld [vmem:[%s1 + $0x2c] sm:$0xf]
  %v79 = vld [vmem:[%s1 + $0x30] sm:$0xf]
  %v80 = vld [vmem:[%s1 + $0x34] sm:$0xf]
  %v81 = vld [vmem:[%s1 + $0x38] sm:$0xf]
  %v82 = vld [vmem:[%s1 + $0x3c] sm:$0xf]
  %v99 = vunpack.c.l.b16 %v51
  %v100 = vunpack.c.l.b16 %v52
  %v101 = vunpack.c.l.b16 %v53
  %v102 = vunpack.c.l.b16 %v54
  %v103 = vunpack.c.l.b16 %v55
  %v104 = vunpack.c.l.b16 %v56
  %v105 = vunpack.c.l.b16 %v57
  %v106 = vunpack.c.l.b16 %v58
  %v107 = vunpack.c.l.b16 %v59
  %v108 = vunpack.c.l.b16 %v60
  %v109 = vunpack.c.l.b16 %v61
  %v110 = vunpack.c.l.b16 %v62
  %v111 = vunpack.c.l.b16 %v63
  %v112 = vunpack.c.l.b16 %v64
  %v113 = vunpack.c.l.b16 %v65
  %v114 = vunpack.c.l.b16 %v66
  %v115 = vpack.c.b16 %v100, %v99
  %v116 = vpack.c.b16 %v102, %v101
  %v117 = vpack.c.b16 %v104, %v103
  %v118 = vpack.c.b16 %v106, %v105
  %v119 = vpack.c.b16 %v108, %v107
  %v120 = vpack.c.b16 %v110, %v109
  %v121 = vpack.c.b16 %v112, %v111
  %v122 = vpack.c.b16 %v114, %v113
  %v147 = vunpack.c.l.b16 %v67
  %v148 = vunpack.c.l.b16 %v68
  %v149 = vunpack.c.l.b16 %v69
  %v150 = vunpack.c.l.b16 %v70
  %v151 = vunpack.c.l.b16 %v71
  %v152 = vunpack.c.l.b16 %v72
  %v153 = vunpack.c.l.b16 %v73
  %v154 = vunpack.c.l.b16 %v74
  %v155 = vunpack.c.l.b16 %v75
  %v156 = vunpack.c.l.b16 %v76
  %v157 = vunpack.c.l.b16 %v77
  %v158 = vunpack.c.l.b16 %v78
  %v159 = vunpack.c.l.b16 %v79
  %v160 = vunpack.c.l.b16 %v80
  %v161 = vunpack.c.l.b16 %v81
  %v162 = vunpack.c.l.b16 %v82
  %v163 = vpack.c.b16 %v148, %v147
  %v164 = vpack.c.b16 %v150, %v149
  %v165 = vpack.c.b16 %v152, %v151
  %v166 = vpack.c.b16 %v154, %v153
  %v167 = vpack.c.b16 %v156, %v155
  %v168 = vpack.c.b16 %v158, %v157
  %v169 = vpack.c.b16 %v160, %v159
  %v170 = vpack.c.b16 %v162, %v161
  %179 = vmatprep.subr.bf16.mxu0 0
  %180 = vmatpush1.bf16.msra.mxu0 %v163
  %181 = vmatprep.subr.bf16.mxu0 0
  %182 = vmatpush1.bf16.msra.mxu0 %v164
  %183 = vmatprep.subr.bf16.mxu0 0
  %184 = vmatpush1.bf16.msra.mxu0 %v165
  %185 = vmatprep.subr.bf16.mxu0 0
  %186 = vmatpush1.bf16.msra.mxu0 %v166
  %187 = vmatprep.subr.bf16.mxu0 0
  %188 = vmatpush1.bf16.msra.mxu0 %v167
  %189 = vmatprep.subr.bf16.mxu0 0
  %190 = vmatpush1.bf16.msra.mxu0 %v168
  %191 = vmatprep.subr.bf16.mxu0 0
  %192 = vmatpush1.bf16.msra.mxu0 %v169
  %193 = vmatprep.subr.bf16.mxu0 0
  %194 = vmatpush1.bf16.msra.mxu0 %v170
  %195 = vmatprep.subr.bf16.mxu0 0
  %196 = vmatpush1.bf16.msra.mxu0 0
  %197 = vmatprep.subr.bf16.mxu0 0
  %198 = vmatpush1.bf16.msra.mxu0 0
  %199 = vmatprep.subr.bf16.mxu0 0
  %200 = vmatpush1.bf16.msra.mxu0 0
  %201 = vmatprep.subr.bf16.mxu0 0
  %202 = vmatpush1.bf16.msra.mxu0 0
  %203 = vmatprep.subr.bf16.mxu0 0
  %204 = vmatpush1.bf16.msra.mxu0 0
  %205 = vmatprep.subr.bf16.mxu0 0
  %206 = vmatpush1.bf16.msra.mxu0 0
  %207 = vmatprep.subr.bf16.mxu0 0
  %208 = vmatpush1.bf16.msra.mxu0 0
  %209 = vmatprep.subr.bf16.mxu0 0
  %210 = vmatpush1.bf16.msra.mxu0 0
  %211 = vmatprep.mubr.bf16.mxu0 0
  %212 = vmatmul.mubr.bf16.gmra.mrb[0].mxu0 %v115
  %v213 = vpop.f32.mrb[0].mxu0
  %v214 = vadd.f32 0.0, %v213
  %v215 = vpop.f32.mrb[0].mxu0
  %v216 = vpop.f32.mrb[0].mxu0
  %v217 = vadd.f32 0.0, %v216
  %v218 = vpop.f32.mrb[0].mxu0
  %219 = vmatprep.mubr.bf16.mxu0 0
  %220 = vmatmul.mubr.bf16.gmra.mrb[0].mxu0 %v116
  %v221 = vpop.f32.mrb[0].mxu0
  %v222 = vadd.f32 0.0, %v221
  %v223 = vpop.f32.mrb[0].mxu0
  %v224 = vpop.f32.mrb[0].mxu0
  %v225 = vadd.f32 0.0, %v224
  %v226 = vpop.f32.mrb[0].mxu0
  %227 = vmatprep.mubr.bf16.mxu0 0
  %228 = vmatmul.mubr.bf16.gmra.mrb[0].mxu0 %v117
  %v229 = vpop.f32.mrb[0].mxu0
  %v230 = vadd.f32 0.0, %v229
  %v231 = vpop.f32.mrb[0].mxu0
  %v232 = vpop.f32.mrb[0].mxu0
  %v233 = vadd.f32 0.0, %v232
  %v234 = vpop.f32.mrb[0].mxu0
  %235 = vmatprep.mubr.bf16.mxu0 0
  %236 = vmatmul.mubr.bf16.gmra.mrb[0].mxu0 %v118
  %v237 = vpop.f32.mrb[0].mxu0
  %v238 = vadd.f32 0.0, %v237
  %v239 = vpop.f32.mrb[0].mxu0
  %v240 = vpop.f32.mrb[0].mxu0
  %v241 = vadd.f32 0.0, %v240
  %v242 = vpop.f32.mrb[0].mxu0
  %243 = vmatprep.mubr.bf16.mxu0 0
  %244 = vmatmul.mubr.bf16.gmra.mrb[0].mxu0 %v119
  %v245 = vpop.f32.mrb[0].mxu0
  %v246 = vadd.f32 0.0, %v245
  %v247 = vpop.f32.mrb[0].mxu0
  %v248 = vpop.f32.mrb[0].mxu0
  %v249 = vadd.f32 0.0, %v248
  %v250 = vpop.f32.mrb[0].mxu0
  %251 = vmatprep.mubr.bf16.mxu0 0
  %252 = vmatmul.mubr.bf16.gmra.mrb[0].mxu0 %v120
  %v253 = vpop.f32.mrb[0].mxu0
  %v254 = vadd.f32 0.0, %v253
  %v255 = vpop.f32.mrb[0].mxu0
  %v256 = vpop.f32.mrb[0].mxu0
  %v257 = vadd.f32 0.0, %v256
  %v258 = vpop.f32.mrb[0].mxu0
  %259 = vmatprep.mubr.bf16.mxu0 0
  %260 = vmatmul.mubr.bf16.gmra.mrb[0].mxu0 %v121
  %v261 = vpop.f32.mrb[0].mxu0
  %v262 = vadd.f32 0.0, %v261
  %v263 = vpop.f32.mrb[0].mxu0
  %v264 = vpop.f32.mrb[0].mxu0
  %v265 = vadd.f32 0.0, %v264
  %v266 = vpop.f32.mrb[0].mxu0
  %267 = vmatprep.mubr.bf16.mxu0 0
  %268 = vmatmul.mubr.bf16.gmra.mrb[0].mxu0 %v122
  %v269 = vpop.f32.mrb[0].mxu0
  %v270 = vadd.f32 0.0, %v269
  %v271 = vpop.f32.mrb[0].mxu0
  %v272 = vpop.f32.mrb[0].mxu0
  %v273 = vadd.f32 0.0, %v272
  %v274 = vpop.f32.mrb[0].mxu0
  %275 = vdwg.mxu0
  %v276 = vadd.f32 %v35, %v214
  %v277 = vadd.f32 %v36, %v217
  %v278 = vadd.f32 %v37, %v222
  %v279 = vadd.f32 %v38, %v225
  %v280 = vadd.f32 %v39, %v230
  %v281 = vadd.f32 %v40, %v233
  %v282 = vadd.f32 %v41, %v238
  %v283 = vadd.f32 %v42, %v241
  %v284 = vadd.f32 %v43, %v246
  %v285 = vadd.f32 %v44, %v249
  %v286 = vadd.f32 %v45, %v254
  %v287 = vadd.f32 %v46, %v257
  %v288 = vadd.f32 %v47, %v262
  %v289 = vadd.f32 %v48, %v265
  %v290 = vadd.f32 %v49, %v270
  %v291 = vadd.f32 %v50, %v273
  %292 = vst [vmem:[#allocation2] sm:$0xff] %v276
  %293 = vst [vmem:[#allocation2 + $0x8] sm:$0xff] %v277
  %294 = vst [vmem:[#allocation2 + $0x10] sm:$0xff] %v278
  %295 = vst [vmem:[#allocation2 + $0x18] sm:$0xff] %v279
  %296 = vst [vmem:[#allocation2 + $0x20] sm:$0xff] %v280
  %297 = vst [vmem:[#allocation2 + $0x28] sm:$0xff] %v281
  %298 = vst [vmem:[#allocation2 + $0x30] sm:$0xff] %v282
  %299 = vst [vmem:[#allocation2 + $0x38] sm:$0xff] %v283
  %300 = vst [vmem:[#allocation2 + $0x40] sm:$0xff] %v284
  %301 = vst [vmem:[#allocation2 + $0x48] sm:$0xff] %v285
  %302 = vst [vmem:[#allocation2 + $0x50] sm:$0xff] %v286
  %303 = vst [vmem:[#allocation2 + $0x58] sm:$0xff] %v287
  %304 = vst [vmem:[#allocation2 + $0x60] sm:$0xff] %v288
  %305 = vst [vmem:[#allocation2 + $0x68] sm:$0xff] %v289
  %306 = vst [vmem:[#allocation2 + $0x70] sm:$0xff] %v290
  %307 = vst [vmem:[#allocation2 + $0x78] sm:$0xff] %v291
  // Predicated region
  $region18: #{decoder_forward.25} parent=0 // pred_check
    %p308 = pneg %p15
  $region19: #{decoder_forward.25} parent=0 // pred_check_branch
    %310 = sbr.rel (%p308) target = $region21
  $region20: #{decoder_forward.25} parent=0 // pred_region
    %v311 = vld [vmem:[#allocation2] sm:$0xff]
    %v312 = vld [vmem:[#allocation2 + $0x8] sm:$0xff]
    %v313 = vld [vmem:[#allocation2 + $0x10] sm:$0xff]
    %v314 = vld [vmem:[#allocation2 + $0x18] sm:$0xff]
    %v315 = vld [vmem:[#allocation2 + $0x20] sm:$0xff]
    %v316 = vld [vmem:[#allocation2 + $0x28] sm:$0xff]
    %v317 = vld [vmem:[#allocation2 + $0x30] sm:$0xff]
    %v318 = vld [vmem:[#allocation2 + $0x38] sm:$0xff]
    %v319 = vld [vmem:[#allocation2 + $0x40] sm:$0xff]
    %v320 = vld [vmem:[#allocation2 + $0x48] sm:$0xff]
    %v321 = vld [vmem:[#allocation2 + $0x50] sm:$0xff]
    %v322 = vld [vmem:[#allocation2 + $0x58] sm:$0xff]
    %v323 = vld [vmem:[#allocation2 + $0x60] sm:$0xff]
    %v324 = vld [vmem:[#allocation2 + $0x68] sm:$0xff]
    %v325 = vld [vmem:[#allocation2 + $0x70] sm:$0xff]
    %v326 = vld [vmem:[#allocation2 + $0x78] sm:$0xff]
    %v327 = vld [vmem:[%s2] sm:$0x1]
    %v329 = vlaneseq
    %v330 = vshrl.u32 %v329, 7
    %v331 = vsub.s32 0, %v330
    %v332 = vrot.slane %v327, %v331
    %v334 = vadd.f32 %v311, %v332
    %v335 = vadd.f32 %v312, %v332
    %v336 = vadd.f32 %v313, %v332
    %v337 = vadd.f32 %v314, %v332
    %v338 = vadd.f32 %v315, %v332
    %v339 = vadd.f32 %v316, %v332
    %v340 = vadd.f32 %v317, %v332
    %v341 = vadd.f32 %v318, %v332
    %v342 = vadd.f32 %v319, %v332
    %v343 = vadd.f32 %v320, %v332
    %v344 = vadd.f32 %v321, %v332
    %v345 = vadd.f32 %v322, %v332
    %v346 = vadd.f32 %v323, %v332
    %v347 = vadd.f32 %v324, %v332
    %v348 = vadd.f32 %v325, %v332
    %v349 = vadd.f32 %v326, %v332
    %350 = vst [vmem:[%s3] sm:$0xff] %v334
    %351 = vst [vmem:[%s3 + $0x8] sm:$0xff] %v335
    %352 = vst [vmem:[%s3 + $0x10] sm:$0xff] %v336
    %353 = vst [vmem:[%s3 + $0x18] sm:$0xff] %v337
    %354 = vst [vmem:[%s3 + $0x20] sm:$0xff] %v338
    %355 = vst [vmem:[%s3 + $0x28] sm:$0xff] %v339
    %356 = vst [vmem:[%s3 + $0x30] sm:$0xff] %v340
    %357 = vst [vmem:[%s3 + $0x38] sm:$0xff] %v341
    %358 = vst [vmem:[%s3 + $0x40] sm:$0xff] %v342
    %359 = vst [vmem:[%s3 + $0x48] sm:$0xff] %v343
    %360 = vst [vmem:[%s3 + $0x50] sm:$0xff] %v344
    %361 = vst [vmem:[%s3 + $0x58] sm:$0xff] %v345
    %362 = vst [vmem:[%s3 + $0x60] sm:$0xff] %v346
    %363 = vst [vmem:[%s3 + $0x68] sm:$0xff] %v347
    %364 = vst [vmem:[%s3 + $0x70] sm:$0xff] %v348
    %365 = vst [vmem:[%s3 + $0x78] sm:$0xff] %v349
  $region21: #{decoder_forward.25} parent=0 // pred_fallthru
    _
  // Predicated region
  $region22: #{decoder_forward.25} parent=0 // pred_check
    _
  $region23: #{decoder_forward.25} parent=0 // pred_check_branch
    %367 = sbr.rel (0) target = $region25
  $region24: #{decoder_forward.25} parent=0 // pred_region
    _
  $region25: #{decoder_forward.25} parent=0 // pred_fallthru
    _
  // Predicated region
  $region26: #{decoder_forward.25} parent=0 // pred_check
    _
  $region27: #{decoder_forward.25} parent=0 // pred_check_branch
    %369 = sbr.rel (0) target = $region29
  $region28: #{decoder_forward.25} parent=0 // pred_region
    _
  $region29: #{decoder_forward.25} parent=0 // pred_fallthru
    _

// kernel: decoder_forward.24
$region0: #{decoder_forward.24}
  #allocation0 [shape = 'u32[]', space=smem, size = 0x4, offset = 0x4, fixed_abs, tag = 'smem constant byte address 0x4 - core index']
  #allocation1 [shape = 'u32[144,128]{1,0:T(1,128)}', space=vmem, size = 0x12000, scoped, tag = 'internal scratch']
  %s0 = inlined_call_operand.hbm [shape: f32[2,64,64], index: 0, kind: input, shape index: {}]
  %s1 = inlined_call_operand.hbm [shape: f32[1,64], index: 1, kind: input, shape index: {}]
  %s2 = inlined_call_operand.hbm [shape: f32[1,64], index: 2, kind: input, shape index: {}]
  %s3 = inlined_call_operand.vmem [shape: f32[64,32], index: 3, kind: input, shape index: {}]
  %s4 = inlined_call_operand.vmem [shape: f32[32,64], index: 4, kind: input, shape index: {}]
  %s5 = inlined_call_operand.vmem [shape: f32[2,64,64], index: 5, kind: output, shape index: {}]
  %s6 = sld [smem:[#allocation0]]
  $region65: #{decoder_forward.24} parent=0
    _
  %s8 = ssub.s32 1, %s6
  %s9 = scalar_select 0, %s8, %s6
  $region1: #{decoder_forward.24} parent=0
    #allocation2 [shape = 'u8[65536]{0}', space=vmem, size = 0x10000, scoped, tag = 'input window, operand 0']
    #allocation3 [shape = 's32[2]{0}', space=sflag, size = 0x8, scoped, tag = 'scoped memory for decoder_forward.24']
    #allocation4 [shape = 'u8[512]{0}', space=vmem, size = 0x400, scoped, tag = 'input window, operand 1, single buffered']
    #allocation5 [shape = 's32[1]{0}', space=sflag, size = 0x4, scoped, tag = 'scoped memory for decoder_forward.24']
    #allocation6 [shape = 'u8[512]{0}', space=vmem, size = 0x400, scoped, tag = 'input window, operand 2, single buffered']
    %10 = vsyncpa [#allocation3], 0
    %s11 = scalar_lea.sflag [#allocation3], 1
    %12 = vsyncpa %s11, 0
    %13 = vsyncpa [#allocation5], 0
    loop: start=0, step=1, limit=4
    $region2: #{decoder_forward.24} parent=1 // loop_pre_header
      _
    $region3: #{decoder_forward.24} parent=1 // loop_header
      %s15 = sphi 0, %s19
      %p16 = scmp.ge.s32.totalorder %s15, 4
      %s25 = sphi 0, %s27
      %s28 = sphi 0, %s25
      %s29 = sphi 0, %s28
      %s45 = sphi 0, %s29
      %s49 = sphi 0, %s49
      %s51 = sphi 0, %s49
      %s52 = sphi 0, %s51
      %s66 = sphi 0, %s52
      %s70 = sphi 0, %s70
      %s72 = sphi 0, %s70
      %s73 = sphi 0, %s72
      %s87 = sphi 0, %s73
      %s91 = sphi 0, %s91
      %s93 = sphi 0, %s91
      %s94 = sphi 0, %s93
      %s108 = sphi 0, %s94
      %s112 = sphi 0, %s112
      %s114 = sphi 0, %s112
      %s115 = sphi 0, %s114
      %s129 = sphi 0, %s115
      %s135 = sphi 0, %s137
      %s138 = sphi 0, %s135
      %s139 = sphi 0, %s138
      %s155 = sphi 0, %s139
    $region4: #{decoder_forward.24} parent=1 // loop_header_branch
      %18 = sbr.rel (%p16) target = $region8
    $region5: #{decoder_forward.24} parent=1 // loop_body
      %s20 = ssub.s32 %s15, 1
      %s21 = ssub.s32 %s15, 2
      %s22 = sadd.s32 %s15, 1
      %s23 = ssub.s32 %s15, %s22
      %p24 = scmp.eq.s32.totalorder %s23, 0
      %s26 = sadd.s32 %s25, 1
      %s27 = scalar_select %p24, %s25, %s26
      %p30 = pneg %p24
      %p31 = scmp.eq.s32.totalorder %s15, 1
      %p32 = por %p30, %p31
      %p33 = scmp.ne.s32.totalorder %s25, %s28
      %p34 = scmp.eq.s32.totalorder %s15, 0
      %p35 = por %p33, %p34
      %p36 = scmp.ne.s32.totalorder %s25, %s28
      %p37 = scmp.eq.s32.totalorder %s20, 1
      %p38 = por %p36, %p37
      %p39 = scmp.ne.s32.totalorder %s28, %s29
      %p40 = scmp.eq.s32.totalorder %s20, 0
      %p41 = por %p39, %p40
      %p42 = scmp.ne.s32.totalorder %s28, %s29
      %p43 = scmp.eq.s32.totalorder %s21, 1
      %p44 = por %p42, %p43
      %p46 = scmp.ne.s32.totalorder %s29, %s45
      %p47 = scmp.eq.s32.totalorder %s21, 0
      %p48 = por %p46, %p47
      %s50 = sadd.s32 %s49, 1
      %p53 = scmp.eq.s32.totalorder %s15, 1
      %p54 = scmp.ne.s32.totalorder %s49, %s51
      %p55 = scmp.eq.s32.totalorder %s15, 0
      %p56 = por %p54, %p55
      %p57 = scmp.ne.s32.totalorder %s49, %s51
      %p58 = scmp.eq.s32.totalorder %s20, 1
      %p59 = por %p57, %p58
      %p60 = scmp.ne.s32.totalorder %s51, %s52
      %p61 = scmp.eq.s32.totalorder %s20, 0
      %p62 = por %p60, %p61
      %p63 = scmp.ne.s32.totalorder %s51, %s52
      %p64 = scmp.eq.s32.totalorder %s21, 1
      %p65 = por %p63, %p64
      %p67 = scmp.ne.s32.totalorder %s52, %s66
      %p68 = scmp.eq.s32.totalorder %s21, 0
      %p69 = por %p67, %p68
      %s71 = sadd.s32 %s70, 1
      %p74 = scmp.eq.s32.totalorder %s15, 1
      %p75 = scmp.ne.s32.totalorder %s70, %s72
      %p76 = scmp.eq.s32.totalorder %s15, 0
      %p77 = por %p75, %p76
      %p78 = scmp.ne.s32.totalorder %s70, %s72
      %p79 = scmp.eq.s32.totalorder %s20, 1
      %p80 = por %p78, %p79
      %p81 = scmp.ne.s32.totalorder %s72, %s73
      %p82 = scmp.eq.s32.totalorder %s20, 0
      %p83 = por %p81, %p82
      %p84 = scmp.ne.s32.totalorder %s72, %s73
      %p85 = scmp.eq.s32.totalorder %s21, 1
      %p86 = por %p84, %p85
      %p88 = scmp.ne.s32.totalorder %s73, %s87
      %p89 = scmp.eq.s32.totalorder %s21, 0
      %p90 = por %p88, %p89
      %s92 = sadd.s32 %s91, 1
      %p95 = scmp.eq.s32.totalorder %s15, 1
      %p96 = scmp.ne.s32.totalorder %s91, %s93
      %p97 = scmp.eq.s32.totalorder %s15, 0
      %p98 = por %p96, %p97
      %p99 = scmp.ne.s32.totalorder %s91, %s93
      %p100 = scmp.eq.s32.totalorder %s20, 1
      %p101 = por %p99, %p100
      %p102 = scmp.ne.s32.totalorder %s93, %s94
      %p103 = scmp.eq.s32.totalorder %s20, 0
      %p104 = por %p102, %p103
      %p105 = scmp.ne.s32.totalorder %s93, %s94
      %p106 = scmp.eq.s32.totalorder %s21, 1
      %p107 = por %p105, %p106
      %p109 = scmp.ne.s32.totalorder %s94, %s108
      %p110 = scmp.eq.s32.totalorder %s21, 0
      %p111 = por %p109, %p110
      %s113 = sadd.s32 %s112, 1
      %p116 = scmp.eq.s32.totalorder %s15, 1
      %p117 = scmp.ne.s32.totalorder %s112, %s114
      %p118 = scmp.eq.s32.totalorder %s15, 0
      %p119 = por %p117, %p118
      %p120 = scmp.ne.s32.totalorder %s112, %s114
      %p121 = scmp.eq.s32.totalorder %s20, 1
      %p122 = por %p120, %p121
      %p123 = scmp.ne.s32.totalorder %s114, %s115
      %p124 = scmp.eq.s32.totalorder %s20, 0
      %p125 = por %p123, %p124
      %p126 = scmp.ne.s32.totalorder %s114, %s115
      %p127 = scmp.eq.s32.totalorder %s21, 1
      %p128 = por %p126, %p127
      %p130 = scmp.ne.s32.totalorder %s115, %s129
      %p131 = scmp.eq.s32.totalorder %s21, 0
      %p132 = por %p130, %p131
      %s133 = ssub.s32 %s15, %s22
      %p134 = scmp.eq.s32.totalorder %s133, 0
      %s136 = sadd.s32 %s135, 1
      %s137 = scalar_select %p134, %s135, %s136
      %p140 = pneg %p134
      %p141 = scmp.eq.s32.totalorder %s15, 1
      %p142 = por %p140, %p141
      %p143 = scmp.ne.s32.totalorder %s135, %s138
      %p144 = scmp.eq.s32.totalorder %s15, 0
      %p145 = por %p143, %p144
      %p146 = scmp.ne.s32.totalorder %s135, %s138
      %p147 = scmp.eq.s32.totalorder %s20, 1
      %p148 = por %p146, %p147
      %p149 = scmp.ne.s32.totalorder %s138, %s139
      %p150 = scmp.eq.s32.totalorder %s20, 0
      %p151 = por %p149, %p150
      %p152 = scmp.ne.s32.totalorder %s138, %s139
      %p153 = scmp.eq.s32.totalorder %s21, 1
      %p154 = por %p152, %p153
      %p156 = scmp.ne.s32.totalorder %s139, %s155
      %p157 = scmp.eq.s32.totalorder %s21, 0
      %p158 = por %p156, %p157
      %p159 = scmp.le.s32.totalorder 1, %s15
      %p160 = scmp.lt.s32.totalorder %s15, 3
      %p161 = pnand %p159, %p160
      %p162 = pneg %p161
      // Predicated region
      $region9: #{decoder_forward.24} parent=5 // pred_check
        _
      $region10: #{decoder_forward.24} parent=5 // pred_check_branch
        %164 = sbr.rel (%p161) target = $region12
      $region11: #{decoder_forward.24} parent=5 // pred_region
        %s165 = ssub.s32 %s15, 1
        // Predicated region
        $region13: #{decoder_forward.24} parent=11 // pred_check
          %p166 = pneg %p62
        $region14: #{decoder_forward.24} parent=11 // pred_check_branch
          %168 = sbr.rel (%p166) target = $region16
        $region15: #{decoder_forward.24} parent=11 // pred_region
          %s170 = ssub.s32 16, 16
          %171 = vsyncadd [#allocation5], %s170
          %s173 = sshll.u32 [#allocation4], 4
          %s174 = int_to_ptr.vmem [resolvable:$true] %s173
          %176 = dma.hbm_to_vmem [thread:$0]  %s1, 16, %s174, [#allocation5]
        $region16: #{decoder_forward.24} parent=11 // pred_fallthru
          _
        // Predicated region
        $region17: #{decoder_forward.24} parent=11 // pred_check
          %p177 = pneg %p83
        $region18: #{decoder_forward.24} parent=11 // pred_check_branch
          %179 = sbr.rel (%p177) target = $region20
        $region19: #{decoder_forward.24} parent=11 // pred_region
          %s181 = ssub.s32 16, 16
          %182 = vsyncadd [#allocation5], %s181
          %s184 = sshll.u32 [#allocation6], 4
          %s185 = int_to_ptr.vmem [resolvable:$true] %s184
          %187 = dma.hbm_to_vmem [thread:$0]  %s2, 16, %s185, [#allocation5]
        $region20: #{decoder_forward.24} parent=11 // pred_fallthru
          _
        // Predicated region
        $region21: #{decoder_forward.24} parent=11 // pred_check
          %p188 = pneg %p104
        $region22: #{decoder_forward.24} parent=11 // pred_check_branch
          %190 = sbr.rel (%p188) target = $region24
        $region23: #{decoder_forward.24} parent=11 // pred_region
          _
        $region24: #{decoder_forward.24} parent=11 // pred_fallthru
          _
        // Predicated region
        $region25: #{decoder_forward.24} parent=11 // pred_check
          %p191 = pneg %p125
        $region26: #{decoder_forward.24} parent=11 // pred_check_branch
          %193 = sbr.rel (%p191) target = $region28
        $region27: #{decoder_forward.24} parent=11 // pred_region
          _
        $region28: #{decoder_forward.24} parent=11 // pred_fallthru
          _
      $region12: #{decoder_forward.24} parent=5 // pred_fallthru
        _
      %p194 = scmp.lt.s32.totalorder %s15, 2
      // Predicated region
      $region29: #{decoder_forward.24} parent=5 // pred_check
        %p195 = pneg %p194
      $region30: #{decoder_forward.24} parent=5 // pred_check_branch
        %197 = sbr.rel (%p195) target = $region32
      $region31: #{decoder_forward.24} parent=5 // pred_region
        // Predicated region
        $region33: #{decoder_forward.24} parent=31 // pred_check
          %p198 = pneg %p35
        $region34: #{decoder_forward.24} parent=31 // pred_check_branch
          %200 = sbr.rel (%p198) target = $region36
        $region35: #{decoder_forward.24} parent=31 // pred_region
          %s201 = sand.u32 %s25, 1
          %s202 = scalar_lea.sflag [#allocation3], %s201
          %s203 = sand.u32 %s25, 1
          %s204 = smul.addr %s203, 64
          %s205 = scalar_lea.vmem [#allocation2], %s204
          %s207 = ssub.s32 1024, 1024
          %208 = vsyncadd %s202, %s207
          %s209 = smul.addr %s15, 8
          %s210 = smul.addr %s209, 128
          %s211 = scalar_lea.hbm %s0, %s210
          %s212 = sshll.u32 %s205, 4
          %s213 = int_to_ptr.vmem [resolvable:$true] %s212
          %218 = dma.hbm_to_vmem [thread:$0]  %s211, 1024, %s213, %s202, 128, 128, 8
        $region36: #{decoder_forward.24} parent=31 // pred_fallthru
          _
      $region32: #{decoder_forward.24} parent=5 // pred_fallthru
        _
      %p219 = scmp.le.s32.totalorder 1, %s15
      %p220 = scmp.lt.s32.totalorder %s15, 3
      %p221 = pnand %p219, %p220
      %p222 = pneg %p221
      // Predicated region
      $region37: #{decoder_forward.24} parent=5 // pred_check
        _
      $region38: #{decoder_forward.24} parent=5 // pred_check_branch
        %224 = sbr.rel (%p221) target = $region40
      $region39: #{decoder_forward.24} parent=5 // pred_region
        %s225 = ssub.s32 %s15, 1
        %s226 = sand.u32 %s28, 1
        %s227 = scalar_lea.sflag [#allocation3], %s226
        %s228 = sand.u32 %s28, 1
        %s229 = smul.addr %s228, 64
        %s230 = scalar_lea.vmem [#allocation2], %s229
        // Predicated region
        $region41: #{decoder_forward.24} parent=39 // pred_check
          %p231 = pneg %p41
        $region42: #{decoder_forward.24} parent=39 // pred_check_branch
          %233 = sbr.rel (%p231) target = $region44
        $region43: #{decoder_forward.24} parent=39 // pred_region
          %234 = dma.done %s227, 1024
        $region44: #{decoder_forward.24} parent=39 // pred_fallthru
          _
        // Predicated region
        $region45: #{decoder_forward.24} parent=39 // pred_check
          %p235 = pneg %p62
        $region46: #{decoder_forward.24} parent=39 // pred_check_branch
          %237 = sbr.rel (%p235) target = $region48
        $region47: #{decoder_forward.24} parent=39 // pred_region
          %238 = dma.done [#allocation5], 16
        $region48: #{decoder_forward.24} parent=39 // pred_fallthru
          _
        // Predicated region
        $region49: #{decoder_forward.24} parent=39 // pred_check
          %p239 = pneg %p83
        $region50: #{decoder_forward.24} parent=39 // pred_check_branch
          %241 = sbr.rel (%p239) target = $region52
        $region51: #{decoder_forward.24} parent=39 // pred_region
          %242 = dma.done [#allocation5], 16
        $region52: #{decoder_forward.24} parent=39 // pred_fallthru
          _
        %s243 = sand.u32 %s28, 1
        %s244 = scalar_lea.sflag [#allocation3], %s243
        %s245 = sand.u32 %s28, 1
        %s246 = smul.addr %s245, 64
        %s247 = scalar_lea.vmem [#allocation2], %s246
        %p248 = pneg %p41
        %p249 = pneg %p38
        %p250 = pneg %p62
        %p251 = pneg %p59
        %p252 = pneg %p83
        %p253 = pneg %p80
        %p254 = pneg %p104
        %p255 = pneg %p101
        %p256 = pneg %p125
        %p257 = pneg %p122
        %p258 = pneg %p151
        %p259 = pneg %p148
        %p260 = scmp.lt.s32.totalorder %s20, 1
        %s261 = scalar_select %p260, %s20, 1
        %s262 = smul.addr %s261, 8
        %s263 = smul.addr %s262, 8
        %s264 = scalar_lea.vmem %s5, %s263
        %p265 = scmp.lt.s32.totalorder %s20, 1
        %s266 = scalar_select %p265, %s20, 1
        %s267 = smul.addr %s266, 8
        %s268 = smul.addr %s267, 8
        %s269 = scalar_lea.vmem %s5, %s268
        %v270 = vld [vmem:[%s230] sm:$0xff]
        %v271 = vld [vmem:[%s230 + $0x8] sm:$0xff]
        %v272 = vld [vmem:[%s230 + $0x10] sm:$0xff]
        %v273 = vld [vmem:[%s230 + $0x18] sm:$0xff]
        %v274 = vld [vmem:[%s230 + $0x20] sm:$0xff]
        %v275 = vld [vmem:[%s230 + $0x28] sm:$0xff]
        %v276 = vld [vmem:[%s230 + $0x30] sm:$0xff]
        %v277 = vld [vmem:[%s230 + $0x38] sm:$0xff]
        %v278 = vld [vmem:[%s3] sm:$0xff]
        %v279 = vld [vmem:[%s3 + $0x8] sm:$0xff]
        %v280 = vld [vmem:[%s3 + $0x10] sm:$0xff]
        %v281 = vld [vmem:[%s3 + $0x18] sm:$0xff]
        %v282 = vld [vmem:[%s3 + $0x20] sm:$0xff]
        %v283 = vld [vmem:[%s3 + $0x28] sm:$0xff]
        %v284 = vld [vmem:[%s3 + $0x30] sm:$0xff]
        %v285 = vld [vmem:[%s3 + $0x38] sm:$0xff]
        %v286 = vld [vmem:[%s4] sm:$0xff]
        %v287 = vld [vmem:[%s4 + $0x8] sm:$0xff]
        %v288 = vld [vmem:[%s4 + $0x10] sm:$0xff]
        %v289 = vld [vmem:[%s4 + $0x18] sm:$0xff]
        %vm290 = vcmask 523264
        %v291 = vsel %vm290, %v270, 0.0
        %v292 = vsel %vm290, %v271, 0.0
        %v293 = vadd.f32 %v291, %v292
        %v294 = vsel %vm290, %v272, 0.0
        %v295 = vadd.f32 %v293, %v294
        %v296 = vsel %vm290, %v273, 0.0
        %v297 = vadd.f32 %v295, %v296
        %v298 = vsel %vm290, %v274, 0.0
        %v299 = vadd.f32 %v297, %v298
        %v300 = vsel %vm290, %v275, 0.0
        %v301 = vadd.f32 %v299, %v300
        %v302 = vsel %vm290, %v276, 0.0
        %v303 = vadd.f32 %v301, %v302
        %v304 = vsel %vm290, %v277, 0.0
        %v305 = vadd.f32 %v303, %v304
        %v306 = vrot.slane %v305, 4
        %v307 = vadd.f32 %v305, %v306
        %v308 = vrot.slane %v307, 2
        %v309 = vadd.f32 %v307, %v308
        %v310 = vrot.slane %v309, 1
        %v311 = vadd.f32 %v309, %v310
        %v312 = vmul.f32 %v270, %v270
        %v313 = vmul.f32 %v271, %v271
        %v314 = vmul.f32 %v272, %v272
        %v315 = vmul.f32 %v273, %v273
        %v316 = vmul.f32 %v274, %v274
        %v317 = vmul.f32 %v275, %v275
        %v318 = vmul.f32 %v276, %v276
        %v319 = vmul.f32 %v277, %v277
        %v320 = vsel %vm290, %v312, 0.0
        %v321 = vsel %vm290, %v313, 0.0
        %v322 = vadd.f32 %v320, %v321
        %v323 = vsel %vm290, %v314, 0.0
        %v324 = vadd.f32 %v322, %v323
        %v325 = vsel %vm290, %v315, 0.0
        %v326 = vadd.f32 %v324, %v325
        %v327 = vsel %vm290, %v316, 0.0
        %v328 = vadd.f32 %v326, %v327
        %v329 = vsel %vm290, %v317, 0.0
        %v330 = vadd.f32 %v328, %v329
        %v331 = vsel %vm290, %v318, 0.0
        %v332 = vadd.f32 %v330, %v331
        %v333 = vsel %vm290, %v319, 0.0
        %v334 = vadd.f32 %v332, %v333
        %v335 = vrot.slane %v334, 4
        %v336 = vadd.f32 %v334, %v335
        %v337 = vrot.slane %v336, 2
        %v338 = vadd.f32 %v336, %v337
        %v339 = vrot.slane %v338, 1
        %v340 = vadd.f32 %v338, %v339
        %v342 = vsel %vm290, %v311, 0
        %344 = vmatprep.subr.mxu0 0.0
        %345 = vmatpush1.msra.mxu0 %v278
        %346 = vmatprep.subr.mxu0 0.0
        %347 = vmatpush1.msra.mxu0 %v279
        %348 = vmatprep.subr.mxu0 0.0
        %349 = vmatpush1.msra.mxu0 %v280
        %350 = vmatprep.subr.mxu0 0.0
        %351 = vmatpush1.msra.mxu0 %v281
        %352 = vmatprep.subr.mxu0 0.0
        %353 = vmatpush1.msra.mxu0 %v282
        %354 = vmatprep.subr.mxu0 0.0
        %355 = vmatpush1.msra.mxu0 %v283
        %356 = vmatprep.subr.mxu0 0.0
        %357 = vmatpush1.msra.mxu0 %v284
        %358 = vmatprep.subr.mxu0 0.0
        %359 = vmatpush1.msra.mxu0 %v285
        %360 = vmatprep.subr.mxu0 0.0
        %361 = vmatpush1.msra.mxu0 0.0
        %362 = vmatprep.subr.mxu0 0.0
        %363 = vmatpush1.msra.mxu0 0.0
        %364 = vmatprep.subr.mxu0 0.0
        %365 = vmatpush1.msra.mxu0 0.0
        %366 = vmatprep.subr.mxu0 0.0
        %367 = vmatpush1.msra.mxu0 0.0
        %368 = vmatprep.subr.mxu0 0.0
        %369 = vmatpush1.msra.mxu0 0.0
        %370 = vmatprep.subr.mxu0 0.0
        %371 = vmatpush1.msra.mxu0 0.0
        %372 = vmatprep.subr.mxu0 0.0
        %373 = vmatpush1.msra.mxu0 0.0
        %374 = vmatprep.subr.mxu0 0.0
        %375 = vmatpush1.msra.mxu0 0.0
        %376 = vmatprep.subr.mxu0 0.0
        %377 = vmatpush1.msra.mxu0 0.0
        %378 = vmatprep.subr.mxu0 0.0
        %379 = vmatpush1.msra.mxu0 0.0
        %380 = vmatprep.subr.mxu0 0.0
        %381 = vmatpush1.msra.mxu0 0.0
        %382 = vmatprep.subr.mxu0 0.0
        %383 = vmatpush1.msra.mxu0 0.0
        %384 = vmatprep.subr.mxu0 0.0
        %385 = vmatpush1.msra.mxu0 0.0
        %386 = vmatprep.subr.mxu0 0.0
        %387 = vmatpush1.msra.mxu0 0.0
        %388 = vmatprep.subr.mxu0 0.0
        %389 = vmatpush1.msra.mxu0 0.0
        %390 = vmatprep.subr.mxu0 0.0
        %391 = vmatpush1.msra.mxu0 0.0
        %392 = vmatprep.subr.mxu0 0.0
        %393 = vmatpush1.msra.mxu0 0.0
        %394 = vmatprep.subr.mxu0 0.0
        %395 = vmatpush1.msra.mxu0 0.0
        %396 = vmatprep.subr.mxu0 0.0
        %397 = vmatpush1.msra.mxu0 0.0
        %398 = vmatprep.subr.mxu0 0.0
        %399 = vmatpush1.msra.mxu0 0.0
        %400 = vmatprep.subr.mxu0 0.0
        %401 = vmatpush1.msra.mxu0 0.0
        %402 = vmatprep.subr.mxu0 0.0
        %403 = vmatpush1.msra.mxu0 0.0
        %404 = vmatprep.subr.mxu0 0.0
        %405 = vmatpush1.msra.mxu0 0.0
        %406 = vmatprep.subr.mxu0 0.0
        %407 = vmatpush1.msra.mxu0 0.0
        %408 = vmatprep.mubr.f32.mxu0 0.0
        %409 = vmatmul.mubr.f32.gmra.mrb[0].mxu0 %v342
        %v410 = vpop.f32.mrb[0].mxu0
        %v411 = vadd.f32 0.0, %v410
        %v412 = vpop.f32.mrb[0].mxu0
        %413 = vdwg.mxu0
        %v414 = vmul.f32 %v411, 0.0078125
        %v416 = vsel %vm290, %v340, 0
        %418 = vmatprep.subr.mxu0 0.0
        %419 = vmatpush1.msra.mxu0 %v278
        %420 = vmatprep.subr.mxu0 0.0
        %421 = vmatpush1.msra.mxu0 %v279
        %422 = vmatprep.subr.mxu0 0.0
        %423 = vmatpush1.msra.mxu0 %v280
        %424 = vmatprep.subr.mxu0 0.0
        %425 = vmatpush1.msra.mxu0 %v281
        %426 = vmatprep.subr.mxu0 0.0
        %427 = vmatpush1.msra.mxu0 %v282
        %428 = vmatprep.subr.mxu0 0.0
        %429 = vmatpush1.msra.mxu0 %v283
        %430 = vmatprep.subr.mxu0 0.0
        %431 = vmatpush1.msra.mxu0 %v284
        %432 = vmatprep.subr.mxu0 0.0
        %433 = vmatpush1.msra.mxu0 %v285
        %434 = vmatprep.subr.mxu0 0.0
        %435 = vmatpush1.msra.mxu0 0.0
        %436 = vmatprep.subr.mxu0 0.0
        %437 = vmatpush1.msra.mxu0 0.0
        %438 = vmatprep.subr.mxu0 0.0
        %439 = vmatpush1.msra.mxu0 0.0
        %440 = vmatprep.subr.mxu0 0.0
        %441 = vmatpush1.msra.mxu0 0.0
        %442 = vmatprep.subr.mxu0 0.0
        %443 = vmatpush1.msra.mxu0 0.0
        %444 = vmatprep.subr.mxu0 0.0
        %445 = vmatpush1.msra.mxu0 0.0
        %446 = vmatprep.subr.mxu0 0.0
        %447 = vmatpush1.msra.mxu0 0.0
        %448 = vmatprep.subr.mxu0 0.0
        %449 = vmatpush1.msra.mxu0 0.0
        %450 = vmatprep.subr.mxu0 0.0
        %451 = vmatpush1.msra.mxu0 0.0
        %452 = vmatprep.subr.mxu0 0.0
        %453 = vmatpush1.msra.mxu0 0.0
        %454 = vmatprep.subr.mxu0 0.0
        %455 = vmatpush1.msra.mxu0 0.0
        %456 = vmatprep.subr.mxu0 0.0
        %457 = vmatpush1.msra.mxu0 0.0
        %458 = vmatprep.subr.mxu0 0.0
        %459 = vmatpush1.msra.mxu0 0.0
        %460 = vmatprep.subr.mxu0 0.0
        %461 = vmatpush1.msra.mxu0 0.0
        %462 = vmatprep.subr.mxu0 0.0
        %463 = vmatpush1.msra.mxu0 0.0
        %464 = vmatprep.subr.mxu0 0.0
        %465 = vmatpush1.msra.mxu0 0.0
        %466 = vmatprep.subr.mxu0 0.0
        %467 = vmatpush1.msra.mxu0 0.0
        %468 = vmatprep.subr.mxu0 0.0
        %469 = vmatpush1.msra.mxu0 0.0
        %470 = vmatprep.subr.mxu0 0.0
        %471 = vmatpush1.msra.mxu0 0.0
        %472 = vmatprep.subr.mxu0 0.0
        %473 = vmatpush1.msra.mxu0 0.0
        %474 = vmatprep.subr.mxu0 0.0
        %475 = vmatpush1.msra.mxu0 0.0
        %476 = vmatprep.subr.mxu0 0.0
        %477 = vmatpush1.msra.mxu0 0.0
        %478 = vmatprep.subr.mxu0 0.0
        %479 = vmatpush1.msra.mxu0 0.0
        %480 = vmatprep.subr.mxu0 0.0
        %481 = vmatpush1.msra.mxu0 0.0
        %482 = vmatprep.mubr.f32.mxu0 0.0
        %483 = vmatmul.mubr.f32.gmra.mrb[0].mxu0 %v416
        %v484 = vpop.f32.mrb[0].mxu0
        %v485 = vadd.f32 0.0, %v484
        %v486 = vpop.f32.mrb[0].mxu0
        %487 = vdwg.mxu0
        %v488 = vmul.f32 %v485, 0.0078125
        %v489 = vmul.f32 %v414, %v414
        %v490 = vsub.f32 %v488, %v489
        %v491 = vadd.f32 %v490, 1e-05
        %v492 = vrsqrt.pop %v491
        %vm493 = vcmask 261120
        %v495 = vsel %vm493, %v414, 0
        %497 = vmatprep.subr.mxu0 0.0
        %498 = vmatpush1.msra.mxu0 %v286
        %499 = vmatprep.subr.mxu0 0.0
        %500 = vmatpush1.msra.mxu0 %v287
        %501 = vmatprep.subr.mxu0 0.0
        %502 = vmatpush1.msra.mxu0 %v288
        %503 = vmatprep.subr.mxu0 0.0
        %504 = vmatpush1.msra.mxu0 %v289
        %505 = vmatprep.subr.mxu0 0.0
        %506 = vmatpush1.msra.mxu0 0.0
        %507 = vmatprep.subr.mxu0 0.0
        %508 = vmatpush1.msra.mxu0 0.0
        %509 = vmatprep.subr.mxu0 0.0
        %510 = vmatpush1.msra.mxu0 0.0
        %511 = vmatprep.subr.mxu0 0.0
        %512 = vmatpush1.msra.mxu0 0.0
        %513 = vmatprep.subr.mxu0 0.0
        %514 = vmatpush1.msra.mxu0 0.0
        %515 = vmatprep.subr.mxu0 0.0
        %516 = vmatpush1.msra.mxu0 0.0
        %517 = vmatprep.subr.mxu0 0.0
        %518 = vmatpush1.msra.mxu0 0.0
        %519 = vmatprep.subr.mxu0 0.0
        %520 = vmatpush1.msra.mxu0 0.0
        %521 = vmatprep.subr.mxu0 0.0
        %522 = vmatpush1.msra.mxu0 0.0
        %523 = vmatprep.subr.mxu0 0.0
        %524 = vmatpush1.msra.mxu0 0.0
        %525 = vmatprep.subr.mxu0 0.0
        %526 = vmatpush1.msra.mxu0 0.0
        %527 = vmatprep.subr.mxu0 0.0
        %528 = vmatpush1.msra.mxu0 0.0
        %529 = vmatprep.subr.mxu0 0.0
        %530 = vmatpush1.msra.mxu0 0.0
        %531 = vmatprep.subr.mxu0 0.0
        %532 = vmatpush1.msra.mxu0 0.0
        %533 = vmatprep.subr.mxu0 0.0
        %534 = vmatpush1.msra.mxu0 0.0
        %535 = vmatprep.subr.mxu0 0.0
        %536 = vmatpush1.msra.mxu0 0.0
        %537 = vmatprep.subr.mxu0 0.0
        %538 = vmatpush1.msra.mxu0 0.0
        %539 = vmatprep.subr.mxu0 0.0
        %540 = vmatpush1.msra.mxu0 0.0
        %541 = vmatprep.subr.mxu0 0.0
        %542 = vmatpush1.msra.mxu0 0.0
        %543 = vmatprep.subr.mxu0 0.0
        %544 = vmatpush1.msra.mxu0 0.0
        %545 = vmatprep.subr.mxu0 0.0
        %546 = vmatpush1.msra.mxu0 0.0
        %547 = vmatprep.subr.mxu0 0.0
        %548 = vmatpush1.msra.mxu0 0.0
        %549 = vmatprep.subr.mxu0 0.0
        %550 = vmatpush1.msra.mxu0 0.0
        %551 = vmatprep.subr.mxu0 0.0
        %552 = vmatpush1.msra.mxu0 0.0
        %553 = vmatprep.subr.mxu0 0.0
        %554 = vmatpush1.msra.mxu0 0.0
        %555 = vmatprep.subr.mxu0 0.0
        %556 = vmatpush1.msra.mxu0 0.0
        %557 = vmatprep.subr.mxu0 0.0
        %558 = vmatpush1.msra.mxu0 0.0
        %559 = vmatprep.subr.mxu0 0.0
        %560 = vmatpush1.msra.mxu0 0.0
        %561 = vmatprep.mubr.f32.mxu0 0.0
        %562 = vmatmul.mubr.f32.gmra.mrb[0].mxu0 %v495
        %v563 = vpop.f32.mrb[0].mxu0
        %v564 = vadd.f32 0.0, %v563
        %v565 = vpop.f32.mrb[0].mxu0
        %566 = vdwg.mxu0
        %v568 = vsel %vm493, %v492, 0
        %570 = vmatprep.subr.mxu0 0.0
        %571 = vmatpush1.msra.mxu0 %v286
        %572 = vmatprep.subr.mxu0 0.0
        %573 = vmatpush1.msra.mxu0 %v287
        %574 = vmatprep.subr.mxu0 0.0
        %575 = vmatpush1.msra.mxu0 %v288
        %576 = vmatprep.subr.mxu0 0.0
        %577 = vmatpush1.msra.mxu0 %v289
        %578 = vmatprep.subr.mxu0 0.0
        %579 = vmatpush1.msra.mxu0 0.0
        %580 = vmatprep.subr.mxu0 0.0
        %581 = vmatpush1.msra.mxu0 0.0
        %582 = vmatprep.subr.mxu0 0.0
        %583 = vmatpush1.msra.mxu0 0.0
        %584 = vmatprep.subr.mxu0 0.0
        %585 = vmatpush1.msra.mxu0 0.0
        %586 = vmatprep.subr.mxu0 0.0
        %587 = vmatpush1.msra.mxu0 0.0
        %588 = vmatprep.subr.mxu0 0.0
        %589 = vmatpush1.msra.mxu0 0.0
        %590 = vmatprep.subr.mxu0 0.0
        %591 = vmatpush1.msra.mxu0 0.0
        %592 = vmatprep.subr.mxu0 0.0
        %593 = vmatpush1.msra.mxu0 0.0
        %594 = vmatprep.subr.mxu0 0.0
        %595 = vmatpush1.msra.mxu0 0.0
        %596 = vmatprep.subr.mxu0 0.0
        %597 = vmatpush1.msra.mxu0 0.0
        %598 = vmatprep.subr.mxu0 0.0
        %599 = vmatpush1.msra.mxu0 0.0
        %600 = vmatprep.subr.mxu0 0.0
        %601 = vmatpush1.msra.mxu0 0.0
        %602 = vmatprep.subr.mxu0 0.0
        %603 = vmatpush1.msra.mxu0 0.0
        %604 = vmatprep.subr.mxu0 0.0
        %605 = vmatpush1.msra.mxu0 0.0
        %606 = vmatprep.subr.mxu0 0.0
        %607 = vmatpush1.msra.mxu0 0.0
        %608 = vmatprep.subr.mxu0 0.0
        %609 = vmatpush1.msra.mxu0 0.0
        %610 = vmatprep.subr.mxu0 0.0
        %611 = vmatpush1.msra.mxu0 0.0
        %612 = vmatprep.subr.mxu0 0.0
        %613 = vmatpush1.msra.mxu0 0.0
        %614 = vmatprep.subr.mxu0 0.0
        %615 = vmatpush1.msra.mxu0 0.0
        %616 = vmatprep.subr.mxu0 0.0
        %617 = vmatpush1.msra.mxu0 0.0
        %618 = vmatprep.subr.mxu0 0.0
        %619 = vmatpush1.msra.mxu0 0.0
        %620 = vmatprep.subr.mxu0 0.0
        %621 = vmatpush1.msra.mxu0 0.0
        %622 = vmatprep.subr.mxu0 0.0
        %623 = vmatpush1.msra.mxu0 0.0
        %624 = vmatprep.subr.mxu0 0.0
        %625 = vmatpush1.msra.mxu0 0.0
        %626 = vmatprep.subr.mxu0 0.0
        %627 = vmatpush1.msra.mxu0 0.0
        %628 = vmatprep.subr.mxu0 0.0
        %629 = vmatpush1.msra.mxu0 0.0
        %630 = vmatprep.subr.mxu0 0.0
        %631 = vmatpush1.msra.mxu0 0.0
        %632 = vmatprep.subr.mxu0 0.0
        %633 = vmatpush1.msra.mxu0 0.0
        %634 = vmatprep.mubr.f32.mxu0 0.0
        %635 = vmatmul.mubr.f32.gmra.mrb[0].mxu0 %v568
        %v636 = vpop.f32.mrb[0].mxu0
        %v637 = vadd.f32 0.0, %v636
        %v638 = vpop.f32.mrb[0].mxu0
        %639 = vdwg.mxu0
        %v640 = vlaneseq
        %v641 = vshrl.u32 %v640, 7
        %v642 = vsub.s32 0, %v641
        %v643 = vrot.slane %v564, %v642
        %v644 = vsub.f32 %v270, %v643
        %v645 = vsub.f32 %v271, %v643
        %v646 = vsub.f32 %v272, %v643
        %v647 = vsub.f32 %v273, %v643
        %v648 = vsub.f32 %v274, %v643
        %v649 = vsub.f32 %v275, %v643
        %v650 = vsub.f32 %v276, %v643
        %v651 = vsub.f32 %v277, %v643
        %v652 = vlaneseq
        %v653 = vshrl.u32 %v652, 7
        %v654 = vsub.s32 0, %v653
        %v655 = vrot.slane %v637, %v654
        %v656 = vmul.f32 %v644, %v655
        %v657 = vmul.f32 %v645, %v655
        %v658 = vmul.f32 %v646, %v655
        %v659 = vmul.f32 %v647, %v655
        %v660 = vmul.f32 %v648, %v655
        %v661 = vmul.f32 %v649, %v655
        %v662 = vmul.f32 %v650, %v655
        %v663 = vmul.f32 %v651, %v655
        %v664 = vld [vmem:[#allocation4] sm:$0x1]
        %v666 = vlaneseq
        %v667 = vshrl.u32 %v666, 7
        %v668 = vsub.s32 0, %v667
        %v669 = vrot.slane %v664, %v668
        %v671 = vmul.f32 %v656, %v669
        %v672 = vmul.f32 %v657, %v669
        %v673 = vmul.f32 %v658, %v669
        %v674 = vmul.f32 %v659, %v669
        %v675 = vmul.f32 %v660, %v669
        %v676 = vmul.f32 %v661, %v669
        %v677 = vmul.f32 %v662, %v669
        %v678 = vmul.f32 %v663, %v669
        %v679 = vld [vmem:[#allocation6] sm:$0x1]
        %v681 = vlaneseq
        %v682 = vshrl.u32 %v681, 7
        %v683 = vsub.s32 0, %v682
        %v684 = vrot.slane %v679, %v683
        %v686 = vadd.f32 %v671, %v684
        %v687 = vadd.f32 %v672, %v684
        %v688 = vadd.f32 %v673, %v684
        %v689 = vadd.f32 %v674, %v684
        %v690 = vadd.f32 %v675, %v684
        %v691 = vadd.f32 %v676, %v684
        %v692 = vadd.f32 %v677, %v684
        %v693 = vadd.f32 %v678, %v684
        %v694 = vxor.u32 %v686, 2147483648
        %v695 = vxor.u32 %v687, 2147483648
        %v696 = vxor.u32 %v688, 2147483648
        %v697 = vxor.u32 %v689, 2147483648
        %v698 = vxor.u32 %v690, 2147483648
        %v699 = vxor.u32 %v691, 2147483648
        %v700 = vxor.u32 %v692, 2147483648
        %v701 = vxor.u32 %v693, 2147483648
        %v702 = vmul.f32 %v694, 1.442695
        %v703 = vpow.pop %v702
        %v704 = vmul.f32 %v695, 1.442695
        %v705 = vpow.pop %v704
        %v706 = vmul.f32 %v696, 1.442695
        %v707 = vpow.pop %v706
        %v708 = vmul.f32 %v697, 1.442695
        %v709 = vpow.pop %v708
        %v710 = vmul.f32 %v698, 1.442695
        %v711 = vpow.pop %v710
        %v712 = vmul.f32 %v699, 1.442695
        %v713 = vpow.pop %v712
        %v714 = vmul.f32 %v700, 1.442695
        %v715 = vpow.pop %v714
        %v716 = vmul.f32 %v701, 1.442695
        %v717 = vpow.pop %v716
        %v718 = vadd.f32 %v703, 1.0
        %v719 = vadd.f32 %v705, 1.0
        %v720 = vadd.f32 %v707, 1.0
        %v721 = vadd.f32 %v709, 1.0
        %v722 = vadd.f32 %v711, 1.0
        %v723 = vadd.f32 %v713, 1.0
        %v724 = vadd.f32 %v715, 1.0
        %v725 = vadd.f32 %v717, 1.0
        %v726 = vrcp.pop %v718
        %v727 = vmul.f32 1.0, %v726
        %v728 = vrcp.pop %v719
        %v729 = vmul.f32 1.0, %v728
        %v730 = vrcp.pop %v720
        %v731 = vmul.f32 1.0, %v730
        %v732 = vrcp.pop %v721
        %v733 = vmul.f32 1.0, %v732
        %v734 = vrcp.pop %v722
        %v735 = vmul.f32 1.0, %v734
        %v736 = vrcp.pop %v723
        %v737 = vmul.f32 1.0, %v736
        %v738 = vrcp.pop %v724
        %v739 = vmul.f32 1.0, %v738
        %v740 = vrcp.pop %v725
        %v741 = vmul.f32 1.0, %v740
        %v742 = vmul.f32 %v686, %v727
        %v743 = vmul.f32 %v687, %v729
        %v744 = vmul.f32 %v688, %v731
        %v745 = vmul.f32 %v689, %v733
        %v746 = vmul.f32 %v690, %v735
        %v747 = vmul.f32 %v691, %v737
        %v748 = vmul.f32 %v692, %v739
        %v749 = vmul.f32 %v693, %v741
        %750 = vst.msk [vmem:[%s269] sm:$0xff] %vm290, %v742
        %751 = vst.msk [vmem:[%s269 + $0x8] sm:$0xff] %vm290, %v743
        %752 = vst.msk [vmem:[%s269 + $0x10] sm:$0xff] %vm290, %v744
        %753 = vst.msk [vmem:[%s269 + $0x18] sm:$0xff] %vm290, %v745
        %754 = vst.msk [vmem:[%s269 + $0x20] sm:$0xff] %vm290, %v746
        %755 = vst.msk [vmem:[%s269 + $0x28] sm:$0xff] %vm290, %v747
        %756 = vst.msk [vmem:[%s269 + $0x30] sm:$0xff] %vm290, %v748
        %757 = vst.msk [vmem:[%s269 + $0x38] sm:$0xff] %vm290, %v749
        %p758 = scmp.lt.s32.totalorder %s20, 1
        %s759 = scalar_select %p758, %s20, 1
        %s760 = smul.addr %s759, 8
        %s761 = smul.addr %s760, 8
        %s762 = scalar_lea.vmem %s5, %s761
        // Predicated region
        $region53: #{decoder_forward.24} parent=39 // pred_check
          %p763 = pneg %p148
        $region54: #{decoder_forward.24} parent=39 // pred_check_branch
          %765 = sbr.rel (%p763) target = $region56
        $region55: #{decoder_forward.24} parent=39 // pred_region
          _
        $region56: #{decoder_forward.24} parent=39 // pred_fallthru
          _
      $region40: #{decoder_forward.24} parent=5 // pred_fallthru
        _
      %p766 = scmp.le.s32.totalorder 2, %s15
      // Predicated region
      $region57: #{decoder_forward.24} parent=5 // pred_check
        %p767 = pneg %p766
      $region58: #{decoder_forward.24} parent=5 // pred_check_branch
        %769 = sbr.rel (%p767) target = $region60
      $region59: #{decoder_forward.24} parent=5 // pred_region
        %s770 = ssub.s32 %s15, 2
        // Predicated region
        $region61: #{decoder_forward.24} parent=59 // pred_check
          %p771 = pneg %p154
        $region62: #{decoder_forward.24} parent=59 // pred_check_branch
          %773 = sbr.rel (%p771) target = $region64
        $region63: #{decoder_forward.24} parent=59 // pred_region
          %p774 = scmp.lt.s32.totalorder %s21, 1
          %s775 = scalar_select %p774, %s21, 1
          %s776 = smul.addr %s775, 8
          %s777 = smul.addr %s776, 8
          %s778 = scalar_lea.vmem %s5, %s777
        $region64: #{decoder_forward.24} parent=59 // pred_fallthru
          _
      $region60: #{decoder_forward.24} parent=5 // pred_fallthru
        _
    $region6: #{decoder_forward.24} parent=1 // loop_footer
      %s19 = sadd.s32 1, %s15
    $region7: #{decoder_forward.24} parent=1 // loop_footer_branch
      %14 = sbr.rel target = $region3
    $region8: #{decoder_forward.24} parent=1 // loop_exit
      _
    %779 = vsyncpa [#allocation3], 1
    %s780 = scalar_lea.sflag [#allocation3], 1
    %781 = vsyncpa %s780, 1
    %782 = vsyncpa [#allocation5], 1

// kernel: decoder_forward.26
$region0: #{decoder_forward.26}
  #allocation0 [shape = 'u32[]', space=smem, size = 0x4, offset = 0x4, fixed_abs, tag = 'smem constant byte address 0x4 - core index']
  #allocation1 [shape = 'u32[144,128]{1,0:T(1,128)}', space=vmem, size = 0x12000, scoped, tag = 'internal scratch']
  %s0 = inlined_call_operand.vmem [shape: f32[2,64,64], index: 0, kind: input, shape index: {}]
  %s1 = inlined_call_operand.hbm [shape: f32[1,64], index: 1, kind: input, shape index: {}]
  %s2 = inlined_call_operand.hbm [shape: f32[1,64], index: 2, kind: input, shape index: {}]
  %s3 = inlined_call_operand.vmem [shape: f32[64,32], index: 3, kind: input, shape index: {}]
  %s4 = inlined_call_operand.vmem [shape: f32[32,64], index: 4, kind: input, shape index: {}]
  %s5 = inlined_call_operand.vmem [shape: f32[2,64,64], index: 5, kind: output, shape index: {}]
  %s6 = sld [smem:[#allocation0]]
  $region61: #{decoder_forward.26} parent=0
    _
  %s8 = ssub.s32 1, %s6
  %s9 = scalar_select 0, %s8, %s6
  $region1: #{decoder_forward.26} parent=0
    #allocation2 [shape = 'u8[512]{0}', space=vmem, size = 0x400, scoped, tag = 'input window, operand 1, single buffered']
    #allocation3 [shape = 's32[2]{0}', space=sflag, size = 0x8, scoped, tag = 'scoped memory for decoder_forward.26']
    #allocation4 [shape = 'u8[512]{0}', space=vmem, size = 0x400, scoped, tag = 'input window, operand 2, single buffered']
    #allocation5 [shape = 's32[1]{0}', space=sflag, size = 0x4, scoped, tag = 'scoped memory for decoder_forward.26']
    %10 = vsyncpa [#allocation3], 0
    %11 = vsyncpa [#allocation5], 0
    loop: start=0, step=1, limit=4
    $region2: #{decoder_forward.26} parent=1 // loop_pre_header
      _
    $region3: #{decoder_forward.26} parent=1 // loop_header
      %s13 = sphi 0, %s17
      %p14 = scmp.ge.s32.totalorder %s13, 4
      %s23 = sphi 0, %s25
      %s26 = sphi 0, %s23
      %s27 = sphi 0, %s26
      %s43 = sphi 0, %s27
      %s47 = sphi 0, %s47
      %s49 = sphi 0, %s47
      %s50 = sphi 0, %s49
      %s64 = sphi 0, %s50
      %s68 = sphi 0, %s68
      %s70 = sphi 0, %s68
      %s71 = sphi 0, %s70
      %s85 = sphi 0, %s71
      %s89 = sphi 0, %s89
      %s91 = sphi 0, %s89
      %s92 = sphi 0, %s91
      %s106 = sphi 0, %s92
      %s110 = sphi 0, %s110
      %s112 = sphi 0, %s110
      %s113 = sphi 0, %s112
      %s127 = sphi 0, %s113
      %s133 = sphi 0, %s135
      %s136 = sphi 0, %s133
      %s137 = sphi 0, %s136
      %s153 = sphi 0, %s137
    $region4: #{decoder_forward.26} parent=1 // loop_header_branch
      %16 = sbr.rel (%p14) target = $region8
    $region5: #{decoder_forward.26} parent=1 // loop_body
      %s18 = ssub.s32 %s13, 1
      %s19 = ssub.s32 %s13, 2
      %s20 = sadd.s32 %s13, 1
      %s21 = ssub.s32 %s13, %s20
      %p22 = scmp.eq.s32.totalorder %s21, 0
      %s24 = sadd.s32 %s23, 1
      %s25 = scalar_select %p22, %s23, %s24
      %p28 = pneg %p22
      %p29 = scmp.eq.s32.totalorder %s13, 1
      %p30 = por %p28, %p29
      %p31 = scmp.ne.s32.totalorder %s23, %s26
      %p32 = scmp.eq.s32.totalorder %s13, 0
      %p33 = por %p31, %p32
      %p34 = scmp.ne.s32.totalorder %s23, %s26
      %p35 = scmp.eq.s32.totalorder %s18, 1
      %p36 = por %p34, %p35
      %p37 = scmp.ne.s32.totalorder %s26, %s27
      %p38 = scmp.eq.s32.totalorder %s18, 0
      %p39 = por %p37, %p38
      %p40 = scmp.ne.s32.totalorder %s26, %s27
      %p41 = scmp.eq.s32.totalorder %s19, 1
      %p42 = por %p40, %p41
      %p44 = scmp.ne.s32.totalorder %s27, %s43
      %p45 = scmp.eq.s32.totalorder %s19, 0
      %p46 = por %p44, %p45
      %s48 = sadd.s32 %s47, 1
      %p51 = scmp.eq.s32.totalorder %s13, 1
      %p52 = scmp.ne.s32.totalorder %s47, %s49
      %p53 = scmp.eq.s32.totalorder %s13, 0
      %p54 = por %p52, %p53
      %p55 = scmp.ne.s32.totalorder %s47, %s49
      %p56 = scmp.eq.s32.totalorder %s18, 1
      %p57 = por %p55, %p56
      %p58 = scmp.ne.s32.totalorder %s49, %s50
      %p59 = scmp.eq.s32.totalorder %s18, 0
      %p60 = por %p58, %p59
      %p61 = scmp.ne.s32.totalorder %s49, %s50
      %p62 = scmp.eq.s32.totalorder %s19, 1
      %p63 = por %p61, %p62
      %p65 = scmp.ne.s32.totalorder %s50, %s64
      %p66 = scmp.eq.s32.totalorder %s19, 0
      %p67 = por %p65, %p66
      %s69 = sadd.s32 %s68, 1
      %p72 = scmp.eq.s32.totalorder %s13, 1
      %p73 = scmp.ne.s32.totalorder %s68, %s70
      %p74 = scmp.eq.s32.totalorder %s13, 0
      %p75 = por %p73, %p74
      %p76 = scmp.ne.s32.totalorder %s68, %s70
      %p77 = scmp.eq.s32.totalorder %s18, 1
      %p78 = por %p76, %p77
      %p79 = scmp.ne.s32.totalorder %s70, %s71
      %p80 = scmp.eq.s32.totalorder %s18, 0
      %p81 = por %p79, %p80
      %p82 = scmp.ne.s32.totalorder %s70, %s71
      %p83 = scmp.eq.s32.totalorder %s19, 1
      %p84 = por %p82, %p83
      %p86 = scmp.ne.s32.totalorder %s71, %s85
      %p87 = scmp.eq.s32.totalorder %s19, 0
      %p88 = por %p86, %p87
      %s90 = sadd.s32 %s89, 1
      %p93 = scmp.eq.s32.totalorder %s13, 1
      %p94 = scmp.ne.s32.totalorder %s89, %s91
      %p95 = scmp.eq.s32.totalorder %s13, 0
      %p96 = por %p94, %p95
      %p97 = scmp.ne.s32.totalorder %s89, %s91
      %p98 = scmp.eq.s32.totalorder %s18, 1
      %p99 = por %p97, %p98
      %p100 = scmp.ne.s32.totalorder %s91, %s92
      %p101 = scmp.eq.s32.totalorder %s18, 0
      %p102 = por %p100, %p101
      %p103 = scmp.ne.s32.totalorder %s91, %s92
      %p104 = scmp.eq.s32.totalorder %s19, 1
      %p105 = por %p103, %p104
      %p107 = scmp.ne.s32.totalorder %s92, %s106
      %p108 = scmp.eq.s32.totalorder %s19, 0
      %p109 = por %p107, %p108
      %s111 = sadd.s32 %s110, 1
      %p114 = scmp.eq.s32.totalorder %s13, 1
      %p115 = scmp.ne.s32.totalorder %s110, %s112
      %p116 = scmp.eq.s32.totalorder %s13, 0
      %p117 = por %p115, %p116
      %p118 = scmp.ne.s32.totalorder %s110, %s112
      %p119 = scmp.eq.s32.totalorder %s18, 1
      %p120 = por %p118, %p119
      %p121 = scmp.ne.s32.totalorder %s112, %s113
      %p122 = scmp.eq.s32.totalorder %s18, 0
      %p123 = por %p121, %p122
      %p124 = scmp.ne.s32.totalorder %s112, %s113
      %p125 = scmp.eq.s32.totalorder %s19, 1
      %p126 = por %p124, %p125
      %p128 = scmp.ne.s32.totalorder %s113, %s127
      %p129 = scmp.eq.s32.totalorder %s19, 0
      %p130 = por %p128, %p129
      %s131 = ssub.s32 %s13, %s20
      %p132 = scmp.eq.s32.totalorder %s131, 0
      %s134 = sadd.s32 %s133, 1
      %s135 = scalar_select %p132, %s133, %s134
      %p138 = pneg %p132
      %p139 = scmp.eq.s32.totalorder %s13, 1
      %p140 = por %p138, %p139
      %p141 = scmp.ne.s32.totalorder %s133, %s136
      %p142 = scmp.eq.s32.totalorder %s13, 0
      %p143 = por %p141, %p142
      %p144 = scmp.ne.s32.totalorder %s133, %s136
      %p145 = scmp.eq.s32.totalorder %s18, 1
      %p146 = por %p144, %p145
      %p147 = scmp.ne.s32.totalorder %s136, %s137
      %p148 = scmp.eq.s32.totalorder %s18, 0
      %p149 = por %p147, %p148
      %p150 = scmp.ne.s32.totalorder %s136, %s137
      %p151 = scmp.eq.s32.totalorder %s19, 1
      %p152 = por %p150, %p151
      %p154 = scmp.ne.s32.totalorder %s137, %s153
      %p155 = scmp.eq.s32.totalorder %s19, 0
      %p156 = por %p154, %p155
      %p157 = scmp.le.s32.totalorder 1, %s13
      %p158 = scmp.lt.s32.totalorder %s13, 3
      %p159 = pnand %p157, %p158
      %p160 = pneg %p159
      // Predicated region
      $region9: #{decoder_forward.26} parent=5 // pred_check
        _
      $region10: #{decoder_forward.26} parent=5 // pred_check_branch
        %162 = sbr.rel (%p159) target = $region12
      $region11: #{decoder_forward.26} parent=5 // pred_region
        %s163 = ssub.s32 %s13, 1
        // Predicated region
        $region13: #{decoder_forward.26} parent=11 // pred_check
          %p164 = pneg %p60
        $region14: #{decoder_forward.26} parent=11 // pred_check_branch
          %166 = sbr.rel (%p164) target = $region16
        $region15: #{decoder_forward.26} parent=11 // pred_region
          %s168 = ssub.s32 16, 16
          %169 = vsyncadd [#allocation3], %s168
          %s171 = sshll.u32 [#allocation2], 4
          %s172 = int_to_ptr.vmem [resolvable:$true] %s171
          %174 = dma.hbm_to_vmem [thread:$0]  %s1, 16, %s172, [#allocation3]
        $region16: #{decoder_forward.26} parent=11 // pred_fallthru
          _
        // Predicated region
        $region17: #{decoder_forward.26} parent=11 // pred_check
          %p175 = pneg %p81
        $region18: #{decoder_forward.26} parent=11 // pred_check_branch
          %177 = sbr.rel (%p175) target = $region20
        $region19: #{decoder_forward.26} parent=11 // pred_region
          %s179 = ssub.s32 16, 16
          %180 = vsyncadd [#allocation5], %s179
          %s182 = sshll.u32 [#allocation4], 4
          %s183 = int_to_ptr.vmem [resolvable:$true] %s182
          %185 = dma.hbm_to_vmem [thread:$0]  %s2, 16, %s183, [#allocation5]
        $region20: #{decoder_forward.26} parent=11 // pred_fallthru
          _
        // Predicated region
        $region21: #{decoder_forward.26} parent=11 // pred_check
          %p186 = pneg %p102
        $region22: #{decoder_forward.26} parent=11 // pred_check_branch
          %188 = sbr.rel (%p186) target = $region24
        $region23: #{decoder_forward.26} parent=11 // pred_region
          _
        $region24: #{decoder_forward.26} parent=11 // pred_fallthru
          _
        // Predicated region
        $region25: #{decoder_forward.26} parent=11 // pred_check
          %p189 = pneg %p123
        $region26: #{decoder_forward.26} parent=11 // pred_check_branch
          %191 = sbr.rel (%p189) target = $region28
        $region27: #{decoder_forward.26} parent=11 // pred_region
          _
        $region28: #{decoder_forward.26} parent=11 // pred_fallthru
          _
      $region12: #{decoder_forward.26} parent=5 // pred_fallthru
        _
      %p192 = scmp.lt.s32.totalorder %s13, 2
      // Predicated region
      $region29: #{decoder_forward.26} parent=5 // pred_check
        %p193 = pneg %p192
      $region30: #{decoder_forward.26} parent=5 // pred_check_branch
        %195 = sbr.rel (%p193) target = $region32
      $region31: #{decoder_forward.26} parent=5 // pred_region
        // Predicated region
        $region33: #{decoder_forward.26} parent=31 // pred_check
          %p196 = pneg %p33
        $region34: #{decoder_forward.26} parent=31 // pred_check_branch
          %198 = sbr.rel (%p196) target = $region36
        $region35: #{decoder_forward.26} parent=31 // pred_region
          %p199 = scmp.lt.s32.totalorder %s13, 1
          %s200 = scalar_select %p199, %s13, 1
          %s201 = smul.addr %s200, 8
          %s202 = smul.addr %s201, 8
          %s203 = scalar_lea.vmem %s0, %s202
        $region36: #{decoder_forward.26} parent=31 // pred_fallthru
          _
      $region32: #{decoder_forward.26} parent=5 // pred_fallthru
        _
      %p204 = scmp.le.s32.totalorder 1, %s13
      %p205 = scmp.lt.s32.totalorder %s13, 3
      %p206 = pnand %p204, %p205
      %p207 = pneg %p206
      // Predicated region
      $region37: #{decoder_forward.26} parent=5 // pred_check
        _
      $region38: #{decoder_forward.26} parent=5 // pred_check_branch
        %209 = sbr.rel (%p206) target = $region40
      $region39: #{decoder_forward.26} parent=5 // pred_region
        %s210 = ssub.s32 %s13, 1
        // Predicated region
        $region41: #{decoder_forward.26} parent=39 // pred_check
          %p211 = pneg %p60
        $region42: #{decoder_forward.26} parent=39 // pred_check_branch
          %213 = sbr.rel (%p211) target = $region44
        $region43: #{decoder_forward.26} parent=39 // pred_region
          %214 = dma.done [#allocation3], 16
        $region44: #{decoder_forward.26} parent=39 // pred_fallthru
          _
        // Predicated region
        $region45: #{decoder_forward.26} parent=39 // pred_check
          %p215 = pneg %p81
        $region46: #{decoder_forward.26} parent=39 // pred_check_branch
          %217 = sbr.rel (%p215) target = $region48
        $region47: #{decoder_forward.26} parent=39 // pred_region
          %218 = dma.done [#allocation5], 16
        $region48: #{decoder_forward.26} parent=39 // pred_fallthru
          _
        %p219 = scmp.lt.s32.totalorder %s18, 1
        %s220 = scalar_select %p219, %s18, 1
        %s221 = smul.addr %s220, 8
        %s222 = smul.addr %s221, 8
        %s223 = scalar_lea.vmem %s0, %s222
        %p224 = pneg %p39
        %p225 = pneg %p36
        %p226 = pneg %p60
        %p227 = pneg %p57
        %p228 = pneg %p81
        %p229 = pneg %p78
        %p230 = pneg %p102
        %p231 = pneg %p99
        %p232 = pneg %p123
        %p233 = pneg %p120
        %p234 = pneg %p149
        %p235 = pneg %p146
        %p236 = scmp.lt.s32.totalorder %s18, 1
        %s237 = scalar_select %p236, %s18, 1
        %s238 = smul.addr %s237, 8
        %s239 = smul.addr %s238, 8
        %s240 = scalar_lea.vmem %s5, %s239
        %p241 = scmp.lt.s32.totalorder %s18, 1
        %s242 = scalar_select %p241, %s18, 1
        %s243 = smul.addr %s242, 8
        %s244 = smul.addr %s243, 8
        %s245 = scalar_lea.vmem %s0, %s244
        %p246 = scmp.lt.s32.totalorder %s18, 1
        %s247 = scalar_select %p246, %s18, 1
        %s248 = smul.addr %s247, 8
        %s249 = smul.addr %s248, 8
        %s250 = scalar_lea.vmem %s5, %s249
        %v251 = vld [vmem:[%s245] sm:$0xff]
        %v252 = vld [vmem:[%s245 + $0x8] sm:$0xff]
        %v253 = vld [vmem:[%s245 + $0x10] sm:$0xff]
        %v254 = vld [vmem:[%s245 + $0x18] sm:$0xff]
        %v255 = vld [vmem:[%s245 + $0x20] sm:$0xff]
        %v256 = vld [vmem:[%s245 + $0x28] sm:$0xff]
        %v257 = vld [vmem:[%s245 + $0x30] sm:$0xff]
        %v258 = vld [vmem:[%s245 + $0x38] sm:$0xff]
        %v259 = vld [vmem:[%s3] sm:$0xff]
        %v260 = vld [vmem:[%s3 + $0x8] sm:$0xff]
        %v261 = vld [vmem:[%s3 + $0x10] sm:$0xff]
        %v262 = vld [vmem:[%s3 + $0x18] sm:$0xff]
        %v263 = vld [vmem:[%s3 + $0x20] sm:$0xff]
        %v264 = vld [vmem:[%s3 + $0x28] sm:$0xff]
        %v265 = vld [vmem:[%s3 + $0x30] sm:$0xff]
        %v266 = vld [vmem:[%s3 + $0x38] sm:$0xff]
        %v267 = vld [vmem:[%s4] sm:$0xff]
        %v268 = vld [vmem:[%s4 + $0x8] sm:$0xff]
        %v269 = vld [vmem:[%s4 + $0x10] sm:$0xff]
        %v270 = vld [vmem:[%s4 + $0x18] sm:$0xff]
        %vm271 = vcmask 523264
        %v272 = vsel %vm271, %v251, 0.0
        %v273 = vsel %vm271, %v252, 0.0
        %v274 = vadd.f32 %v272, %v273
        %v275 = vsel %vm271, %v253, 0.0
        %v276 = vadd.f32 %v274, %v275
        %v277 = vsel %vm271, %v254, 0.0
        %v278 = vadd.f32 %v276, %v277
        %v279 = vsel %vm271, %v255, 0.0
        %v280 = vadd.f32 %v278, %v279
        %v281 = vsel %vm271, %v256, 0.0
        %v282 = vadd.f32 %v280, %v281
        %v283 = vsel %vm271, %v257, 0.0
        %v284 = vadd.f32 %v282, %v283
        %v285 = vsel %vm271, %v258, 0.0
        %v286 = vadd.f32 %v284, %v285
        %v287 = vrot.slane %v286, 4
        %v288 = vadd.f32 %v286, %v287
        %v289 = vrot.slane %v288, 2
        %v290 = vadd.f32 %v288, %v289
        %v291 = vrot.slane %v290, 1
        %v292 = vadd.f32 %v290, %v291
        %v293 = vmul.f32 %v251, %v251
        %v294 = vmul.f32 %v252, %v252
        %v295 = vmul.f32 %v253, %v253
        %v296 = vmul.f32 %v254, %v254
        %v297 = vmul.f32 %v255, %v255
        %v298 = vmul.f32 %v256, %v256
        %v299 = vmul.f32 %v257, %v257
        %v300 = vmul.f32 %v258, %v258
        %v301 = vsel %vm271, %v293, 0.0
        %v302 = vsel %vm271, %v294, 0.0
        %v303 = vadd.f32 %v301, %v302
        %v304 = vsel %vm271, %v295, 0.0
        %v305 = vadd.f32 %v303, %v304
        %v306 = vsel %vm271, %v296, 0.0
        %v307 = vadd.f32 %v305, %v306
        %v308 = vsel %vm271, %v297, 0.0
        %v309 = vadd.f32 %v307, %v308
        %v310 = vsel %vm271, %v298, 0.0
        %v311 = vadd.f32 %v309, %v310
        %v312 = vsel %vm271, %v299, 0.0
        %v313 = vadd.f32 %v311, %v312
        %v314 = vsel %vm271, %v300, 0.0
        %v315 = vadd.f32 %v313, %v314
        %v316 = vrot.slane %v315, 4
        %v317 = vadd.f32 %v315, %v316
        %v318 = vrot.slane %v317, 2
        %v319 = vadd.f32 %v317, %v318
        %v320 = vrot.slane %v319, 1
        %v321 = vadd.f32 %v319, %v320
        %v323 = vsel %vm271, %v292, 0
        %325 = vmatprep.subr.mxu0 0.0
        %326 = vmatpush1.msra.mxu0 %v259
        %327 = vmatprep.subr.mxu0 0.0
        %328 = vmatpush1.msra.mxu0 %v260
        %329 = vmatprep.subr.mxu0 0.0
        %330 = vmatpush1.msra.mxu0 %v261
        %331 = vmatprep.subr.mxu0 0.0
        %332 = vmatpush1.msra.mxu0 %v262
        %333 = vmatprep.subr.mxu0 0.0
        %334 = vmatpush1.msra.mxu0 %v263
        %335 = vmatprep.subr.mxu0 0.0
        %336 = vmatpush1.msra.mxu0 %v264
        %337 = vmatprep.subr.mxu0 0.0
        %338 = vmatpush1.msra.mxu0 %v265
        %339 = vmatprep.subr.mxu0 0.0
        %340 = vmatpush1.msra.mxu0 %v266
        %341 = vmatprep.subr.mxu0 0.0
        %342 = vmatpush1.msra.mxu0 0.0
        %343 = vmatprep.subr.mxu0 0.0
        %344 = vmatpush1.msra.mxu0 0.0
        %345 = vmatprep.subr.mxu0 0.0
        %346 = vmatpush1.msra.mxu0 0.0
        %347 = vmatprep.subr.mxu0 0.0
        %348 = vmatpush1.msra.mxu0 0.0
        %349 = vmatprep.subr.mxu0 0.0
        %350 = vmatpush1.msra.mxu0 0.0
        %351 = vmatprep.subr.mxu0 0.0
        %352 = vmatpush1.msra.mxu0 0.0
        %353 = vmatprep.subr.mxu0 0.0
        %354 = vmatpush1.msra.mxu0 0.0
        %355 = vmatprep.subr.mxu0 0.0
        %356 = vmatpush1.msra.mxu0 0.0
        %357 = vmatprep.subr.mxu0 0.0
        %358 = vmatpush1.msra.mxu0 0.0
        %359 = vmatprep.subr.mxu0 0.0
        %360 = vmatpush1.msra.mxu0 0.0
        %361 = vmatprep.subr.mxu0 0.0
        %362 = vmatpush1.msra.mxu0 0.0
        %363 = vmatprep.subr.mxu0 0.0
        %364 = vmatpush1.msra.mxu0 0.0
        %365 = vmatprep.subr.mxu0 0.0
        %366 = vmatpush1.msra.mxu0 0.0
        %367 = vmatprep.subr.mxu0 0.0
        %368 = vmatpush1.msra.mxu0 0.0
        %369 = vmatprep.subr.mxu0 0.0
        %370 = vmatpush1.msra.mxu0 0.0
        %371 = vmatprep.subr.mxu0 0.0
        %372 = vmatpush1.msra.mxu0 0.0
        %373 = vmatprep.subr.mxu0 0.0
        %374 = vmatpush1.msra.mxu0 0.0
        %375 = vmatprep.subr.mxu0 0.0
        %376 = vmatpush1.msra.mxu0 0.0
        %377 = vmatprep.subr.mxu0 0.0
        %378 = vmatpush1.msra.mxu0 0.0
        %379 = vmatprep.subr.mxu0 0.0
        %380 = vmatpush1.msra.mxu0 0.0
        %381 = vmatprep.subr.mxu0 0.0
        %382 = vmatpush1.msra.mxu0 0.0
        %383 = vmatprep.subr.mxu0 0.0
        %384 = vmatpush1.msra.mxu0 0.0
        %385 = vmatprep.subr.mxu0 0.0
        %386 = vmatpush1.msra.mxu0 0.0
        %387 = vmatprep.subr.mxu0 0.0
        %388 = vmatpush1.msra.mxu0 0.0
        %389 = vmatprep.mubr.f32.mxu0 0.0
        %390 = vmatmul.mubr.f32.gmra.mrb[0].mxu0 %v323
        %v391 = vpop.f32.mrb[0].mxu0
        %v392 = vadd.f32 0.0, %v391
        %v393 = vpop.f32.mrb[0].mxu0
        %394 = vdwg.mxu0
        %v395 = vmul.f32 %v392, 0.0078125
        %v397 = vsel %vm271, %v321, 0
        %399 = vmatprep.subr.mxu0 0.0
        %400 = vmatpush1.msra.mxu0 %v259
        %401 = vmatprep.subr.mxu0 0.0
        %402 = vmatpush1.msra.mxu0 %v260
        %403 = vmatprep.subr.mxu0 0.0
        %404 = vmatpush1.msra.mxu0 %v261
        %405 = vmatprep.subr.mxu0 0.0
        %406 = vmatpush1.msra.mxu0 %v262
        %407 = vmatprep.subr.mxu0 0.0
        %408 = vmatpush1.msra.mxu0 %v263
        %409 = vmatprep.subr.mxu0 0.0
        %410 = vmatpush1.msra.mxu0 %v264
        %411 = vmatprep.subr.mxu0 0.0
        %412 = vmatpush1.msra.mxu0 %v265
        %413 = vmatprep.subr.mxu0 0.0
        %414 = vmatpush1.msra.mxu0 %v266
        %415 = vmatprep.subr.mxu0 0.0
        %416 = vmatpush1.msra.mxu0 0.0
        %417 = vmatprep.subr.mxu0 0.0
        %418 = vmatpush1.msra.mxu0 0.0
        %419 = vmatprep.subr.mxu0 0.0
        %420 = vmatpush1.msra.mxu0 0.0
        %421 = vmatprep.subr.mxu0 0.0
        %422 = vmatpush1.msra.mxu0 0.0
        %423 = vmatprep.subr.mxu0 0.0
        %424 = vmatpush1.msra.mxu0 0.0
        %425 = vmatprep.subr.mxu0 0.0
        %426 = vmatpush1.msra.mxu0 0.0
        %427 = vmatprep.subr.mxu0 0.0
        %428 = vmatpush1.msra.mxu0 0.0
        %429 = vmatprep.subr.mxu0 0.0
        %430 = vmatpush1.msra.mxu0 0.0
        %431 = vmatprep.subr.mxu0 0.0
        %432 = vmatpush1.msra.mxu0 0.0
        %433 = vmatprep.subr.mxu0 0.0
        %434 = vmatpush1.msra.mxu0 0.0
        %435 = vmatprep.subr.mxu0 0.0
        %436 = vmatpush1.msra.mxu0 0.0
        %437 = vmatprep.subr.mxu0 0.0
        %438 = vmatpush1.msra.mxu0 0.0
        %439 = vmatprep.subr.mxu0 0.0
        %440 = vmatpush1.msra.mxu0 0.0
        %441 = vmatprep.subr.mxu0 0.0
        %442 = vmatpush1.msra.mxu0 0.0
        %443 = vmatprep.subr.mxu0 0.0
        %444 = vmatpush1.msra.mxu0 0.0
        %445 = vmatprep.subr.mxu0 0.0
        %446 = vmatpush1.msra.mxu0 0.0
        %447 = vmatprep.subr.mxu0 0.0
        %448 = vmatpush1.msra.mxu0 0.0
        %449 = vmatprep.subr.mxu0 0.0
        %450 = vmatpush1.msra.mxu0 0.0
        %451 = vmatprep.subr.mxu0 0.0
        %452 = vmatpush1.msra.mxu0 0.0
        %453 = vmatprep.subr.mxu0 0.0
        %454 = vmatpush1.msra.mxu0 0.0
        %455 = vmatprep.subr.mxu0 0.0
        %456 = vmatpush1.msra.mxu0 0.0
        %457 = vmatprep.subr.mxu0 0.0
        %458 = vmatpush1.msra.mxu0 0.0
        %459 = vmatprep.subr.mxu0 0.0
        %460 = vmatpush1.msra.mxu0 0.0
        %461 = vmatprep.subr.mxu0 0.0
        %462 = vmatpush1.msra.mxu0 0.0
        %463 = vmatprep.mubr.f32.mxu0 0.0
        %464 = vmatmul.mubr.f32.gmra.mrb[0].mxu0 %v397
        %v465 = vpop.f32.mrb[0].mxu0
        %v466 = vadd.f32 0.0, %v465
        %v467 = vpop.f32.mrb[0].mxu0
        %468 = vdwg.mxu0
        %v469 = vmul.f32 %v466, 0.0078125
        %v470 = vmul.f32 %v395, %v395
        %v471 = vsub.f32 %v469, %v470
        %v472 = vadd.f32 %v471, 1e-05
        %v473 = vrsqrt.pop %v472
        %vm474 = vcmask 261120
        %v476 = vsel %vm474, %v395, 0
        %478 = vmatprep.subr.mxu0 0.0
        %479 = vmatpush1.msra.mxu0 %v267
        %480 = vmatprep.subr.mxu0 0.0
        %481 = vmatpush1.msra.mxu0 %v268
        %482 = vmatprep.subr.mxu0 0.0
        %483 = vmatpush1.msra.mxu0 %v269
        %484 = vmatprep.subr.mxu0 0.0
        %485 = vmatpush1.msra.mxu0 %v270
        %486 = vmatprep.subr.mxu0 0.0
        %487 = vmatpush1.msra.mxu0 0.0
        %488 = vmatprep.subr.mxu0 0.0
        %489 = vmatpush1.msra.mxu0 0.0
        %490 = vmatprep.subr.mxu0 0.0
        %491 = vmatpush1.msra.mxu0 0.0
        %492 = vmatprep.subr.mxu0 0.0
        %493 = vmatpush1.msra.mxu0 0.0
        %494 = vmatprep.subr.mxu0 0.0
        %495 = vmatpush1.msra.mxu0 0.0
        %496 = vmatprep.subr.mxu0 0.0
        %497 = vmatpush1.msra.mxu0 0.0
        %498 = vmatprep.subr.mxu0 0.0
        %499 = vmatpush1.msra.mxu0 0.0
        %500 = vmatprep.subr.mxu0 0.0
        %501 = vmatpush1.msra.mxu0 0.0
        %502 = vmatprep.subr.mxu0 0.0
        %503 = vmatpush1.msra.mxu0 0.0
        %504 = vmatprep.subr.mxu0 0.0
        %505 = vmatpush1.msra.mxu0 0.0
        %506 = vmatprep.subr.mxu0 0.0
        %507 = vmatpush1.msra.mxu0 0.0
        %508 = vmatprep.subr.mxu0 0.0
        %509 = vmatpush1.msra.mxu0 0.0
        %510 = vmatprep.subr.mxu0 0.0
        %511 = vmatpush1.msra.mxu0 0.0
        %512 = vmatprep.subr.mxu0 0.0
        %513 = vmatpush1.msra.mxu0 0.0
        %514 = vmatprep.subr.mxu0 0.0
        %515 = vmatpush1.msra.mxu0 0.0
        %516 = vmatprep.subr.mxu0 0.0
        %517 = vmatpush1.msra.mxu0 0.0
        %518 = vmatprep.subr.mxu0 0.0
        %519 = vmatpush1.msra.mxu0 0.0
        %520 = vmatprep.subr.mxu0 0.0
        %521 = vmatpush1.msra.mxu0 0.0
        %522 = vmatprep.subr.mxu0 0.0
        %523 = vmatpush1.msra.mxu0 0.0
        %524 = vmatprep.subr.mxu0 0.0
        %525 = vmatpush1.msra.mxu0 0.0
        %526 = vmatprep.subr.mxu0 0.0
        %527 = vmatpush1.msra.mxu0 0.0
        %528 = vmatprep.subr.mxu0 0.0
        %529 = vmatpush1.msra.mxu0 0.0
        %530 = vmatprep.subr.mxu0 0.0
        %531 = vmatpush1.msra.mxu0 0.0
        %532 = vmatprep.subr.mxu0 0.0
        %533 = vmatpush1.msra.mxu0 0.0
        %534 = vmatprep.subr.mxu0 0.0
        %535 = vmatpush1.msra.mxu0 0.0
        %536 = vmatprep.subr.mxu0 0.0
        %537 = vmatpush1.msra.mxu0 0.0
        %538 = vmatprep.subr.mxu0 0.0
        %539 = vmatpush1.msra.mxu0 0.0
        %540 = vmatprep.subr.mxu0 0.0
        %541 = vmatpush1.msra.mxu0 0.0
        %542 = vmatprep.mubr.f32.mxu0 0.0
        %543 = vmatmul.mubr.f32.gmra.mrb[0].mxu0 %v476
        %v544 = vpop.f32.mrb[0].mxu0
        %v545 = vadd.f32 0.0, %v544
        %v546 = vpop.f32.mrb[0].mxu0
        %547 = vdwg.mxu0
        %v549 = vsel %vm474, %v473, 0
        %551 = vmatprep.subr.mxu0 0.0
        %552 = vmatpush1.msra.mxu0 %v267
        %553 = vmatprep.subr.mxu0 0.0
        %554 = vmatpush1.msra.mxu0 %v268
        %555 = vmatprep.subr.mxu0 0.0
        %556 = vmatpush1.msra.mxu0 %v269
        %557 = vmatprep.subr.mxu0 0.0
        %558 = vmatpush1.msra.mxu0 %v270
        %559 = vmatprep.subr.mxu0 0.0
        %560 = vmatpush1.msra.mxu0 0.0
        %561 = vmatprep.subr.mxu0 0.0
        %562 = vmatpush1.msra.mxu0 0.0
        %563 = vmatprep.subr.mxu0 0.0
        %564 = vmatpush1.msra.mxu0 0.0
        %565 = vmatprep.subr.mxu0 0.0
        %566 = vmatpush1.msra.mxu0 0.0
        %567 = vmatprep.subr.mxu0 0.0
        %568 = vmatpush1.msra.mxu0 0.0
        %569 = vmatprep.subr.mxu0 0.0
        %570 = vmatpush1.msra.mxu0 0.0
        %571 = vmatprep.subr.mxu0 0.0
        %572 = vmatpush1.msra.mxu0 0.0
        %573 = vmatprep.subr.mxu0 0.0
        %574 = vmatpush1.msra.mxu0 0.0
        %575 = vmatprep.subr.mxu0 0.0
        %576 = vmatpush1.msra.mxu0 0.0
        %577 = vmatprep.subr.mxu0 0.0
        %578 = vmatpush1.msra.mxu0 0.0
        %579 = vmatprep.subr.mxu0 0.0
        %580 = vmatpush1.msra.mxu0 0.0
        %581 = vmatprep.subr.mxu0 0.0
        %582 = vmatpush1.msra.mxu0 0.0
        %583 = vmatprep.subr.mxu0 0.0
        %584 = vmatpush1.msra.mxu0 0.0
        %585 = vmatprep.subr.mxu0 0.0
        %586 = vmatpush1.msra.mxu0 0.0
        %587 = vmatprep.subr.mxu0 0.0
        %588 = vmatpush1.msra.mxu0 0.0
        %589 = vmatprep.subr.mxu0 0.0
        %590 = vmatpush1.msra.mxu0 0.0
        %591 = vmatprep.subr.mxu0 0.0
        %592 = vmatpush1.msra.mxu0 0.0
        %593 = vmatprep.subr.mxu0 0.0
        %594 = vmatpush1.msra.mxu0 0.0
        %595 = vmatprep.subr.mxu0 0.0
        %596 = vmatpush1.msra.mxu0 0.0
        %597 = vmatprep.subr.mxu0 0.0
        %598 = vmatpush1.msra.mxu0 0.0
        %599 = vmatprep.subr.mxu0 0.0
        %600 = vmatpush1.msra.mxu0 0.0
        %601 = vmatprep.subr.mxu0 0.0
        %602 = vmatpush1.msra.mxu0 0.0
        %603 = vmatprep.subr.mxu0 0.0
        %604 = vmatpush1.msra.mxu0 0.0
        %605 = vmatprep.subr.mxu0 0.0
        %606 = vmatpush1.msra.mxu0 0.0
        %607 = vmatprep.subr.mxu0 0.0
        %608 = vmatpush1.msra.mxu0 0.0
        %609 = vmatprep.subr.mxu0 0.0
        %610 = vmatpush1.msra.mxu0 0.0
        %611 = vmatprep.subr.mxu0 0.0
        %612 = vmatpush1.msra.mxu0 0.0
        %613 = vmatprep.subr.mxu0 0.0
        %614 = vmatpush1.msra.mxu0 0.0
        %615 = vmatprep.mubr.f32.mxu0 0.0
        %616 = vmatmul.mubr.f32.gmra.mrb[0].mxu0 %v549
        %v617 = vpop.f32.mrb[0].mxu0
        %v618 = vadd.f32 0.0, %v617
        %v619 = vpop.f32.mrb[0].mxu0
        %620 = vdwg.mxu0
        %v621 = vlaneseq
        %v622 = vshrl.u32 %v621, 7
        %v623 = vsub.s32 0, %v622
        %v624 = vrot.slane %v545, %v623
        %v625 = vsub.f32 %v251, %v624
        %v626 = vsub.f32 %v252, %v624
        %v627 = vsub.f32 %v253, %v624
        %v628 = vsub.f32 %v254, %v624
        %v629 = vsub.f32 %v255, %v624
        %v630 = vsub.f32 %v256, %v624
        %v631 = vsub.f32 %v257, %v624
        %v632 = vsub.f32 %v258, %v624
        %v633 = vlaneseq
        %v634 = vshrl.u32 %v633, 7
        %v635 = vsub.s32 0, %v634
        %v636 = vrot.slane %v618, %v635
        %v637 = vmul.f32 %v625, %v636
        %v638 = vmul.f32 %v626, %v636
        %v639 = vmul.f32 %v627, %v636
        %v640 = vmul.f32 %v628, %v636
        %v641 = vmul.f32 %v629, %v636
        %v642 = vmul.f32 %v630, %v636
        %v643 = vmul.f32 %v631, %v636
        %v644 = vmul.f32 %v632, %v636
        %v645 = vld [vmem:[#allocation2] sm:$0x1]
        %v647 = vlaneseq
        %v648 = vshrl.u32 %v647, 7
        %v649 = vsub.s32 0, %v648
        %v650 = vrot.slane %v645, %v649
        %v652 = vmul.f32 %v637, %v650
        %v653 = vmul.f32 %v638, %v650
        %v654 = vmul.f32 %v639, %v650
        %v655 = vmul.f32 %v640, %v650
        %v656 = vmul.f32 %v641, %v650
        %v657 = vmul.f32 %v642, %v650
        %v658 = vmul.f32 %v643, %v650
        %v659 = vmul.f32 %v644, %v650
        %v660 = vld [vmem:[#allocation4] sm:$0x1]
        %v662 = vlaneseq
        %v663 = vshrl.u32 %v662, 7
        %v664 = vsub.s32 0, %v663
        %v665 = vrot.slane %v660, %v664
        %v667 = vadd.f32 %v652, %v665
        %v668 = vadd.f32 %v653, %v665
        %v669 = vadd.f32 %v654, %v665
        %v670 = vadd.f32 %v655, %v665
        %v671 = vadd.f32 %v656, %v665
        %v672 = vadd.f32 %v657, %v665
        %v673 = vadd.f32 %v658, %v665
        %v674 = vadd.f32 %v659, %v665
        %v675 = vxor.u32 %v667, 2147483648
        %v676 = vxor.u32 %v668, 2147483648
        %v677 = vxor.u32 %v669, 2147483648
        %v678 = vxor.u32 %v670, 2147483648
        %v679 = vxor.u32 %v671, 2147483648
        %v680 = vxor.u32 %v672, 2147483648
        %v681 = vxor.u32 %v673, 2147483648
        %v682 = vxor.u32 %v674, 2147483648
        %v683 = vmul.f32 %v675, 1.442695
        %v684 = vpow.pop %v683
        %v685 = vmul.f32 %v676, 1.442695
        %v686 = vpow.pop %v685
        %v687 = vmul.f32 %v677, 1.442695
        %v688 = vpow.pop %v687
        %v689 = vmul.f32 %v678, 1.442695
        %v690 = vpow.pop %v689
        %v691 = vmul.f32 %v679, 1.442695
        %v692 = vpow.pop %v691
        %v693 = vmul.f32 %v680, 1.442695
        %v694 = vpow.pop %v693
        %v695 = vmul.f32 %v681, 1.442695
        %v696 = vpow.pop %v695
        %v697 = vmul.f32 %v682, 1.442695
        %v698 = vpow.pop %v697
        %v699 = vadd.f32 %v684, 1.0
        %v700 = vadd.f32 %v686, 1.0
        %v701 = vadd.f32 %v688, 1.0
        %v702 = vadd.f32 %v690, 1.0
        %v703 = vadd.f32 %v692, 1.0
        %v704 = vadd.f32 %v694, 1.0
        %v705 = vadd.f32 %v696, 1.0
        %v706 = vadd.f32 %v698, 1.0
        %v707 = vrcp.pop %v699
        %v708 = vmul.f32 1.0, %v707
        %v709 = vrcp.pop %v700
        %v710 = vmul.f32 1.0, %v709
        %v711 = vrcp.pop %v701
        %v712 = vmul.f32 1.0, %v711
        %v713 = vrcp.pop %v702
        %v714 = vmul.f32 1.0, %v713
        %v715 = vrcp.pop %v703
        %v716 = vmul.f32 1.0, %v715
        %v717 = vrcp.pop %v704
        %v718 = vmul.f32 1.0, %v717
        %v719 = vrcp.pop %v705
        %v720 = vmul.f32 1.0, %v719
        %v721 = vrcp.pop %v706
        %v722 = vmul.f32 1.0, %v721
        %v723 = vmul.f32 %v667, %v708
        %v724 = vmul.f32 %v668, %v710
        %v725 = vmul.f32 %v669, %v712
        %v726 = vmul.f32 %v670, %v714
        %v727 = vmul.f32 %v671, %v716
        %v728 = vmul.f32 %v672, %v718
        %v729 = vmul.f32 %v673, %v720
        %v730 = vmul.f32 %v674, %v722
        %731 = vst.msk [vmem:[%s250] sm:$0xff] %vm271, %v723
        %732 = vst.msk [vmem:[%s250 + $0x8] sm:$0xff] %vm271, %v724
        %733 = vst.msk [vmem:[%s250 + $0x10] sm:$0xff] %vm271, %v725
        %734 = vst.msk [vmem:[%s250 + $0x18] sm:$0xff] %vm271, %v726
        %735 = vst.msk [vmem:[%s250 + $0x20] sm:$0xff] %vm271, %v727
        %736 = vst.msk [vmem:[%s250 + $0x28] sm:$0xff] %vm271, %v728
        %737 = vst.msk [vmem:[%s250 + $0x30] sm:$0xff] %vm271, %v729
        %738 = vst.msk [vmem:[%s250 + $0x38] sm:$0xff] %vm271, %v730
        %p739 = scmp.lt.s32.totalorder %s18, 1
        %s740 = scalar_select %p739, %s18, 1
        %s741 = smul.addr %s740, 8
        %s742 = smul.addr %s741, 8
        %s743 = scalar_lea.vmem %s5, %s742
        // Predicated region
        $region49: #{decoder_forward.26} parent=39 // pred_check
          %p744 = pneg %p146
        $region50: #{decoder_forward.26} parent=39 // pred_check_branch
          %746 = sbr.rel (%p744) target = $region52
        $region51: #{decoder_forward.26} parent=39 // pred_region
          _
        $region52: #{decoder_forward.26} parent=39 // pred_fallthru
          _
      $region40: #{decoder_forward.26} parent=5 // pred_fallthru
        _
      %p747 = scmp.le.s32.totalorder 2, %s13
      // Predicated region
      $region53: #{decoder_forward.26} parent=5 // pred_check
        %p748 = pneg %p747
      $region54: #{decoder_forward.26} parent=5 // pred_check_branch
        %750 = sbr.rel (%p748) target = $region56
      $region55: #{decoder_forward.26} parent=5 // pred_region
        %s751 = ssub.s32 %s13, 2
        // Predicated region
        $region57: #{decoder_forward.26} parent=55 // pred_check
          %p752 = pneg %p152
        $region58: #{decoder_forward.26} parent=55 // pred_check_branch
          %754 = sbr.rel (%p752) target = $region60
        $region59: #{decoder_forward.26} parent=55 // pred_region
          %p755 = scmp.lt.s32.totalorder %s19, 1
          %s756 = scalar_select %p755, %s19, 1
          %s757 = smul.addr %s756, 8
          %s758 = smul.addr %s757, 8
          %s759 = scalar_lea.vmem %s5, %s758
        $region60: #{decoder_forward.26} parent=55 // pred_fallthru
          _
      $region56: #{decoder_forward.26} parent=5 // pred_fallthru
        _
    $region6: #{decoder_forward.26} parent=1 // loop_footer
      %s17 = sadd.s32 1, %s13
    $region7: #{decoder_forward.26} parent=1 // loop_footer_branch
      %12 = sbr.rel target = $region3
    $region8: #{decoder_forward.26} parent=1 // loop_exit
      _
    %760 = vsyncpa [#allocation3], 1
    %s761 = scalar_lea.sflag [#allocation3], 1
    %762 = vsyncpa %s761, 1
    %763 = vsyncpa [#allocation5], 1

// kernel: decoder_forward.27
$region0: #{decoder_forward.27}
  #allocation0 [shape = 'u32[]', space=smem, size = 0x4, offset = 0x4, fixed_abs, tag = 'smem constant byte address 0x4 - core index']
  #allocation1 [shape = 'u32[144,128]{1,0:T(1,128)}', space=vmem, size = 0x12000, scoped, tag = 'internal scratch']
  #allocation2 [shape = 'f32[128,128]{1,0:T(8,128)}', space=vmem, size = 0x10000, scoped, tag = 'scratch operand']
  %s0 = inlined_call_operand.vmem [shape: bf16[128,640], index: 0, kind: input, shape index: {}]
  %s1 = inlined_call_operand.vmem [shape: bf16[640,128], index: 1, kind: input, shape index: {}]
  %s2 = inlined_call_operand.vmem [shape: f32[1,128], index: 2, kind: input, shape index: {}]
  %s3 = inlined_call_operand.vmem [shape: f32[128,128], index: 3, kind: output, shape index: {}]
  %s4 = sld [smem:[#allocation0]]
  $region94: #{decoder_forward.27} parent=0
    _
  %s6 = ssub.s32 1, %s4
  %s7 = scalar_select 0, %s6, %s4
  $region1: #{decoder_forward.27} parent=0
    #allocation3 [shape = 'u8[65536]{0}', space=vmem, size = 0x10000, scoped, tag = 'input window, operand 0']
    loop: start=0, step=1, limit=7
    $region2: #{decoder_forward.27} parent=1 // loop_pre_header
      _
    $region3: #{decoder_forward.27} parent=1 // loop_header
      %s9 = sphi 0, %s13
      %p10 = scmp.ge.s32.totalorder %s9, 7
      %s16 = sphi 0, %s35
      %s17 = sphi 0, %s31
      %s18 = sphi 0, %s27
      %s19 = sphi 0, %s16
      %s20 = sphi 0, %s17
      %s21 = sphi 0, %s18
      %s22 = sphi 0, %s19
      %s23 = sphi 0, %s20
      %s24 = sphi 0, %s21
      %s40 = sphi 0, %s42
      %s43 = sphi 0, %s40
      %s44 = sphi 0, %s43
      %s60 = sphi 0, %s44
      %s68 = sphi 0, %s70
      %s71 = sphi 0, %s68
      %s72 = sphi 0, %s71
      %s88 = sphi 0, %s72
      %s94 = sphi 0, %s96
      %s97 = sphi 0, %s94
      %s98 = sphi 0, %s97
      %s114 = sphi 0, %s98
      %s122 = sphi 0, %s124
      %s125 = sphi 0, %s122
      %s126 = sphi 0, %s125
      %s142 = sphi 0, %s126
    $region4: #{decoder_forward.27} parent=1 // loop_header_branch
      %12 = sbr.rel (%p10) target = $region8
    $region5: #{decoder_forward.27} parent=1 // loop_body
      %s14 = ssub.s32 %s9, 1
      %s15 = ssub.s32 %s9, 2
      %s25 = sadd.s32 1, %s18
      %p26 = scmp.ge.s32.totalorder %s25, 5
      %s27 = scalar_select %p26, 0, %s25
      %s28 = sadd.s32 1, %s17
      %s29 = scalar_select %p26, %s28, %s17
      %p30 = scmp.ge.s32.totalorder %s29, 1
      %s31 = scalar_select %p30, 0, %s29
      %s32 = sadd.s32 1, %s16
      %s33 = scalar_select %p30, %s32, %s16
      %p34 = scmp.ge.s32.totalorder %s33, 1
      %s35 = scalar_select %p34, 0, %s33
      %s36 = ssub.s32 %s16, %s35
      %s37 = ssub.s32 %s18, %s27
      %s38 = sor.u32 %s36, %s37
      %p39 = scmp.eq.s32.totalorder %s38, 0
      %s41 = sadd.s32 %s40, 1
      %s42 = scalar_select %p39, %s40, %s41
      %p45 = pneg %p39
      %p46 = scmp.eq.s32.totalorder %s9, 4
      %p47 = por %p45, %p46
      %p48 = scmp.ne.s32.totalorder %s40, %s43
      %p49 = scmp.eq.s32.totalorder %s9, 0
      %p50 = por %p48, %p49
      %p51 = scmp.ne.s32.totalorder %s40, %s43
      %p52 = scmp.eq.s32.totalorder %s14, 4
      %p53 = por %p51, %p52
      %p54 = scmp.ne.s32.totalorder %s43, %s44
      %p55 = scmp.eq.s32.totalorder %s14, 0
      %p56 = por %p54, %p55
      %p57 = scmp.ne.s32.totalorder %s43, %s44
      %p58 = scmp.eq.s32.totalorder %s15, 4
      %p59 = por %p57, %p58
      %p61 = scmp.ne.s32.totalorder %s44, %s60
      %p62 = scmp.eq.s32.totalorder %s15, 0
      %p63 = por %p61, %p62
      %s64 = ssub.s32 %s18, %s27
      %s65 = ssub.s32 %s17, %s31
      %s66 = sor.u32 %s64, %s65
      %p67 = scmp.eq.s32.totalorder %s66, 0
      %s69 = sadd.s32 %s68, 1
      %s70 = scalar_select %p67, %s68, %s69
      %p73 = pneg %p67
      %p74 = scmp.eq.s32.totalorder %s9, 4
      %p75 = por %p73, %p74
      %p76 = scmp.ne.s32.totalorder %s68, %s71
      %p77 = scmp.eq.s32.totalorder %s9, 0
      %p78 = por %p76, %p77
      %p79 = scmp.ne.s32.totalorder %s68, %s71
      %p80 = scmp.eq.s32.totalorder %s14, 4
      %p81 = por %p79, %p80
      %p82 = scmp.ne.s32.totalorder %s71, %s72
      %p83 = scmp.eq.s32.totalorder %s14, 0
      %p84 = por %p82, %p83
      %p85 = scmp.ne.s32.totalorder %s71, %s72
      %p86 = scmp.eq.s32.totalorder %s15, 4
      %p87 = por %p85, %p86
      %p89 = scmp.ne.s32.totalorder %s72, %s88
      %p90 = scmp.eq.s32.totalorder %s15, 0
      %p91 = por %p89, %p90
      %s92 = ssub.s32 %s17, %s31
      %p93 = scmp.eq.s32.totalorder %s92, 0
      %s95 = sadd.s32 %s94, 1
      %s96 = scalar_select %p93, %s94, %s95
      %p99 = pneg %p93
      %p100 = scmp.eq.s32.totalorder %s9, 4
      %p101 = por %p99, %p100
      %p102 = scmp.ne.s32.totalorder %s94, %s97
      %p103 = scmp.eq.s32.totalorder %s9, 0
      %p104 = por %p102, %p103
      %p105 = scmp.ne.s32.totalorder %s94, %s97
      %p106 = scmp.eq.s32.totalorder %s14, 4
      %p107 = por %p105, %p106
      %p108 = scmp.ne.s32.totalorder %s97, %s98
      %p109 = scmp.eq.s32.totalorder %s14, 0
      %p110 = por %p108, %p109
      %p111 = scmp.ne.s32.totalorder %s97, %s98
      %p112 = scmp.eq.s32.totalorder %s15, 4
      %p113 = por %p111, %p112
      %p115 = scmp.ne.s32.totalorder %s98, %s114
      %p116 = scmp.eq.s32.totalorder %s15, 0
      %p117 = por %p115, %p116
      %s118 = ssub.s32 %s16, %s35
      %s119 = ssub.s32 %s17, %s31
      %s120 = sor.u32 %s118, %s119
      %p121 = scmp.eq.s32.totalorder %s120, 0
      %s123 = sadd.s32 %s122, 1
      %s124 = scalar_select %p121, %s122, %s123
      %p127 = pneg %p121
      %p128 = scmp.eq.s32.totalorder %s9, 4
      %p129 = por %p127, %p128
      %p130 = scmp.ne.s32.totalorder %s122, %s125
      %p131 = scmp.eq.s32.totalorder %s9, 0
      %p132 = por %p130, %p131
      %p133 = scmp.ne.s32.totalorder %s122, %s125
      %p134 = scmp.eq.s32.totalorder %s14, 4
      %p135 = por %p133, %p134
      %p136 = scmp.ne.s32.totalorder %s125, %s126
      %p137 = scmp.eq.s32.totalorder %s14, 0
      %p138 = por %p136, %p137
      %p139 = scmp.ne.s32.totalorder %s125, %s126
      %p140 = scmp.eq.s32.totalorder %s15, 4
      %p141 = por %p139, %p140
      %p143 = scmp.ne.s32.totalorder %s126, %s142
      %p144 = scmp.eq.s32.totalorder %s15, 0
      %p145 = por %p143, %p144
      %p146 = scmp.le.s32.totalorder 1, %s9
      %p147 = scmp.lt.s32.totalorder %s9, 6
      %p148 = pnand %p146, %p147
      %p149 = pneg %p148
      // Predicated region
      $region9: #{decoder_forward.27} parent=5 // pred_check
        _
      $region10: #{decoder_forward.27} parent=5 // pred_check_branch
        %151 = sbr.rel (%p148) target = $region12
      $region11: #{decoder_forward.27} parent=5 // pred_region
        %s152 = ssub.s32 %s9, 1
        // Predicated region
        $region13: #{decoder_forward.27} parent=11 // pred_check
          %p153 = pneg %p110
        $region14: #{decoder_forward.27} parent=11 // pred_check_branch
          %155 = sbr.rel (%p153) target = $region16
        $region15: #{decoder_forward.27} parent=11 // pred_region
          %p156 = scmp.lt.s32.totalorder %s20, 0
          %s157 = scalar_select %p156, %s20, 0
          %s158 = scalar_lea.vmem %s2, %s157
        $region16: #{decoder_forward.27} parent=11 // pred_fallthru
          _
      $region12: #{decoder_forward.27} parent=5 // pred_fallthru
        _
      %p159 = scmp.lt.s32.totalorder %s9, 5
      // Predicated region
      $region17: #{decoder_forward.27} parent=5 // pred_check
        %p160 = pneg %p159
      $region18: #{decoder_forward.27} parent=5 // pred_check_branch
        %162 = sbr.rel (%p160) target = $region20
      $region19: #{decoder_forward.27} parent=5 // pred_region
        // Predicated region
        $region21: #{decoder_forward.27} parent=19 // pred_check
          %p163 = pneg %p50
        $region22: #{decoder_forward.27} parent=19 // pred_check_branch
          %165 = sbr.rel (%p163) target = $region24
        $region23: #{decoder_forward.27} parent=19 // pred_region
          %s166 = sand.u32 %s40, 1
          %s167 = sand.u32 %s40, 1
          %s168 = smul.addr %s167, 64
          %s169 = scalar_lea.vmem [#allocation3], %s168
          %s170 = smul.u32 16, %s16
          %s171 = smul.addr %s170, 5
          %s172 = sadd.s32 %s18, %s171
          %s173 = smul.addr %s172, 4
          %s174 = scalar_lea.vmem %s0, %s173
          // Predicated region
          $region25: #{decoder_forward.27} parent=23 // pred_check
            _
          $region26: #{decoder_forward.27} parent=23 // pred_check_branch
            %176 = sbr.rel (0) target = $region28
          $region27: #{decoder_forward.27} parent=23 // pred_region
            // Predicated region
            $region29: #{decoder_forward.27} parent=27 // pred_check
              _
            $region30: #{decoder_forward.27} parent=27 // pred_check_branch
              %178 = sbr.rel target = $region32
            $region31: #{decoder_forward.27} parent=27 // pred_region
              // Predicated region
              $region44: #{decoder_forward.27} parent=31 // pred_check
                _
              $region45: #{decoder_forward.27} parent=31 // pred_check_branch
                %223 = sbr.rel (0) target = $region47
              $region46: #{decoder_forward.27} parent=31 // pred_region
                loop: start=0, step=1, limit=1
                $region48: #{decoder_forward.27} parent=46 // loop_pre_header
                  _
                $region49: #{decoder_forward.27} parent=46 // loop_header
                  %s225 = sphi 0, %s229
                  %p226 = scmp.ge.s32.totalorder %s225, 1
                  %s230 = sphi %s174, %s174
                  %s231 = sphi %s169, %s169
                $region50: #{decoder_forward.27} parent=46 // loop_header_branch
                  %228 = sbr.rel (%p226) target = $region54
                $region51: #{decoder_forward.27} parent=46 // loop_body
                  _
                $region52: #{decoder_forward.27} parent=46 // loop_footer
                  %s229 = sadd.s32 1, %s225
                $region53: #{decoder_forward.27} parent=46 // loop_footer_branch
                  %224 = sbr.rel target = $region49
                $region54: #{decoder_forward.27} parent=46 // loop_exit
                  _
                loop: start=0, step=1, limit=1
                $region55: #{decoder_forward.27} parent=46 // loop_pre_header
                  _
                $region56: #{decoder_forward.27} parent=46 // loop_header
                  %s234 = sphi 0, %s238
                  %p235 = scmp.ge.s32.totalorder %s234, 1
                  %s239 = sphi %s174, %s174
                  %s240 = sphi %s169, %s169
                $region57: #{decoder_forward.27} parent=46 // loop_header_branch
                  %237 = sbr.rel (%p235) target = $region61
                $region58: #{decoder_forward.27} parent=46 // loop_body
                  %v241 = vld [vmem:[%s239] sm:$0xf]
                  %242 = vst [vmem:[%s240] sm:$0xf] %v241
                  %v243 = vld [vmem:[%s239 + $0x14] sm:$0xf]
                  %244 = vst [vmem:[%s240 + $0x4] sm:$0xf] %v243
                  %v245 = vld [vmem:[%s239 + $0x28] sm:$0xf]
                  %246 = vst [vmem:[%s240 + $0x8] sm:$0xf] %v245
                  %v247 = vld [vmem:[%s239 + $0x3c] sm:$0xf]
                  %248 = vst [vmem:[%s240 + $0xc] sm:$0xf] %v247
                  %v249 = vld [vmem:[%s239 + $0x50] sm:$0xf]
                  %250 = vst [vmem:[%s240 + $0x10] sm:$0xf] %v249
                  %v251 = vld [vmem:[%s239 + $0x64] sm:$0xf]
                  %252 = vst [vmem:[%s240 + $0x14] sm:$0xf] %v251
                  %v253 = vld [vmem:[%s239 + $0x78] sm:$0xf]
                  %254 = vst [vmem:[%s240 + $0x18] sm:$0xf] %v253
                  %v255 = vld [vmem:[%s239 + $0x8c] sm:$0xf]
                  %256 = vst [vmem:[%s240 + $0x1c] sm:$0xf] %v255
                  %v257 = vld [vmem:[%s239 + $0xa0] sm:$0xf]
                  %258 = vst [vmem:[%s240 + $0x20] sm:$0xf] %v257
                  %v259 = vld [vmem:[%s239 + $0xb4] sm:$0xf]
                  %260 = vst [vmem:[%s240 + $0x24] sm:$0xf] %v259
                  %v261 = vld [vmem:[%s239 + $0xc8] sm:$0xf]
                  %262 = vst [vmem:[%s240 + $0x28] sm:$0xf] %v261
                  %v263 = vld [vmem:[%s239 + $0xdc] sm:$0xf]
                  %264 = vst [vmem:[%s240 + $0x2c] sm:$0xf] %v263
                  %v265 = vld [vmem:[%s239 + $0xf0] sm:$0xf]
                  %266 = vst [vmem:[%s240 + $0x30] sm:$0xf] %v265
                  %v267 = vld [vmem:[%s239 + $0x104] sm:$0xf]
                  %268 = vst [vmem:[%s240 + $0x34] sm:$0xf] %v267
                  %v269 = vld [vmem:[%s239 + $0x118] sm:$0xf]
                  %270 = vst [vmem:[%s240 + $0x38] sm:$0xf] %v269
                  %v271 = vld [vmem:[%s239 + $0x12c] sm:$0xf]
                  %272 = vst [vmem:[%s240 + $0x3c] sm:$0xf] %v271
                $region59: #{decoder_forward.27} parent=46 // loop_footer
                  %s238 = sadd.s32 1, %s234
                $region60: #{decoder_forward.27} parent=46 // loop_footer_branch
                  %233 = sbr.rel target = $region56
                $region61: #{decoder_forward.27} parent=46 // loop_exit
                  _
              $region47: #{decoder_forward.27} parent=31 // pred_fallthru
                _
            $region32: #{decoder_forward.27} parent=27 // pred_fallthru
              _
            // Predicated region
            $region33: #{decoder_forward.27} parent=27 // pred_check
              _
            $region34: #{decoder_forward.27} parent=27 // pred_check_branch
              %180 = sbr.rel (0) target = $region36
            $region35: #{decoder_forward.27} parent=27 // pred_region
              loop: start=0, step=1, limit=1
              $region37: #{decoder_forward.27} parent=35 // loop_pre_header
                _
              $region38: #{decoder_forward.27} parent=35 // loop_header
                %s183 = sphi 0, %s187
                %p184 = scmp.ge.s32.totalorder %s183, 1
                %s188 = sphi %s174, %s174
                %s189 = sphi %s169, %s169
              $region39: #{decoder_forward.27} parent=35 // loop_header_branch
                %186 = sbr.rel (%p184) target = $region43
              $region40: #{decoder_forward.27} parent=35 // loop_body
                %v190 = vld [vmem:[%s188] sm:$0xf]
                %191 = vst [vmem:[%s189] sm:$0xf] %v190
                %v192 = vld [vmem:[%s188 + $0x14] sm:$0xf]
                %193 = vst [vmem:[%s189 + $0x4] sm:$0xf] %v192
                %v194 = vld [vmem:[%s188 + $0x28] sm:$0xf]
                %195 = vst [vmem:[%s189 + $0x8] sm:$0xf] %v194
                %v196 = vld [vmem:[%s188 + $0x3c] sm:$0xf]
                %197 = vst [vmem:[%s189 + $0xc] sm:$0xf] %v196
                %v198 = vld [vmem:[%s188 + $0x50] sm:$0xf]
                %199 = vst [vmem:[%s189 + $0x10] sm:$0xf] %v198
                %v200 = vld [vmem:[%s188 + $0x64] sm:$0xf]
                %201 = vst [vmem:[%s189 + $0x14] sm:$0xf] %v200
                %v202 = vld [vmem:[%s188 + $0x78] sm:$0xf]
                %203 = vst [vmem:[%s189 + $0x18] sm:$0xf] %v202
                %v204 = vld [vmem:[%s188 + $0x8c] sm:$0xf]
                %205 = vst [vmem:[%s189 + $0x1c] sm:$0xf] %v204
                %v206 = vld [vmem:[%s188 + $0xa0] sm:$0xf]
                %207 = vst [vmem:[%s189 + $0x20] sm:$0xf] %v206
                %v208 = vld [vmem:[%s188 + $0xb4] sm:$0xf]
                %209 = vst [vmem:[%s189 + $0x24] sm:$0xf] %v208
                %v210 = vld [vmem:[%s188 + $0xc8] sm:$0xf]
                %211 = vst [vmem:[%s189 + $0x28] sm:$0xf] %v210
                %v212 = vld [vmem:[%s188 + $0xdc] sm:$0xf]
                %213 = vst [vmem:[%s189 + $0x2c] sm:$0xf] %v212
                %v214 = vld [vmem:[%s188 + $0xf0] sm:$0xf]
                %215 = vst [vmem:[%s189 + $0x30] sm:$0xf] %v214
                %v216 = vld [vmem:[%s188 + $0x104] sm:$0xf]
                %217 = vst [vmem:[%s189 + $0x34] sm:$0xf] %v216
                %v218 = vld [vmem:[%s188 + $0x118] sm:$0xf]
                %219 = vst [vmem:[%s189 + $0x38] sm:$0xf] %v218
                %v220 = vld [vmem:[%s188 + $0x12c] sm:$0xf]
                %221 = vst [vmem:[%s189 + $0x3c] sm:$0xf] %v220
              $region41: #{decoder_forward.27} parent=35 // loop_footer
                %s187 = sadd.s32 1, %s183
              $region42: #{decoder_forward.27} parent=35 // loop_footer_branch
                %182 = sbr.rel target = $region38
              $region43: #{decoder_forward.27} parent=35 // loop_exit
                _
            $region36: #{decoder_forward.27} parent=27 // pred_fallthru
              _
          $region28: #{decoder_forward.27} parent=23 // pred_fallthru
            _
          %273 = vnop
        $region24: #{decoder_forward.27} parent=19 // pred_fallthru
          _
        // Predicated region
        $region62: #{decoder_forward.27} parent=19 // pred_check
          %p274 = pneg %p78
        $region63: #{decoder_forward.27} parent=19 // pred_check_branch
          %276 = sbr.rel (%p274) target = $region65
        $region64: #{decoder_forward.27} parent=19 // pred_region
          %s277 = smul.u32 16, %s18
          %p278 = scmp.lt.s32.totalorder %s277, 79
          %s279 = scalar_select %p278, %s277, 79
          %p280 = scmp.lt.s32.totalorder %s17, 0
          %s281 = scalar_select %p280, %s17, 0
          %s282 = sadd.s32 %s281, %s279
          %s283 = smul.addr %s282, 4
          %s284 = scalar_lea.vmem %s1, %s283
          %s285 = smul.u32 16, %s18
        $region65: #{decoder_forward.27} parent=19 // pred_fallthru
          _
      $region20: #{decoder_forward.27} parent=5 // pred_fallthru
        _
      %p286 = scmp.le.s32.totalorder 1, %s9
      %p287 = scmp.lt.s32.totalorder %s9, 6
      %p288 = pnand %p286, %p287
      %p289 = pneg %p288
      // Predicated region
      $region66: #{decoder_forward.27} parent=5 // pred_check
        _
      $region67: #{decoder_forward.27} parent=5 // pred_check_branch
        %291 = sbr.rel (%p288) target = $region69
      $region68: #{decoder_forward.27} parent=5 // pred_region
        %s292 = ssub.s32 %s9, 1
        %s293 = sand.u32 %s43, 1
        %s294 = sand.u32 %s43, 1
        %s295 = smul.addr %s294, 64
        %s296 = scalar_lea.vmem [#allocation3], %s295
        // Predicated region
        $region70: #{decoder_forward.27} parent=68 // pred_check
          %p297 = pneg %p56
        $region71: #{decoder_forward.27} parent=68 // pred_check_branch
          %299 = sbr.rel (%p297) target = $region73
        $region72: #{decoder_forward.27} parent=68 // pred_region
          _
        $region73: #{decoder_forward.27} parent=68 // pred_fallthru
          _
        %s300 = sand.u32 %s43, 1
        %s301 = sand.u32 %s43, 1
        %s302 = smul.addr %s301, 64
        %s303 = scalar_lea.vmem [#allocation3], %s302
        %p304 = pneg %p56
        %p305 = pneg %p53
        %s306 = smul.u32 16, %s21
        %p307 = scmp.lt.s32.totalorder %s306, 79
        %s308 = scalar_select %p307, %s306, 79
        %p309 = scmp.lt.s32.totalorder %s20, 0
        %s310 = scalar_select %p309, %s20, 0
        %s311 = sadd.s32 %s310, %s308
        %s312 = smul.addr %s311, 4
        %s313 = scalar_lea.vmem %s1, %s312
        %p314 = pneg %p84
        %p315 = pneg %p81
        %p316 = scmp.lt.s32.totalorder %s20, 0
        %s317 = scalar_select %p316, %s20, 0
        %s318 = scalar_lea.vmem %s2, %s317
        %p319 = pneg %p110
        %p320 = pneg %p107
        %p321 = pneg %p138
        %p322 = pneg %p135
        %s323 = smul.u32 16, %s19
        %p324 = scmp.lt.s32.totalorder %s323, 15
        %s325 = scalar_select %p324, %s323, 15
        %p326 = scmp.lt.s32.totalorder %s20, 0
        %s327 = scalar_select %p326, %s20, 0
        %s328 = sadd.s32 %s327, %s325
        %s329 = smul.addr %s328, 8
        %s330 = scalar_lea.vmem %s3, %s329
        %s331 = smul.u32 16, %s19
        %s332 = smul.u32 16, %s21
        %p333 = scmp.lt.s32.totalorder %s332, 79
        %s334 = scalar_select %p333, %s332, 79
        %p335 = scmp.lt.s32.totalorder %s20, 0
        %s336 = scalar_select %p335, %s20, 0
        %s337 = sadd.s32 %s336, %s334
        %s338 = smul.addr %s337, 4
        %s339 = scalar_lea.vmem %s1, %s338
        %s340 = smul.u32 16, %s21
        %p341 = scmp.lt.s32.totalorder %s20, 0
        %s342 = scalar_select %p341, %s20, 0
        %s343 = scalar_lea.vmem %s2, %s342
        %s344 = smul.u32 16, %s19
        %p345 = scmp.lt.s32.totalorder %s344, 15
        %s346 = scalar_select %p345, %s344, 15
        %p347 = scmp.lt.s32.totalorder %s20, 0
        %s348 = scalar_select %p347, %s20, 0
        %s349 = sadd.s32 %s348, %s346
        %s350 = smul.addr %s349, 8
        %s351 = scalar_lea.vmem %s3, %s350
        %s352 = smul.u32 16, %s19
        %p354 = scmp.eq.s32.totalorder %s21, 0
        // Predicated region
        $region74: #{decoder_forward.27} parent=68 // pred_check
          %p355 = pneg %p354
        $region75: #{decoder_forward.27} parent=68 // pred_check_branch
          %357 = sbr.rel (%p355) target = $region77
        $region76: #{decoder_forward.27} parent=68 // pred_region
          %358 = vst [vmem:[#allocation2] sm:$0xff] 0.0
          %359 = vst [vmem:[#allocation2 + $0x8] sm:$0xff] 0.0
          %360 = vst [vmem:[#allocation2 + $0x10] sm:$0xff] 0.0
          %361 = vst [vmem:[#allocation2 + $0x18] sm:$0xff] 0.0
          %362 = vst [vmem:[#allocation2 + $0x20] sm:$0xff] 0.0
          %363 = vst [vmem:[#allocation2 + $0x28] sm:$0xff] 0.0
          %364 = vst [vmem:[#allocation2 + $0x30] sm:$0xff] 0.0
          %365 = vst [vmem:[#allocation2 + $0x38] sm:$0xff] 0.0
          %366 = vst [vmem:[#allocation2 + $0x40] sm:$0xff] 0.0
          %367 = vst [vmem:[#allocation2 + $0x48] sm:$0xff] 0.0
          %368 = vst [vmem:[#allocation2 + $0x50] sm:$0xff] 0.0
          %369 = vst [vmem:[#allocation2 + $0x58] sm:$0xff] 0.0
          %370 = vst [vmem:[#allocation2 + $0x60] sm:$0xff] 0.0
          %371 = vst [vmem:[#allocation2 + $0x68] sm:$0xff] 0.0
          %372 = vst [vmem:[#allocation2 + $0x70] sm:$0xff] 0.0
          %373 = vst [vmem:[#allocation2 + $0x78] sm:$0xff] 0.0
        $region77: #{decoder_forward.27} parent=68 // pred_fallthru
          _
        %v374 = vld [vmem:[#allocation2] sm:$0xff]
        %v375 = vld [vmem:[#allocation2 + $0x8] sm:$0xff]
        %v376 = vld [vmem:[#allocation2 + $0x10] sm:$0xff]
        %v377 = vld [vmem:[#allocation2 + $0x18] sm:$0xff]
        %v378 = vld [vmem:[#allocation2 + $0x20] sm:$0xff]
        %v379 = vld [vmem:[#allocation2 + $0x28] sm:$0xff]
        %v380 = vld [vmem:[#allocation2 + $0x30] sm:$0xff]
        %v381 = vld [vmem:[#allocation2 + $0x38] sm:$0xff]
        %v382 = vld [vmem:[#allocation2 + $0x40] sm:$0xff]
        %v383 = vld [vmem:[#allocation2 + $0x48] sm:$0xff]
        %v384 = vld [vmem:[#allocation2 + $0x50] sm:$0xff]
        %v385 = vld [vmem:[#allocation2 + $0x58] sm:$0xff]
        %v386 = vld [vmem:[#allocation2 + $0x60] sm:$0xff]
        %v387 = vld [vmem:[#allocation2 + $0x68] sm:$0xff]
        %v388 = vld [vmem:[#allocation2 + $0x70] sm:$0xff]
        %v389 = vld [vmem:[#allocation2 + $0x78] sm:$0xff]
        %v390 = vld [vmem:[%s296] sm:$0xf]
        %v391 = vld [vmem:[%s296 + $0x4] sm:$0xf]
        %v392 = vld [vmem:[%s296 + $0x8] sm:$0xf]
        %v393 = vld [vmem:[%s296 + $0xc] sm:$0xf]
        %v394 = vld [vmem:[%s296 + $0x10] sm:$0xf]
        %v395 = vld [vmem:[%s296 + $0x14] sm:$0xf]
        %v396 = vld [vmem:[%s296 + $0x18] sm:$0xf]
        %v397 = vld [vmem:[%s296 + $0x1c] sm:$0xf]
        %v398 = vld [vmem:[%s296 + $0x20] sm:$0xf]
        %v399 = vld [vmem:[%s296 + $0x24] sm:$0xf]
        %v400 = vld [vmem:[%s296 + $0x28] sm:$0xf]
        %v401 = vld [vmem:[%s296 + $0x2c] sm:$0xf]
        %v402 = vld [vmem:[%s296 + $0x30] sm:$0xf]
        %v403 = vld [vmem:[%s296 + $0x34] sm:$0xf]
        %v404 = vld [vmem:[%s296 + $0x38] sm:$0xf]
        %v405 = vld [vmem:[%s296 + $0x3c] sm:$0xf]
        %v406 = vld [vmem:[%s339] sm:$0xf]
        %v407 = vld [vmem:[%s339 + $0x4] sm:$0xf]
        %v408 = vld [vmem:[%s339 + $0x8] sm:$0xf]
        %v409 = vld [vmem:[%s339 + $0xc] sm:$0xf]
        %v410 = vld [vmem:[%s339 + $0x10] sm:$0xf]
        %v411 = vld [vmem:[%s339 + $0x14] sm:$0xf]
        %v412 = vld [vmem:[%s339 + $0x18] sm:$0xf]
        %v413 = vld [vmem:[%s339 + $0x1c] sm:$0xf]
        %v414 = vld [vmem:[%s339 + $0x20] sm:$0xf]
        %v415 = vld [vmem:[%s339 + $0x24] sm:$0xf]
        %v416 = vld [vmem:[%s339 + $0x28] sm:$0xf]
        %v417 = vld [vmem:[%s339 + $0x2c] sm:$0xf]
        %v418 = vld [vmem:[%s339 + $0x30] sm:$0xf]
        %v419 = vld [vmem:[%s339 + $0x34] sm:$0xf]
        %v420 = vld [vmem:[%s339 + $0x38] sm:$0xf]
        %v421 = vld [vmem:[%s339 + $0x3c] sm:$0xf]
        %v438 = vunpack.c.l.b16 %v390
        %v439 = vunpack.c.l.b16 %v391
        %v440 = vunpack.c.l.b16 %v392
        %v441 = vunpack.c.l.b16 %v393
        %v442 = vunpack.c.l.b16 %v394
        %v443 = vunpack.c.l.b16 %v395
        %v444 = vunpack.c.l.b16 %v396
        %v445 = vunpack.c.l.b16 %v397
        %v446 = vunpack.c.l.b16 %v398
        %v447 = vunpack.c.l.b16 %v399
        %v448 = vunpack.c.l.b16 %v400
        %v449 = vunpack.c.l.b16 %v401
        %v450 = vunpack.c.l.b16 %v402
        %v451 = vunpack.c.l.b16 %v403
        %v452 = vunpack.c.l.b16 %v404
        %v453 = vunpack.c.l.b16 %v405
        %v454 = vpack.c.b16 %v439, %v438
        %v455 = vpack.c.b16 %v441, %v440
        %v456 = vpack.c.b16 %v443, %v442
        %v457 = vpack.c.b16 %v445, %v444
        %v458 = vpack.c.b16 %v447, %v446
        %v459 = vpack.c.b16 %v449, %v448
        %v460 = vpack.c.b16 %v451, %v450
        %v461 = vpack.c.b16 %v453, %v452
        %v486 = vunpack.c.l.b16 %v406
        %v487 = vunpack.c.l.b16 %v407
        %v488 = vunpack.c.l.b16 %v408
        %v489 = vunpack.c.l.b16 %v409
        %v490 = vunpack.c.l.b16 %v410
        %v491 = vunpack.c.l.b16 %v411
        %v492 = vunpack.c.l.b16 %v412
        %v493 = vunpack.c.l.b16 %v413
        %v494 = vunpack.c.l.b16 %v414
        %v495 = vunpack.c.l.b16 %v415
        %v496 = vunpack.c.l.b16 %v416
        %v497 = vunpack.c.l.b16 %v417
        %v498 = vunpack.c.l.b16 %v418
        %v499 = vunpack.c.l.b16 %v419
        %v500 = vunpack.c.l.b16 %v420
        %v501 = vunpack.c.l.b16 %v421
        %v502 = vpack.c.b16 %v487, %v486
        %v503 = vpack.c.b16 %v489, %v488
        %v504 = vpack.c.b16 %v491, %v490
        %v505 = vpack.c.b16 %v493, %v492
        %v506 = vpack.c.b16 %v495, %v494
        %v507 = vpack.c.b16 %v497, %v496
        %v508 = vpack.c.b16 %v499, %v498
        %v509 = vpack.c.b16 %v501, %v500
        %518 = vmatprep.subr.bf16.mxu0 0
        %519 = vmatpush1.bf16.msra.mxu0 %v502
        %520 = vmatprep.subr.bf16.mxu0 0
        %521 = vmatpush1.bf16.msra.mxu0 %v503
        %522 = vmatprep.subr.bf16.mxu0 0
        %523 = vmatpush1.bf16.msra.mxu0 %v504
        %524 = vmatprep.subr.bf16.mxu0 0
        %525 = vmatpush1.bf16.msra.mxu0 %v505
        %526 = vmatprep.subr.bf16.mxu0 0
        %527 = vmatpush1.bf16.msra.mxu0 %v506
        %528 = vmatprep.subr.bf16.mxu0 0
        %529 = vmatpush1.bf16.msra.mxu0 %v507
        %530 = vmatprep.subr.bf16.mxu0 0
        %531 = vmatpush1.bf16.msra.mxu0 %v508
        %532 = vmatprep.subr.bf16.mxu0 0
        %533 = vmatpush1.bf16.msra.mxu0 %v509
        %534 = vmatprep.subr.bf16.mxu0 0
        %535 = vmatpush1.bf16.msra.mxu0 0
        %536 = vmatprep.subr.bf16.mxu0 0
        %537 = vmatpush1.bf16.msra.mxu0 0
        %538 = vmatprep.subr.bf16.mxu0 0
        %539 = vmatpush1.bf16.msra.mxu0 0
        %540 = vmatprep.subr.bf16.mxu0 0
        %541 = vmatpush1.bf16.msra.mxu0 0
        %542 = vmatprep.subr.bf16.mxu0 0
        %543 = vmatpush1.bf16.msra.mxu0 0
        %544 = vmatprep.subr.bf16.mxu0 0
        %545 = vmatpush1.bf16.msra.mxu0 0
        %546 = vmatprep.subr.bf16.mxu0 0
        %547 = vmatpush1.bf16.msra.mxu0 0
        %548 = vmatprep.subr.bf16.mxu0 0
        %549 = vmatpush1.bf16.msra.mxu0 0
        %550 = vmatprep.mubr.bf16.mxu0 0
        %551 = vmatmul.mubr.bf16.gmra.mrb[0].mxu0 %v454
        %v552 = vpop.f32.mrb[0].mxu0
        %v553 = vadd.f32 0.0, %v552
        %v554 = vpop.f32.mrb[0].mxu0
        %v555 = vpop.f32.mrb[0].mxu0
        %v556 = vadd.f32 0.0, %v555
        %v557 = vpop.f32.mrb[0].mxu0
        %558 = vmatprep.mubr.bf16.mxu0 0
        %559 = vmatmul.mubr.bf16.gmra.mrb[0].mxu0 %v455
        %v560 = vpop.f32.mrb[0].mxu0
        %v561 = vadd.f32 0.0, %v560
        %v562 = vpop.f32.mrb[0].mxu0
        %v563 = vpop.f32.mrb[0].mxu0
        %v564 = vadd.f32 0.0, %v563
        %v565 = vpop.f32.mrb[0].mxu0
        %566 = vmatprep.mubr.bf16.mxu0 0
        %567 = vmatmul.mubr.bf16.gmra.mrb[0].mxu0 %v456
        %v568 = vpop.f32.mrb[0].mxu0
        %v569 = vadd.f32 0.0, %v568
        %v570 = vpop.f32.mrb[0].mxu0
        %v571 = vpop.f32.mrb[0].mxu0
        %v572 = vadd.f32 0.0, %v571
        %v573 = vpop.f32.mrb[0].mxu0
        %574 = vmatprep.mubr.bf16.mxu0 0
        %575 = vmatmul.mubr.bf16.gmra.mrb[0].mxu0 %v457
        %v576 = vpop.f32.mrb[0].mxu0
        %v577 = vadd.f32 0.0, %v576
        %v578 = vpop.f32.mrb[0].mxu0
        %v579 = vpop.f32.mrb[0].mxu0
        %v580 = vadd.f32 0.0, %v579
        %v581 = vpop.f32.mrb[0].mxu0
        %582 = vmatprep.mubr.bf16.mxu0 0
        %583 = vmatmul.mubr.bf16.gmra.mrb[0].mxu0 %v458
        %v584 = vpop.f32.mrb[0].mxu0
        %v585 = vadd.f32 0.0, %v584
        %v586 = vpop.f32.mrb[0].mxu0
        %v587 = vpop.f32.mrb[0].mxu0
        %v588 = vadd.f32 0.0, %v587
        %v589 = vpop.f32.mrb[0].mxu0
        %590 = vmatprep.mubr.bf16.mxu0 0
        %591 = vmatmul.mubr.bf16.gmra.mrb[0].mxu0 %v459
        %v592 = vpop.f32.mrb[0].mxu0
        %v593 = vadd.f32 0.0, %v592
        %v594 = vpop.f32.mrb[0].mxu0
        %v595 = vpop.f32.mrb[0].mxu0
        %v596 = vadd.f32 0.0, %v595
        %v597 = vpop.f32.mrb[0].mxu0
        %598 = vmatprep.mubr.bf16.mxu0 0
        %599 = vmatmul.mubr.bf16.gmra.mrb[0].mxu0 %v460
        %v600 = vpop.f32.mrb[0].mxu0
        %v601 = vadd.f32 0.0, %v600
        %v602 = vpop.f32.mrb[0].mxu0
        %v603 = vpop.f32.mrb[0].mxu0
        %v604 = vadd.f32 0.0, %v603
        %v605 = vpop.f32.mrb[0].mxu0
        %606 = vmatprep.mubr.bf16.mxu0 0
        %607 = vmatmul.mubr.bf16.gmra.mrb[0].mxu0 %v461
        %v608 = vpop.f32.mrb[0].mxu0
        %v609 = vadd.f32 0.0, %v608
        %v610 = vpop.f32.mrb[0].mxu0
        %v611 = vpop.f32.mrb[0].mxu0
        %v612 = vadd.f32 0.0, %v611
        %v613 = vpop.f32.mrb[0].mxu0
        %614 = vdwg.mxu0
        %v615 = vadd.f32 %v374, %v553
        %v616 = vadd.f32 %v375, %v556
        %v617 = vadd.f32 %v376, %v561
        %v618 = vadd.f32 %v377, %v564
        %v619 = vadd.f32 %v378, %v569
        %v620 = vadd.f32 %v379, %v572
        %v621 = vadd.f32 %v380, %v577
        %v622 = vadd.f32 %v381, %v580
        %v623 = vadd.f32 %v382, %v585
        %v624 = vadd.f32 %v383, %v588
        %v625 = vadd.f32 %v384, %v593
        %v626 = vadd.f32 %v385, %v596
        %v627 = vadd.f32 %v386, %v601
        %v628 = vadd.f32 %v387, %v604
        %v629 = vadd.f32 %v388, %v609
        %v630 = vadd.f32 %v389, %v612
        %631 = vst [vmem:[#allocation2] sm:$0xff] %v615
        %632 = vst [vmem:[#allocation2 + $0x8] sm:$0xff] %v616
        %633 = vst [vmem:[#allocation2 + $0x10] sm:$0xff] %v617
        %634 = vst [vmem:[#allocation2 + $0x18] sm:$0xff] %v618
        %635 = vst [vmem:[#allocation2 + $0x20] sm:$0xff] %v619
        %636 = vst [vmem:[#allocation2 + $0x28] sm:$0xff] %v620
        %637 = vst [vmem:[#allocation2 + $0x30] sm:$0xff] %v621
        %638 = vst [vmem:[#allocation2 + $0x38] sm:$0xff] %v622
        %639 = vst [vmem:[#allocation2 + $0x40] sm:$0xff] %v623
        %640 = vst [vmem:[#allocation2 + $0x48] sm:$0xff] %v624
        %641 = vst [vmem:[#allocation2 + $0x50] sm:$0xff] %v625
        %642 = vst [vmem:[#allocation2 + $0x58] sm:$0xff] %v626
        %643 = vst [vmem:[#allocation2 + $0x60] sm:$0xff] %v627
        %644 = vst [vmem:[#allocation2 + $0x68] sm:$0xff] %v628
        %645 = vst [vmem:[#allocation2 + $0x70] sm:$0xff] %v629
        %646 = vst [vmem:[#allocation2 + $0x78] sm:$0xff] %v630
        %p647 = scmp.eq.s32.totalorder %s21, 4
        // Predicated region
        $region78: #{decoder_forward.27} parent=68 // pred_check
          %p648 = pneg %p647
        $region79: #{decoder_forward.27} parent=68 // pred_check_branch
          %650 = sbr.rel (%p648) target = $region81
        $region80: #{decoder_forward.27} parent=68 // pred_region
          %v651 = vld [vmem:[#allocation2] sm:$0xff]
          %v652 = vld [vmem:[#allocation2 + $0x8] sm:$0xff]
          %v653 = vld [vmem:[#allocation2 + $0x10] sm:$0xff]
          %v654 = vld [vmem:[#allocation2 + $0x18] sm:$0xff]
          %v655 = vld [vmem:[#allocation2 + $0x20] sm:$0xff]
          %v656 = vld [vmem:[#allocation2 + $0x28] sm:$0xff]
          %v657 = vld [vmem:[#allocation2 + $0x30] sm:$0xff]
          %v658 = vld [vmem:[#allocation2 + $0x38] sm:$0xff]
          %v659 = vld [vmem:[#allocation2 + $0x40] sm:$0xff]
          %v660 = vld [vmem:[#allocation2 + $0x48] sm:$0xff]
          %v661 = vld [vmem:[#allocation2 + $0x50] sm:$0xff]
          %v662 = vld [vmem:[#allocation2 + $0x58] sm:$0xff]
          %v663 = vld [vmem:[#allocation2 + $0x60] sm:$0xff]
          %v664 = vld [vmem:[#allocation2 + $0x68] sm:$0xff]
          %v665 = vld [vmem:[#allocation2 + $0x70] sm:$0xff]
          %v666 = vld [vmem:[#allocation2 + $0x78] sm:$0xff]
          %v667 = vld [vmem:[%s343] sm:$0x1]
          %v669 = vlaneseq
          %v670 = vshrl.u32 %v669, 7
          %v671 = vsub.s32 0, %v670
          %v672 = vrot.slane %v667, %v671
          %v674 = vadd.f32 %v651, %v672
          %v675 = vadd.f32 %v652, %v672
          %v676 = vadd.f32 %v653, %v672
          %v677 = vadd.f32 %v654, %v672
          %v678 = vadd.f32 %v655, %v672
          %v679 = vadd.f32 %v656, %v672
          %v680 = vadd.f32 %v657, %v672
          %v681 = vadd.f32 %v658, %v672
          %v682 = vadd.f32 %v659, %v672
          %v683 = vadd.f32 %v660, %v672
          %v684 = vadd.f32 %v661, %v672
          %v685 = vadd.f32 %v662, %v672
          %v686 = vadd.f32 %v663, %v672
          %v687 = vadd.f32 %v664, %v672
          %v688 = vadd.f32 %v665, %v672
          %v689 = vadd.f32 %v666, %v672
          %690 = vst [vmem:[%s351] sm:$0xff] %v674
          %691 = vst [vmem:[%s351 + $0x8] sm:$0xff] %v675
          %692 = vst [vmem:[%s351 + $0x10] sm:$0xff] %v676
          %693 = vst [vmem:[%s351 + $0x18] sm:$0xff] %v677
          %694 = vst [vmem:[%s351 + $0x20] sm:$0xff] %v678
          %695 = vst [vmem:[%s351 + $0x28] sm:$0xff] %v679
          %696 = vst [vmem:[%s351 + $0x30] sm:$0xff] %v680
          %697 = vst [vmem:[%s351 + $0x38] sm:$0xff] %v681
          %698 = vst [vmem:[%s351 + $0x40] sm:$0xff] %v682
          %699 = vst [vmem:[%s351 + $0x48] sm:$0xff] %v683
          %700 = vst [vmem:[%s351 + $0x50] sm:$0xff] %v684
          %701 = vst [vmem:[%s351 + $0x58] sm:$0xff] %v685
          %702 = vst [vmem:[%s351 + $0x60] sm:$0xff] %v686
          %703 = vst [vmem:[%s351 + $0x68] sm:$0xff] %v687
          %704 = vst [vmem:[%s351 + $0x70] sm:$0xff] %v688
          %705 = vst [vmem:[%s351 + $0x78] sm:$0xff] %v689
        $region81: #{decoder_forward.27} parent=68 // pred_fallthru
          _
        %s706 = smul.u32 16, %s19
        %p707 = scmp.lt.s32.totalorder %s706, 15
        %s708 = scalar_select %p707, %s706, 15
        %p709 = scmp.lt.s32.totalorder %s20, 0
        %s710 = scalar_select %p709, %s20, 0
        %s711 = sadd.s32 %s710, %s708
        %s712 = smul.addr %s711, 8
        %s713 = scalar_lea.vmem %s3, %s712
        // Predicated region
        $region82: #{decoder_forward.27} parent=68 // pred_check
          %p714 = pneg %p135
        $region83: #{decoder_forward.27} parent=68 // pred_check_branch
          %716 = sbr.rel (%p714) target = $region85
        $region84: #{decoder_forward.27} parent=68 // pred_region
          %s717 = smul.u32 16, %s19
        $region85: #{decoder_forward.27} parent=68 // pred_fallthru
          _
        // Predicated region
        $region86: #{decoder_forward.27} parent=68 // pred_check
          %p718 = pneg %p135
        $region87: #{decoder_forward.27} parent=68 // pred_check_branch
          %720 = sbr.rel (%p718) target = $region89
        $region88: #{decoder_forward.27} parent=68 // pred_region
          %s721 = smul.u32 16, %s19
          %p722 = scmp.lt.s32.totalorder %s721, 15
          %s723 = scalar_select %p722, %s721, 15
          %p724 = scmp.lt.s32.totalorder %s20, 0
          %s725 = scalar_select %p724, %s20, 0
          %s726 = sadd.s32 %s725, %s723
          %s727 = smul.addr %s726, 8
          %s728 = scalar_lea.vmem %s3, %s727
        $region89: #{decoder_forward.27} parent=68 // pred_fallthru
          _
      $region69: #{decoder_forward.27} parent=5 // pred_fallthru
        _
      %p729 = scmp.le.s32.totalorder 2, %s9
      // Predicated region
      $region90: #{decoder_forward.27} parent=5 // pred_check
        %p730 = pneg %p729
      $region91: #{decoder_forward.27} parent=5 // pred_check_branch
        %732 = sbr.rel (%p730) target = $region93
      $region92: #{decoder_forward.27} parent=5 // pred_region
        %s733 = ssub.s32 %s9, 2
      $region93: #{decoder_forward.27} parent=5 // pred_fallthru
        _
    $region6: #{decoder_forward.27} parent=1 // loop_footer
      %s13 = sadd.s32 1, %s9
    $region7: #{decoder_forward.27} parent=1 // loop_footer_branch
      %8 = sbr.rel target = $region3
    $region8: #{decoder_forward.27} parent=1 // loop_exit
      _

// kernel: decoder_forward.28
$region0: #{decoder_forward.28}
  #allocation0 [shape = 'u32[]', space=smem, size = 0x4, offset = 0x4, fixed_abs, tag = 'smem constant byte address 0x4 - core index']
  #allocation1 [shape = 'u32[144,128]{1,0:T(1,128)}', space=vmem, size = 0x12000, scoped, tag = 'internal scratch']
  %s0 = inlined_call_operand.vmem [shape: f32[2,64,64], index: 0, kind: input, shape index: {}]
  %s1 = inlined_call_operand.vmem [shape: f32[1,64], index: 1, kind: input, shape index: {}]
  %s2 = inlined_call_operand.vmem [shape: f32[1,64], index: 2, kind: input, shape index: {}]
  %s3 = inlined_call_operand.vmem [shape: f32[64,32], index: 3, kind: input, shape index: {}]
  %s4 = inlined_call_operand.vmem [shape: f32[32,64], index: 4, kind: input, shape index: {}]
  %s5 = inlined_call_operand.vmem [shape: f32[2,64,64], index: 5, kind: output, shape index: {}]
  %s6 = sld [smem:[#allocation0]]
  $region53: #{decoder_forward.28} parent=0
    _
  %s8 = ssub.s32 1, %s6
  %s9 = scalar_select 0, %s8, %s6
  loop: start=0, step=1, limit=4
  $region2: #{decoder_forward.28} parent=0 // loop_pre_header
    _
  $region3: #{decoder_forward.28} parent=0 // loop_header
    %s11 = sphi 0, %s15
    %p12 = scmp.ge.s32.totalorder %s11, 4
    %s21 = sphi 0, %s23
    %s24 = sphi 0, %s21
    %s25 = sphi 0, %s24
    %s41 = sphi 0, %s25
    %s45 = sphi 0, %s45
    %s47 = sphi 0, %s45
    %s48 = sphi 0, %s47
    %s62 = sphi 0, %s48
    %s66 = sphi 0, %s66
    %s68 = sphi 0, %s66
    %s69 = sphi 0, %s68
    %s83 = sphi 0, %s69
    %s87 = sphi 0, %s87
    %s89 = sphi 0, %s87
    %s90 = sphi 0, %s89
    %s104 = sphi 0, %s90
    %s108 = sphi 0, %s108
    %s110 = sphi 0, %s108
    %s111 = sphi 0, %s110
    %s125 = sphi 0, %s111
    %s131 = sphi 0, %s133
    %s134 = sphi 0, %s131
    %s135 = sphi 0, %s134
    %s151 = sphi 0, %s135
  $region4: #{decoder_forward.28} parent=0 // loop_header_branch
    %14 = sbr.rel (%p12) target = $region8
  $region5: #{decoder_forward.28} parent=0 // loop_body
    %s16 = ssub.s32 %s11, 1
    %s17 = ssub.s32 %s11, 2
    %s18 = sadd.s32 %s11, 1
    %s19 = ssub.s32 %s11, %s18
    %p20 = scmp.eq.s32.totalorder %s19, 0
    %s22 = sadd.s32 %s21, 1
    %s23 = scalar_select %p20, %s21, %s22
    %p26 = pneg %p20
    %p27 = scmp.eq.s32.totalorder %s11, 1
    %p28 = por %p26, %p27
    %p29 = scmp.ne.s32.totalorder %s21, %s24
    %p30 = scmp.eq.s32.totalorder %s11, 0
    %p31 = por %p29, %p30
    %p32 = scmp.ne.s32.totalorder %s21, %s24
    %p33 = scmp.eq.s32.totalorder %s16, 1
    %p34 = por %p32, %p33
    %p35 = scmp.ne.s32.totalorder %s24, %s25
    %p36 = scmp.eq.s32.totalorder %s16, 0
    %p37 = por %p35, %p36
    %p38 = scmp.ne.s32.totalorder %s24, %s25
    %p39 = scmp.eq.s32.totalorder %s17, 1
    %p40 = por %p38, %p39
    %p42 = scmp.ne.s32.totalorder %s25, %s41
    %p43 = scmp.eq.s32.totalorder %s17, 0
    %p44 = por %p42, %p43
    %s46 = sadd.s32 %s45, 1
    %p49 = scmp.eq.s32.totalorder %s11, 1
    %p50 = scmp.ne.s32.totalorder %s45, %s47
    %p51 = scmp.eq.s32.totalorder %s11, 0
    %p52 = por %p50, %p51
    %p53 = scmp.ne.s32.totalorder %s45, %s47
    %p54 = scmp.eq.s32.totalorder %s16, 1
    %p55 = por %p53, %p54
    %p56 = scmp.ne.s32.totalorder %s47, %s48
    %p57 = scmp.eq.s32.totalorder %s16, 0
    %p58 = por %p56, %p57
    %p59 = scmp.ne.s32.totalorder %s47, %s48
    %p60 = scmp.eq.s32.totalorder %s17, 1
    %p61 = por %p59, %p60
    %p63 = scmp.ne.s32.totalorder %s48, %s62
    %p64 = scmp.eq.s32.totalorder %s17, 0
    %p65 = por %p63, %p64
    %s67 = sadd.s32 %s66, 1
    %p70 = scmp.eq.s32.totalorder %s11, 1
    %p71 = scmp.ne.s32.totalorder %s66, %s68
    %p72 = scmp.eq.s32.totalorder %s11, 0
    %p73 = por %p71, %p72
    %p74 = scmp.ne.s32.totalorder %s66, %s68
    %p75 = scmp.eq.s32.totalorder %s16, 1
    %p76 = por %p74, %p75
    %p77 = scmp.ne.s32.totalorder %s68, %s69
    %p78 = scmp.eq.s32.totalorder %s16, 0
    %p79 = por %p77, %p78
    %p80 = scmp.ne.s32.totalorder %s68, %s69
    %p81 = scmp.eq.s32.totalorder %s17, 1
    %p82 = por %p80, %p81
    %p84 = scmp.ne.s32.totalorder %s69, %s83
    %p85 = scmp.eq.s32.totalorder %s17, 0
    %p86 = por %p84, %p85
    %s88 = sadd.s32 %s87, 1
    %p91 = scmp.eq.s32.totalorder %s11, 1
    %p92 = scmp.ne.s32.totalorder %s87, %s89
    %p93 = scmp.eq.s32.totalorder %s11, 0
    %p94 = por %p92, %p93
    %p95 = scmp.ne.s32.totalorder %s87, %s89
    %p96 = scmp.eq.s32.totalorder %s16, 1
    %p97 = por %p95, %p96
    %p98 = scmp.ne.s32.totalorder %s89, %s90
    %p99 = scmp.eq.s32.totalorder %s16, 0
    %p100 = por %p98, %p99
    %p101 = scmp.ne.s32.totalorder %s89, %s90
    %p102 = scmp.eq.s32.totalorder %s17, 1
    %p103 = por %p101, %p102
    %p105 = scmp.ne.s32.totalorder %s90, %s104
    %p106 = scmp.eq.s32.totalorder %s17, 0
    %p107 = por %p105, %p106
    %s109 = sadd.s32 %s108, 1
    %p112 = scmp.eq.s32.totalorder %s11, 1
    %p113 = scmp.ne.s32.totalorder %s108, %s110
    %p114 = scmp.eq.s32.totalorder %s11, 0
    %p115 = por %p113, %p114
    %p116 = scmp.ne.s32.totalorder %s108, %s110
    %p117 = scmp.eq.s32.totalorder %s16, 1
    %p118 = por %p116, %p117
    %p119 = scmp.ne.s32.totalorder %s110, %s111
    %p120 = scmp.eq.s32.totalorder %s16, 0
    %p121 = por %p119, %p120
    %p122 = scmp.ne.s32.totalorder %s110, %s111
    %p123 = scmp.eq.s32.totalorder %s17, 1
    %p124 = por %p122, %p123
    %p126 = scmp.ne.s32.totalorder %s111, %s125
    %p127 = scmp.eq.s32.totalorder %s17, 0
    %p128 = por %p126, %p127
    %s129 = ssub.s32 %s11, %s18
    %p130 = scmp.eq.s32.totalorder %s129, 0
    %s132 = sadd.s32 %s131, 1
    %s133 = scalar_select %p130, %s131, %s132
    %p136 = pneg %p130
    %p137 = scmp.eq.s32.totalorder %s11, 1
    %p138 = por %p136, %p137
    %p139 = scmp.ne.s32.totalorder %s131, %s134
    %p140 = scmp.eq.s32.totalorder %s11, 0
    %p141 = por %p139, %p140
    %p142 = scmp.ne.s32.totalorder %s131, %s134
    %p143 = scmp.eq.s32.totalorder %s16, 1
    %p144 = por %p142, %p143
    %p145 = scmp.ne.s32.totalorder %s134, %s135
    %p146 = scmp.eq.s32.totalorder %s16, 0
    %p147 = por %p145, %p146
    %p148 = scmp.ne.s32.totalorder %s134, %s135
    %p149 = scmp.eq.s32.totalorder %s17, 1
    %p150 = por %p148, %p149
    %p152 = scmp.ne.s32.totalorder %s135, %s151
    %p153 = scmp.eq.s32.totalorder %s17, 0
    %p154 = por %p152, %p153
    %p155 = scmp.le.s32.totalorder 1, %s11
    %p156 = scmp.lt.s32.totalorder %s11, 3
    %p157 = pnand %p155, %p156
    %p158 = pneg %p157
    // Predicated region
    $region9: #{decoder_forward.28} parent=5 // pred_check
      _
    $region10: #{decoder_forward.28} parent=5 // pred_check_branch
      %160 = sbr.rel (%p157) target = $region12
    $region11: #{decoder_forward.28} parent=5 // pred_region
      %s161 = ssub.s32 %s11, 1
      // Predicated region
      $region13: #{decoder_forward.28} parent=11 // pred_check
        %p162 = pneg %p58
      $region14: #{decoder_forward.28} parent=11 // pred_check_branch
        %164 = sbr.rel (%p162) target = $region16
      $region15: #{decoder_forward.28} parent=11 // pred_region
        _
      $region16: #{decoder_forward.28} parent=11 // pred_fallthru
        _
      // Predicated region
      $region17: #{decoder_forward.28} parent=11 // pred_check
        %p165 = pneg %p79
      $region18: #{decoder_forward.28} parent=11 // pred_check_branch
        %167 = sbr.rel (%p165) target = $region20
      $region19: #{decoder_forward.28} parent=11 // pred_region
        _
      $region20: #{decoder_forward.28} parent=11 // pred_fallthru
        _
      // Predicated region
      $region21: #{decoder_forward.28} parent=11 // pred_check
        %p168 = pneg %p100
      $region22: #{decoder_forward.28} parent=11 // pred_check_branch
        %170 = sbr.rel (%p168) target = $region24
      $region23: #{decoder_forward.28} parent=11 // pred_region
        _
      $region24: #{decoder_forward.28} parent=11 // pred_fallthru
        _
      // Predicated region
      $region25: #{decoder_forward.28} parent=11 // pred_check
        %p171 = pneg %p121
      $region26: #{decoder_forward.28} parent=11 // pred_check_branch
        %173 = sbr.rel (%p171) target = $region28
      $region27: #{decoder_forward.28} parent=11 // pred_region
        _
      $region28: #{decoder_forward.28} parent=11 // pred_fallthru
        _
    $region12: #{decoder_forward.28} parent=5 // pred_fallthru
      _
    %p174 = scmp.lt.s32.totalorder %s11, 2
    // Predicated region
    $region29: #{decoder_forward.28} parent=5 // pred_check
      %p175 = pneg %p174
    $region30: #{decoder_forward.28} parent=5 // pred_check_branch
      %177 = sbr.rel (%p175) target = $region32
    $region31: #{decoder_forward.28} parent=5 // pred_region
      // Predicated region
      $region33: #{decoder_forward.28} parent=31 // pred_check
        %p178 = pneg %p31
      $region34: #{decoder_forward.28} parent=31 // pred_check_branch
        %180 = sbr.rel (%p178) target = $region36
      $region35: #{decoder_forward.28} parent=31 // pred_region
        %p181 = scmp.lt.s32.totalorder %s11, 1
        %s182 = scalar_select %p181, %s11, 1
        %s183 = smul.addr %s182, 8
        %s184 = smul.addr %s183, 8
        %s185 = scalar_lea.vmem %s0, %s184
      $region36: #{decoder_forward.28} parent=31 // pred_fallthru
        _
    $region32: #{decoder_forward.28} parent=5 // pred_fallthru
      _
    %p186 = scmp.le.s32.totalorder 1, %s11
    %p187 = scmp.lt.s32.totalorder %s11, 3
    %p188 = pnand %p186, %p187
    %p189 = pneg %p188
    // Predicated region
    $region37: #{decoder_forward.28} parent=5 // pred_check
      _
    $region38: #{decoder_forward.28} parent=5 // pred_check_branch
      %191 = sbr.rel (%p188) target = $region40
    $region39: #{decoder_forward.28} parent=5 // pred_region
      %s192 = ssub.s32 %s11, 1
      %p193 = scmp.lt.s32.totalorder %s16, 1
      %s194 = scalar_select %p193, %s16, 1
      %s195 = smul.addr %s194, 8
      %s196 = smul.addr %s195, 8
      %s197 = scalar_lea.vmem %s0, %s196
      %p198 = pneg %p37
      %p199 = pneg %p34
      %p200 = pneg %p58
      %p201 = pneg %p55
      %p202 = pneg %p79
      %p203 = pneg %p76
      %p204 = pneg %p100
      %p205 = pneg %p97
      %p206 = pneg %p121
      %p207 = pneg %p118
      %p208 = pneg %p147
      %p209 = pneg %p144
      %p210 = scmp.lt.s32.totalorder %s16, 1
      %s211 = scalar_select %p210, %s16, 1
      %s212 = smul.addr %s211, 8
      %s213 = smul.addr %s212, 8
      %s214 = scalar_lea.vmem %s5, %s213
      %p215 = scmp.lt.s32.totalorder %s16, 1
      %s216 = scalar_select %p215, %s16, 1
      %s217 = smul.addr %s216, 8
      %s218 = smul.addr %s217, 8
      %s219 = scalar_lea.vmem %s0, %s218
      %p220 = scmp.lt.s32.totalorder %s16, 1
      %s221 = scalar_select %p220, %s16, 1
      %s222 = smul.addr %s221, 8
      %s223 = smul.addr %s222, 8
      %s224 = scalar_lea.vmem %s5, %s223
      %v225 = vld [vmem:[%s219] sm:$0xff]
      %v226 = vld [vmem:[%s219 + $0x8] sm:$0xff]
      %v227 = vld [vmem:[%s219 + $0x10] sm:$0xff]
      %v228 = vld [vmem:[%s219 + $0x18] sm:$0xff]
      %v229 = vld [vmem:[%s219 + $0x20] sm:$0xff]
      %v230 = vld [vmem:[%s219 + $0x28] sm:$0xff]
      %v231 = vld [vmem:[%s219 + $0x30] sm:$0xff]
      %v232 = vld [vmem:[%s219 + $0x38] sm:$0xff]
      %v233 = vld [vmem:[%s3] sm:$0xff]
      %v234 = vld [vmem:[%s3 + $0x8] sm:$0xff]
      %v235 = vld [vmem:[%s3 + $0x10] sm:$0xff]
      %v236 = vld [vmem:[%s3 + $0x18] sm:$0xff]
      %v237 = vld [vmem:[%s3 + $0x20] sm:$0xff]
      %v238 = vld [vmem:[%s3 + $0x28] sm:$0xff]
      %v239 = vld [vmem:[%s3 + $0x30] sm:$0xff]
      %v240 = vld [vmem:[%s3 + $0x38] sm:$0xff]
      %v241 = vld [vmem:[%s4] sm:$0xff]
      %v242 = vld [vmem:[%s4 + $0x8] sm:$0xff]
      %v243 = vld [vmem:[%s4 + $0x10] sm:$0xff]
      %v244 = vld [vmem:[%s4 + $0x18] sm:$0xff]
      %vm245 = vcmask 523264
      %v246 = vsel %vm245, %v225, 0.0
      %v247 = vsel %vm245, %v226, 0.0
      %v248 = vadd.f32 %v246, %v247
      %v249 = vsel %vm245, %v227, 0.0
      %v250 = vadd.f32 %v248, %v249
      %v251 = vsel %vm245, %v228, 0.0
      %v252 = vadd.f32 %v250, %v251
      %v253 = vsel %vm245, %v229, 0.0
      %v254 = vadd.f32 %v252, %v253
      %v255 = vsel %vm245, %v230, 0.0
      %v256 = vadd.f32 %v254, %v255
      %v257 = vsel %vm245, %v231, 0.0
      %v258 = vadd.f32 %v256, %v257
      %v259 = vsel %vm245, %v232, 0.0
      %v260 = vadd.f32 %v258, %v259
      %v261 = vrot.slane %v260, 4
      %v262 = vadd.f32 %v260, %v261
      %v263 = vrot.slane %v262, 2
      %v264 = vadd.f32 %v262, %v263
      %v265 = vrot.slane %v264, 1
      %v266 = vadd.f32 %v264, %v265
      %v267 = vmul.f32 %v225, %v225
      %v268 = vmul.f32 %v226, %v226
      %v269 = vmul.f32 %v227, %v227
      %v270 = vmul.f32 %v228, %v228
      %v271 = vmul.f32 %v229, %v229
      %v272 = vmul.f32 %v230, %v230
      %v273 = vmul.f32 %v231, %v231
      %v274 = vmul.f32 %v232, %v232
      %v275 = vsel %vm245, %v267, 0.0
      %v276 = vsel %vm245, %v268, 0.0
      %v277 = vadd.f32 %v275, %v276
      %v278 = vsel %vm245, %v269, 0.0
      %v279 = vadd.f32 %v277, %v278
      %v280 = vsel %vm245, %v270, 0.0
      %v281 = vadd.f32 %v279, %v280
      %v282 = vsel %vm245, %v271, 0.0
      %v283 = vadd.f32 %v281, %v282
      %v284 = vsel %vm245, %v272, 0.0
      %v285 = vadd.f32 %v283, %v284
      %v286 = vsel %vm245, %v273, 0.0
      %v287 = vadd.f32 %v285, %v286
      %v288 = vsel %vm245, %v274, 0.0
      %v289 = vadd.f32 %v287, %v288
      %v290 = vrot.slane %v289, 4
      %v291 = vadd.f32 %v289, %v290
      %v292 = vrot.slane %v291, 2
      %v293 = vadd.f32 %v291, %v292
      %v294 = vrot.slane %v293, 1
      %v295 = vadd.f32 %v293, %v294
      %v297 = vsel %vm245, %v266, 0
      %299 = vmatprep.subr.mxu0 0.0
      %300 = vmatpush1.msra.mxu0 %v233
      %301 = vmatprep.subr.mxu0 0.0
      %302 = vmatpush1.msra.mxu0 %v234
      %303 = vmatprep.subr.mxu0 0.0
      %304 = vmatpush1.msra.mxu0 %v235
      %305 = vmatprep.subr.mxu0 0.0
      %306 = vmatpush1.msra.mxu0 %v236
      %307 = vmatprep.subr.mxu0 0.0
      %308 = vmatpush1.msra.mxu0 %v237
      %309 = vmatprep.subr.mxu0 0.0
      %310 = vmatpush1.msra.mxu0 %v238
      %311 = vmatprep.subr.mxu0 0.0
      %312 = vmatpush1.msra.mxu0 %v239
      %313 = vmatprep.subr.mxu0 0.0
      %314 = vmatpush1.msra.mxu0 %v240
      %315 = vmatprep.subr.mxu0 0.0
      %316 = vmatpush1.msra.mxu0 0.0
      %317 = vmatprep.subr.mxu0 0.0
      %318 = vmatpush1.msra.mxu0 0.0
      %319 = vmatprep.subr.mxu0 0.0
      %320 = vmatpush1.msra.mxu0 0.0
      %321 = vmatprep.subr.mxu0 0.0
      %322 = vmatpush1.msra.mxu0 0.0
      %323 = vmatprep.subr.mxu0 0.0
      %324 = vmatpush1.msra.mxu0 0.0
      %325 = vmatprep.subr.mxu0 0.0
      %326 = vmatpush1.msra.mxu0 0.0
      %327 = vmatprep.subr.mxu0 0.0
      %328 = vmatpush1.msra.mxu0 0.0
      %329 = vmatprep.subr.mxu0 0.0
      %330 = vmatpush1.msra.mxu0 0.0
      %331 = vmatprep.subr.mxu0 0.0
      %332 = vmatpush1.msra.mxu0 0.0
      %333 = vmatprep.subr.mxu0 0.0
      %334 = vmatpush1.msra.mxu0 0.0
      %335 = vmatprep.subr.mxu0 0.0
      %336 = vmatpush1.msra.mxu0 0.0
      %337 = vmatprep.subr.mxu0 0.0
      %338 = vmatpush1.msra.mxu0 0.0
      %339 = vmatprep.subr.mxu0 0.0
      %340 = vmatpush1.msra.mxu0 0.0
      %341 = vmatprep.subr.mxu0 0.0
      %342 = vmatpush1.msra.mxu0 0.0
      %343 = vmatprep.subr.mxu0 0.0
      %344 = vmatpush1.msra.mxu0 0.0
      %345 = vmatprep.subr.mxu0 0.0
      %346 = vmatpush1.msra.mxu0 0.0
      %347 = vmatprep.subr.mxu0 0.0
      %348 = vmatpush1.msra.mxu0 0.0
      %349 = vmatprep.subr.mxu0 0.0
      %350 = vmatpush1.msra.mxu0 0.0
      %351 = vmatprep.subr.mxu0 0.0
      %352 = vmatpush1.msra.mxu0 0.0
      %353 = vmatprep.subr.mxu0 0.0
      %354 = vmatpush1.msra.mxu0 0.0
      %355 = vmatprep.subr.mxu0 0.0
      %356 = vmatpush1.msra.mxu0 0.0
      %357 = vmatprep.subr.mxu0 0.0
      %358 = vmatpush1.msra.mxu0 0.0
      %359 = vmatprep.subr.mxu0 0.0
      %360 = vmatpush1.msra.mxu0 0.0
      %361 = vmatprep.subr.mxu0 0.0
      %362 = vmatpush1.msra.mxu0 0.0
      %363 = vmatprep.mubr.f32.mxu0 0.0
      %364 = vmatmul.mubr.f32.gmra.mrb[0].mxu0 %v297
      %v365 = vpop.f32.mrb[0].mxu0
      %v366 = vadd.f32 0.0, %v365
      %v367 = vpop.f32.mrb[0].mxu0
      %368 = vdwg.mxu0
      %v369 = vmul.f32 %v366, 0.0078125
      %v371 = vsel %vm245, %v295, 0
      %373 = vmatprep.subr.mxu0 0.0
      %374 = vmatpush1.msra.mxu0 %v233
      %375 = vmatprep.subr.mxu0 0.0
      %376 = vmatpush1.msra.mxu0 %v234
      %377 = vmatprep.subr.mxu0 0.0
      %378 = vmatpush1.msra.mxu0 %v235
      %379 = vmatprep.subr.mxu0 0.0
      %380 = vmatpush1.msra.mxu0 %v236
      %381 = vmatprep.subr.mxu0 0.0
      %382 = vmatpush1.msra.mxu0 %v237
      %383 = vmatprep.subr.mxu0 0.0
      %384 = vmatpush1.msra.mxu0 %v238
      %385 = vmatprep.subr.mxu0 0.0
      %386 = vmatpush1.msra.mxu0 %v239
      %387 = vmatprep.subr.mxu0 0.0
      %388 = vmatpush1.msra.mxu0 %v240
      %389 = vmatprep.subr.mxu0 0.0
      %390 = vmatpush1.msra.mxu0 0.0
      %391 = vmatprep.subr.mxu0 0.0
      %392 = vmatpush1.msra.mxu0 0.0
      %393 = vmatprep.subr.mxu0 0.0
      %394 = vmatpush1.msra.mxu0 0.0
      %395 = vmatprep.subr.mxu0 0.0
      %396 = vmatpush1.msra.mxu0 0.0
      %397 = vmatprep.subr.mxu0 0.0
      %398 = vmatpush1.msra.mxu0 0.0
      %399 = vmatprep.subr.mxu0 0.0
      %400 = vmatpush1.msra.mxu0 0.0
      %401 = vmatprep.subr.mxu0 0.0
      %402 = vmatpush1.msra.mxu0 0.0
      %403 = vmatprep.subr.mxu0 0.0
      %404 = vmatpush1.msra.mxu0 0.0
      %405 = vmatprep.subr.mxu0 0.0
      %406 = vmatpush1.msra.mxu0 0.0
      %407 = vmatprep.subr.mxu0 0.0
      %408 = vmatpush1.msra.mxu0 0.0
      %409 = vmatprep.subr.mxu0 0.0
      %410 = vmatpush1.msra.mxu0 0.0
      %411 = vmatprep.subr.mxu0 0.0
      %412 = vmatpush1.msra.mxu0 0.0
      %413 = vmatprep.subr.mxu0 0.0
      %414 = vmatpush1.msra.mxu0 0.0
      %415 = vmatprep.subr.mxu0 0.0
      %416 = vmatpush1.msra.mxu0 0.0
      %417 = vmatprep.subr.mxu0 0.0
      %418 = vmatpush1.msra.mxu0 0.0
      %419 = vmatprep.subr.mxu0 0.0
      %420 = vmatpush1.msra.mxu0 0.0
      %421 = vmatprep.subr.mxu0 0.0
      %422 = vmatpush1.msra.mxu0 0.0
      %423 = vmatprep.subr.mxu0 0.0
      %424 = vmatpush1.msra.mxu0 0.0
      %425 = vmatprep.subr.mxu0 0.0
      %426 = vmatpush1.msra.mxu0 0.0
      %427 = vmatprep.subr.mxu0 0.0
      %428 = vmatpush1.msra.mxu0 0.0
      %429 = vmatprep.subr.mxu0 0.0
      %430 = vmatpush1.msra.mxu0 0.0
      %431 = vmatprep.subr.mxu0 0.0
      %432 = vmatpush1.msra.mxu0 0.0
      %433 = vmatprep.subr.mxu0 0.0
      %434 = vmatpush1.msra.mxu0 0.0
      %435 = vmatprep.subr.mxu0 0.0
      %436 = vmatpush1.msra.mxu0 0.0
      %437 = vmatprep.mubr.f32.mxu0 0.0
      %438 = vmatmul.mubr.f32.gmra.mrb[0].mxu0 %v371
      %v439 = vpop.f32.mrb[0].mxu0
      %v440 = vadd.f32 0.0, %v439
      %v441 = vpop.f32.mrb[0].mxu0
      %442 = vdwg.mxu0
      %v443 = vmul.f32 %v440, 0.0078125
      %v444 = vmul.f32 %v369, %v369
      %v445 = vsub.f32 %v443, %v444
      %v446 = vadd.f32 %v445, 1e-05
      %v447 = vrsqrt.pop %v446
      %vm448 = vcmask 261120
      %v450 = vsel %vm448, %v369, 0
      %452 = vmatprep.subr.mxu0 0.0
      %453 = vmatpush1.msra.mxu0 %v241
      %454 = vmatprep.subr.mxu0 0.0
      %455 = vmatpush1.msra.mxu0 %v242
      %456 = vmatprep.subr.mxu0 0.0
      %457 = vmatpush1.msra.mxu0 %v243
      %458 = vmatprep.subr.mxu0 0.0
      %459 = vmatpush1.msra.mxu0 %v244
      %460 = vmatprep.subr.mxu0 0.0
      %461 = vmatpush1.msra.mxu0 0.0
      %462 = vmatprep.subr.mxu0 0.0
      %463 = vmatpush1.msra.mxu0 0.0
      %464 = vmatprep.subr.mxu0 0.0
      %465 = vmatpush1.msra.mxu0 0.0
      %466 = vmatprep.subr.mxu0 0.0
      %467 = vmatpush1.msra.mxu0 0.0
      %468 = vmatprep.subr.mxu0 0.0
      %469 = vmatpush1.msra.mxu0 0.0
      %470 = vmatprep.subr.mxu0 0.0
      %471 = vmatpush1.msra.mxu0 0.0
      %472 = vmatprep.subr.mxu0 0.0
      %473 = vmatpush1.msra.mxu0 0.0
      %474 = vmatprep.subr.mxu0 0.0
      %475 = vmatpush1.msra.mxu0 0.0
      %476 = vmatprep.subr.mxu0 0.0
      %477 = vmatpush1.msra.mxu0 0.0
      %478 = vmatprep.subr.mxu0 0.0
      %479 = vmatpush1.msra.mxu0 0.0
      %480 = vmatprep.subr.mxu0 0.0
      %481 = vmatpush1.msra.mxu0 0.0
      %482 = vmatprep.subr.mxu0 0.0
      %483 = vmatpush1.msra.mxu0 0.0
      %484 = vmatprep.subr.mxu0 0.0
      %485 = vmatpush1.msra.mxu0 0.0
      %486 = vmatprep.subr.mxu0 0.0
      %487 = vmatpush1.msra.mxu0 0.0
      %488 = vmatprep.subr.mxu0 0.0
      %489 = vmatpush1.msra.mxu0 0.0
      %490 = vmatprep.subr.mxu0 0.0
      %491 = vmatpush1.msra.mxu0 0.0
      %492 = vmatprep.subr.mxu0 0.0
      %493 = vmatpush1.msra.mxu0 0.0
      %494 = vmatprep.subr.mxu0 0.0
      %495 = vmatpush1.msra.mxu0 0.0
      %496 = vmatprep.subr.mxu0 0.0
      %497 = vmatpush1.msra.mxu0 0.0
      %498 = vmatprep.subr.mxu0 0.0
      %499 = vmatpush1.msra.mxu0 0.0
      %500 = vmatprep.subr.mxu0 0.0
      %501 = vmatpush1.msra.mxu0 0.0
      %502 = vmatprep.subr.mxu0 0.0
      %503 = vmatpush1.msra.mxu0 0.0
      %504 = vmatprep.subr.mxu0 0.0
      %505 = vmatpush1.msra.mxu0 0.0
      %506 = vmatprep.subr.mxu0 0.0
      %507 = vmatpush1.msra.mxu0 0.0
      %508 = vmatprep.subr.mxu0 0.0
      %509 = vmatpush1.msra.mxu0 0.0
      %510 = vmatprep.subr.mxu0 0.0
      %511 = vmatpush1.msra.mxu0 0.0
      %512 = vmatprep.subr.mxu0 0.0
      %513 = vmatpush1.msra.mxu0 0.0
      %514 = vmatprep.subr.mxu0 0.0
      %515 = vmatpush1.msra.mxu0 0.0
      %516 = vmatprep.mubr.f32.mxu0 0.0
      %517 = vmatmul.mubr.f32.gmra.mrb[0].mxu0 %v450
      %v518 = vpop.f32.mrb[0].mxu0
      %v519 = vadd.f32 0.0, %v518
      %v520 = vpop.f32.mrb[0].mxu0
      %521 = vdwg.mxu0
      %v523 = vsel %vm448, %v447, 0
      %525 = vmatprep.subr.mxu0 0.0
      %526 = vmatpush1.msra.mxu0 %v241
      %527 = vmatprep.subr.mxu0 0.0
      %528 = vmatpush1.msra.mxu0 %v242
      %529 = vmatprep.subr.mxu0 0.0
      %530 = vmatpush1.msra.mxu0 %v243
      %531 = vmatprep.subr.mxu0 0.0
      %532 = vmatpush1.msra.mxu0 %v244
      %533 = vmatprep.subr.mxu0 0.0
      %534 = vmatpush1.msra.mxu0 0.0
      %535 = vmatprep.subr.mxu0 0.0
      %536 = vmatpush1.msra.mxu0 0.0
      %537 = vmatprep.subr.mxu0 0.0
      %538 = vmatpush1.msra.mxu0 0.0
      %539 = vmatprep.subr.mxu0 0.0
      %540 = vmatpush1.msra.mxu0 0.0
      %541 = vmatprep.subr.mxu0 0.0
      %542 = vmatpush1.msra.mxu0 0.0
      %543 = vmatprep.subr.mxu0 0.0
      %544 = vmatpush1.msra.mxu0 0.0
      %545 = vmatprep.subr.mxu0 0.0
      %546 = vmatpush1.msra.mxu0 0.0
      %547 = vmatprep.subr.mxu0 0.0
      %548 = vmatpush1.msra.mxu0 0.0
      %549 = vmatprep.subr.mxu0 0.0
      %550 = vmatpush1.msra.mxu0 0.0
      %551 = vmatprep.subr.mxu0 0.0
      %552 = vmatpush1.msra.mxu0 0.0
      %553 = vmatprep.subr.mxu0 0.0
      %554 = vmatpush1.msra.mxu0 0.0
      %555 = vmatprep.subr.mxu0 0.0
      %556 = vmatpush1.msra.mxu0 0.0
      %557 = vmatprep.subr.mxu0 0.0
      %558 = vmatpush1.msra.mxu0 0.0
      %559 = vmatprep.subr.mxu0 0.0
      %560 = vmatpush1.msra.mxu0 0.0
      %561 = vmatprep.subr.mxu0 0.0
      %562 = vmatpush1.msra.mxu0 0.0
      %563 = vmatprep.subr.mxu0 0.0
      %564 = vmatpush1.msra.mxu0 0.0
      %565 = vmatprep.subr.mxu0 0.0
      %566 = vmatpush1.msra.mxu0 0.0
      %567 = vmatprep.subr.mxu0 0.0
      %568 = vmatpush1.msra.mxu0 0.0
      %569 = vmatprep.subr.mxu0 0.0
      %570 = vmatpush1.msra.mxu0 0.0
      %571 = vmatprep.subr.mxu0 0.0
      %572 = vmatpush1.msra.mxu0 0.0
      %573 = vmatprep.subr.mxu0 0.0
      %574 = vmatpush1.msra.mxu0 0.0
      %575 = vmatprep.subr.mxu0 0.0
      %576 = vmatpush1.msra.mxu0 0.0
      %577 = vmatprep.subr.mxu0 0.0
      %578 = vmatpush1.msra.mxu0 0.0
      %579 = vmatprep.subr.mxu0 0.0
      %580 = vmatpush1.msra.mxu0 0.0
      %581 = vmatprep.subr.mxu0 0.0
      %582 = vmatpush1.msra.mxu0 0.0
      %583 = vmatprep.subr.mxu0 0.0
      %584 = vmatpush1.msra.mxu0 0.0
      %585 = vmatprep.subr.mxu0 0.0
      %586 = vmatpush1.msra.mxu0 0.0
      %587 = vmatprep.subr.mxu0 0.0
      %588 = vmatpush1.msra.mxu0 0.0
      %589 = vmatprep.mubr.f32.mxu0 0.0
      %590 = vmatmul.mubr.f32.gmra.mrb[0].mxu0 %v523
      %v591 = vpop.f32.mrb[0].mxu0
      %v592 = vadd.f32 0.0, %v591
      %v593 = vpop.f32.mrb[0].mxu0
      %594 = vdwg.mxu0
      %v595 = vlaneseq
      %v596 = vshrl.u32 %v595, 7
      %v597 = vsub.s32 0, %v596
      %v598 = vrot.slane %v519, %v597
      %v599 = vsub.f32 %v225, %v598
      %v600 = vsub.f32 %v226, %v598
      %v601 = vsub.f32 %v227, %v598
      %v602 = vsub.f32 %v228, %v598
      %v603 = vsub.f32 %v229, %v598
      %v604 = vsub.f32 %v230, %v598
      %v605 = vsub.f32 %v231, %v598
      %v606 = vsub.f32 %v232, %v598
      %v607 = vlaneseq
      %v608 = vshrl.u32 %v607, 7
      %v609 = vsub.s32 0, %v608
      %v610 = vrot.slane %v592, %v609
      %v611 = vmul.f32 %v599, %v610
      %v612 = vmul.f32 %v600, %v610
      %v613 = vmul.f32 %v601, %v610
      %v614 = vmul.f32 %v602, %v610
      %v615 = vmul.f32 %v603, %v610
      %v616 = vmul.f32 %v604, %v610
      %v617 = vmul.f32 %v605, %v610
      %v618 = vmul.f32 %v606, %v610
      %v619 = vld [vmem:[%s1] sm:$0x1]
      %v621 = vlaneseq
      %v622 = vshrl.u32 %v621, 7
      %v623 = vsub.s32 0, %v622
      %v624 = vrot.slane %v619, %v623
      %v626 = vmul.f32 %v611, %v624
      %v627 = vmul.f32 %v612, %v624
      %v628 = vmul.f32 %v613, %v624
      %v629 = vmul.f32 %v614, %v624
      %v630 = vmul.f32 %v615, %v624
      %v631 = vmul.f32 %v616, %v624
      %v632 = vmul.f32 %v617, %v624
      %v633 = vmul.f32 %v618, %v624
      %v634 = vld [vmem:[%s2] sm:$0x1]
      %v636 = vlaneseq
      %v637 = vshrl.u32 %v636, 7
      %v638 = vsub.s32 0, %v637
      %v639 = vrot.slane %v634, %v638
      %v641 = vadd.f32 %v626, %v639
      %v642 = vadd.f32 %v627, %v639
      %v643 = vadd.f32 %v628, %v639
      %v644 = vadd.f32 %v629, %v639
      %v645 = vadd.f32 %v630, %v639
      %v646 = vadd.f32 %v631, %v639
      %v647 = vadd.f32 %v632, %v639
      %v648 = vadd.f32 %v633, %v639
      %v649 = vxor.u32 %v641, 2147483648
      %v650 = vxor.u32 %v642, 2147483648
      %v651 = vxor.u32 %v643, 2147483648
      %v652 = vxor.u32 %v644, 2147483648
      %v653 = vxor.u32 %v645, 2147483648
      %v654 = vxor.u32 %v646, 2147483648
      %v655 = vxor.u32 %v647, 2147483648
      %v656 = vxor.u32 %v648, 2147483648
      %v657 = vmul.f32 %v649, 1.442695
      %v658 = vpow.pop %v657
      %v659 = vmul.f32 %v650, 1.442695
      %v660 = vpow.pop %v659
      %v661 = vmul.f32 %v651, 1.442695
      %v662 = vpow.pop %v661
      %v663 = vmul.f32 %v652, 1.442695
      %v664 = vpow.pop %v663
      %v665 = vmul.f32 %v653, 1.442695
      %v666 = vpow.pop %v665
      %v667 = vmul.f32 %v654, 1.442695
      %v668 = vpow.pop %v667
      %v669 = vmul.f32 %v655, 1.442695
      %v670 = vpow.pop %v669
      %v671 = vmul.f32 %v656, 1.442695
      %v672 = vpow.pop %v671
      %v673 = vadd.f32 %v658, 1.0
      %v674 = vadd.f32 %v660, 1.0
      %v675 = vadd.f32 %v662, 1.0
      %v676 = vadd.f32 %v664, 1.0
      %v677 = vadd.f32 %v666, 1.0
      %v678 = vadd.f32 %v668, 1.0
      %v679 = vadd.f32 %v670, 1.0
      %v680 = vadd.f32 %v672, 1.0
      %v681 = vrcp.pop %v673
      %v682 = vmul.f32 1.0, %v681
      %v683 = vrcp.pop %v674
      %v684 = vmul.f32 1.0, %v683
      %v685 = vrcp.pop %v675
      %v686 = vmul.f32 1.0, %v685
      %v687 = vrcp.pop %v676
      %v688 = vmul.f32 1.0, %v687
      %v689 = vrcp.pop %v677
      %v690 = vmul.f32 1.0, %v689
      %v691 = vrcp.pop %v678
      %v692 = vmul.f32 1.0, %v691
      %v693 = vrcp.pop %v679
      %v694 = vmul.f32 1.0, %v693
      %v695 = vrcp.pop %v680
      %v696 = vmul.f32 1.0, %v695
      %v697 = vmul.f32 %v641, %v682
      %v698 = vmul.f32 %v642, %v684
      %v699 = vmul.f32 %v643, %v686
      %v700 = vmul.f32 %v644, %v688
      %v701 = vmul.f32 %v645, %v690
      %v702 = vmul.f32 %v646, %v692
      %v703 = vmul.f32 %v647, %v694
      %v704 = vmul.f32 %v648, %v696
      %705 = vst.msk [vmem:[%s224] sm:$0xff] %vm245, %v697
      %706 = vst.msk [vmem:[%s224 + $0x8] sm:$0xff] %vm245, %v698
      %707 = vst.msk [vmem:[%s224 + $0x10] sm:$0xff] %vm245, %v699
      %708 = vst.msk [vmem:[%s224 + $0x18] sm:$0xff] %vm245, %v700
      %709 = vst.msk [vmem:[%s224 + $0x20] sm:$0xff] %vm245, %v701
      %710 = vst.msk [vmem:[%s224 + $0x28] sm:$0xff] %vm245, %v702
      %711 = vst.msk [vmem:[%s224 + $0x30] sm:$0xff] %vm245, %v703
      %712 = vst.msk [vmem:[%s224 + $0x38] sm:$0xff] %vm245, %v704
      %p713 = scmp.lt.s32.totalorder %s16, 1
      %s714 = scalar_select %p713, %s16, 1
      %s715 = smul.addr %s714, 8
      %s716 = smul.addr %s715, 8
      %s717 = scalar_lea.vmem %s5, %s716
      // Predicated region
      $region41: #{decoder_forward.28} parent=39 // pred_check
        %p718 = pneg %p144
      $region42: #{decoder_forward.28} parent=39 // pred_check_branch
        %720 = sbr.rel (%p718) target = $region44
      $region43: #{decoder_forward.28} parent=39 // pred_region
        _
      $region44: #{decoder_forward.28} parent=39 // pred_fallthru
        _
    $region40: #{decoder_forward.28} parent=5 // pred_fallthru
      _
    %p721 = scmp.le.s32.totalorder 2, %s11
    // Predicated region
    $region45: #{decoder_forward.28} parent=5 // pred_check
      %p722 = pneg %p721
    $region46: #{decoder_forward.28} parent=5 // pred_check_branch
      %724 = sbr.rel (%p722) target = $region48
    $region47: #{decoder_forward.28} parent=5 // pred_region
      %s725 = ssub.s32 %s11, 2
      // Predicated region
      $region49: #{decoder_forward.28} parent=47 // pred_check
        %p726 = pneg %p150
      $region50: #{decoder_forward.28} parent=47 // pred_check_branch
        %728 = sbr.rel (%p726) target = $region52
      $region51: #{decoder_forward.28} parent=47 // pred_region
        %p729 = scmp.lt.s32.totalorder %s17, 1
        %s730 = scalar_select %p729, %s17, 1
        %s731 = smul.addr %s730, 8
        %s732 = smul.addr %s731, 8
        %s733 = scalar_lea.vmem %s5, %s732
      $region52: #{decoder_forward.28} parent=47 // pred_fallthru
        _
    $region48: #{decoder_forward.28} parent=5 // pred_fallthru
      _
  $region6: #{decoder_forward.28} parent=0 // loop_footer
    %s15 = sadd.s32 1, %s11
  $region7: #{decoder_forward.28} parent=0 // loop_footer_branch
    %10 = sbr.rel target = $region3
  $region8: #{decoder_forward.28} parent=0 // loop_exit
    _

// kernel: decoder_forward.30
$region0: #{decoder_forward.30}
  #allocation0 [shape = 'u32[]', space=smem, size = 0x4, offset = 0x4, fixed_abs, tag = 'smem constant byte address 0x4 - core index']
  #allocation1 [shape = 'u32[144,128]{1,0:T(1,128)}', space=vmem, size = 0x12000, scoped, tag = 'internal scratch']
  #allocation2 [shape = 'f32[128,256]{1,0:T(8,128)}', space=vmem, size = 0x20000, scoped, tag = 'scratch operand']
  %s0 = inlined_call_operand.vmem [shape: bf16[128,128], index: 0, kind: input, shape index: {}]
  %s1 = inlined_call_operand.vmem [shape: bf16[128,256], index: 1, kind: input, shape index: {}]
  %s2 = inlined_call_operand.vmem [shape: f32[1,256], index: 2, kind: input, shape index: {}]
  %s3 = inlined_call_operand.vmem [shape: f32[128,256], index: 3, kind: output, shape index: {}]
  %s4 = sld [smem:[#allocation0]]
  $region30: #{decoder_forward.30} parent=0
    _
  %s6 = ssub.s32 1, %s4
  %s7 = scalar_select 0, %s6, %s4
  // Predicated region
  $region2: #{decoder_forward.30} parent=0 // pred_check
    _
  $region3: #{decoder_forward.30} parent=0 // pred_check_branch
    %9 = sbr.rel (0) target = $region5
  $region4: #{decoder_forward.30} parent=0 // pred_region
    _
  $region5: #{decoder_forward.30} parent=0 // pred_fallthru
    _
  // Predicated region
  $region6: #{decoder_forward.30} parent=0 // pred_check
    _
  $region7: #{decoder_forward.30} parent=0 // pred_check_branch
    %11 = sbr.rel (0) target = $region9
  $region8: #{decoder_forward.30} parent=0 // pred_region
    _
  $region9: #{decoder_forward.30} parent=0 // pred_fallthru
    _
  // Predicated region
  $region10: #{decoder_forward.30} parent=0 // pred_check
    _
  $region11: #{decoder_forward.30} parent=0 // pred_check_branch
    %13 = sbr.rel (0) target = $region13
  $region12: #{decoder_forward.30} parent=0 // pred_region
    _
  $region13: #{decoder_forward.30} parent=0 // pred_fallthru
    _
  %p15 = scmp.eq.s32.totalorder 0, 0
  // Predicated region
  $region14: #{decoder_forward.30} parent=0 // pred_check
    %p16 = pneg %p15
  $region15: #{decoder_forward.30} parent=0 // pred_check_branch
    %18 = sbr.rel (%p16) target = $region17
  $region16: #{decoder_forward.30} parent=0 // pred_region
    %19 = vst [vmem:[#allocation2] sm:$0xff] 0.0
    %20 = vst [vmem:[#allocation2 + $0x8] sm:$0xff] 0.0
    %21 = vst [vmem:[#allocation2 + $0x10] sm:$0xff] 0.0
    %22 = vst [vmem:[#allocation2 + $0x18] sm:$0xff] 0.0
    %23 = vst [vmem:[#allocation2 + $0x20] sm:$0xff] 0.0
    %24 = vst [vmem:[#allocation2 + $0x28] sm:$0xff] 0.0
    %25 = vst [vmem:[#allocation2 + $0x30] sm:$0xff] 0.0
    %26 = vst [vmem:[#allocation2 + $0x38] sm:$0xff] 0.0
    %27 = vst [vmem:[#allocation2 + $0x40] sm:$0xff] 0.0
    %28 = vst [vmem:[#allocation2 + $0x48] sm:$0xff] 0.0
    %29 = vst [vmem:[#allocation2 + $0x50] sm:$0xff] 0.0
    %30 = vst [vmem:[#allocation2 + $0x58] sm:$0xff] 0.0
    %31 = vst [vmem:[#allocation2 + $0x60] sm:$0xff] 0.0
    %32 = vst [vmem:[#allocation2 + $0x68] sm:$0xff] 0.0
    %33 = vst [vmem:[#allocation2 + $0x70] sm:$0xff] 0.0
    %34 = vst [vmem:[#allocation2 + $0x78] sm:$0xff] 0.0
    %35 = vst [vmem:[#allocation2 + $0x80] sm:$0xff] 0.0
    %36 = vst [vmem:[#allocation2 + $0x88] sm:$0xff] 0.0
    %37 = vst [vmem:[#allocation2 + $0x90] sm:$0xff] 0.0
    %38 = vst [vmem:[#allocation2 + $0x98] sm:$0xff] 0.0
    %39 = vst [vmem:[#allocation2 + $0xa0] sm:$0xff] 0.0
    %40 = vst [vmem:[#allocation2 + $0xa8] sm:$0xff] 0.0
    %41 = vst [vmem:[#allocation2 + $0xb0] sm:$0xff] 0.0
    %42 = vst [vmem:[#allocation2 + $0xb8] sm:$0xff] 0.0
    %43 = vst [vmem:[#allocation2 + $0xc0] sm:$0xff] 0.0
    %44 = vst [vmem:[#allocation2 + $0xc8] sm:$0xff] 0.0
    %45 = vst [vmem:[#allocation2 + $0xd0] sm:$0xff] 0.0
    %46 = vst [vmem:[#allocation2 + $0xd8] sm:$0xff] 0.0
    %47 = vst [vmem:[#allocation2 + $0xe0] sm:$0xff] 0.0
    %48 = vst [vmem:[#allocation2 + $0xe8] sm:$0xff] 0.0
    %49 = vst [vmem:[#allocation2 + $0xf0] sm:$0xff] 0.0
    %50 = vst [vmem:[#allocation2 + $0xf8] sm:$0xff] 0.0
  $region17: #{decoder_forward.30} parent=0 // pred_fallthru
    _
  %v51 = vld [vmem:[#allocation2] sm:$0xff]
  %v52 = vld [vmem:[#allocation2 + $0x8] sm:$0xff]
  %v53 = vld [vmem:[#allocation2 + $0x10] sm:$0xff]
  %v54 = vld [vmem:[#allocation2 + $0x18] sm:$0xff]
  %v55 = vld [vmem:[#allocation2 + $0x20] sm:$0xff]
  %v56 = vld [vmem:[#allocation2 + $0x28] sm:$0xff]
  %v57 = vld [vmem:[#allocation2 + $0x30] sm:$0xff]
  %v58 = vld [vmem:[#allocation2 + $0x38] sm:$0xff]
  %v59 = vld [vmem:[#allocation2 + $0x40] sm:$0xff]
  %v60 = vld [vmem:[#allocation2 + $0x48] sm:$0xff]
  %v61 = vld [vmem:[#allocation2 + $0x50] sm:$0xff]
  %v62 = vld [vmem:[#allocation2 + $0x58] sm:$0xff]
  %v63 = vld [vmem:[#allocation2 + $0x60] sm:$0xff]
  %v64 = vld [vmem:[#allocation2 + $0x68] sm:$0xff]
  %v65 = vld [vmem:[#allocation2 + $0x70] sm:$0xff]
  %v66 = vld [vmem:[#allocation2 + $0x78] sm:$0xff]
  %v67 = vld [vmem:[#allocation2 + $0x80] sm:$0xff]
  %v68 = vld [vmem:[#allocation2 + $0x88] sm:$0xff]
  %v69 = vld [vmem:[#allocation2 + $0x90] sm:$0xff]
  %v70 = vld [vmem:[#allocation2 + $0x98] sm:$0xff]
  %v71 = vld [vmem:[#allocation2 + $0xa0] sm:$0xff]
  %v72 = vld [vmem:[#allocation2 + $0xa8] sm:$0xff]
  %v73 = vld [vmem:[#allocation2 + $0xb0] sm:$0xff]
  %v74 = vld [vmem:[#allocation2 + $0xb8] sm:$0xff]
  %v75 = vld [vmem:[#allocation2 + $0xc0] sm:$0xff]
  %v76 = vld [vmem:[#allocation2 + $0xc8] sm:$0xff]
  %v77 = vld [vmem:[#allocation2 + $0xd0] sm:$0xff]
  %v78 = vld [vmem:[#allocation2 + $0xd8] sm:$0xff]
  %v79 = vld [vmem:[#allocation2 + $0xe0] sm:$0xff]
  %v80 = vld [vmem:[#allocation2 + $0xe8] sm:$0xff]
  %v81 = vld [vmem:[#allocation2 + $0xf0] sm:$0xff]
  %v82 = vld [vmem:[#allocation2 + $0xf8] sm:$0xff]
  %v83 = vld [vmem:[%s0] sm:$0xf]
  %v84 = vld [vmem:[%s0 + $0x4] sm:$0xf]
  %v85 = vld [vmem:[%s0 + $0x8] sm:$0xf]
  %v86 = vld [vmem:[%s0 + $0xc] sm:$0xf]
  %v87 = vld [vmem:[%s0 + $0x10] sm:$0xf]
  %v88 = vld [vmem:[%s0 + $0x14] sm:$0xf]
  %v89 = vld [vmem:[%s0 + $0x18] sm:$0xf]
  %v90 = vld [vmem:[%s0 + $0x1c] sm:$0xf]
  %v91 = vld [vmem:[%s0 + $0x20] sm:$0xf]
  %v92 = vld [vmem:[%s0 + $0x24] sm:$0xf]
  %v93 = vld [vmem:[%s0 + $0x28] sm:$0xf]
  %v94 = vld [vmem:[%s0 + $0x2c] sm:$0xf]
  %v95 = vld [vmem:[%s0 + $0x30] sm:$0xf]
  %v96 = vld [vmem:[%s0 + $0x34] sm:$0xf]
  %v97 = vld [vmem:[%s0 + $0x38] sm:$0xf]
  %v98 = vld [vmem:[%s0 + $0x3c] sm:$0xf]
  %v99 = vld [vmem:[%s1] sm:$0xff]
  %v100 = vld [vmem:[%s1 + $0x8] sm:$0xff]
  %v101 = vld [vmem:[%s1 + $0x10] sm:$0xff]
  %v102 = vld [vmem:[%s1 + $0x18] sm:$0xff]
  %v103 = vld [vmem:[%s1 + $0x20] sm:$0xff]
  %v104 = vld [vmem:[%s1 + $0x28] sm:$0xff]
  %v105 = vld [vmem:[%s1 + $0x30] sm:$0xff]
  %v106 = vld [vmem:[%s1 + $0x38] sm:$0xff]
  %v107 = vld [vmem:[%s1 + $0x40] sm:$0xff]
  %v108 = vld [vmem:[%s1 + $0x48] sm:$0xff]
  %v109 = vld [vmem:[%s1 + $0x50] sm:$0xff]
  %v110 = vld [vmem:[%s1 + $0x58] sm:$0xff]
  %v111 = vld [vmem:[%s1 + $0x60] sm:$0xff]
  %v112 = vld [vmem:[%s1 + $0x68] sm:$0xff]
  %v113 = vld [vmem:[%s1 + $0x70] sm:$0xff]
  %v114 = vld [vmem:[%s1 + $0x78] sm:$0xff]
  %v131 = vunpack.c.l.b16 %v83
  %v132 = vunpack.c.l.b16 %v84
  %v133 = vunpack.c.l.b16 %v85
  %v134 = vunpack.c.l.b16 %v86
  %v135 = vunpack.c.l.b16 %v87
  %v136 = vunpack.c.l.b16 %v88
  %v137 = vunpack.c.l.b16 %v89
  %v138 = vunpack.c.l.b16 %v90
  %v139 = vunpack.c.l.b16 %v91
  %v140 = vunpack.c.l.b16 %v92
  %v141 = vunpack.c.l.b16 %v93
  %v142 = vunpack.c.l.b16 %v94
  %v143 = vunpack.c.l.b16 %v95
  %v144 = vunpack.c.l.b16 %v96
  %v145 = vunpack.c.l.b16 %v97
  %v146 = vunpack.c.l.b16 %v98
  %v147 = vpack.c.b16 %v132, %v131
  %v148 = vpack.c.b16 %v134, %v133
  %v149 = vpack.c.b16 %v136, %v135
  %v150 = vpack.c.b16 %v138, %v137
  %v151 = vpack.c.b16 %v140, %v139
  %v152 = vpack.c.b16 %v142, %v141
  %v153 = vpack.c.b16 %v144, %v143
  %v154 = vpack.c.b16 %v146, %v145
  %v179 = vunpack.c.l.b16 %v99
  %v180 = vunpack.c.h.b16 %v99
  %v181 = vunpack.c.l.b16 %v100
  %v182 = vunpack.c.h.b16 %v100
  %v183 = vunpack.c.l.b16 %v101
  %v184 = vunpack.c.h.b16 %v101
  %v185 = vunpack.c.l.b16 %v102
  %v186 = vunpack.c.h.b16 %v102
  %v187 = vunpack.c.l.b16 %v103
  %v188 = vunpack.c.h.b16 %v103
  %v189 = vunpack.c.l.b16 %v104
  %v190 = vunpack.c.h.b16 %v104
  %v191 = vunpack.c.l.b16 %v105
  %v192 = vunpack.c.h.b16 %v105
  %v193 = vunpack.c.l.b16 %v106
  %v194 = vunpack.c.h.b16 %v106
  %v195 = vunpack.c.l.b16 %v107
  %v196 = vunpack.c.h.b16 %v107
  %v197 = vunpack.c.l.b16 %v108
  %v198 = vunpack.c.h.b16 %v108
  %v199 = vunpack.c.l.b16 %v109
  %v200 = vunpack.c.h.b16 %v109
  %v201 = vunpack.c.l.b16 %v110
  %v202 = vunpack.c.h.b16 %v110
  %v203 = vunpack.c.l.b16 %v111
  %v204 = vunpack.c.h.b16 %v111
  %v205 = vunpack.c.l.b16 %v112
  %v206 = vunpack.c.h.b16 %v112
  %v207 = vunpack.c.l.b16 %v113
  %v208 = vunpack.c.h.b16 %v113
  %v209 = vunpack.c.l.b16 %v114
  %v210 = vunpack.c.h.b16 %v114
  %v211 = vpack.c.b16 %v181, %v179
  %v212 = vpack.c.b16 %v182, %v180
  %v213 = vpack.c.b16 %v185, %v183
  %v214 = vpack.c.b16 %v186, %v184
  %v215 = vpack.c.b16 %v189, %v187
  %v216 = vpack.c.b16 %v190, %v188
  %v217 = vpack.c.b16 %v193, %v191
  %v218 = vpack.c.b16 %v194, %v192
  %v219 = vpack.c.b16 %v197, %v195
  %v220 = vpack.c.b16 %v198, %v196
  %v221 = vpack.c.b16 %v201, %v199
  %v222 = vpack.c.b16 %v202, %v200
  %v223 = vpack.c.b16 %v205, %v203
  %v224 = vpack.c.b16 %v206, %v204
  %v225 = vpack.c.b16 %v209, %v207
  %v226 = vpack.c.b16 %v210, %v208
  %243 = vmatprep.subr.bf16.mxu0 %v212
  %244 = vmatpush1.bf16.msra.mxu0 %v211
  %245 = vmatprep.subr.bf16.mxu0 %v214
  %246 = vmatpush1.bf16.msra.mxu0 %v213
  %247 = vmatprep.subr.bf16.mxu0 %v216
  %248 = vmatpush1.bf16.msra.mxu0 %v215
  %249 = vmatprep.subr.bf16.mxu0 %v218
  %250 = vmatpush1.bf16.msra.mxu0 %v217
  %251 = vmatprep.subr.bf16.mxu0 %v220
  %252 = vmatpush1.bf16.msra.mxu0 %v219
  %253 = vmatprep.subr.bf16.mxu0 %v222
  %254 = vmatpush1.bf16.msra.mxu0 %v221
  %255 = vmatprep.subr.bf16.mxu0 %v224
  %256 = vmatpush1.bf16.msra.mxu0 %v223
  %257 = vmatprep.subr.bf16.mxu0 %v226
  %258 = vmatpush1.bf16.msra.mxu0 %v225
  %259 = vmatprep.subr.bf16.mxu0 0
  %260 = vmatpush1.bf16.msra.mxu0 0
  %261 = vmatprep.subr.bf16.mxu0 0
  %262 = vmatpush1.bf16.msra.mxu0 0
  %263 = vmatprep.subr.bf16.mxu0 0
  %264 = vmatpush1.bf16.msra.mxu0 0
  %265 = vmatprep.subr.bf16.mxu0 0
  %266 = vmatpush1.bf16.msra.mxu0 0
  %267 = vmatprep.subr.bf16.mxu0 0
  %268 = vmatpush1.bf16.msra.mxu0 0
  %269 = vmatprep.subr.bf16.mxu0 0
  %270 = vmatpush1.bf16.msra.mxu0 0
  %271 = vmatprep.subr.bf16.mxu0 0
  %272 = vmatpush1.bf16.msra.mxu0 0
  %273 = vmatprep.subr.bf16.mxu0 0
  %274 = vmatpush1.bf16.msra.mxu0 0
  %275 = vmatprep.mubr.bf16.mxu0 0
  %276 = vmatmul.mubr.bf16.gmra.mrb[0].mxu0 %v147
  %v277 = vpop.f32.mrb[0].mxu0
  %v278 = vadd.f32 0.0, %v277
  %v279 = vpop.f32.mrb[0].mxu0
  %v280 = vadd.f32 0.0, %v279
  %v281 = vpop.f32.mrb[0].mxu0
  %v282 = vadd.f32 0.0, %v281
  %v283 = vpop.f32.mrb[0].mxu0
  %v284 = vadd.f32 0.0, %v283
  %285 = vmatprep.mubr.bf16.mxu0 0
  %286 = vmatmul.mubr.bf16.gmra.mrb[0].mxu0 %v148
  %v287 = vpop.f32.mrb[0].mxu0
  %v288 = vadd.f32 0.0, %v287
  %v289 = vpop.f32.mrb[0].mxu0
  %v290 = vadd.f32 0.0, %v289
  %v291 = vpop.f32.mrb[0].mxu0
  %v292 = vadd.f32 0.0, %v291
  %v293 = vpop.f32.mrb[0].mxu0
  %v294 = vadd.f32 0.0, %v293
  %295 = vmatprep.mubr.bf16.mxu0 0
  %296 = vmatmul.mubr.bf16.gmra.mrb[0].mxu0 %v149
  %v297 = vpop.f32.mrb[0].mxu0
  %v298 = vadd.f32 0.0, %v297
  %v299 = vpop.f32.mrb[0].mxu0
  %v300 = vadd.f32 0.0, %v299
  %v301 = vpop.f32.mrb[0].mxu0
  %v302 = vadd.f32 0.0, %v301
  %v303 = vpop.f32.mrb[0].mxu0
  %v304 = vadd.f32 0.0, %v303
  %305 = vmatprep.mubr.bf16.mxu0 0
  %306 = vmatmul.mubr.bf16.gmra.mrb[0].mxu0 %v150
  %v307 = vpop.f32.mrb[0].mxu0
  %v308 = vadd.f32 0.0, %v307
  %v309 = vpop.f32.mrb[0].mxu0
  %v310 = vadd.f32 0.0, %v309
  %v311 = vpop.f32.mrb[0].mxu0
  %v312 = vadd.f32 0.0, %v311
  %v313 = vpop.f32.mrb[0].mxu0
  %v314 = vadd.f32 0.0, %v313
  %315 = vmatprep.mubr.bf16.mxu0 0
  %316 = vmatmul.mubr.bf16.gmra.mrb[0].mxu0 %v151
  %v317 = vpop.f32.mrb[0].mxu0
  %v318 = vadd.f32 0.0, %v317
  %v319 = vpop.f32.mrb[0].mxu0
  %v320 = vadd.f32 0.0, %v319
  %v321 = vpop.f32.mrb[0].mxu0
  %v322 = vadd.f32 0.0, %v321
  %v323 = vpop.f32.mrb[0].mxu0
  %v324 = vadd.f32 0.0, %v323
  %325 = vmatprep.mubr.bf16.mxu0 0
  %326 = vmatmul.mubr.bf16.gmra.mrb[0].mxu0 %v152
  %v327 = vpop.f32.mrb[0].mxu0
  %v328 = vadd.f32 0.0, %v327
  %v329 = vpop.f32.mrb[0].mxu0
  %v330 = vadd.f32 0.0, %v329
  %v331 = vpop.f32.mrb[0].mxu0
  %v332 = vadd.f32 0.0, %v331
  %v333 = vpop.f32.mrb[0].mxu0
  %v334 = vadd.f32 0.0, %v333
  %335 = vmatprep.mubr.bf16.mxu0 0
  %336 = vmatmul.mubr.bf16.gmra.mrb[0].mxu0 %v153
  %v337 = vpop.f32.mrb[0].mxu0
  %v338 = vadd.f32 0.0, %v337
  %v339 = vpop.f32.mrb[0].mxu0
  %v340 = vadd.f32 0.0, %v339
  %v341 = vpop.f32.mrb[0].mxu0
  %v342 = vadd.f32 0.0, %v341
  %v343 = vpop.f32.mrb[0].mxu0
  %v344 = vadd.f32 0.0, %v343
  %345 = vmatprep.mubr.bf16.mxu0 0
  %346 = vmatmul.mubr.bf16.gmra.mrb[0].mxu0 %v154
  %v347 = vpop.f32.mrb[0].mxu0
  %v348 = vadd.f32 0.0, %v347
  %v349 = vpop.f32.mrb[0].mxu0
  %v350 = vadd.f32 0.0, %v349
  %v351 = vpop.f32.mrb[0].mxu0
  %v352 = vadd.f32 0.0, %v351
  %v353 = vpop.f32.mrb[0].mxu0
  %v354 = vadd.f32 0.0, %v353
  %355 = vdwg.mxu0
  %v356 = vadd.f32 %v51, %v278
  %v357 = vadd.f32 %v52, %v280
  %v358 = vadd.f32 %v53, %v282
  %v359 = vadd.f32 %v54, %v284
  %v360 = vadd.f32 %v55, %v288
  %v361 = vadd.f32 %v56, %v290
  %v362 = vadd.f32 %v57, %v292
  %v363 = vadd.f32 %v58, %v294
  %v364 = vadd.f32 %v59, %v298
  %v365 = vadd.f32 %v60, %v300
  %v366 = vadd.f32 %v61, %v302
  %v367 = vadd.f32 %v62, %v304
  %v368 = vadd.f32 %v63, %v308
  %v369 = vadd.f32 %v64, %v310
  %v370 = vadd.f32 %v65, %v312
  %v371 = vadd.f32 %v66, %v314
  %v372 = vadd.f32 %v67, %v318
  %v373 = vadd.f32 %v68, %v320
  %v374 = vadd.f32 %v69, %v322
  %v375 = vadd.f32 %v70, %v324
  %v376 = vadd.f32 %v71, %v328
  %v377 = vadd.f32 %v72, %v330
  %v378 = vadd.f32 %v73, %v332
  %v379 = vadd.f32 %v74, %v334
  %v380 = vadd.f32 %v75, %v338
  %v381 = vadd.f32 %v76, %v340
  %v382 = vadd.f32 %v77, %v342
  %v383 = vadd.f32 %v78, %v344
  %v384 = vadd.f32 %v79, %v348
  %v385 = vadd.f32 %v80, %v350
  %v386 = vadd.f32 %v81, %v352
  %v387 = vadd.f32 %v82, %v354
  %388 = vst [vmem:[#allocation2] sm:$0xff] %v356
  %389 = vst [vmem:[#allocation2 + $0x8] sm:$0xff] %v357
  %390 = vst [vmem:[#allocation2 + $0x10] sm:$0xff] %v358
  %391 = vst [vmem:[#allocation2 + $0x18] sm:$0xff] %v359
  %392 = vst [vmem:[#allocation2 + $0x20] sm:$0xff] %v360
  %393 = vst [vmem:[#allocation2 + $0x28] sm:$0xff] %v361
  %394 = vst [vmem:[#allocation2 + $0x30] sm:$0xff] %v362
  %395 = vst [vmem:[#allocation2 + $0x38] sm:$0xff] %v363
  %396 = vst [vmem:[#allocation2 + $0x40] sm:$0xff] %v364
  %397 = vst [vmem:[#allocation2 + $0x48] sm:$0xff] %v365
  %398 = vst [vmem:[#allocation2 + $0x50] sm:$0xff] %v366
  %399 = vst [vmem:[#allocation2 + $0x58] sm:$0xff] %v367
  %400 = vst [vmem:[#allocation2 + $0x60] sm:$0xff] %v368
  %401 = vst [vmem:[#allocation2 + $0x68] sm:$0xff] %v369
  %402 = vst [vmem:[#allocation2 + $0x70] sm:$0xff] %v370
  %403 = vst [vmem:[#allocation2 + $0x78] sm:$0xff] %v371
  %404 = vst [vmem:[#allocation2 + $0x80] sm:$0xff] %v372
  %405 = vst [vmem:[#allocation2 + $0x88] sm:$0xff] %v373
  %406 = vst [vmem:[#allocation2 + $0x90] sm:$0xff] %v374
  %407 = vst [vmem:[#allocation2 + $0x98] sm:$0xff] %v375
  %408 = vst [vmem:[#allocation2 + $0xa0] sm:$0xff] %v376
  %409 = vst [vmem:[#allocation2 + $0xa8] sm:$0xff] %v377
  %410 = vst [vmem:[#allocation2 + $0xb0] sm:$0xff] %v378
  %411 = vst [vmem:[#allocation2 + $0xb8] sm:$0xff] %v379
  %412 = vst [vmem:[#allocation2 + $0xc0] sm:$0xff] %v380
  %413 = vst [vmem:[#allocation2 + $0xc8] sm:$0xff] %v381
  %414 = vst [vmem:[#allocation2 + $0xd0] sm:$0xff] %v382
  %415 = vst [vmem:[#allocation2 + $0xd8] sm:$0xff] %v383
  %416 = vst [vmem:[#allocation2 + $0xe0] sm:$0xff] %v384
  %417 = vst [vmem:[#allocation2 + $0xe8] sm:$0xff] %v385
  %418 = vst [vmem:[#allocation2 + $0xf0] sm:$0xff] %v386
  %419 = vst [vmem:[#allocation2 + $0xf8] sm:$0xff] %v387
  // Predicated region
  $region18: #{decoder_forward.30} parent=0 // pred_check
    %p420 = pneg %p15
  $region19: #{decoder_forward.30} parent=0 // pred_check_branch
    %422 = sbr.rel (%p420) target = $region21
  $region20: #{decoder_forward.30} parent=0 // pred_region
    %v423 = vld [vmem:[#allocation2] sm:$0xff]
    %v424 = vld [vmem:[#allocation2 + $0x8] sm:$0xff]
    %v425 = vld [vmem:[#allocation2 + $0x10] sm:$0xff]
    %v426 = vld [vmem:[#allocation2 + $0x18] sm:$0xff]
    %v427 = vld [vmem:[#allocation2 + $0x20] sm:$0xff]
    %v428 = vld [vmem:[#allocation2 + $0x28] sm:$0xff]
    %v429 = vld [vmem:[#allocation2 + $0x30] sm:$0xff]
    %v430 = vld [vmem:[#allocation2 + $0x38] sm:$0xff]
    %v431 = vld [vmem:[#allocation2 + $0x40] sm:$0xff]
    %v432 = vld [vmem:[#allocation2 + $0x48] sm:$0xff]
    %v433 = vld [vmem:[#allocation2 + $0x50] sm:$0xff]
    %v434 = vld [vmem:[#allocation2 + $0x58] sm:$0xff]
    %v435 = vld [vmem:[#allocation2 + $0x60] sm:$0xff]
    %v436 = vld [vmem:[#allocation2 + $0x68] sm:$0xff]
    %v437 = vld [vmem:[#allocation2 + $0x70] sm:$0xff]
    %v438 = vld [vmem:[#allocation2 + $0x78] sm:$0xff]
    %v439 = vld [vmem:[#allocation2 + $0x80] sm:$0xff]
    %v440 = vld [vmem:[#allocation2 + $0x88] sm:$0xff]
    %v441 = vld [vmem:[#allocation2 + $0x90] sm:$0xff]
    %v442 = vld [vmem:[#allocation2 + $0x98] sm:$0xff]
    %v443 = vld [vmem:[#allocation2 + $0xa0] sm:$0xff]
    %v444 = vld [vmem:[#allocation2 + $0xa8] sm:$0xff]
    %v445 = vld [vmem:[#allocation2 + $0xb0] sm:$0xff]
    %v446 = vld [vmem:[#allocation2 + $0xb8] sm:$0xff]
    %v447 = vld [vmem:[#allocation2 + $0xc0] sm:$0xff]
    %v448 = vld [vmem:[#allocation2 + $0xc8] sm:$0xff]
    %v449 = vld [vmem:[#allocation2 + $0xd0] sm:$0xff]
    %v450 = vld [vmem:[#allocation2 + $0xd8] sm:$0xff]
    %v451 = vld [vmem:[#allocation2 + $0xe0] sm:$0xff]
    %v452 = vld [vmem:[#allocation2 + $0xe8] sm:$0xff]
    %v453 = vld [vmem:[#allocation2 + $0xf0] sm:$0xff]
    %v454 = vld [vmem:[#allocation2 + $0xf8] sm:$0xff]
    %v455 = vld [vmem:[%s2] sm:$0x3]
    %v457 = vlaneseq
    %v458 = vshrl.u32 %v457, 7
    %v459 = vsub.s32 0, %v458
    %v460 = vrot.slane %v455, %v459
    %v461 = vlaneseq
    %v462 = vshrl.u32 %v461, 7
    %v463 = vsub.s32 1, %v462
    %v464 = vrot.slane %v455, %v463
    %v467 = vadd.f32 %v423, %v460
    %v468 = vadd.f32 %v424, %v464
    %v469 = vadd.f32 %v425, %v460
    %v470 = vadd.f32 %v426, %v464
    %v471 = vadd.f32 %v427, %v460
    %v472 = vadd.f32 %v428, %v464
    %v473 = vadd.f32 %v429, %v460
    %v474 = vadd.f32 %v430, %v464
    %v475 = vadd.f32 %v431, %v460
    %v476 = vadd.f32 %v432, %v464
    %v477 = vadd.f32 %v433, %v460
    %v478 = vadd.f32 %v434, %v464
    %v479 = vadd.f32 %v435, %v460
    %v480 = vadd.f32 %v436, %v464
    %v481 = vadd.f32 %v437, %v460
    %v482 = vadd.f32 %v438, %v464
    %v483 = vadd.f32 %v439, %v460
    %v484 = vadd.f32 %v440, %v464
    %v485 = vadd.f32 %v441, %v460
    %v486 = vadd.f32 %v442, %v464
    %v487 = vadd.f32 %v443, %v460
    %v488 = vadd.f32 %v444, %v464
    %v489 = vadd.f32 %v445, %v460
    %v490 = vadd.f32 %v446, %v464
    %v491 = vadd.f32 %v447, %v460
    %v492 = vadd.f32 %v448, %v464
    %v493 = vadd.f32 %v449, %v460
    %v494 = vadd.f32 %v450, %v464
    %v495 = vadd.f32 %v451, %v460
    %v496 = vadd.f32 %v452, %v464
    %v497 = vadd.f32 %v453, %v460
    %v498 = vadd.f32 %v454, %v464
    %499 = vst [vmem:[%s3] sm:$0xff] %v467
    %500 = vst [vmem:[%s3 + $0x8] sm:$0xff] %v468
    %501 = vst [vmem:[%s3 + $0x10] sm:$0xff] %v469
    %502 = vst [vmem:[%s3 + $0x18] sm:$0xff] %v470
    %503 = vst [vmem:[%s3 + $0x20] sm:$0xff] %v471
    %504 = vst [vmem:[%s3 + $0x28] sm:$0xff] %v472
    %505 = vst [vmem:[%s3 + $0x30] sm:$0xff] %v473
    %506 = vst [vmem:[%s3 + $0x38] sm:$0xff] %v474
    %507 = vst [vmem:[%s3 + $0x40] sm:$0xff] %v475
    %508 = vst [vmem:[%s3 + $0x48] sm:$0xff] %v476
    %509 = vst [vmem:[%s3 + $0x50] sm:$0xff] %v477
    %510 = vst [vmem:[%s3 + $0x58] sm:$0xff] %v478
    %511 = vst [vmem:[%s3 + $0x60] sm:$0xff] %v479
    %512 = vst [vmem:[%s3 + $0x68] sm:$0xff] %v480
    %513 = vst [vmem:[%s3 + $0x70] sm:$0xff] %v481
    %514 = vst [vmem:[%s3 + $0x78] sm:$0xff] %v482
    %515 = vst [vmem:[%s3 + $0x80] sm:$0xff] %v483
    %516 = vst [vmem:[%s3 + $0x88] sm:$0xff] %v484
    %517 = vst [vmem:[%s3 + $0x90] sm:$0xff] %v485
    %518 = vst [vmem:[%s3 + $0x98] sm:$0xff] %v486
    %519 = vst [vmem:[%s3 + $0xa0] sm:$0xff] %v487
    %520 = vst [vmem:[%s3 + $0xa8] sm:$0xff] %v488
    %521 = vst [vmem:[%s3 + $0xb0] sm:$0xff] %v489
    %522 = vst [vmem:[%s3 + $0xb8] sm:$0xff] %v490
    %523 = vst [vmem:[%s3 + $0xc0] sm:$0xff] %v491
    %524 = vst [vmem:[%s3 + $0xc8] sm:$0xff] %v492
    %525 = vst [vmem:[%s3 + $0xd0] sm:$0xff] %v493
    %526 = vst [vmem:[%s3 + $0xd8] sm:$0xff] %v494
    %527 = vst [vmem:[%s3 + $0xe0] sm:$0xff] %v495
    %528 = vst [vmem:[%s3 + $0xe8] sm:$0xff] %v496
    %529 = vst [vmem:[%s3 + $0xf0] sm:$0xff] %v497
    %530 = vst [vmem:[%s3 + $0xf8] sm:$0xff] %v498
  $region21: #{decoder_forward.30} parent=0 // pred_fallthru
    _
  // Predicated region
  $region22: #{decoder_forward.30} parent=0 // pred_check
    _
  $region23: #{decoder_forward.30} parent=0 // pred_check_branch
    %532 = sbr.rel (0) target = $region25
  $region24: #{decoder_forward.30} parent=0 // pred_region
    _
  $region25: #{decoder_forward.30} parent=0 // pred_fallthru
    _
  // Predicated region
  $region26: #{decoder_forward.30} parent=0 // pred_check
    _
  $region27: #{decoder_forward.30} parent=0 // pred_check_branch
    %534 = sbr.rel (0) target = $region29
  $region28: #{decoder_forward.30} parent=0 // pred_region
    _
  $region29: #{decoder_forward.30} parent=0 // pred_fallthru
    _

// kernel: decoder_forward.31
$region0: #{decoder_forward.31}
  #allocation0 [shape = 'u32[]', space=smem, size = 0x4, offset = 0x4, fixed_abs, tag = 'smem constant byte address 0x4 - core index']
  #allocation1 [shape = 'u32[144,128]{1,0:T(1,128)}', space=vmem, size = 0x12000, scoped, tag = 'internal scratch']
  %s0 = inlined_call_operand.vmem [shape: f32[8,64,16], index: 0, kind: input, shape index: {}]
  %s1 = inlined_call_operand.vmem [shape: f32[8,64,16], index: 1, kind: input, shape index: {}]
  %s2 = inlined_call_operand.vmem [shape: f32[8,64,16], index: 2, kind: input, shape index: {}]
  %s3 = inlined_call_operand.vmem [shape: f32[8,64,16], index: 3, kind: output, shape index: {}]
  %s4 = sld [smem:[#allocation0]]
  $region45: #{decoder_forward.31} parent=0
    _
  %s6 = ssub.s32 1, %s4
  %s7 = scalar_select 0, %s6, %s4
  loop: start=0, step=1, limit=10
  $region2: #{decoder_forward.31} parent=0 // loop_pre_header
    _
  $region3: #{decoder_forward.31} parent=0 // loop_header
    %s9 = sphi 0, %s13
    %p10 = scmp.ge.s32.totalorder %s9, 10
    %s19 = sphi 0, %s21
    %s22 = sphi 0, %s19
    %s23 = sphi 0, %s22
    %s39 = sphi 0, %s23
    %s45 = sphi 0, %s47
    %s48 = sphi 0, %s45
    %s49 = sphi 0, %s48
    %s65 = sphi 0, %s49
    %s71 = sphi 0, %s73
    %s74 = sphi 0, %s71
    %s75 = sphi 0, %s74
    %s91 = sphi 0, %s75
    %s97 = sphi 0, %s99
    %s100 = sphi 0, %s97
    %s101 = sphi 0, %s100
    %s117 = sphi 0, %s101
  $region4: #{decoder_forward.31} parent=0 // loop_header_branch
    %12 = sbr.rel (%p10) target = $region8
  $region5: #{decoder_forward.31} parent=0 // loop_body
    %s14 = ssub.s32 %s9, 1
    %s15 = ssub.s32 %s9, 2
    %s16 = sadd.s32 %s9, 1
    %s17 = ssub.s32 %s9, %s16
    %p18 = scmp.eq.s32.totalorder %s17, 0
    %s20 = sadd.s32 %s19, 1
    %s21 = scalar_select %p18, %s19, %s20
    %p24 = pneg %p18
    %p25 = scmp.eq.s32.totalorder %s9, 7
    %p26 = por %p24, %p25
    %p27 = scmp.ne.s32.totalorder %s19, %s22
    %p28 = scmp.eq.s32.totalorder %s9, 0
    %p29 = por %p27, %p28
    %p30 = scmp.ne.s32.totalorder %s19, %s22
    %p31 = scmp.eq.s32.totalorder %s14, 7
    %p32 = por %p30, %p31
    %p33 = scmp.ne.s32.totalorder %s22, %s23
    %p34 = scmp.eq.s32.totalorder %s14, 0
    %p35 = por %p33, %p34
    %p36 = scmp.ne.s32.totalorder %s22, %s23
    %p37 = scmp.eq.s32.totalorder %s15, 7
    %p38 = por %p36, %p37
    %p40 = scmp.ne.s32.totalorder %s23, %s39
    %p41 = scmp.eq.s32.totalorder %s15, 0
    %p42 = por %p40, %p41
    %s43 = ssub.s32 %s9, %s16
    %p44 = scmp.eq.s32.totalorder %s43, 0
    %s46 = sadd.s32 %s45, 1
    %s47 = scalar_select %p44, %s45, %s46
    %p50 = pneg %p44
    %p51 = scmp.eq.s32.totalorder %s9, 7
    %p52 = por %p50, %p51
    %p53 = scmp.ne.s32.totalorder %s45, %s48
    %p54 = scmp.eq.s32.totalorder %s9, 0
    %p55 = por %p53, %p54
    %p56 = scmp.ne.s32.totalorder %s45, %s48
    %p57 = scmp.eq.s32.totalorder %s14, 7
    %p58 = por %p56, %p57
    %p59 = scmp.ne.s32.totalorder %s48, %s49
    %p60 = scmp.eq.s32.totalorder %s14, 0
    %p61 = por %p59, %p60
    %p62 = scmp.ne.s32.totalorder %s48, %s49
    %p63 = scmp.eq.s32.totalorder %s15, 7
    %p64 = por %p62, %p63
    %p66 = scmp.ne.s32.totalorder %s49, %s65
    %p67 = scmp.eq.s32.totalorder %s15, 0
    %p68 = por %p66, %p67
    %s69 = ssub.s32 %s9, %s16
    %p70 = scmp.eq.s32.totalorder %s69, 0
    %s72 = sadd.s32 %s71, 1
    %s73 = scalar_select %p70, %s71, %s72
    %p76 = pneg %p70
    %p77 = scmp.eq.s32.totalorder %s9, 7
    %p78 = por %p76, %p77
    %p79 = scmp.ne.s32.totalorder %s71, %s74
    %p80 = scmp.eq.s32.totalorder %s9, 0
    %p81 = por %p79, %p80
    %p82 = scmp.ne.s32.totalorder %s71, %s74
    %p83 = scmp.eq.s32.totalorder %s14, 7
    %p84 = por %p82, %p83
    %p85 = scmp.ne.s32.totalorder %s74, %s75
    %p86 = scmp.eq.s32.totalorder %s14, 0
    %p87 = por %p85, %p86
    %p88 = scmp.ne.s32.totalorder %s74, %s75
    %p89 = scmp.eq.s32.totalorder %s15, 7
    %p90 = por %p88, %p89
    %p92 = scmp.ne.s32.totalorder %s75, %s91
    %p93 = scmp.eq.s32.totalorder %s15, 0
    %p94 = por %p92, %p93
    %s95 = ssub.s32 %s9, %s16
    %p96 = scmp.eq.s32.totalorder %s95, 0
    %s98 = sadd.s32 %s97, 1
    %s99 = scalar_select %p96, %s97, %s98
    %p102 = pneg %p96
    %p103 = scmp.eq.s32.totalorder %s9, 7
    %p104 = por %p102, %p103
    %p105 = scmp.ne.s32.totalorder %s97, %s100
    %p106 = scmp.eq.s32.totalorder %s9, 0
    %p107 = por %p105, %p106
    %p108 = scmp.ne.s32.totalorder %s97, %s100
    %p109 = scmp.eq.s32.totalorder %s14, 7
    %p110 = por %p108, %p109
    %p111 = scmp.ne.s32.totalorder %s100, %s101
    %p112 = scmp.eq.s32.totalorder %s14, 0
    %p113 = por %p111, %p112
    %p114 = scmp.ne.s32.totalorder %s100, %s101
    %p115 = scmp.eq.s32.totalorder %s15, 7
    %p116 = por %p114, %p115
    %p118 = scmp.ne.s32.totalorder %s101, %s117
    %p119 = scmp.eq.s32.totalorder %s15, 0
    %p120 = por %p118, %p119
    %p121 = scmp.le.s32.totalorder 1, %s9
    %p122 = scmp.lt.s32.totalorder %s9, 9
    %p123 = pnand %p121, %p122
    %p124 = pneg %p123
    // Predicated region
    $region9: #{decoder_forward.31} parent=5 // pred_check
      _
    $region10: #{decoder_forward.31} parent=5 // pred_check_branch
      %126 = sbr.rel (%p123) target = $region12
    $region11: #{decoder_forward.31} parent=5 // pred_region
      %s127 = ssub.s32 %s9, 1
    $region12: #{decoder_forward.31} parent=5 // pred_fallthru
      _
    %p128 = scmp.lt.s32.totalorder %s9, 8
    // Predicated region
    $region13: #{decoder_forward.31} parent=5 // pred_check
      %p129 = pneg %p128
    $region14: #{decoder_forward.31} parent=5 // pred_check_branch
      %131 = sbr.rel (%p129) target = $region16
    $region15: #{decoder_forward.31} parent=5 // pred_region
      // Predicated region
      $region17: #{decoder_forward.31} parent=15 // pred_check
        %p132 = pneg %p29
      $region18: #{decoder_forward.31} parent=15 // pred_check_branch
        %134 = sbr.rel (%p132) target = $region20
      $region19: #{decoder_forward.31} parent=15 // pred_region
        %p135 = scmp.lt.s32.totalorder %s9, 7
        %s136 = scalar_select %p135, %s9, 7
        %s137 = smul.addr %s136, 8
        %s138 = smul.addr %s137, 8
        %s139 = scalar_lea.vmem %s0, %s138
      $region20: #{decoder_forward.31} parent=15 // pred_fallthru
        _
      // Predicated region
      $region21: #{decoder_forward.31} parent=15 // pred_check
        %p140 = pneg %p55
      $region22: #{decoder_forward.31} parent=15 // pred_check_branch
        %142 = sbr.rel (%p140) target = $region24
      $region23: #{decoder_forward.31} parent=15 // pred_region
        %p143 = scmp.lt.s32.totalorder %s9, 7
        %s144 = scalar_select %p143, %s9, 7
        %s145 = smul.addr %s144, 8
        %s146 = smul.addr %s145, 8
        %s147 = scalar_lea.vmem %s1, %s146
      $region24: #{decoder_forward.31} parent=15 // pred_fallthru
        _
      // Predicated region
      $region25: #{decoder_forward.31} parent=15 // pred_check
        %p148 = pneg %p81
      $region26: #{decoder_forward.31} parent=15 // pred_check_branch
        %150 = sbr.rel (%p148) target = $region28
      $region27: #{decoder_forward.31} parent=15 // pred_region
        %p151 = scmp.lt.s32.totalorder %s9, 7
        %s152 = scalar_select %p151, %s9, 7
        %s153 = smul.addr %s152, 8
        %s154 = smul.addr %s153, 8
        %s155 = scalar_lea.vmem %s2, %s154
      $region28: #{decoder_forward.31} parent=15 // pred_fallthru
        _
    $region16: #{decoder_forward.31} parent=5 // pred_fallthru
      _
    %p156 = scmp.le.s32.totalorder 1, %s9
    %p157 = scmp.lt.s32.totalorder %s9, 9
    %p158 = pnand %p156, %p157
    %p159 = pneg %p158
    // Predicated region
    $region29: #{decoder_forward.31} parent=5 // pred_check
      _
    $region30: #{decoder_forward.31} parent=5 // pred_check_branch
      %161 = sbr.rel (%p158) target = $region32
    $region31: #{decoder_forward.31} parent=5 // pred_region
      %s162 = ssub.s32 %s9, 1
      %p163 = scmp.lt.s32.totalorder %s14, 7
      %s164 = scalar_select %p163, %s14, 7
      %s165 = smul.addr %s164, 8
      %s166 = smul.addr %s165, 8
      %s167 = scalar_lea.vmem %s0, %s166
      %p168 = pneg %p35
      %p169 = pneg %p32
      %p170 = scmp.lt.s32.totalorder %s14, 7
      %s171 = scalar_select %p170, %s14, 7
      %s172 = smul.addr %s171, 8
      %s173 = smul.addr %s172, 8
      %s174 = scalar_lea.vmem %s1, %s173
      %p175 = pneg %p61
      %p176 = pneg %p58
      %p177 = scmp.lt.s32.totalorder %s14, 7
      %s178 = scalar_select %p177, %s14, 7
      %s179 = smul.addr %s178, 8
      %s180 = smul.addr %s179, 8
      %s181 = scalar_lea.vmem %s2, %s180
      %p182 = pneg %p87
      %p183 = pneg %p84
      %p184 = pneg %p113
      %p185 = pneg %p110
      %p186 = scmp.lt.s32.totalorder %s14, 7
      %s187 = scalar_select %p186, %s14, 7
      %s188 = smul.addr %s187, 8
      %s189 = smul.addr %s188, 8
      %s190 = scalar_lea.vmem %s3, %s189
      %p191 = scmp.lt.s32.totalorder %s14, 7
      %s192 = scalar_select %p191, %s14, 7
      %s193 = smul.addr %s192, 8
      %s194 = smul.addr %s193, 8
      %s195 = scalar_lea.vmem %s0, %s194
      %p196 = scmp.lt.s32.totalorder %s14, 7
      %s197 = scalar_select %p196, %s14, 7
      %s198 = smul.addr %s197, 8
      %s199 = smul.addr %s198, 8
      %s200 = scalar_lea.vmem %s1, %s199
      %p201 = scmp.lt.s32.totalorder %s14, 7
      %s202 = scalar_select %p201, %s14, 7
      %s203 = smul.addr %s202, 8
      %s204 = smul.addr %s203, 8
      %s205 = scalar_lea.vmem %s2, %s204
      %p206 = scmp.lt.s32.totalorder %s14, 7
      %s207 = scalar_select %p206, %s14, 7
      %s208 = smul.addr %s207, 8
      %s209 = smul.addr %s208, 8
      %s210 = scalar_lea.vmem %s3, %s209
      %v211 = vld [vmem:[%s195] sm:$0xff]
      %v212 = vld [vmem:[%s195 + $0x8] sm:$0xff]
      %v213 = vld [vmem:[%s195 + $0x10] sm:$0xff]
      %v214 = vld [vmem:[%s195 + $0x18] sm:$0xff]
      %v215 = vld [vmem:[%s195 + $0x20] sm:$0xff]
      %v216 = vld [vmem:[%s195 + $0x28] sm:$0xff]
      %v217 = vld [vmem:[%s195 + $0x30] sm:$0xff]
      %v218 = vld [vmem:[%s195 + $0x38] sm:$0xff]
      %v219 = vld [vmem:[%s200] sm:$0xff]
      %v220 = vld [vmem:[%s200 + $0x8] sm:$0xff]
      %v221 = vld [vmem:[%s200 + $0x10] sm:$0xff]
      %v222 = vld [vmem:[%s200 + $0x18] sm:$0xff]
      %v223 = vld [vmem:[%s200 + $0x20] sm:$0xff]
      %v224 = vld [vmem:[%s200 + $0x28] sm:$0xff]
      %v225 = vld [vmem:[%s200 + $0x30] sm:$0xff]
      %v226 = vld [vmem:[%s200 + $0x38] sm:$0xff]
      %v227 = vld [vmem:[%s205] sm:$0xff]
      %v228 = vld [vmem:[%s205 + $0x8] sm:$0xff]
      %v229 = vld [vmem:[%s205 + $0x10] sm:$0xff]
      %v230 = vld [vmem:[%s205 + $0x18] sm:$0xff]
      %v231 = vld [vmem:[%s205 + $0x20] sm:$0xff]
      %v232 = vld [vmem:[%s205 + $0x28] sm:$0xff]
      %v233 = vld [vmem:[%s205 + $0x30] sm:$0xff]
      %v234 = vld [vmem:[%s205 + $0x38] sm:$0xff]
      %vm235 = vcmask 130048
      %v237 = vsel %vm235, %v211, 0
      %v240 = vsel %vm235, %v212, 0
      %v243 = vsel %vm235, %v213, 0
      %v246 = vsel %vm235, %v214, 0
      %v249 = vsel %vm235, %v215, 0
      %v252 = vsel %vm235, %v216, 0
      %v255 = vsel %vm235, %v217, 0
      %v258 = vsel %vm235, %v218, 0
      %v261 = vsel %vm235, %v219, 0
      %v264 = vsel %vm235, %v220, 0
      %v267 = vsel %vm235, %v221, 0
      %v270 = vsel %vm235, %v222, 0
      %v273 = vsel %vm235, %v223, 0
      %v276 = vsel %vm235, %v224, 0
      %v279 = vsel %vm235, %v225, 0
      %v282 = vsel %vm235, %v226, 0
      %284 = vmatprep.subr.mxu0 0.0
      %285 = vmatpush1.xpose.msra.mxu0 %v261
      %286 = vmatprep.subr.mxu0 0.0
      %287 = vmatpush1.xpose.msra.mxu0 %v264
      %288 = vmatprep.subr.mxu0 0.0
      %289 = vmatpush1.xpose.msra.mxu0 %v267
      %290 = vmatprep.subr.mxu0 0.0
      %291 = vmatpush1.xpose.msra.mxu0 %v270
      %292 = vmatprep.subr.mxu0 0.0
      %293 = vmatpush1.xpose.msra.mxu0 %v273
      %294 = vmatprep.subr.mxu0 0.0
      %295 = vmatpush1.xpose.msra.mxu0 %v276
      %296 = vmatprep.subr.mxu0 0.0
      %297 = vmatpush1.xpose.msra.mxu0 %v279
      %298 = vmatprep.subr.mxu0 0.0
      %299 = vmatpush1.xpose.msra.mxu0 %v282
      %300 = vmatprep.subr.mxu0 0.0
      %301 = vmatpush1.xpose.msra.mxu0 0.0
      %302 = vmatprep.subr.mxu0 0.0
      %303 = vmatpush1.xpose.msra.mxu0 0.0
      %304 = vmatprep.subr.mxu0 0.0
      %305 = vmatpush1.xpose.msra.mxu0 0.0
      %306 = vmatprep.subr.mxu0 0.0
      %307 = vmatpush1.xpose.msra.mxu0 0.0
      %308 = vmatprep.subr.mxu0 0.0
      %309 = vmatpush1.xpose.msra.mxu0 0.0
      %310 = vmatprep.subr.mxu0 0.0
      %311 = vmatpush1.xpose.msra.mxu0 0.0
      %312 = vmatprep.subr.mxu0 0.0
      %313 = vmatpush1.xpose.msra.mxu0 0.0
      %314 = vmatprep.subr.mxu0 0.0
      %315 = vmatpush1.xpose.msra.mxu0 0.0
      %316 = vmatprep.subr.mxu0 0.0
      %317 = vmatpush1.xpose.msra.mxu0 0.0
      %318 = vmatprep.subr.mxu0 0.0
      %319 = vmatpush1.xpose.msra.mxu0 0.0
      %320 = vmatprep.subr.mxu0 0.0
      %321 = vmatpush1.xpose.msra.mxu0 0.0
      %322 = vmatprep.subr.mxu0 0.0
      %323 = vmatpush1.xpose.msra.mxu0 0.0
      %324 = vmatprep.subr.mxu0 0.0
      %325 = vmatpush1.xpose.msra.mxu0 0.0
      %326 = vmatprep.subr.mxu0 0.0
      %327 = vmatpush1.xpose.msra.mxu0 0.0
      %328 = vmatprep.subr.mxu0 0.0
      %329 = vmatpush1.xpose.msra.mxu0 0.0
      %330 = vmatprep.subr.mxu0 0.0
      %331 = vmatpush1.xpose.msra.mxu0 0.0
      %332 = vmatprep.subr.mxu0 0.0
      %333 = vmatpush1.xpose.msra.mxu0 0.0
      %334 = vmatprep.subr.mxu0 0.0
      %335 = vmatpush1.xpose.msra.mxu0 0.0
      %336 = vmatprep.subr.mxu0 0.0
      %337 = vmatpush1.xpose.msra.mxu0 0.0
      %338 = vmatprep.subr.mxu0 0.0
      %339 = vmatpush1.xpose.msra.mxu0 0.0
      %340 = vmatprep.subr.mxu0 0.0
      %341 = vmatpush1.xpose.msra.mxu0 0.0
      %342 = vmatprep.subr.mxu0 0.0
      %343 = vmatpush1.xpose.msra.mxu0 0.0
      %344 = vmatprep.subr.mxu0 0.0
      %345 = vmatpush1.xpose.msra.mxu0 0.0
      %346 = vmatprep.subr.mxu0 0.0
      %347 = vmatpush1.xpose.msra.mxu0 0.0
      %348 = vmatprep.mubr.f32.mxu0 0.0
      %349 = vmatmul.mubr.f32.gmra.mrb[0].mxu0 %v237
      %v350 = vpop.f32.mrb[0].mxu0
      %v351 = vadd.f32 0.0, %v350
      %v352 = vpop.f32.mrb[0].mxu0
      %353 = vmatprep.mubr.f32.mxu0 0.0
      %354 = vmatmul.mubr.f32.gmra.mrb[0].mxu0 %v240
      %v355 = vpop.f32.mrb[0].mxu0
      %v356 = vadd.f32 0.0, %v355
      %v357 = vpop.f32.mrb[0].mxu0
      %358 = vmatprep.mubr.f32.mxu0 0.0
      %359 = vmatmul.mubr.f32.gmra.mrb[0].mxu0 %v243
      %v360 = vpop.f32.mrb[0].mxu0
      %v361 = vadd.f32 0.0, %v360
      %v362 = vpop.f32.mrb[0].mxu0
      %363 = vmatprep.mubr.f32.mxu0 0.0
      %364 = vmatmul.mubr.f32.gmra.mrb[0].mxu0 %v246
      %v365 = vpop.f32.mrb[0].mxu0
      %v366 = vadd.f32 0.0, %v365
      %v367 = vpop.f32.mrb[0].mxu0
      %368 = vmatprep.mubr.f32.mxu0 0.0
      %369 = vmatmul.mubr.f32.gmra.mrb[0].mxu0 %v249
      %v370 = vpop.f32.mrb[0].mxu0
      %v371 = vadd.f32 0.0, %v370
      %v372 = vpop.f32.mrb[0].mxu0
      %373 = vmatprep.mubr.f32.mxu0 0.0
      %374 = vmatmul.mubr.f32.gmra.mrb[0].mxu0 %v252
      %v375 = vpop.f32.mrb[0].mxu0
      %v376 = vadd.f32 0.0, %v375
      %v377 = vpop.f32.mrb[0].mxu0
      %378 = vmatprep.mubr.f32.mxu0 0.0
      %379 = vmatmul.mubr.f32.gmra.mrb[0].mxu0 %v255
      %v380 = vpop.f32.mrb[0].mxu0
      %v381 = vadd.f32 0.0, %v380
      %v382 = vpop.f32.mrb[0].mxu0
      %383 = vmatprep.mubr.f32.mxu0 0.0
      %384 = vmatmul.mubr.f32.gmra.mrb[0].mxu0 %v258
      %v385 = vpop.f32.mrb[0].mxu0
      %v386 = vadd.f32 0.0, %v385
      %v387 = vpop.f32.mrb[0].mxu0
      %388 = vdwg.mxu0
      %v389 = vmul.f32 %v351, 0.25
      %v390 = vmul.f32 %v356, 0.25
      %v391 = vmul.f32 %v361, 0.25
      %v392 = vmul.f32 %v366, 0.25
      %v393 = vmul.f32 %v371, 0.25
      %v394 = vmul.f32 %v376, 0.25
      %v395 = vmul.f32 %v381, 0.25
      %v396 = vmul.f32 %v386, 0.25
      %vm397 = vcmask 523264
      %v398 = vsel %vm397, %v389, -inf
      %399 = vmax.xlane.f32.xlu0 %v398
      %v400 = vpop.xlane.xlu0 %399
      %v401 = vsel %vm397, %v390, -inf
      %402 = vmax.xlane.f32.xlu0 %v401
      %v403 = vpop.xlane.xlu0 %402
      %v404 = vsel %vm397, %v391, -inf
      %405 = vmax.xlane.f32.xlu0 %v404
      %v406 = vpop.xlane.xlu0 %405
      %v407 = vsel %vm397, %v392, -inf
      %408 = vmax.xlane.f32.xlu0 %v407
      %v409 = vpop.xlane.xlu0 %408
      %v410 = vsel %vm397, %v393, -inf
      %411 = vmax.xlane.f32.xlu0 %v410
      %v412 = vpop.xlane.xlu0 %411
      %v413 = vsel %vm397, %v394, -inf
      %414 = vmax.xlane.f32.xlu0 %v413
      %v415 = vpop.xlane.xlu0 %414
      %v416 = vsel %vm397, %v395, -inf
      %417 = vmax.xlane.f32.xlu0 %v416
      %v418 = vpop.xlane.xlu0 %417
      %v419 = vsel %vm397, %v396, -inf
      %420 = vmax.xlane.f32.xlu0 %v419
      %v421 = vpop.xlane.xlu0 %420
      %v422 = vsub.f32 %v389, %v400
      %v423 = vsub.f32 %v390, %v403
      %v424 = vsub.f32 %v391, %v406
      %v425 = vsub.f32 %v392, %v409
      %v426 = vsub.f32 %v393, %v412
      %v427 = vsub.f32 %v394, %v415
      %v428 = vsub.f32 %v395, %v418
      %v429 = vsub.f32 %v396, %v421
      %v430 = vmul.f32 %v422, 1.442695
      %v431 = vpow.pop %v430
      %v432 = vmul.f32 %v423, 1.442695
      %v433 = vpow.pop %v432
      %v434 = vmul.f32 %v424, 1.442695
      %v435 = vpow.pop %v434
      %v436 = vmul.f32 %v425, 1.442695
      %v437 = vpow.pop %v436
      %v438 = vmul.f32 %v426, 1.442695
      %v439 = vpow.pop %v438
      %v440 = vmul.f32 %v427, 1.442695
      %v441 = vpow.pop %v440
      %v442 = vmul.f32 %v428, 1.442695
      %v443 = vpow.pop %v442
      %v444 = vmul.f32 %v429, 1.442695
      %v445 = vpow.pop %v444
      %v446 = vsel %vm397, %v431, 0.0
      %447 = vadd.xlane.f32.xlu0 %v446
      %v448 = vpop.xlane.xlu0 %447
      %v449 = vsel %vm397, %v433, 0.0
      %450 = vadd.xlane.f32.xlu0 %v449
      %v451 = vpop.xlane.xlu0 %450
      %v452 = vsel %vm397, %v435, 0.0
      %453 = vadd.xlane.f32.xlu0 %v452
      %v454 = vpop.xlane.xlu0 %453
      %v455 = vsel %vm397, %v437, 0.0
      %456 = vadd.xlane.f32.xlu0 %v455
      %v457 = vpop.xlane.xlu0 %456
      %v458 = vsel %vm397, %v439, 0.0
      %459 = vadd.xlane.f32.xlu0 %v458
      %v460 = vpop.xlane.xlu0 %459
      %v461 = vsel %vm397, %v441, 0.0
      %462 = vadd.xlane.f32.xlu0 %v461
      %v463 = vpop.xlane.xlu0 %462
      %v464 = vsel %vm397, %v443, 0.0
      %465 = vadd.xlane.f32.xlu0 %v464
      %v466 = vpop.xlane.xlu0 %465
      %v467 = vsel %vm397, %v445, 0.0
      %468 = vadd.xlane.f32.xlu0 %v467
      %v469 = vpop.xlane.xlu0 %468
      %v470 = vrcp.pop %v448
      %v471 = vmul.f32 %v431, %v470
      %v472 = vrcp.pop %v451
      %v473 = vmul.f32 %v433, %v472
      %v474 = vrcp.pop %v454
      %v475 = vmul.f32 %v435, %v474
      %v476 = vrcp.pop %v457
      %v477 = vmul.f32 %v437, %v476
      %v478 = vrcp.pop %v460
      %v479 = vmul.f32 %v439, %v478
      %v480 = vrcp.pop %v463
      %v481 = vmul.f32 %v441, %v480
      %v482 = vrcp.pop %v466
      %v483 = vmul.f32 %v443, %v482
      %v484 = vrcp.pop %v469
      %v485 = vmul.f32 %v445, %v484
      %v487 = vsel %vm397, %v471, 0
      %v490 = vsel %vm397, %v473, 0
      %v493 = vsel %vm397, %v475, 0
      %v496 = vsel %vm397, %v477, 0
      %v499 = vsel %vm397, %v479, 0
      %v502 = vsel %vm397, %v481, 0
      %v505 = vsel %vm397, %v483, 0
      %v508 = vsel %vm397, %v485, 0
      %510 = vmatprep.subr.mxu0 0.0
      %511 = vmatpush1.msra.mxu0 %v227
      %512 = vmatprep.subr.mxu0 0.0
      %513 = vmatpush1.msra.mxu0 %v228
      %514 = vmatprep.subr.mxu0 0.0
      %515 = vmatpush1.msra.mxu0 %v229
      %516 = vmatprep.subr.mxu0 0.0
      %517 = vmatpush1.msra.mxu0 %v230
      %518 = vmatprep.subr.mxu0 0.0
      %519 = vmatpush1.msra.mxu0 %v231
      %520 = vmatprep.subr.mxu0 0.0
      %521 = vmatpush1.msra.mxu0 %v232
      %522 = vmatprep.subr.mxu0 0.0
      %523 = vmatpush1.msra.mxu0 %v233
      %524 = vmatprep.subr.mxu0 0.0
      %525 = vmatpush1.msra.mxu0 %v234
      %526 = vmatprep.subr.mxu0 0.0
      %527 = vmatpush1.msra.mxu0 0.0
      %528 = vmatprep.subr.mxu0 0.0
      %529 = vmatpush1.msra.mxu0 0.0
      %530 = vmatprep.subr.mxu0 0.0
      %531 = vmatpush1.msra.mxu0 0.0
      %532 = vmatprep.subr.mxu0 0.0
      %533 = vmatpush1.msra.mxu0 0.0
      %534 = vmatprep.subr.mxu0 0.0
      %535 = vmatpush1.msra.mxu0 0.0
      %536 = vmatprep.subr.mxu0 0.0
      %537 = vmatpush1.msra.mxu0 0.0
      %538 = vmatprep.subr.mxu0 0.0
      %539 = vmatpush1.msra.mxu0 0.0
      %540 = vmatprep.subr.mxu0 0.0
      %541 = vmatpush1.msra.mxu0 0.0
      %542 = vmatprep.subr.mxu0 0.0
      %543 = vmatpush1.msra.mxu0 0.0
      %544 = vmatprep.subr.mxu0 0.0
      %545 = vmatpush1.msra.mxu0 0.0
      %546 = vmatprep.subr.mxu0 0.0
      %547 = vmatpush1.msra.mxu0 0.0
      %548 = vmatprep.subr.mxu0 0.0
      %549 = vmatpush1.msra.mxu0 0.0
      %550 = vmatprep.subr.mxu0 0.0
      %551 = vmatpush1.msra.mxu0 0.0
      %552 = vmatprep.subr.mxu0 0.0
      %553 = vmatpush1.msra.mxu0 0.0
      %554 = vmatprep.subr.mxu0 0.0
      %555 = vmatpush1.msra.mxu0 0.0
      %556 = vmatprep.subr.mxu0 0.0
      %557 = vmatpush1.msra.mxu0 0.0
      %558 = vmatprep.subr.mxu0 0.0
      %559 = vmatpush1.msra.mxu0 0.0
      %560 = vmatprep.subr.mxu0 0.0
      %561 = vmatpush1.msra.mxu0 0.0
      %562 = vmatprep.subr.mxu0 0.0
      %563 = vmatpush1.msra.mxu0 0.0
      %564 = vmatprep.subr.mxu0 0.0
      %565 = vmatpush1.msra.mxu0 0.0
      %566 = vmatprep.subr.mxu0 0.0
      %567 = vmatpush1.msra.mxu0 0.0
      %568 = vmatprep.subr.mxu0 0.0
      %569 = vmatpush1.msra.mxu0 0.0
      %570 = vmatprep.subr.mxu0 0.0
      %571 = vmatpush1.msra.mxu0 0.0
      %572 = vmatprep.subr.mxu0 0.0
      %573 = vmatpush1.msra.mxu0 0.0
      %574 = vmatprep.mubr.f32.mxu0 0.0
      %575 = vmatmul.mubr.f32.gmra.mrb[0].mxu0 %v487
      %v576 = vpop.f32.mrb[0].mxu0
      %v577 = vadd.f32 0.0, %v576
      %v578 = vpop.f32.mrb[0].mxu0
      %579 = vmatprep.mubr.f32.mxu0 0.0
      %580 = vmatmul.mubr.f32.gmra.mrb[0].mxu0 %v490
      %v581 = vpop.f32.mrb[0].mxu0
      %v582 = vadd.f32 0.0, %v581
      %v583 = vpop.f32.mrb[0].mxu0
      %584 = vmatprep.mubr.f32.mxu0 0.0
      %585 = vmatmul.mubr.f32.gmra.mrb[0].mxu0 %v493
      %v586 = vpop.f32.mrb[0].mxu0
      %v587 = vadd.f32 0.0, %v586
      %v588 = vpop.f32.mrb[0].mxu0
      %589 = vmatprep.mubr.f32.mxu0 0.0
      %590 = vmatmul.mubr.f32.gmra.mrb[0].mxu0 %v496
      %v591 = vpop.f32.mrb[0].mxu0
      %v592 = vadd.f32 0.0, %v591
      %v593 = vpop.f32.mrb[0].mxu0
      %594 = vmatprep.mubr.f32.mxu0 0.0
      %595 = vmatmul.mubr.f32.gmra.mrb[0].mxu0 %v499
      %v596 = vpop.f32.mrb[0].mxu0
      %v597 = vadd.f32 0.0, %v596
      %v598 = vpop.f32.mrb[0].mxu0
      %599 = vmatprep.mubr.f32.mxu0 0.0
      %600 = vmatmul.mubr.f32.gmra.mrb[0].mxu0 %v502
      %v601 = vpop.f32.mrb[0].mxu0
      %v602 = vadd.f32 0.0, %v601
      %v603 = vpop.f32.mrb[0].mxu0
      %604 = vmatprep.mubr.f32.mxu0 0.0
      %605 = vmatmul.mubr.f32.gmra.mrb[0].mxu0 %v505
      %v606 = vpop.f32.mrb[0].mxu0
      %v607 = vadd.f32 0.0, %v606
      %v608 = vpop.f32.mrb[0].mxu0
      %609 = vmatprep.mubr.f32.mxu0 0.0
      %610 = vmatmul.mubr.f32.gmra.mrb[0].mxu0 %v508
      %v611 = vpop.f32.mrb[0].mxu0
      %v612 = vadd.f32 0.0, %v611
      %v613 = vpop.f32.mrb[0].mxu0
      %614 = vdwg.mxu0
      %615 = vst.msk [vmem:[%s210] sm:$0xff] %vm235, %v577
      %616 = vst.msk [vmem:[%s210 + $0x8] sm:$0xff] %vm235, %v582
      %617 = vst.msk [vmem:[%s210 + $0x10] sm:$0xff] %vm235, %v587
      %618 = vst.msk [vmem:[%s210 + $0x18] sm:$0xff] %vm235, %v592
      %619 = vst.msk [vmem:[%s210 + $0x20] sm:$0xff] %vm235, %v597
      %620 = vst.msk [vmem:[%s210 + $0x28] sm:$0xff] %vm235, %v602
      %621 = vst.msk [vmem:[%s210 + $0x30] sm:$0xff] %vm235, %v607
      %622 = vst.msk [vmem:[%s210 + $0x38] sm:$0xff] %vm235, %v612
      %p623 = scmp.lt.s32.totalorder %s14, 7
      %s624 = scalar_select %p623, %s14, 7
      %s625 = smul.addr %s624, 8
      %s626 = smul.addr %s625, 8
      %s627 = scalar_lea.vmem %s3, %s626
      // Predicated region
      $region33: #{decoder_forward.31} parent=31 // pred_check
        %p628 = pneg %p110
      $region34: #{decoder_forward.31} parent=31 // pred_check_branch
        %630 = sbr.rel (%p628) target = $region36
      $region35: #{decoder_forward.31} parent=31 // pred_region
        _
      $region36: #{decoder_forward.31} parent=31 // pred_fallthru
        _
    $region32: #{decoder_forward.31} parent=5 // pred_fallthru
      _
    %p631 = scmp.le.s32.totalorder 2, %s9
    // Predicated region
    $region37: #{decoder_forward.31} parent=5 // pred_check
      %p632 = pneg %p631
    $region38: #{decoder_forward.31} parent=5 // pred_check_branch
      %634 = sbr.rel (%p632) target = $region40
    $region39: #{decoder_forward.31} parent=5 // pred_region
      %s635 = ssub.s32 %s9, 2
      // Predicated region
      $region41: #{decoder_forward.31} parent=39 // pred_check
        %p636 = pneg %p116
      $region42: #{decoder_forward.31} parent=39 // pred_check_branch
        %638 = sbr.rel (%p636) target = $region44
      $region43: #{decoder_forward.31} parent=39 // pred_region
        %p639 = scmp.lt.s32.totalorder %s15, 7
        %s640 = scalar_select %p639, %s15, 7
        %s641 = smul.addr %s640, 8
        %s642 = smul.addr %s641, 8
        %s643 = scalar_lea.vmem %s3, %s642
      $region44: #{decoder_forward.31} parent=39 // pred_fallthru
        _
    $region40: #{decoder_forward.31} parent=5 // pred_fallthru
      _
  $region6: #{decoder_forward.31} parent=0 // loop_footer
    %s13 = sadd.s32 1, %s9
  $region7: #{decoder_forward.31} parent=0 // loop_footer_branch
    %8 = sbr.rel target = $region3
  $region8: #{decoder_forward.31} parent=0 // loop_exit
    _

// kernel: decoder_forward.33
$region0: #{decoder_forward.33}
  #allocation0 [shape = 'u32[]', space=smem, size = 0x4, offset = 0x4, fixed_abs, tag = 'smem constant byte address 0x4 - core index']
  #allocation1 [shape = 'u32[144,128]{1,0:T(1,128)}', space=vmem, size = 0x12000, scoped, tag = 'internal scratch']
  %s0 = inlined_call_operand.vmem [shape: f32[128,64], index: 0, kind: input, shape index: {}]
  %s1 = inlined_call_operand.vmem [shape: f32[1,64], index: 1, kind: input, shape index: {}]
  %s2 = inlined_call_operand.vmem [shape: f32[1,64], index: 2, kind: input, shape index: {}]
  %s3 = inlined_call_operand.vmem [shape: f32[128,64], index: 3, kind: output, shape index: {}]
  %s4 = sld [smem:[#allocation0]]
  $region22: #{decoder_forward.33} parent=0
    _
  %s6 = ssub.s32 1, %s4
  %s7 = scalar_select 0, %s6, %s4
  // Predicated region
  $region2: #{decoder_forward.33} parent=0 // pred_check
    _
  $region3: #{decoder_forward.33} parent=0 // pred_check_branch
    %9 = sbr.rel (0) target = $region5
  $region4: #{decoder_forward.33} parent=0 // pred_region
    _
  $region5: #{decoder_forward.33} parent=0 // pred_fallthru
    _
  // Predicated region
  $region6: #{decoder_forward.33} parent=0 // pred_check
    _
  $region7: #{decoder_forward.33} parent=0 // pred_check_branch
    %11 = sbr.rel (0) target = $region9
  $region8: #{decoder_forward.33} parent=0 // pred_region
    _
  $region9: #{decoder_forward.33} parent=0 // pred_fallthru
    _
  // Predicated region
  $region10: #{decoder_forward.33} parent=0 // pred_check
    _
  $region11: #{decoder_forward.33} parent=0 // pred_check_branch
    %13 = sbr.rel (0) target = $region13
  $region12: #{decoder_forward.33} parent=0 // pred_region
    _
  $region13: #{decoder_forward.33} parent=0 // pred_fallthru
    _
  %v14 = vld [vmem:[%s0] sm:$0xff]
  %v15 = vld [vmem:[%s0 + $0x8] sm:$0xff]
  %v16 = vld [vmem:[%s0 + $0x10] sm:$0xff]
  %v17 = vld [vmem:[%s0 + $0x18] sm:$0xff]
  %v18 = vld [vmem:[%s0 + $0x20] sm:$0xff]
  %v19 = vld [vmem:[%s0 + $0x28] sm:$0xff]
  %v20 = vld [vmem:[%s0 + $0x30] sm:$0xff]
  %v21 = vld [vmem:[%s0 + $0x38] sm:$0xff]
  %v22 = vld [vmem:[%s0 + $0x40] sm:$0xff]
  %v23 = vld [vmem:[%s0 + $0x48] sm:$0xff]
  %v24 = vld [vmem:[%s0 + $0x50] sm:$0xff]
  %v25 = vld [vmem:[%s0 + $0x58] sm:$0xff]
  %v26 = vld [vmem:[%s0 + $0x60] sm:$0xff]
  %v27 = vld [vmem:[%s0 + $0x68] sm:$0xff]
  %v28 = vld [vmem:[%s0 + $0x70] sm:$0xff]
  %v29 = vld [vmem:[%s0 + $0x78] sm:$0xff]
  %vm30 = vcmask 523264
  %v31 = vsel %vm30, %v14, 0.0
  %32 = vadd.xlane.f32.xlu0 %v31
  %v33 = vpop.xlane.xlu0 %32
  %v34 = vsel %vm30, %v15, 0.0
  %35 = vadd.xlane.f32.xlu0 %v34
  %v36 = vpop.xlane.xlu0 %35
  %v37 = vsel %vm30, %v16, 0.0
  %38 = vadd.xlane.f32.xlu0 %v37
  %v39 = vpop.xlane.xlu0 %38
  %v40 = vsel %vm30, %v17, 0.0
  %41 = vadd.xlane.f32.xlu0 %v40
  %v42 = vpop.xlane.xlu0 %41
  %v43 = vsel %vm30, %v18, 0.0
  %44 = vadd.xlane.f32.xlu0 %v43
  %v45 = vpop.xlane.xlu0 %44
  %v46 = vsel %vm30, %v19, 0.0
  %47 = vadd.xlane.f32.xlu0 %v46
  %v48 = vpop.xlane.xlu0 %47
  %v49 = vsel %vm30, %v20, 0.0
  %50 = vadd.xlane.f32.xlu0 %v49
  %v51 = vpop.xlane.xlu0 %50
  %v52 = vsel %vm30, %v21, 0.0
  %53 = vadd.xlane.f32.xlu0 %v52
  %v54 = vpop.xlane.xlu0 %53
  %v55 = vsel %vm30, %v22, 0.0
  %56 = vadd.xlane.f32.xlu0 %v55
  %v57 = vpop.xlane.xlu0 %56
  %v58 = vsel %vm30, %v23, 0.0
  %59 = vadd.xlane.f32.xlu0 %v58
  %v60 = vpop.xlane.xlu0 %59
  %v61 = vsel %vm30, %v24, 0.0
  %62 = vadd.xlane.f32.xlu0 %v61
  %v63 = vpop.xlane.xlu0 %62
  %v64 = vsel %vm30, %v25, 0.0
  %65 = vadd.xlane.f32.xlu0 %v64
  %v66 = vpop.xlane.xlu0 %65
  %v67 = vsel %vm30, %v26, 0.0
  %68 = vadd.xlane.f32.xlu0 %v67
  %v69 = vpop.xlane.xlu0 %68
  %v70 = vsel %vm30, %v27, 0.0
  %71 = vadd.xlane.f32.xlu0 %v70
  %v72 = vpop.xlane.xlu0 %71
  %v73 = vsel %vm30, %v28, 0.0
  %74 = vadd.xlane.f32.xlu0 %v73
  %v75 = vpop.xlane.xlu0 %74
  %v76 = vsel %vm30, %v29, 0.0
  %77 = vadd.xlane.f32.xlu0 %v76
  %v78 = vpop.xlane.xlu0 %77
  %v79 = vrcp.pop 64.0
  %v80 = vmul.f32 %v33, %v79
  %v81 = vmul.f32 %v36, %v79
  %v82 = vmul.f32 %v39, %v79
  %v83 = vmul.f32 %v42, %v79
  %v84 = vmul.f32 %v45, %v79
  %v85 = vmul.f32 %v48, %v79
  %v86 = vmul.f32 %v51, %v79
  %v87 = vmul.f32 %v54, %v79
  %v88 = vmul.f32 %v57, %v79
  %v89 = vmul.f32 %v60, %v79
  %v90 = vmul.f32 %v63, %v79
  %v91 = vmul.f32 %v66, %v79
  %v92 = vmul.f32 %v69, %v79
  %v93 = vmul.f32 %v72, %v79
  %v94 = vmul.f32 %v75, %v79
  %v95 = vmul.f32 %v78, %v79
  %v96 = vsub.f32 %v14, %v80
  %v97 = vsub.f32 %v15, %v81
  %v98 = vsub.f32 %v16, %v82
  %v99 = vsub.f32 %v17, %v83
  %v100 = vsub.f32 %v18, %v84
  %v101 = vsub.f32 %v19, %v85
  %v102 = vsub.f32 %v20, %v86
  %v103 = vsub.f32 %v21, %v87
  %v104 = vsub.f32 %v22, %v88
  %v105 = vsub.f32 %v23, %v89
  %v106 = vsub.f32 %v24, %v90
  %v107 = vsub.f32 %v25, %v91
  %v108 = vsub.f32 %v26, %v92
  %v109 = vsub.f32 %v27, %v93
  %v110 = vsub.f32 %v28, %v94
  %v111 = vsub.f32 %v29, %v95
  %v112 = vmul.f32 %v96, %v96
  %v113 = vmul.f32 %v97, %v97
  %v114 = vmul.f32 %v98, %v98
  %v115 = vmul.f32 %v99, %v99
  %v116 = vmul.f32 %v100, %v100
  %v117 = vmul.f32 %v101, %v101
  %v118 = vmul.f32 %v102, %v102
  %v119 = vmul.f32 %v103, %v103
  %v120 = vmul.f32 %v104, %v104
  %v121 = vmul.f32 %v105, %v105
  %v122 = vmul.f32 %v106, %v106
  %v123 = vmul.f32 %v107, %v107
  %v124 = vmul.f32 %v108, %v108
  %v125 = vmul.f32 %v109, %v109
  %v126 = vmul.f32 %v110, %v110
  %v127 = vmul.f32 %v111, %v111
  %v128 = vsel %vm30, %v112, 0.0
  %129 = vadd.xlane.f32.xlu0 %v128
  %v130 = vpop.xlane.xlu0 %129
  %v131 = vsel %vm30, %v113, 0.0
  %132 = vadd.xlane.f32.xlu0 %v131
  %v133 = vpop.xlane.xlu0 %132
  %v134 = vsel %vm30, %v114, 0.0
  %135 = vadd.xlane.f32.xlu0 %v134
  %v136 = vpop.xlane.xlu0 %135
  %v137 = vsel %vm30, %v115, 0.0
  %138 = vadd.xlane.f32.xlu0 %v137
  %v139 = vpop.xlane.xlu0 %138
  %v140 = vsel %vm30, %v116, 0.0
  %141 = vadd.xlane.f32.xlu0 %v140
  %v142 = vpop.xlane.xlu0 %141
  %v143 = vsel %vm30, %v117, 0.0
  %144 = vadd.xlane.f32.xlu0 %v143
  %v145 = vpop.xlane.xlu0 %144
  %v146 = vsel %vm30, %v118, 0.0
  %147 = vadd.xlane.f32.xlu0 %v146
  %v148 = vpop.xlane.xlu0 %147
  %v149 = vsel %vm30, %v119, 0.0
  %150 = vadd.xlane.f32.xlu0 %v149
  %v151 = vpop.xlane.xlu0 %150
  %v152 = vsel %vm30, %v120, 0.0
  %153 = vadd.xlane.f32.xlu0 %v152
  %v154 = vpop.xlane.xlu0 %153
  %v155 = vsel %vm30, %v121, 0.0
  %156 = vadd.xlane.f32.xlu0 %v155
  %v157 = vpop.xlane.xlu0 %156
  %v158 = vsel %vm30, %v122, 0.0
  %159 = vadd.xlane.f32.xlu0 %v158
  %v160 = vpop.xlane.xlu0 %159
  %v161 = vsel %vm30, %v123, 0.0
  %162 = vadd.xlane.f32.xlu0 %v161
  %v163 = vpop.xlane.xlu0 %162
  %v164 = vsel %vm30, %v124, 0.0
  %165 = vadd.xlane.f32.xlu0 %v164
  %v166 = vpop.xlane.xlu0 %165
  %v167 = vsel %vm30, %v125, 0.0
  %168 = vadd.xlane.f32.xlu0 %v167
  %v169 = vpop.xlane.xlu0 %168
  %v170 = vsel %vm30, %v126, 0.0
  %171 = vadd.xlane.f32.xlu0 %v170
  %v172 = vpop.xlane.xlu0 %171
  %v173 = vsel %vm30, %v127, 0.0
  %174 = vadd.xlane.f32.xlu0 %v173
  %v175 = vpop.xlane.xlu0 %174
  %v176 = vmul.f32 %v130, %v79
  %v177 = vmul.f32 %v133, %v79
  %v178 = vmul.f32 %v136, %v79
  %v179 = vmul.f32 %v139, %v79
  %v180 = vmul.f32 %v142, %v79
  %v181 = vmul.f32 %v145, %v79
  %v182 = vmul.f32 %v148, %v79
  %v183 = vmul.f32 %v151, %v79
  %v184 = vmul.f32 %v154, %v79
  %v185 = vmul.f32 %v157, %v79
  %v186 = vmul.f32 %v160, %v79
  %v187 = vmul.f32 %v163, %v79
  %v188 = vmul.f32 %v166, %v79
  %v189 = vmul.f32 %v169, %v79
  %v190 = vmul.f32 %v172, %v79
  %v191 = vmul.f32 %v175, %v79
  %v192 = vadd.f32 %v176, 1e-05
  %v193 = vadd.f32 %v177, 1e-05
  %v194 = vadd.f32 %v178, 1e-05
  %v195 = vadd.f32 %v179, 1e-05
  %v196 = vadd.f32 %v180, 1e-05
  %v197 = vadd.f32 %v181, 1e-05
  %v198 = vadd.f32 %v182, 1e-05
  %v199 = vadd.f32 %v183, 1e-05
  %v200 = vadd.f32 %v184, 1e-05
  %v201 = vadd.f32 %v185, 1e-05
  %v202 = vadd.f32 %v186, 1e-05
  %v203 = vadd.f32 %v187, 1e-05
  %v204 = vadd.f32 %v188, 1e-05
  %v205 = vadd.f32 %v189, 1e-05
  %v206 = vadd.f32 %v190, 1e-05
  %v207 = vadd.f32 %v191, 1e-05
  %v208 = vrsqrt.pop %v192
  %v209 = vrsqrt.pop %v193
  %v210 = vrsqrt.pop %v194
  %v211 = vrsqrt.pop %v195
  %v212 = vrsqrt.pop %v196
  %v213 = vrsqrt.pop %v197
  %v214 = vrsqrt.pop %v198
  %v215 = vrsqrt.pop %v199
  %v216 = vrsqrt.pop %v200
  %v217 = vrsqrt.pop %v201
  %v218 = vrsqrt.pop %v202
  %v219 = vrsqrt.pop %v203
  %v220 = vrsqrt.pop %v204
  %v221 = vrsqrt.pop %v205
  %v222 = vrsqrt.pop %v206
  %v223 = vrsqrt.pop %v207
  %v224 = vmul.f32 %v96, %v208
  %v225 = vmul.f32 %v97, %v209
  %v226 = vmul.f32 %v98, %v210
  %v227 = vmul.f32 %v99, %v211
  %v228 = vmul.f32 %v100, %v212
  %v229 = vmul.f32 %v101, %v213
  %v230 = vmul.f32 %v102, %v214
  %v231 = vmul.f32 %v103, %v215
  %v232 = vmul.f32 %v104, %v216
  %v233 = vmul.f32 %v105, %v217
  %v234 = vmul.f32 %v106, %v218
  %v235 = vmul.f32 %v107, %v219
  %v236 = vmul.f32 %v108, %v220
  %v237 = vmul.f32 %v109, %v221
  %v238 = vmul.f32 %v110, %v222
  %v239 = vmul.f32 %v111, %v223
  %v240 = vld [vmem:[%s1] sm:$0x1]
  %v242 = vlaneseq
  %v243 = vshrl.u32 %v242, 7
  %v244 = vsub.s32 0, %v243
  %v245 = vrot.slane %v240, %v244
  %v247 = vmul.f32 %v224, %v245
  %v248 = vmul.f32 %v225, %v245
  %v249 = vmul.f32 %v226, %v245
  %v250 = vmul.f32 %v227, %v245
  %v251 = vmul.f32 %v228, %v245
  %v252 = vmul.f32 %v229, %v245
  %v253 = vmul.f32 %v230, %v245
  %v254 = vmul.f32 %v231, %v245
  %v255 = vmul.f32 %v232, %v245
  %v256 = vmul.f32 %v233, %v245
  %v257 = vmul.f32 %v234, %v245
  %v258 = vmul.f32 %v235, %v245
  %v259 = vmul.f32 %v236, %v245
  %v260 = vmul.f32 %v237, %v245
  %v261 = vmul.f32 %v238, %v245
  %v262 = vmul.f32 %v239, %v245
  %v263 = vld [vmem:[%s2] sm:$0x1]
  %v265 = vlaneseq
  %v266 = vshrl.u32 %v265, 7
  %v267 = vsub.s32 0, %v266
  %v268 = vrot.slane %v263, %v267
  %v270 = vadd.f32 %v247, %v268
  %v271 = vadd.f32 %v248, %v268
  %v272 = vadd.f32 %v249, %v268
  %v273 = vadd.f32 %v250, %v268
  %v274 = vadd.f32 %v251, %v268
  %v275 = vadd.f32 %v252, %v268
  %v276 = vadd.f32 %v253, %v268
  %v277 = vadd.f32 %v254, %v268
  %v278 = vadd.f32 %v255, %v268
  %v279 = vadd.f32 %v256, %v268
  %v280 = vadd.f32 %v257, %v268
  %v281 = vadd.f32 %v258, %v268
  %v282 = vadd.f32 %v259, %v268
  %v283 = vadd.f32 %v260, %v268
  %v284 = vadd.f32 %v261, %v268
  %v285 = vadd.f32 %v262, %v268
  %286 = vst.msk [vmem:[%s3] sm:$0xff] %vm30, %v270
  %287 = vst.msk [vmem:[%s3 + $0x8] sm:$0xff] %vm30, %v271
  %288 = vst.msk [vmem:[%s3 + $0x10] sm:$0xff] %vm30, %v272
  %289 = vst.msk [vmem:[%s3 + $0x18] sm:$0xff] %vm30, %v273
  %290 = vst.msk [vmem:[%s3 + $0x20] sm:$0xff] %vm30, %v274
  %291 = vst.msk [vmem:[%s3 + $0x28] sm:$0xff] %vm30, %v275
  %292 = vst.msk [vmem:[%s3 + $0x30] sm:$0xff] %vm30, %v276
  %293 = vst.msk [vmem:[%s3 + $0x38] sm:$0xff] %vm30, %v277
  %294 = vst.msk [vmem:[%s3 + $0x40] sm:$0xff] %vm30, %v278
  %295 = vst.msk [vmem:[%s3 + $0x48] sm:$0xff] %vm30, %v279
  %296 = vst.msk [vmem:[%s3 + $0x50] sm:$0xff] %vm30, %v280
  %297 = vst.msk [vmem:[%s3 + $0x58] sm:$0xff] %vm30, %v281
  %298 = vst.msk [vmem:[%s3 + $0x60] sm:$0xff] %vm30, %v282
  %299 = vst.msk [vmem:[%s3 + $0x68] sm:$0xff] %vm30, %v283
  %300 = vst.msk [vmem:[%s3 + $0x70] sm:$0xff] %vm30, %v284
  %301 = vst.msk [vmem:[%s3 + $0x78] sm:$0xff] %vm30, %v285
  // Predicated region
  $region14: #{decoder_forward.33} parent=0 // pred_check
    _
  $region15: #{decoder_forward.33} parent=0 // pred_check_branch
    %303 = sbr.rel (0) target = $region17
  $region16: #{decoder_forward.33} parent=0 // pred_region
    _
  $region17: #{decoder_forward.33} parent=0 // pred_fallthru
    _
  // Predicated region
  $region18: #{decoder_forward.33} parent=0 // pred_check
    _
  $region19: #{decoder_forward.33} parent=0 // pred_check_branch
    %305 = sbr.rel (0) target = $region21
  $region20: #{decoder_forward.33} parent=0 // pred_region
    _
  $region21: #{decoder_forward.33} parent=0 // pred_fallthru
    _

// kernel: decoder_forward.46
$region0: #{decoder_forward.46}
  #allocation0 [shape = 'u32[]', space=smem, size = 0x4, offset = 0x4, fixed_abs, tag = 'smem constant byte address 0x4 - core index']
  #allocation1 [shape = 'u32[144,128]{1,0:T(1,128)}', space=vmem, size = 0x12000, scoped, tag = 'internal scratch']
  #allocation2 [shape = 'f32[512,128]{1,0:T(8,128)}', space=vmem, size = 0x40000, scoped, tag = 'scratch operand']
  %s0 = inlined_call_operand.vmem [shape: bf16[512,1024], index: 0, kind: input, shape index: {}]
  %s1 = inlined_call_operand.vmem [shape: bf16[1024,128], index: 1, kind: input, shape index: {}]
  %s2 = inlined_call_operand.vmem [shape: f32[1,128], index: 2, kind: input, shape index: {}]
  %s3 = inlined_call_operand.vmem [shape: f32[512,128], index: 3, kind: output, shape index: {}]
  %s4 = sld [smem:[#allocation0]]
  $region76: #{decoder_forward.46} parent=0
    _
  %s6 = ssub.s32 1, %s4
  %s7 = scalar_select 0, %s6, %s4
  $region1: #{decoder_forward.46} parent=0
    #allocation3 [shape = 'u8[1048576]{0}', space=vmem, size = 0x100000, scoped, tag = 'input window, operand 0']
    loop: start=0, step=1, limit=4
    $region2: #{decoder_forward.46} parent=1 // loop_pre_header
      _
    $region3: #{decoder_forward.46} parent=1 // loop_header
      %s9 = sphi 0, %s13
      %p10 = scmp.ge.s32.totalorder %s9, 4
      %s16 = sphi 0, %s35
      %s17 = sphi 0, %s31
      %s18 = sphi 0, %s27
      %s19 = sphi 0, %s16
      %s20 = sphi 0, %s17
      %s21 = sphi 0, %s18
      %s22 = sphi 0, %s19
      %s23 = sphi 0, %s20
      %s24 = sphi 0, %s21
      %s40 = sphi 0, %s42
      %s43 = sphi 0, %s40
      %s44 = sphi 0, %s43
      %s60 = sphi 0, %s44
      %s68 = sphi 0, %s70
      %s71 = sphi 0, %s68
      %s72 = sphi 0, %s71
      %s88 = sphi 0, %s72
      %s94 = sphi 0, %s96
      %s97 = sphi 0, %s94
      %s98 = sphi 0, %s97
      %s114 = sphi 0, %s98
      %s122 = sphi 0, %s124
      %s125 = sphi 0, %s122
      %s126 = sphi 0, %s125
      %s142 = sphi 0, %s126
    $region4: #{decoder_forward.46} parent=1 // loop_header_branch
      %12 = sbr.rel (%p10) target = $region8
    $region5: #{decoder_forward.46} parent=1 // loop_body
      %s14 = ssub.s32 %s9, 1
      %s15 = ssub.s32 %s9, 2
      %s25 = sadd.s32 1, %s18
      %p26 = scmp.ge.s32.totalorder %s25, 2
      %s27 = scalar_select %p26, 0, %s25
      %s28 = sadd.s32 1, %s17
      %s29 = scalar_select %p26, %s28, %s17
      %p30 = scmp.ge.s32.totalorder %s29, 1
      %s31 = scalar_select %p30, 0, %s29
      %s32 = sadd.s32 1, %s16
      %s33 = scalar_select %p30, %s32, %s16
      %p34 = scmp.ge.s32.totalorder %s33, 1
      %s35 = scalar_select %p34, 0, %s33
      %s36 = ssub.s32 %s16, %s35
      %s37 = ssub.s32 %s18, %s27
      %s38 = sor.u32 %s36, %s37
      %p39 = scmp.eq.s32.totalorder %s38, 0
      %s41 = sadd.s32 %s40, 1
      %s42 = scalar_select %p39, %s40, %s41
      %p45 = pneg %p39
      %p46 = scmp.eq.s32.totalorder %s9, 1
      %p47 = por %p45, %p46
      %p48 = scmp.ne.s32.totalorder %s40, %s43
      %p49 = scmp.eq.s32.totalorder %s9, 0
      %p50 = por %p48, %p49
      %p51 = scmp.ne.s32.totalorder %s40, %s43
      %p52 = scmp.eq.s32.totalorder %s14, 1
      %p53 = por %p51, %p52
      %p54 = scmp.ne.s32.totalorder %s43, %s44
      %p55 = scmp.eq.s32.totalorder %s14, 0
      %p56 = por %p54, %p55
      %p57 = scmp.ne.s32.totalorder %s43, %s44
      %p58 = scmp.eq.s32.totalorder %s15, 1
      %p59 = por %p57, %p58
      %p61 = scmp.ne.s32.totalorder %s44, %s60
      %p62 = scmp.eq.s32.totalorder %s15, 0
      %p63 = por %p61, %p62
      %s64 = ssub.s32 %s18, %s27
      %s65 = ssub.s32 %s17, %s31
      %s66 = sor.u32 %s64, %s65
      %p67 = scmp.eq.s32.totalorder %s66, 0
      %s69 = sadd.s32 %s68, 1
      %s70 = scalar_select %p67, %s68, %s69
      %p73 = pneg %p67
      %p74 = scmp.eq.s32.totalorder %s9, 1
      %p75 = por %p73, %p74
      %p76 = scmp.ne.s32.totalorder %s68, %s71
      %p77 = scmp.eq.s32.totalorder %s9, 0
      %p78 = por %p76, %p77
      %p79 = scmp.ne.s32.totalorder %s68, %s71
      %p80 = scmp.eq.s32.totalorder %s14, 1
      %p81 = por %p79, %p80
      %p82 = scmp.ne.s32.totalorder %s71, %s72
      %p83 = scmp.eq.s32.totalorder %s14, 0
      %p84 = por %p82, %p83
      %p85 = scmp.ne.s32.totalorder %s71, %s72
      %p86 = scmp.eq.s32.totalorder %s15, 1
      %p87 = por %p85, %p86
      %p89 = scmp.ne.s32.totalorder %s72, %s88
      %p90 = scmp.eq.s32.totalorder %s15, 0
      %p91 = por %p89, %p90
      %s92 = ssub.s32 %s17, %s31
      %p93 = scmp.eq.s32.totalorder %s92, 0
      %s95 = sadd.s32 %s94, 1
      %s96 = scalar_select %p93, %s94, %s95
      %p99 = pneg %p93
      %p100 = scmp.eq.s32.totalorder %s9, 1
      %p101 = por %p99, %p100
      %p102 = scmp.ne.s32.totalorder %s94, %s97
      %p103 = scmp.eq.s32.totalorder %s9, 0
      %p104 = por %p102, %p103
      %p105 = scmp.ne.s32.totalorder %s94, %s97
      %p106 = scmp.eq.s32.totalorder %s14, 1
      %p107 = por %p105, %p106
      %p108 = scmp.ne.s32.totalorder %s97, %s98
      %p109 = scmp.eq.s32.totalorder %s14, 0
      %p110 = por %p108, %p109
      %p111 = scmp.ne.s32.totalorder %s97, %s98
      %p112 = scmp.eq.s32.totalorder %s15, 1
      %p113 = por %p111, %p112
      %p115 = scmp.ne.s32.totalorder %s98, %s114
      %p116 = scmp.eq.s32.totalorder %s15, 0
      %p117 = por %p115, %p116
      %s118 = ssub.s32 %s16, %s35
      %s119 = ssub.s32 %s17, %s31
      %s120 = sor.u32 %s118, %s119
      %p121 = scmp.eq.s32.totalorder %s120, 0
      %s123 = sadd.s32 %s122, 1
      %s124 = scalar_select %p121, %s122, %s123
      %p127 = pneg %p121
      %p128 = scmp.eq.s32.totalorder %s9, 1
      %p129 = por %p127, %p128
      %p130 = scmp.ne.s32.totalorder %s122, %s125
      %p131 = scmp.eq.s32.totalorder %s9, 0
      %p132 = por %p130, %p131
      %p133 = scmp.ne.s32.totalorder %s122, %s125
      %p134 = scmp.eq.s32.totalorder %s14, 1
      %p135 = por %p133, %p134
      %p136 = scmp.ne.s32.totalorder %s125, %s126
      %p137 = scmp.eq.s32.totalorder %s14, 0
      %p138 = por %p136, %p137
      %p139 = scmp.ne.s32.totalorder %s125, %s126
      %p140 = scmp.eq.s32.totalorder %s15, 1
      %p141 = por %p139, %p140
      %p143 = scmp.ne.s32.totalorder %s126, %s142
      %p144 = scmp.eq.s32.totalorder %s15, 0
      %p145 = por %p143, %p144
      %p146 = scmp.le.s32.totalorder 1, %s9
      %p147 = scmp.lt.s32.totalorder %s9, 3
      %p148 = pnand %p146, %p147
      %p149 = pneg %p148
      // Predicated region
      $region9: #{decoder_forward.46} parent=5 // pred_check
        _
      $region10: #{decoder_forward.46} parent=5 // pred_check_branch
        %151 = sbr.rel (%p148) target = $region12
      $region11: #{decoder_forward.46} parent=5 // pred_region
        %s152 = ssub.s32 %s9, 1
        // Predicated region
        $region13: #{decoder_forward.46} parent=11 // pred_check
          %p153 = pneg %p110
        $region14: #{decoder_forward.46} parent=11 // pred_check_branch
          %155 = sbr.rel (%p153) target = $region16
        $region15: #{decoder_forward.46} parent=11 // pred_region
          %p156 = scmp.lt.s32.totalorder %s20, 0
          %s157 = scalar_select %p156, %s20, 0
          %s158 = scalar_lea.vmem %s2, %s157
        $region16: #{decoder_forward.46} parent=11 // pred_fallthru
          _
      $region12: #{decoder_forward.46} parent=5 // pred_fallthru
        _
      %p159 = scmp.lt.s32.totalorder %s9, 2
      // Predicated region
      $region17: #{decoder_forward.46} parent=5 // pred_check
        %p160 = pneg %p159
      $region18: #{decoder_forward.46} parent=5 // pred_check_branch
        %162 = sbr.rel (%p160) target = $region20
      $region19: #{decoder_forward.46} parent=5 // pred_region
        // Predicated region
        $region21: #{decoder_forward.46} parent=19 // pred_check
          %p163 = pneg %p50
        $region22: #{decoder_forward.46} parent=19 // pred_check_branch
          %165 = sbr.rel (%p163) target = $region24
        $region23: #{decoder_forward.46} parent=19 // pred_region
          %s166 = sand.u32 %s40, 1
          %s167 = sand.u32 %s40, 1
          %s168 = smul.addr %s167, 1024
          %s169 = scalar_lea.vmem [#allocation3], %s168
          %s170 = smul.u32 64, %s16
          %s171 = smul.u32 4, %s18
          %s172 = smul.addr %s170, 8
          %s173 = sadd.s32 %s171, %s172
          %s174 = smul.addr %s173, 4
          %s175 = scalar_lea.vmem %s0, %s174
          // Predicated region
          $region25: #{decoder_forward.46} parent=23 // pred_check
            _
          $region26: #{decoder_forward.46} parent=23 // pred_check_branch
            %177 = sbr.rel (0) target = $region28
          $region27: #{decoder_forward.46} parent=23 // pred_region
            // Predicated region
            $region29: #{decoder_forward.46} parent=27 // pred_check
              _
            $region30: #{decoder_forward.46} parent=27 // pred_check_branch
              %179 = sbr.rel (0) target = $region32
            $region31: #{decoder_forward.46} parent=27 // pred_region
              loop: start=0, step=1, limit=1
              $region33: #{decoder_forward.46} parent=31 // loop_pre_header
                _
              $region34: #{decoder_forward.46} parent=31 // loop_header
                %s181 = sphi 0, %s185
                %p182 = scmp.ge.s32.totalorder %s181, 1
                %s186 = sphi %s175, %s175
                %s187 = sphi %s169, %s169
              $region35: #{decoder_forward.46} parent=31 // loop_header_branch
                %184 = sbr.rel (%p182) target = $region39
              $region36: #{decoder_forward.46} parent=31 // loop_body
                %v188 = vld [vmem:[%s186] sm:$0xff]
                %189 = vst [vmem:[%s187] sm:$0xff] %v188
                %v190 = vld [vmem:[%s186 + $0x8] sm:$0xff]
                %191 = vst [vmem:[%s187 + $0x8] sm:$0xff] %v190
                %v192 = vld [vmem:[%s186 + $0x20] sm:$0xff]
                %193 = vst [vmem:[%s187 + $0x10] sm:$0xff] %v192
                %v194 = vld [vmem:[%s186 + $0x28] sm:$0xff]
                %195 = vst [vmem:[%s187 + $0x18] sm:$0xff] %v194
                %v196 = vld [vmem:[%s186 + $0x40] sm:$0xff]
                %197 = vst [vmem:[%s187 + $0x20] sm:$0xff] %v196
                %v198 = vld [vmem:[%s186 + $0x48] sm:$0xff]
                %199 = vst [vmem:[%s187 + $0x28] sm:$0xff] %v198
                %v200 = vld [vmem:[%s186 + $0x60] sm:$0xff]
                %201 = vst [vmem:[%s187 + $0x30] sm:$0xff] %v200
                %v202 = vld [vmem:[%s186 + $0x68] sm:$0xff]
                %203 = vst [vmem:[%s187 + $0x38] sm:$0xff] %v202
                %v204 = vld [vmem:[%s186 + $0x80] sm:$0xff]
                %205 = vst [vmem:[%s187 + $0x40] sm:$0xff] %v204
                %v206 = vld [vmem:[%s186 + $0x88] sm:$0xff]
                %207 = vst [vmem:[%s187 + $0x48] sm:$0xff] %v206
                %v208 = vld [vmem:[%s186 + $0xa0] sm:$0xff]
                %209 = vst [vmem:[%s187 + $0x50] sm:$0xff] %v208
                %v210 = vld [vmem:[%s186 + $0xa8] sm:$0xff]
                %211 = vst [vmem:[%s187 + $0x58] sm:$0xff] %v210
                %v212 = vld [vmem:[%s186 + $0xc0] sm:$0xff]
                %213 = vst [vmem:[%s187 + $0x60] sm:$0xff] %v212
                %v214 = vld [vmem:[%s186 + $0xc8] sm:$0xff]
                %215 = vst [vmem:[%s187 + $0x68] sm:$0xff] %v214
                %v216 = vld [vmem:[%s186 + $0xe0] sm:$0xff]
                %217 = vst [vmem:[%s187 + $0x70] sm:$0xff] %v216
                %v218 = vld [vmem:[%s186 + $0xe8] sm:$0xff]
                %219 = vst [vmem:[%s187 + $0x78] sm:$0xff] %v218
                %v220 = vld [vmem:[%s186 + $0x100] sm:$0xff]
                %221 = vst [vmem:[%s187 + $0x80] sm:$0xff] %v220
                %v222 = vld [vmem:[%s186 + $0x108] sm:$0xff]
                %223 = vst [vmem:[%s187 + $0x88] sm:$0xff] %v222
                %v224 = vld [vmem:[%s186 + $0x120] sm:$0xff]
                %225 = vst [vmem:[%s187 + $0x90] sm:$0xff] %v224
                %v226 = vld [vmem:[%s186 + $0x128] sm:$0xff]
                %227 = vst [vmem:[%s187 + $0x98] sm:$0xff] %v226
                %v228 = vld [vmem:[%s186 + $0x140] sm:$0xff]
                %229 = vst [vmem:[%s187 + $0xa0] sm:$0xff] %v228
                %v230 = vld [vmem:[%s186 + $0x148] sm:$0xff]
                %231 = vst [vmem:[%s187 + $0xa8] sm:$0xff] %v230
                %v232 = vld [vmem:[%s186 + $0x160] sm:$0xff]
                %233 = vst [vmem:[%s187 + $0xb0] sm:$0xff] %v232
                %v234 = vld [vmem:[%s186 + $0x168] sm:$0xff]
                %235 = vst [vmem:[%s187 + $0xb8] sm:$0xff] %v234
                %v236 = vld [vmem:[%s186 + $0x180] sm:$0xff]
                %237 = vst [vmem:[%s187 + $0xc0] sm:$0xff] %v236
                %v238 = vld [vmem:[%s186 + $0x188] sm:$0xff]
                %239 = vst [vmem:[%s187 + $0xc8] sm:$0xff] %v238
                %v240 = vld [vmem:[%s186 + $0x1a0] sm:$0xff]
                %241 = vst [vmem:[%s187 + $0xd0] sm:$0xff] %v240
                %v242 = vld [vmem:[%s186 + $0x1a8] sm:$0xff]
                %243 = vst [vmem:[%s187 + $0xd8] sm:$0xff] %v242
                %v244 = vld [vmem:[%s186 + $0x1c0] sm:$0xff]
                %245 = vst [vmem:[%s187 + $0xe0] sm:$0xff] %v244
                %v246 = vld [vmem:[%s186 + $0x1c8] sm:$0xff]
                %247 = vst [vmem:[%s187 + $0xe8] sm:$0xff] %v246
                %v248 = vld [vmem:[%s186 + $0x1e0] sm:$0xff]
                %249 = vst [vmem:[%s187 + $0xf0] sm:$0xff] %v248
                %v250 = vld [vmem:[%s186 + $0x1e8] sm:$0xff]
                %251 = vst [vmem:[%s187 + $0xf8] sm:$0xff] %v250
                %v252 = vld [vmem:[%s186 + $0x200] sm:$0xff]
                %253 = vst [vmem:[%s187 + $0x100] sm:$0xff] %v252
                %v254 = vld [vmem:[%s186 + $0x208] sm:$0xff]
                %255 = vst [vmem:[%s187 + $0x108] sm:$0xff] %v254
                %v256 = vld [vmem:[%s186 + $0x220] sm:$0xff]
                %257 = vst [vmem:[%s187 + $0x110] sm:$0xff] %v256
                %v258 = vld [vmem:[%s186 + $0x228] sm:$0xff]
                %259 = vst [vmem:[%s187 + $0x118] sm:$0xff] %v258
                %v260 = vld [vmem:[%s186 + $0x240] sm:$0xff]
                %261 = vst [vmem:[%s187 + $0x120] sm:$0xff] %v260
                %v262 = vld [vmem:[%s186 + $0x248] sm:$0xff]
                %263 = vst [vmem:[%s187 + $0x128] sm:$0xff] %v262
                %v264 = vld [vmem:[%s186 + $0x260] sm:$0xff]
                %265 = vst [vmem:[%s187 + $0x130] sm:$0xff] %v264
                %v266 = vld [vmem:[%s186 + $0x268] sm:$0xff]
                %267 = vst [vmem:[%s187 + $0x138] sm:$0xff] %v266
                %v268 = vld [vmem:[%s186 + $0x280] sm:$0xff]
                %269 = vst [vmem:[%s187 + $0x140] sm:$0xff] %v268
                %v270 = vld [vmem:[%s186 + $0x288] sm:$0xff]
                %271 = vst [vmem:[%s187 + $0x148] sm:$0xff] %v270
                %v272 = vld [vmem:[%s186 + $0x2a0] sm:$0xff]
                %273 = vst [vmem:[%s187 + $0x150] sm:$0xff] %v272
                %v274 = vld [vmem:[%s186 + $0x2a8] sm:$0xff]
                %275 = vst [vmem:[%s187 + $0x158] sm:$0xff] %v274
                %v276 = vld [vmem:[%s186 + $0x2c0] sm:$0xff]
                %277 = vst [vmem:[%s187 + $0x160] sm:$0xff] %v276
                %v278 = vld [vmem:[%s186 + $0x2c8] sm:$0xff]
                %279 = vst [vmem:[%s187 + $0x168] sm:$0xff] %v278
                %v280 = vld [vmem:[%s186 + $0x2e0] sm:$0xff]
                %281 = vst [vmem:[%s187 + $0x170] sm:$0xff] %v280
                %v282 = vld [vmem:[%s186 + $0x2e8] sm:$0xff]
                %283 = vst [vmem:[%s187 + $0x178] sm:$0xff] %v282
                %v284 = vld [vmem:[%s186 + $0x300] sm:$0xff]
                %285 = vst [vmem:[%s187 + $0x180] sm:$0xff] %v284
                %v286 = vld [vmem:[%s186 + $0x308] sm:$0xff]
                %287 = vst [vmem:[%s187 + $0x188] sm:$0xff] %v286
                %v288 = vld [vmem:[%s186 + $0x320] sm:$0xff]
                %289 = vst [vmem:[%s187 + $0x190] sm:$0xff] %v288
                %v290 = vld [vmem:[%s186 + $0x328] sm:$0xff]
                %291 = vst [vmem:[%s187 + $0x198] sm:$0xff] %v290
                %v292 = vld [vmem:[%s186 + $0x340] sm:$0xff]
                %293 = vst [vmem:[%s187 + $0x1a0] sm:$0xff] %v292
                %v294 = vld [vmem:[%s186 + $0x348] sm:$0xff]
                %295 = vst [vmem:[%s187 + $0x1a8] sm:$0xff] %v294
                %v296 = vld [vmem:[%s186 + $0x360] sm:$0xff]
                %297 = vst [vmem:[%s187 + $0x1b0] sm:$0xff] %v296
                %v298 = vld [vmem:[%s186 + $0x368] sm:$0xff]
                %299 = vst [vmem:[%s187 + $0x1b8] sm:$0xff] %v298
                %v300 = vld [vmem:[%s186 + $0x380] sm:$0xff]
                %301 = vst [vmem:[%s187 + $0x1c0] sm:$0xff] %v300
                %v302 = vld [vmem:[%s186 + $0x388] sm:$0xff]
                %303 = vst [vmem:[%s187 + $0x1c8] sm:$0xff] %v302
                %v304 = vld [vmem:[%s186 + $0x3a0] sm:$0xff]
                %305 = vst [vmem:[%s187 + $0x1d0] sm:$0xff] %v304
                %v306 = vld [vmem:[%s186 + $0x3a8] sm:$0xff]
                %307 = vst [vmem:[%s187 + $0x1d8] sm:$0xff] %v306
                %v308 = vld [vmem:[%s186 + $0x3c0] sm:$0xff]
                %309 = vst [vmem:[%s187 + $0x1e0] sm:$0xff] %v308
                %v310 = vld [vmem:[%s186 + $0x3c8] sm:$0xff]
                %311 = vst [vmem:[%s187 + $0x1e8] sm:$0xff] %v310
                %v312 = vld [vmem:[%s186 + $0x3e0] sm:$0xff]
                %313 = vst [vmem:[%s187 + $0x1f0] sm:$0xff] %v312
                %v314 = vld [vmem:[%s186 + $0x3e8] sm:$0xff]
                %315 = vst [vmem:[%s187 + $0x1f8] sm:$0xff] %v314
                %v316 = vld [vmem:[%s186 + $0x400] sm:$0xff]
                %317 = vst [vmem:[%s187 + $0x200] sm:$0xff] %v316
                %v318 = vld [vmem:[%s186 + $0x408] sm:$0xff]
                %319 = vst [vmem:[%s187 + $0x208] sm:$0xff] %v318
                %v320 = vld [vmem:[%s186 + $0x420] sm:$0xff]
                %321 = vst [vmem:[%s187 + $0x210] sm:$0xff] %v320
                %v322 = vld [vmem:[%s186 + $0x428] sm:$0xff]
                %323 = vst [vmem:[%s187 + $0x218] sm:$0xff] %v322
                %v324 = vld [vmem:[%s186 + $0x440] sm:$0xff]
                %325 = vst [vmem:[%s187 + $0x220] sm:$0xff] %v324
                %v326 = vld [vmem:[%s186 + $0x448] sm:$0xff]
                %327 = vst [vmem:[%s187 + $0x228] sm:$0xff] %v326
                %v328 = vld [vmem:[%s186 + $0x460] sm:$0xff]
                %329 = vst [vmem:[%s187 + $0x230] sm:$0xff] %v328
                %v330 = vld [vmem:[%s186 + $0x468] sm:$0xff]
                %331 = vst [vmem:[%s187 + $0x238] sm:$0xff] %v330
                %v332 = vld [vmem:[%s186 + $0x480] sm:$0xff]
                %333 = vst [vmem:[%s187 + $0x240] sm:$0xff] %v332
                %v334 = vld [vmem:[%s186 + $0x488] sm:$0xff]
                %335 = vst [vmem:[%s187 + $0x248] sm:$0xff] %v334
                %v336 = vld [vmem:[%s186 + $0x4a0] sm:$0xff]
                %337 = vst [vmem:[%s187 + $0x250] sm:$0xff] %v336
                %v338 = vld [vmem:[%s186 + $0x4a8] sm:$0xff]
                %339 = vst [vmem:[%s187 + $0x258] sm:$0xff] %v338
                %v340 = vld [vmem:[%s186 + $0x4c0] sm:$0xff]
                %341 = vst [vmem:[%s187 + $0x260] sm:$0xff] %v340
                %v342 = vld [vmem:[%s186 + $0x4c8] sm:$0xff]
                %343 = vst [vmem:[%s187 + $0x268] sm:$0xff] %v342
                %v344 = vld [vmem:[%s186 + $0x4e0] sm:$0xff]
                %345 = vst [vmem:[%s187 + $0x270] sm:$0xff] %v344
                %v346 = vld [vmem:[%s186 + $0x4e8] sm:$0xff]
                %347 = vst [vmem:[%s187 + $0x278] sm:$0xff] %v346
                %v348 = vld [vmem:[%s186 + $0x500] sm:$0xff]
                %349 = vst [vmem:[%s187 + $0x280] sm:$0xff] %v348
                %v350 = vld [vmem:[%s186 + $0x508] sm:$0xff]
                %351 = vst [vmem:[%s187 + $0x288] sm:$0xff] %v350
                %v352 = vld [vmem:[%s186 + $0x520] sm:$0xff]
                %353 = vst [vmem:[%s187 + $0x290] sm:$0xff] %v352
                %v354 = vld [vmem:[%s186 + $0x528] sm:$0xff]
                %355 = vst [vmem:[%s187 + $0x298] sm:$0xff] %v354
                %v356 = vld [vmem:[%s186 + $0x540] sm:$0xff]
                %357 = vst [vmem:[%s187 + $0x2a0] sm:$0xff] %v356
                %v358 = vld [vmem:[%s186 + $0x548] sm:$0xff]
                %359 = vst [vmem:[%s187 + $0x2a8] sm:$0xff] %v358
                %v360 = vld [vmem:[%s186 + $0x560] sm:$0xff]
                %361 = vst [vmem:[%s187 + $0x2b0] sm:$0xff] %v360
                %v362 = vld [vmem:[%s186 + $0x568] sm:$0xff]
                %363 = vst [vmem:[%s187 + $0x2b8] sm:$0xff] %v362
                %v364 = vld [vmem:[%s186 + $0x580] sm:$0xff]
                %365 = vst [vmem:[%s187 + $0x2c0] sm:$0xff] %v364
                %v366 = vld [vmem:[%s186 + $0x588] sm:$0xff]
                %367 = vst [vmem:[%s187 + $0x2c8] sm:$0xff] %v366
                %v368 = vld [vmem:[%s186 + $0x5a0] sm:$0xff]
                %369 = vst [vmem:[%s187 + $0x2d0] sm:$0xff] %v368
                %v370 = vld [vmem:[%s186 + $0x5a8] sm:$0xff]
                %371 = vst [vmem:[%s187 + $0x2d8] sm:$0xff] %v370
                %v372 = vld [vmem:[%s186 + $0x5c0] sm:$0xff]
                %373 = vst [vmem:[%s187 + $0x2e0] sm:$0xff] %v372
                %v374 = vld [vmem:[%s186 + $0x5c8] sm:$0xff]
                %375 = vst [vmem:[%s187 + $0x2e8] sm:$0xff] %v374
                %v376 = vld [vmem:[%s186 + $0x5e0] sm:$0xff]
                %377 = vst [vmem:[%s187 + $0x2f0] sm:$0xff] %v376
                %v378 = vld [vmem:[%s186 + $0x5e8] sm:$0xff]
                %379 = vst [vmem:[%s187 + $0x2f8] sm:$0xff] %v378
                %v380 = vld [vmem:[%s186 + $0x600] sm:$0xff]
                %381 = vst [vmem:[%s187 + $0x300] sm:$0xff] %v380
                %v382 = vld [vmem:[%s186 + $0x608] sm:$0xff]
                %383 = vst [vmem:[%s187 + $0x308] sm:$0xff] %v382
                %v384 = vld [vmem:[%s186 + $0x620] sm:$0xff]
                %385 = vst [vmem:[%s187 + $0x310] sm:$0xff] %v384
                %v386 = vld [vmem:[%s186 + $0x628] sm:$0xff]
                %387 = vst [vmem:[%s187 + $0x318] sm:$0xff] %v386
                %v388 = vld [vmem:[%s186 + $0x640] sm:$0xff]
                %389 = vst [vmem:[%s187 + $0x320] sm:$0xff] %v388
                %v390 = vld [vmem:[%s186 + $0x648] sm:$0xff]
                %391 = vst [vmem:[%s187 + $0x328] sm:$0xff] %v390
                %v392 = vld [vmem:[%s186 + $0x660] sm:$0xff]
                %393 = vst [vmem:[%s187 + $0x330] sm:$0xff] %v392
                %v394 = vld [vmem:[%s186 + $0x668] sm:$0xff]
                %395 = vst [vmem:[%s187 + $0x338] sm:$0xff] %v394
                %v396 = vld [vmem:[%s186 + $0x680] sm:$0xff]
                %397 = vst [vmem:[%s187 + $0x340] sm:$0xff] %v396
                %v398 = vld [vmem:[%s186 + $0x688] sm:$0xff]
                %399 = vst [vmem:[%s187 + $0x348] sm:$0xff] %v398
                %v400 = vld [vmem:[%s186 + $0x6a0] sm:$0xff]
                %401 = vst [vmem:[%s187 + $0x350] sm:$0xff] %v400
                %v402 = vld [vmem:[%s186 + $0x6a8] sm:$0xff]
                %403 = vst [vmem:[%s187 + $0x358] sm:$0xff] %v402
                %v404 = vld [vmem:[%s186 + $0x6c0] sm:$0xff]
                %405 = vst [vmem:[%s187 + $0x360] sm:$0xff] %v404
                %v406 = vld [vmem:[%s186 + $0x6c8] sm:$0xff]
                %407 = vst [vmem:[%s187 + $0x368] sm:$0xff] %v406
                %v408 = vld [vmem:[%s186 + $0x6e0] sm:$0xff]
                %409 = vst [vmem:[%s187 + $0x370] sm:$0xff] %v408
                %v410 = vld [vmem:[%s186 + $0x6e8] sm:$0xff]
                %411 = vst [vmem:[%s187 + $0x378] sm:$0xff] %v410
                %v412 = vld [vmem:[%s186 + $0x700] sm:$0xff]
                %413 = vst [vmem:[%s187 + $0x380] sm:$0xff] %v412
                %v414 = vld [vmem:[%s186 + $0x708] sm:$0xff]
                %415 = vst [vmem:[%s187 + $0x388] sm:$0xff] %v414
                %v416 = vld [vmem:[%s186 + $0x720] sm:$0xff]
                %417 = vst [vmem:[%s187 + $0x390] sm:$0xff] %v416
                %v418 = vld [vmem:[%s186 + $0x728] sm:$0xff]
                %419 = vst [vmem:[%s187 + $0x398] sm:$0xff] %v418
                %v420 = vld [vmem:[%s186 + $0x740] sm:$0xff]
                %421 = vst [vmem:[%s187 + $0x3a0] sm:$0xff] %v420
                %v422 = vld [vmem:[%s186 + $0x748] sm:$0xff]
                %423 = vst [vmem:[%s187 + $0x3a8] sm:$0xff] %v422
                %v424 = vld [vmem:[%s186 + $0x760] sm:$0xff]
                %425 = vst [vmem:[%s187 + $0x3b0] sm:$0xff] %v424
                %v426 = vld [vmem:[%s186 + $0x768] sm:$0xff]
                %427 = vst [vmem:[%s187 + $0x3b8] sm:$0xff] %v426
                %v428 = vld [vmem:[%s186 + $0x780] sm:$0xff]
                %429 = vst [vmem:[%s187 + $0x3c0] sm:$0xff] %v428
                %v430 = vld [vmem:[%s186 + $0x788] sm:$0xff]
                %431 = vst [vmem:[%s187 + $0x3c8] sm:$0xff] %v430
                %v432 = vld [vmem:[%s186 + $0x7a0] sm:$0xff]
                %433 = vst [vmem:[%s187 + $0x3d0] sm:$0xff] %v432
                %v434 = vld [vmem:[%s186 + $0x7a8] sm:$0xff]
                %435 = vst [vmem:[%s187 + $0x3d8] sm:$0xff] %v434
                %v436 = vld [vmem:[%s186 + $0x7c0] sm:$0xff]
                %437 = vst [vmem:[%s187 + $0x3e0] sm:$0xff] %v436
                %v438 = vld [vmem:[%s186 + $0x7c8] sm:$0xff]
                %439 = vst [vmem:[%s187 + $0x3e8] sm:$0xff] %v438
                %v440 = vld [vmem:[%s186 + $0x7e0] sm:$0xff]
                %441 = vst [vmem:[%s187 + $0x3f0] sm:$0xff] %v440
                %v442 = vld [vmem:[%s186 + $0x7e8] sm:$0xff]
                %443 = vst [vmem:[%s187 + $0x3f8] sm:$0xff] %v442
              $region37: #{decoder_forward.46} parent=31 // loop_footer
                %s185 = sadd.s32 1, %s181
              $region38: #{decoder_forward.46} parent=31 // loop_footer_branch
                %180 = sbr.rel target = $region34
              $region39: #{decoder_forward.46} parent=31 // loop_exit
                _
            $region32: #{decoder_forward.46} parent=27 // pred_fallthru
              _
            // Predicated region
            $region40: #{decoder_forward.46} parent=27 // pred_check
              _
            $region41: #{decoder_forward.46} parent=27 // pred_check_branch
              %445 = sbr.rel target = $region43
            $region42: #{decoder_forward.46} parent=27 // pred_region
              _
            $region43: #{decoder_forward.46} parent=27 // pred_fallthru
              _
          $region28: #{decoder_forward.46} parent=23 // pred_fallthru
            _
          %446 = vnop
        $region24: #{decoder_forward.46} parent=19 // pred_fallthru
          _
        // Predicated region
        $region44: #{decoder_forward.46} parent=19 // pred_check
          %p447 = pneg %p78
        $region45: #{decoder_forward.46} parent=19 // pred_check_branch
          %449 = sbr.rel (%p447) target = $region47
        $region46: #{decoder_forward.46} parent=19 // pred_region
          %s450 = smul.u32 64, %s18
          %p451 = scmp.lt.s32.totalorder %s450, 127
          %s452 = scalar_select %p451, %s450, 127
          %p453 = scmp.lt.s32.totalorder %s17, 0
          %s454 = scalar_select %p453, %s17, 0
          %s455 = sadd.s32 %s454, %s452
          %s456 = smul.addr %s455, 4
          %s457 = scalar_lea.vmem %s1, %s456
          %s458 = smul.u32 64, %s18
        $region47: #{decoder_forward.46} parent=19 // pred_fallthru
          _
      $region20: #{decoder_forward.46} parent=5 // pred_fallthru
        _
      %p459 = scmp.le.s32.totalorder 1, %s9
      %p460 = scmp.lt.s32.totalorder %s9, 3
      %p461 = pnand %p459, %p460
      %p462 = pneg %p461
      // Predicated region
      $region48: #{decoder_forward.46} parent=5 // pred_check
        _
      $region49: #{decoder_forward.46} parent=5 // pred_check_branch
        %464 = sbr.rel (%p461) target = $region51
      $region50: #{decoder_forward.46} parent=5 // pred_region
        %s465 = ssub.s32 %s9, 1
        %s466 = sand.u32 %s43, 1
        %s467 = sand.u32 %s43, 1
        %s468 = smul.addr %s467, 1024
        %s469 = scalar_lea.vmem [#allocation3], %s468
        // Predicated region
        $region52: #{decoder_forward.46} parent=50 // pred_check
          %p470 = pneg %p56
        $region53: #{decoder_forward.46} parent=50 // pred_check_branch
          %472 = sbr.rel (%p470) target = $region55
        $region54: #{decoder_forward.46} parent=50 // pred_region
          _
        $region55: #{decoder_forward.46} parent=50 // pred_fallthru
          _
        %s473 = sand.u32 %s43, 1
        %s474 = sand.u32 %s43, 1
        %s475 = smul.addr %s474, 1024
        %s476 = scalar_lea.vmem [#allocation3], %s475
        %p477 = pneg %p56
        %p478 = pneg %p53
        %s479 = smul.u32 64, %s21
        %p480 = scmp.lt.s32.totalorder %s479, 127
        %s481 = scalar_select %p480, %s479, 127
        %p482 = scmp.lt.s32.totalorder %s20, 0
        %s483 = scalar_select %p482, %s20, 0
        %s484 = sadd.s32 %s483, %s481
        %s485 = smul.addr %s484, 4
        %s486 = scalar_lea.vmem %s1, %s485
        %p487 = pneg %p84
        %p488 = pneg %p81
        %p489 = scmp.lt.s32.totalorder %s20, 0
        %s490 = scalar_select %p489, %s20, 0
        %s491 = scalar_lea.vmem %s2, %s490
        %p492 = pneg %p110
        %p493 = pneg %p107
        %p494 = pneg %p138
        %p495 = pneg %p135
        %s496 = smul.u32 64, %s19
        %p497 = scmp.lt.s32.totalorder %s496, 63
        %s498 = scalar_select %p497, %s496, 63
        %p499 = scmp.lt.s32.totalorder %s20, 0
        %s500 = scalar_select %p499, %s20, 0
        %s501 = sadd.s32 %s500, %s498
        %s502 = smul.addr %s501, 8
        %s503 = scalar_lea.vmem %s3, %s502
        %s504 = smul.u32 64, %s19
        %s505 = smul.u32 4, %s21
        %s506 = smul.u32 64, %s21
        %p507 = scmp.lt.s32.totalorder %s506, 127
        %s508 = scalar_select %p507, %s506, 127
        %p509 = scmp.lt.s32.totalorder %s20, 0
        %s510 = scalar_select %p509, %s20, 0
        %s511 = sadd.s32 %s510, %s508
        %s512 = smul.addr %s511, 4
        %s513 = scalar_lea.vmem %s1, %s512
        %s514 = smul.u32 64, %s21
        %p515 = scmp.lt.s32.totalorder %s20, 0
        %s516 = scalar_select %p515, %s20, 0
        %s517 = scalar_lea.vmem %s2, %s516
        %s518 = smul.u32 64, %s19
        %p519 = scmp.lt.s32.totalorder %s518, 63
        %s520 = scalar_select %p519, %s518, 63
        %p521 = scmp.lt.s32.totalorder %s20, 0
        %s522 = scalar_select %p521, %s20, 0
        %s523 = sadd.s32 %s522, %s520
        %s524 = smul.addr %s523, 8
        %s525 = scalar_lea.vmem %s3, %s524
        %s526 = smul.u32 64, %s19
        %p528 = scmp.eq.s32.totalorder %s21, 0
        // Predicated region
        $region56: #{decoder_forward.46} parent=50 // pred_check
          %p529 = pneg %p528
        $region57: #{decoder_forward.46} parent=50 // pred_check_branch
          %531 = sbr.rel (%p529) target = $region59
        $region58: #{decoder_forward.46} parent=50 // pred_region
          %532 = vst [vmem:[#allocation2] sm:$0xff] 0.0
          %533 = vst [vmem:[#allocation2 + $0x8] sm:$0xff] 0.0
          %534 = vst [vmem:[#allocation2 + $0x10] sm:$0xff] 0.0
          %535 = vst [vmem:[#allocation2 + $0x18] sm:$0xff] 0.0
          %536 = vst [vmem:[#allocation2 + $0x20] sm:$0xff] 0.0
          %537 = vst [vmem:[#allocation2 + $0x28] sm:$0xff] 0.0
          %538 = vst [vmem:[#allocation2 + $0x30] sm:$0xff] 0.0
          %539 = vst [vmem:[#allocation2 + $0x38] sm:$0xff] 0.0
          %540 = vst [vmem:[#allocation2 + $0x40] sm:$0xff] 0.0
          %541 = vst [vmem:[#allocation2 + $0x48] sm:$0xff] 0.0
          %542 = vst [vmem:[#allocation2 + $0x50] sm:$0xff] 0.0
          %543 = vst [vmem:[#allocation2 + $0x58] sm:$0xff] 0.0
          %544 = vst [vmem:[#allocation2 + $0x60] sm:$0xff] 0.0
          %545 = vst [vmem:[#allocation2 + $0x68] sm:$0xff] 0.0
          %546 = vst [vmem:[#allocation2 + $0x70] sm:$0xff] 0.0
          %547 = vst [vmem:[#allocation2 + $0x78] sm:$0xff] 0.0
          %548 = vst [vmem:[#allocation2 + $0x80] sm:$0xff] 0.0
          %549 = vst [vmem:[#allocation2 + $0x88] sm:$0xff] 0.0
          %550 = vst [vmem:[#allocation2 + $0x90] sm:$0xff] 0.0
          %551 = vst [vmem:[#allocation2 + $0x98] sm:$0xff] 0.0
          %552 = vst [vmem:[#allocation2 + $0xa0] sm:$0xff] 0.0
          %553 = vst [vmem:[#allocation2 + $0xa8] sm:$0xff] 0.0
          %554 = vst [vmem:[#allocation2 + $0xb0] sm:$0xff] 0.0
          %555 = vst [vmem:[#allocation2 + $0xb8] sm:$0xff] 0.0
          %556 = vst [vmem:[#allocation2 + $0xc0] sm:$0xff] 0.0
          %557 = vst [vmem:[#allocation2 + $0xc8] sm:$0xff] 0.0
          %558 = vst [vmem:[#allocation2 + $0xd0] sm:$0xff] 0.0
          %559 = vst [vmem:[#allocation2 + $0xd8] sm:$0xff] 0.0
          %560 = vst [vmem:[#allocation2 + $0xe0] sm:$0xff] 0.0
          %561 = vst [vmem:[#allocation2 + $0xe8] sm:$0xff] 0.0
          %562 = vst [vmem:[#allocation2 + $0xf0] sm:$0xff] 0.0
          %563 = vst [vmem:[#allocation2 + $0xf8] sm:$0xff] 0.0
          %564 = vst [vmem:[#allocation2 + $0x100] sm:$0xff] 0.0
          %565 = vst [vmem:[#allocation2 + $0x108] sm:$0xff] 0.0
          %566 = vst [vmem:[#allocation2 + $0x110] sm:$0xff] 0.0
          %567 = vst [vmem:[#allocation2 + $0x118] sm:$0xff] 0.0
          %568 = vst [vmem:[#allocation2 + $0x120] sm:$0xff] 0.0
          %569 = vst [vmem:[#allocation2 + $0x128] sm:$0xff] 0.0
          %570 = vst [vmem:[#allocation2 + $0x130] sm:$0xff] 0.0
          %571 = vst [vmem:[#allocation2 + $0x138] sm:$0xff] 0.0
          %572 = vst [vmem:[#allocation2 + $0x140] sm:$0xff] 0.0
          %573 = vst [vmem:[#allocation2 + $0x148] sm:$0xff] 0.0
          %574 = vst [vmem:[#allocation2 + $0x150] sm:$0xff] 0.0
          %575 = vst [vmem:[#allocation2 + $0x158] sm:$0xff] 0.0
          %576 = vst [vmem:[#allocation2 + $0x160] sm:$0xff] 0.0
          %577 = vst [vmem:[#allocation2 + $0x168] sm:$0xff] 0.0
          %578 = vst [vmem:[#allocation2 + $0x170] sm:$0xff] 0.0
          %579 = vst [vmem:[#allocation2 + $0x178] sm:$0xff] 0.0
          %580 = vst [vmem:[#allocation2 + $0x180] sm:$0xff] 0.0
          %581 = vst [vmem:[#allocation2 + $0x188] sm:$0xff] 0.0
          %582 = vst [vmem:[#allocation2 + $0x190] sm:$0xff] 0.0
          %583 = vst [vmem:[#allocation2 + $0x198] sm:$0xff] 0.0
          %584 = vst [vmem:[#allocation2 + $0x1a0] sm:$0xff] 0.0
          %585 = vst [vmem:[#allocation2 + $0x1a8] sm:$0xff] 0.0
          %586 = vst [vmem:[#allocation2 + $0x1b0] sm:$0xff] 0.0
          %587 = vst [vmem:[#allocation2 + $0x1b8] sm:$0xff] 0.0
          %588 = vst [vmem:[#allocation2 + $0x1c0] sm:$0xff] 0.0
          %589 = vst [vmem:[#allocation2 + $0x1c8] sm:$0xff] 0.0
          %590 = vst [vmem:[#allocation2 + $0x1d0] sm:$0xff] 0.0
          %591 = vst [vmem:[#allocation2 + $0x1d8] sm:$0xff] 0.0
          %592 = vst [vmem:[#allocation2 + $0x1e0] sm:$0xff] 0.0
          %593 = vst [vmem:[#allocation2 + $0x1e8] sm:$0xff] 0.0
          %594 = vst [vmem:[#allocation2 + $0x1f0] sm:$0xff] 0.0
          %595 = vst [vmem:[#allocation2 + $0x1f8] sm:$0xff] 0.0
        $region59: #{decoder_forward.46} parent=50 // pred_fallthru
          _
        %v596 = vld [vmem:[#allocation2] sm:$0xff]
        %v597 = vld [vmem:[#allocation2 + $0x8] sm:$0xff]
        %v598 = vld [vmem:[#allocation2 + $0x10] sm:$0xff]
        %v599 = vld [vmem:[#allocation2 + $0x18] sm:$0xff]
        %v600 = vld [vmem:[#allocation2 + $0x20] sm:$0xff]
        %v601 = vld [vmem:[#allocation2 + $0x28] sm:$0xff]
        %v602 = vld [vmem:[#allocation2 + $0x30] sm:$0xff]
        %v603 = vld [vmem:[#allocation2 + $0x38] sm:$0xff]
        %v604 = vld [vmem:[#allocation2 + $0x40] sm:$0xff]
        %v605 = vld [vmem:[#allocation2 + $0x48] sm:$0xff]
        %v606 = vld [vmem:[#allocation2 + $0x50] sm:$0xff]
        %v607 = vld [vmem:[#allocation2 + $0x58] sm:$0xff]
        %v608 = vld [vmem:[#allocation2 + $0x60] sm:$0xff]
        %v609 = vld [vmem:[#allocation2 + $0x68] sm:$0xff]
        %v610 = vld [vmem:[#allocation2 + $0x70] sm:$0xff]
        %v611 = vld [vmem:[#allocation2 + $0x78] sm:$0xff]
        %v612 = vld [vmem:[#allocation2 + $0x80] sm:$0xff]
        %v613 = vld [vmem:[#allocation2 + $0x88] sm:$0xff]
        %v614 = vld [vmem:[#allocation2 + $0x90] sm:$0xff]
        %v615 = vld [vmem:[#allocation2 + $0x98] sm:$0xff]
        %v616 = vld [vmem:[#allocation2 + $0xa0] sm:$0xff]
        %v617 = vld [vmem:[#allocation2 + $0xa8] sm:$0xff]
        %v618 = vld [vmem:[#allocation2 + $0xb0] sm:$0xff]
        %v619 = vld [vmem:[#allocation2 + $0xb8] sm:$0xff]
        %v620 = vld [vmem:[#allocation2 + $0xc0] sm:$0xff]
        %v621 = vld [vmem:[#allocation2 + $0xc8] sm:$0xff]
        %v622 = vld [vmem:[#allocation2 + $0xd0] sm:$0xff]
        %v623 = vld [vmem:[#allocation2 + $0xd8] sm:$0xff]
        %v624 = vld [vmem:[#allocation2 + $0xe0] sm:$0xff]
        %v625 = vld [vmem:[#allocation2 + $0xe8] sm:$0xff]
        %v626 = vld [vmem:[#allocation2 + $0xf0] sm:$0xff]
        %v627 = vld [vmem:[#allocation2 + $0xf8] sm:$0xff]
        %v628 = vld [vmem:[#allocation2 + $0x100] sm:$0xff]
        %v629 = vld [vmem:[#allocation2 + $0x108] sm:$0xff]
        %v630 = vld [vmem:[#allocation2 + $0x110] sm:$0xff]
        %v631 = vld [vmem:[#allocation2 + $0x118] sm:$0xff]
        %v632 = vld [vmem:[#allocation2 + $0x120] sm:$0xff]
        %v633 = vld [vmem:[#allocation2 + $0x128] sm:$0xff]
        %v634 = vld [vmem:[#allocation2 + $0x130] sm:$0xff]
        %v635 = vld [vmem:[#allocation2 + $0x138] sm:$0xff]
        %v636 = vld [vmem:[#allocation2 + $0x140] sm:$0xff]
        %v637 = vld [vmem:[#allocation2 + $0x148] sm:$0xff]
        %v638 = vld [vmem:[#allocation2 + $0x150] sm:$0xff]
        %v639 = vld [vmem:[#allocation2 + $0x158] sm:$0xff]
        %v640 = vld [vmem:[#allocation2 + $0x160] sm:$0xff]
        %v641 = vld [vmem:[#allocation2 + $0x168] sm:$0xff]
        %v642 = vld [vmem:[#allocation2 + $0x170] sm:$0xff]
        %v643 = vld [vmem:[#allocation2 + $0x178] sm:$0xff]
        %v644 = vld [vmem:[#allocation2 + $0x180] sm:$0xff]
        %v645 = vld [vmem:[#allocation2 + $0x188] sm:$0xff]
        %v646 = vld [vmem:[#allocation2 + $0x190] sm:$0xff]
        %v647 = vld [vmem:[#allocation2 + $0x198] sm:$0xff]
        %v648 = vld [vmem:[#allocation2 + $0x1a0] sm:$0xff]
        %v649 = vld [vmem:[#allocation2 + $0x1a8] sm:$0xff]
        %v650 = vld [vmem:[#allocation2 + $0x1b0] sm:$0xff]
        %v651 = vld [vmem:[#allocation2 + $0x1b8] sm:$0xff]
        %v652 = vld [vmem:[#allocation2 + $0x1c0] sm:$0xff]
        %v653 = vld [vmem:[#allocation2 + $0x1c8] sm:$0xff]
        %v654 = vld [vmem:[#allocation2 + $0x1d0] sm:$0xff]
        %v655 = vld [vmem:[#allocation2 + $0x1d8] sm:$0xff]
        %v656 = vld [vmem:[#allocation2 + $0x1e0] sm:$0xff]
        %v657 = vld [vmem:[#allocation2 + $0x1e8] sm:$0xff]
        %v658 = vld [vmem:[#allocation2 + $0x1f0] sm:$0xff]
        %v659 = vld [vmem:[#allocation2 + $0x1f8] sm:$0xff]
        %v660 = vld [vmem:[%s469] sm:$0xff]
        %v661 = vld [vmem:[%s469 + $0x8] sm:$0xff]
        %v662 = vld [vmem:[%s469 + $0x10] sm:$0xff]
        %v663 = vld [vmem:[%s469 + $0x18] sm:$0xff]
        %v664 = vld [vmem:[%s469 + $0x20] sm:$0xff]
        %v665 = vld [vmem:[%s469 + $0x28] sm:$0xff]
        %v666 = vld [vmem:[%s469 + $0x30] sm:$0xff]
        %v667 = vld [vmem:[%s469 + $0x38] sm:$0xff]
        %v668 = vld [vmem:[%s469 + $0x40] sm:$0xff]
        %v669 = vld [vmem:[%s469 + $0x48] sm:$0xff]
        %v670 = vld [vmem:[%s469 + $0x50] sm:$0xff]
        %v671 = vld [vmem:[%s469 + $0x58] sm:$0xff]
        %v672 = vld [vmem:[%s469 + $0x60] sm:$0xff]
        %v673 = vld [vmem:[%s469 + $0x68] sm:$0xff]
        %v674 = vld [vmem:[%s469 + $0x70] sm:$0xff]
        %v675 = vld [vmem:[%s469 + $0x78] sm:$0xff]
        %v676 = vld [vmem:[%s469 + $0x80] sm:$0xff]
        %v677 = vld [vmem:[%s469 + $0x88] sm:$0xff]
        %v678 = vld [vmem:[%s469 + $0x90] sm:$0xff]
        %v679 = vld [vmem:[%s469 + $0x98] sm:$0xff]
        %v680 = vld [vmem:[%s469 + $0xa0] sm:$0xff]
        %v681 = vld [vmem:[%s469 + $0xa8] sm:$0xff]
        %v682 = vld [vmem:[%s469 + $0xb0] sm:$0xff]
        %v683 = vld [vmem:[%s469 + $0xb8] sm:$0xff]
        %v684 = vld [vmem:[%s469 + $0xc0] sm:$0xff]
        %v685 = vld [vmem:[%s469 + $0xc8] sm:$0xff]
        %v686 = vld [vmem:[%s469 + $0xd0] sm:$0xff]
        %v687 = vld [vmem:[%s469 + $0xd8] sm:$0xff]
        %v688 = vld [vmem:[%s469 + $0xe0] sm:$0xff]
        %v689 = vld [vmem:[%s469 + $0xe8] sm:$0xff]
        %v690 = vld [vmem:[%s469 + $0xf0] sm:$0xff]
        %v691 = vld [vmem:[%s469 + $0xf8] sm:$0xff]
        %v692 = vld [vmem:[%s469 + $0x100] sm:$0xff]
        %v693 = vld [vmem:[%s469 + $0x108] sm:$0xff]
        %v694 = vld [vmem:[%s469 + $0x110] sm:$0xff]
        %v695 = vld [vmem:[%s469 + $0x118] sm:$0xff]
        %v696 = vld [vmem:[%s469 + $0x120] sm:$0xff]
        %v697 = vld [vmem:[%s469 + $0x128] sm:$0xff]
        %v698 = vld [vmem:[%s469 + $0x130] sm:$0xff]
        %v699 = vld [vmem:[%s469 + $0x138] sm:$0xff]
        %v700 = vld [vmem:[%s469 + $0x140] sm:$0xff]
        %v701 = vld [vmem:[%s469 + $0x148] sm:$0xff]
        %v702 = vld [vmem:[%s469 + $0x150] sm:$0xff]
        %v703 = vld [vmem:[%s469 + $0x158] sm:$0xff]
        %v704 = vld [vmem:[%s469 + $0x160] sm:$0xff]
        %v705 = vld [vmem:[%s469 + $0x168] sm:$0xff]
        %v706 = vld [vmem:[%s469 + $0x170] sm:$0xff]
        %v707 = vld [vmem:[%s469 + $0x178] sm:$0xff]
        %v708 = vld [vmem:[%s469 + $0x180] sm:$0xff]
        %v709 = vld [vmem:[%s469 + $0x188] sm:$0xff]
        %v710 = vld [vmem:[%s469 + $0x190] sm:$0xff]
        %v711 = vld [vmem:[%s469 + $0x198] sm:$0xff]
        %v712 = vld [vmem:[%s469 + $0x1a0] sm:$0xff]
        %v713 = vld [vmem:[%s469 + $0x1a8] sm:$0xff]
        %v714 = vld [vmem:[%s469 + $0x1b0] sm:$0xff]
        %v715 = vld [vmem:[%s469 + $0x1b8] sm:$0xff]
        %v716 = vld [vmem:[%s469 + $0x1c0] sm:$0xff]
        %v717 = vld [vmem:[%s469 + $0x1c8] sm:$0xff]
        %v718 = vld [vmem:[%s469 + $0x1d0] sm:$0xff]
        %v719 = vld [vmem:[%s469 + $0x1d8] sm:$0xff]
        %v720 = vld [vmem:[%s469 + $0x1e0] sm:$0xff]
        %v721 = vld [vmem:[%s469 + $0x1e8] sm:$0xff]
        %v722 = vld [vmem:[%s469 + $0x1f0] sm:$0xff]
        %v723 = vld [vmem:[%s469 + $0x1f8] sm:$0xff]
        %v724 = vld [vmem:[%s469 + $0x200] sm:$0xff]
        %v725 = vld [vmem:[%s469 + $0x208] sm:$0xff]
        %v726 = vld [vmem:[%s469 + $0x210] sm:$0xff]
        %v727 = vld [vmem:[%s469 + $0x218] sm:$0xff]
        %v728 = vld [vmem:[%s469 + $0x220] sm:$0xff]
        %v729 = vld [vmem:[%s469 + $0x228] sm:$0xff]
        %v730 = vld [vmem:[%s469 + $0x230] sm:$0xff]
        %v731 = vld [vmem:[%s469 + $0x238] sm:$0xff]
        %v732 = vld [vmem:[%s469 + $0x240] sm:$0xff]
        %v733 = vld [vmem:[%s469 + $0x248] sm:$0xff]
        %v734 = vld [vmem:[%s469 + $0x250] sm:$0xff]
        %v735 = vld [vmem:[%s469 + $0x258] sm:$0xff]
        %v736 = vld [vmem:[%s469 + $0x260] sm:$0xff]
        %v737 = vld [vmem:[%s469 + $0x268] sm:$0xff]
        %v738 = vld [vmem:[%s469 + $0x270] sm:$0xff]
        %v739 = vld [vmem:[%s469 + $0x278] sm:$0xff]
        %v740 = vld [vmem:[%s469 + $0x280] sm:$0xff]
        %v741 = vld [vmem:[%s469 + $0x288] sm:$0xff]
        %v742 = vld [vmem:[%s469 + $0x290] sm:$0xff]
        %v743 = vld [vmem:[%s469 + $0x298] sm:$0xff]
        %v744 = vld [vmem:[%s469 + $0x2a0] sm:$0xff]
        %v745 = vld [vmem:[%s469 + $0x2a8] sm:$0xff]
        %v746 = vld [vmem:[%s469 + $0x2b0] sm:$0xff]
        %v747 = vld [vmem:[%s469 + $0x2b8] sm:$0xff]
        %v748 = vld [vmem:[%s469 + $0x2c0] sm:$0xff]
        %v749 = vld [vmem:[%s469 + $0x2c8] sm:$0xff]
        %v750 = vld [vmem:[%s469 + $0x2d0] sm:$0xff]
        %v751 = vld [vmem:[%s469 + $0x2d8] sm:$0xff]
        %v752 = vld [vmem:[%s469 + $0x2e0] sm:$0xff]
        %v753 = vld [vmem:[%s469 + $0x2e8] sm:$0xff]
        %v754 = vld [vmem:[%s469 + $0x2f0] sm:$0xff]
        %v755 = vld [vmem:[%s469 + $0x2f8] sm:$0xff]
        %v756 = vld [vmem:[%s469 + $0x300] sm:$0xff]
        %v757 = vld [vmem:[%s469 + $0x308] sm:$0xff]
        %v758 = vld [vmem:[%s469 + $0x310] sm:$0xff]
        %v759 = vld [vmem:[%s469 + $0x318] sm:$0xff]
        %v760 = vld [vmem:[%s469 + $0x320] sm:$0xff]
        %v761 = vld [vmem:[%s469 + $0x328] sm:$0xff]
        %v762 = vld [vmem:[%s469 + $0x330] sm:$0xff]
        %v763 = vld [vmem:[%s469 + $0x338] sm:$0xff]
        %v764 = vld [vmem:[%s469 + $0x340] sm:$0xff]
        %v765 = vld [vmem:[%s469 + $0x348] sm:$0xff]
        %v766 = vld [vmem:[%s469 + $0x350] sm:$0xff]
        %v767 = vld [vmem:[%s469 + $0x358] sm:$0xff]
        %v768 = vld [vmem:[%s469 + $0x360] sm:$0xff]
        %v769 = vld [vmem:[%s469 + $0x368] sm:$0xff]
        %v770 = vld [vmem:[%s469 + $0x370] sm:$0xff]
        %v771 = vld [vmem:[%s469 + $0x378] sm:$0xff]
        %v772 = vld [vmem:[%s469 + $0x380] sm:$0xff]
        %v773 = vld [vmem:[%s469 + $0x388] sm:$0xff]
        %v774 = vld [vmem:[%s469 + $0x390] sm:$0xff]
        %v775 = vld [vmem:[%s469 + $0x398] sm:$0xff]
        %v776 = vld [vmem:[%s469 + $0x3a0] sm:$0xff]
        %v777 = vld [vmem:[%s469 + $0x3a8] sm:$0xff]
        %v778 = vld [vmem:[%s469 + $0x3b0] sm:$0xff]
        %v779 = vld [vmem:[%s469 + $0x3b8] sm:$0xff]
        %v780 = vld [vmem:[%s469 + $0x3c0] sm:$0xff]
        %v781 = vld [vmem:[%s469 + $0x3c8] sm:$0xff]
        %v782 = vld [vmem:[%s469 + $0x3d0] sm:$0xff]
        %v783 = vld [vmem:[%s469 + $0x3d8] sm:$0xff]
        %v784 = vld [vmem:[%s469 + $0x3e0] sm:$0xff]
        %v785 = vld [vmem:[%s469 + $0x3e8] sm:$0xff]
        %v786 = vld [vmem:[%s469 + $0x3f0] sm:$0xff]
        %v787 = vld [vmem:[%s469 + $0x3f8] sm:$0xff]
        %v788 = vld [vmem:[%s513] sm:$0xf]
        %v789 = vld [vmem:[%s513 + $0x4] sm:$0xf]
        %v790 = vld [vmem:[%s513 + $0x8] sm:$0xf]
        %v791 = vld [vmem:[%s513 + $0xc] sm:$0xf]
        %v792 = vld [vmem:[%s513 + $0x10] sm:$0xf]
        %v793 = vld [vmem:[%s513 + $0x14] sm:$0xf]
        %v794 = vld [vmem:[%s513 + $0x18] sm:$0xf]
        %v795 = vld [vmem:[%s513 + $0x1c] sm:$0xf]
        %v796 = vld [vmem:[%s513 + $0x20] sm:$0xf]
        %v797 = vld [vmem:[%s513 + $0x24] sm:$0xf]
        %v798 = vld [vmem:[%s513 + $0x28] sm:$0xf]
        %v799 = vld [vmem:[%s513 + $0x2c] sm:$0xf]
        %v800 = vld [vmem:[%s513 + $0x30] sm:$0xf]
        %v801 = vld [vmem:[%s513 + $0x34] sm:$0xf]
        %v802 = vld [vmem:[%s513 + $0x38] sm:$0xf]
        %v803 = vld [vmem:[%s513 + $0x3c] sm:$0xf]
        %v804 = vld [vmem:[%s513 + $0x40] sm:$0xf]
        %v805 = vld [vmem:[%s513 + $0x44] sm:$0xf]
        %v806 = vld [vmem:[%s513 + $0x48] sm:$0xf]
        %v807 = vld [vmem:[%s513 + $0x4c] sm:$0xf]
        %v808 = vld [vmem:[%s513 + $0x50] sm:$0xf]
        %v809 = vld [vmem:[%s513 + $0x54] sm:$0xf]
        %v810 = vld [vmem:[%s513 + $0x58] sm:$0xf]
        %v811 = vld [vmem:[%s513 + $0x5c] sm:$0xf]
        %v812 = vld [vmem:[%s513 + $0x60] sm:$0xf]
        %v813 = vld [vmem:[%s513 + $0x64] sm:$0xf]
        %v814 = vld [vmem:[%s513 + $0x68] sm:$0xf]
        %v815 = vld [vmem:[%s513 + $0x6c] sm:$0xf]
        %v816 = vld [vmem:[%s513 + $0x70] sm:$0xf]
        %v817 = vld [vmem:[%s513 + $0x74] sm:$0xf]
        %v818 = vld [vmem:[%s513 + $0x78] sm:$0xf]
        %v819 = vld [vmem:[%s513 + $0x7c] sm:$0xf]
        %v820 = vld [vmem:[%s513 + $0x80] sm:$0xf]
        %v821 = vld [vmem:[%s513 + $0x84] sm:$0xf]
        %v822 = vld [vmem:[%s513 + $0x88] sm:$0xf]
        %v823 = vld [vmem:[%s513 + $0x8c] sm:$0xf]
        %v824 = vld [vmem:[%s513 + $0x90] sm:$0xf]
        %v825 = vld [vmem:[%s513 + $0x94] sm:$0xf]
        %v826 = vld [vmem:[%s513 + $0x98] sm:$0xf]
        %v827 = vld [vmem:[%s513 + $0x9c] sm:$0xf]
        %v828 = vld [vmem:[%s513 + $0xa0] sm:$0xf]
        %v829 = vld [vmem:[%s513 + $0xa4] sm:$0xf]
        %v830 = vld [vmem:[%s513 + $0xa8] sm:$0xf]
        %v831 = vld [vmem:[%s513 + $0xac] sm:$0xf]
        %v832 = vld [vmem:[%s513 + $0xb0] sm:$0xf]
        %v833 = vld [vmem:[%s513 + $0xb4] sm:$0xf]
        %v834 = vld [vmem:[%s513 + $0xb8] sm:$0xf]
        %v835 = vld [vmem:[%s513 + $0xbc] sm:$0xf]
        %v836 = vld [vmem:[%s513 + $0xc0] sm:$0xf]
        %v837 = vld [vmem:[%s513 + $0xc4] sm:$0xf]
        %v838 = vld [vmem:[%s513 + $0xc8] sm:$0xf]
        %v839 = vld [vmem:[%s513 + $0xcc] sm:$0xf]
        %v840 = vld [vmem:[%s513 + $0xd0] sm:$0xf]
        %v841 = vld [vmem:[%s513 + $0xd4] sm:$0xf]
        %v842 = vld [vmem:[%s513 + $0xd8] sm:$0xf]
        %v843 = vld [vmem:[%s513 + $0xdc] sm:$0xf]
        %v844 = vld [vmem:[%s513 + $0xe0] sm:$0xf]
        %v845 = vld [vmem:[%s513 + $0xe4] sm:$0xf]
        %v846 = vld [vmem:[%s513 + $0xe8] sm:$0xf]
        %v847 = vld [vmem:[%s513 + $0xec] sm:$0xf]
        %v848 = vld [vmem:[%s513 + $0xf0] sm:$0xf]
        %v849 = vld [vmem:[%s513 + $0xf4] sm:$0xf]
        %v850 = vld [vmem:[%s513 + $0xf8] sm:$0xf]
        %v851 = vld [vmem:[%s513 + $0xfc] sm:$0xf]
        %v980 = vunpack.c.l.b16 %v660
        %v981 = vunpack.c.h.b16 %v660
        %v982 = vunpack.c.l.b16 %v661
        %v983 = vunpack.c.h.b16 %v661
        %v984 = vunpack.c.l.b16 %v662
        %v985 = vunpack.c.h.b16 %v662
        %v986 = vunpack.c.l.b16 %v663
        %v987 = vunpack.c.h.b16 %v663
        %v988 = vunpack.c.l.b16 %v664
        %v989 = vunpack.c.h.b16 %v664
        %v990 = vunpack.c.l.b16 %v665
        %v991 = vunpack.c.h.b16 %v665
        %v992 = vunpack.c.l.b16 %v666
        %v993 = vunpack.c.h.b16 %v666
        %v994 = vunpack.c.l.b16 %v667
        %v995 = vunpack.c.h.b16 %v667
        %v996 = vunpack.c.l.b16 %v668
        %v997 = vunpack.c.h.b16 %v668
        %v998 = vunpack.c.l.b16 %v669
        %v999 = vunpack.c.h.b16 %v669
        %v1000 = vunpack.c.l.b16 %v670
        %v1001 = vunpack.c.h.b16 %v670
        %v1002 = vunpack.c.l.b16 %v671
        %v1003 = vunpack.c.h.b16 %v671
        %v1004 = vunpack.c.l.b16 %v672
        %v1005 = vunpack.c.h.b16 %v672
        %v1006 = vunpack.c.l.b16 %v673
        %v1007 = vunpack.c.h.b16 %v673
        %v1008 = vunpack.c.l.b16 %v674
        %v1009 = vunpack.c.h.b16 %v674
        %v1010 = vunpack.c.l.b16 %v675
        %v1011 = vunpack.c.h.b16 %v675
        %v1012 = vunpack.c.l.b16 %v676
        %v1013 = vunpack.c.h.b16 %v676
        %v1014 = vunpack.c.l.b16 %v677
        %v1015 = vunpack.c.h.b16 %v677
        %v1016 = vunpack.c.l.b16 %v678
        %v1017 = vunpack.c.h.b16 %v678
        %v1018 = vunpack.c.l.b16 %v679
        %v1019 = vunpack.c.h.b16 %v679
        %v1020 = vunpack.c.l.b16 %v680
        %v1021 = vunpack.c.h.b16 %v680
        %v1022 = vunpack.c.l.b16 %v681
        %v1023 = vunpack.c.h.b16 %v681
        %v1024 = vunpack.c.l.b16 %v682
        %v1025 = vunpack.c.h.b16 %v682
        %v1026 = vunpack.c.l.b16 %v683
        %v1027 = vunpack.c.h.b16 %v683
        %v1028 = vunpack.c.l.b16 %v684
        %v1029 = vunpack.c.h.b16 %v684
        %v1030 = vunpack.c.l.b16 %v685
        %v1031 = vunpack.c.h.b16 %v685
        %v1032 = vunpack.c.l.b16 %v686
        %v1033 = vunpack.c.h.b16 %v686
        %v1034 = vunpack.c.l.b16 %v687
        %v1035 = vunpack.c.h.b16 %v687
        %v1036 = vunpack.c.l.b16 %v688
        %v1037 = vunpack.c.h.b16 %v688
        %v1038 = vunpack.c.l.b16 %v689
        %v1039 = vunpack.c.h.b16 %v689
        %v1040 = vunpack.c.l.b16 %v690
        %v1041 = vunpack.c.h.b16 %v690
        %v1042 = vunpack.c.l.b16 %v691
        %v1043 = vunpack.c.h.b16 %v691
        %v1044 = vunpack.c.l.b16 %v692
        %v1045 = vunpack.c.h.b16 %v692
        %v1046 = vunpack.c.l.b16 %v693
        %v1047 = vunpack.c.h.b16 %v693
        %v1048 = vunpack.c.l.b16 %v694
        %v1049 = vunpack.c.h.b16 %v694
        %v1050 = vunpack.c.l.b16 %v695
        %v1051 = vunpack.c.h.b16 %v695
        %v1052 = vunpack.c.l.b16 %v696
        %v1053 = vunpack.c.h.b16 %v696
        %v1054 = vunpack.c.l.b16 %v697
        %v1055 = vunpack.c.h.b16 %v697
        %v1056 = vunpack.c.l.b16 %v698
        %v1057 = vunpack.c.h.b16 %v698
        %v1058 = vunpack.c.l.b16 %v699
        %v1059 = vunpack.c.h.b16 %v699
        %v1060 = vunpack.c.l.b16 %v700
        %v1061 = vunpack.c.h.b16 %v700
        %v1062 = vunpack.c.l.b16 %v701
        %v1063 = vunpack.c.h.b16 %v701
        %v1064 = vunpack.c.l.b16 %v702
        %v1065 = vunpack.c.h.b16 %v702
        %v1066 = vunpack.c.l.b16 %v703
        %v1067 = vunpack.c.h.b16 %v703
        %v1068 = vunpack.c.l.b16 %v704
        %v1069 = vunpack.c.h.b16 %v704
        %v1070 = vunpack.c.l.b16 %v705
        %v1071 = vunpack.c.h.b16 %v705
        %v1072 = vunpack.c.l.b16 %v706
        %v1073 = vunpack.c.h.b16 %v706
        %v1074 = vunpack.c.l.b16 %v707
        %v1075 = vunpack.c.h.b16 %v707
        %v1076 = vunpack.c.l.b16 %v708
        %v1077 = vunpack.c.h.b16 %v708
        %v1078 = vunpack.c.l.b16 %v709
        %v1079 = vunpack.c.h.b16 %v709
        %v1080 = vunpack.c.l.b16 %v710
        %v1081 = vunpack.c.h.b16 %v710
        %v1082 = vunpack.c.l.b16 %v711
        %v1083 = vunpack.c.h.b16 %v711
        %v1084 = vunpack.c.l.b16 %v712
        %v1085 = vunpack.c.h.b16 %v712
        %v1086 = vunpack.c.l.b16 %v713
        %v1087 = vunpack.c.h.b16 %v713
        %v1088 = vunpack.c.l.b16 %v714
        %v1089 = vunpack.c.h.b16 %v714
        %v1090 = vunpack.c.l.b16 %v715
        %v1091 = vunpack.c.h.b16 %v715
        %v1092 = vunpack.c.l.b16 %v716
        %v1093 = vunpack.c.h.b16 %v716
        %v1094 = vunpack.c.l.b16 %v717
        %v1095 = vunpack.c.h.b16 %v717
        %v1096 = vunpack.c.l.b16 %v718
        %v1097 = vunpack.c.h.b16 %v718
        %v1098 = vunpack.c.l.b16 %v719
        %v1099 = vunpack.c.h.b16 %v719
        %v1100 = vunpack.c.l.b16 %v720
        %v1101 = vunpack.c.h.b16 %v720
        %v1102 = vunpack.c.l.b16 %v721
        %v1103 = vunpack.c.h.b16 %v721
        %v1104 = vunpack.c.l.b16 %v722
        %v1105 = vunpack.c.h.b16 %v722
        %v1106 = vunpack.c.l.b16 %v723
        %v1107 = vunpack.c.h.b16 %v723
        %v1108 = vunpack.c.l.b16 %v724
        %v1109 = vunpack.c.h.b16 %v724
        %v1110 = vunpack.c.l.b16 %v725
        %v1111 = vunpack.c.h.b16 %v725
        %v1112 = vunpack.c.l.b16 %v726
        %v1113 = vunpack.c.h.b16 %v726
        %v1114 = vunpack.c.l.b16 %v727
        %v1115 = vunpack.c.h.b16 %v727
        %v1116 = vunpack.c.l.b16 %v728
        %v1117 = vunpack.c.h.b16 %v728
        %v1118 = vunpack.c.l.b16 %v729
        %v1119 = vunpack.c.h.b16 %v729
        %v1120 = vunpack.c.l.b16 %v730
        %v1121 = vunpack.c.h.b16 %v730
        %v1122 = vunpack.c.l.b16 %v731
        %v1123 = vunpack.c.h.b16 %v731
        %v1124 = vunpack.c.l.b16 %v732
        %v1125 = vunpack.c.h.b16 %v732
        %v1126 = vunpack.c.l.b16 %v733
        %v1127 = vunpack.c.h.b16 %v733
        %v1128 = vunpack.c.l.b16 %v734
        %v1129 = vunpack.c.h.b16 %v734
        %v1130 = vunpack.c.l.b16 %v735
        %v1131 = vunpack.c.h.b16 %v735
        %v1132 = vunpack.c.l.b16 %v736
        %v1133 = vunpack.c.h.b16 %v736
        %v1134 = vunpack.c.l.b16 %v737
        %v1135 = vunpack.c.h.b16 %v737
        %v1136 = vunpack.c.l.b16 %v738
        %v1137 = vunpack.c.h.b16 %v738
        %v1138 = vunpack.c.l.b16 %v739
        %v1139 = vunpack.c.h.b16 %v739
        %v1140 = vunpack.c.l.b16 %v740
        %v1141 = vunpack.c.h.b16 %v740
        %v1142 = vunpack.c.l.b16 %v741
        %v1143 = vunpack.c.h.b16 %v741
        %v1144 = vunpack.c.l.b16 %v742
        %v1145 = vunpack.c.h.b16 %v742
        %v1146 = vunpack.c.l.b16 %v743
        %v1147 = vunpack.c.h.b16 %v743
        %v1148 = vunpack.c.l.b16 %v744
        %v1149 = vunpack.c.h.b16 %v744
        %v1150 = vunpack.c.l.b16 %v745
        %v1151 = vunpack.c.h.b16 %v745
        %v1152 = vunpack.c.l.b16 %v746
        %v1153 = vunpack.c.h.b16 %v746
        %v1154 = vunpack.c.l.b16 %v747
        %v1155 = vunpack.c.h.b16 %v747
        %v1156 = vunpack.c.l.b16 %v748
        %v1157 = vunpack.c.h.b16 %v748
        %v1158 = vunpack.c.l.b16 %v749
        %v1159 = vunpack.c.h.b16 %v749
        %v1160 = vunpack.c.l.b16 %v750
        %v1161 = vunpack.c.h.b16 %v750
        %v1162 = vunpack.c.l.b16 %v751
        %v1163 = vunpack.c.h.b16 %v751
        %v1164 = vunpack.c.l.b16 %v752
        %v1165 = vunpack.c.h.b16 %v752
        %v1166 = vunpack.c.l.b16 %v753
        %v1167 = vunpack.c.h.b16 %v753
        %v1168 = vunpack.c.l.b16 %v754
        %v1169 = vunpack.c.h.b16 %v754
        %v1170 = vunpack.c.l.b16 %v755
        %v1171 = vunpack.c.h.b16 %v755
        %v1172 = vunpack.c.l.b16 %v756
        %v1173 = vunpack.c.h.b16 %v756
        %v1174 = vunpack.c.l.b16 %v757
        %v1175 = vunpack.c.h.b16 %v757
        %v1176 = vunpack.c.l.b16 %v758
        %v1177 = vunpack.c.h.b16 %v758
        %v1178 = vunpack.c.l.b16 %v759
        %v1179 = vunpack.c.h.b16 %v759
        %v1180 = vunpack.c.l.b16 %v760
        %v1181 = vunpack.c.h.b16 %v760
        %v1182 = vunpack.c.l.b16 %v761
        %v1183 = vunpack.c.h.b16 %v761
        %v1184 = vunpack.c.l.b16 %v762
        %v1185 = vunpack.c.h.b16 %v762
        %v1186 = vunpack.c.l.b16 %v763
        %v1187 = vunpack.c.h.b16 %v763
        %v1188 = vunpack.c.l.b16 %v764
        %v1189 = vunpack.c.h.b16 %v764
        %v1190 = vunpack.c.l.b16 %v765
        %v1191 = vunpack.c.h.b16 %v765
        %v1192 = vunpack.c.l.b16 %v766
        %v1193 = vunpack.c.h.b16 %v766
        %v1194 = vunpack.c.l.b16 %v767
        %v1195 = vunpack.c.h.b16 %v767
        %v1196 = vunpack.c.l.b16 %v768
        %v1197 = vunpack.c.h.b16 %v768
        %v1198 = vunpack.c.l.b16 %v769
        %v1199 = vunpack.c.h.b16 %v769
        %v1200 = vunpack.c.l.b16 %v770
        %v1201 = vunpack.c.h.b16 %v770
        %v1202 = vunpack.c.l.b16 %v771
        %v1203 = vunpack.c.h.b16 %v771
        %v1204 = vunpack.c.l.b16 %v772
        %v1205 = vunpack.c.h.b16 %v772
        %v1206 = vunpack.c.l.b16 %v773
        %v1207 = vunpack.c.h.b16 %v773
        %v1208 = vunpack.c.l.b16 %v774
        %v1209 = vunpack.c.h.b16 %v774
        %v1210 = vunpack.c.l.b16 %v775
        %v1211 = vunpack.c.h.b16 %v775
        %v1212 = vunpack.c.l.b16 %v776
        %v1213 = vunpack.c.h.b16 %v776
        %v1214 = vunpack.c.l.b16 %v777
        %v1215 = vunpack.c.h.b16 %v777
        %v1216 = vunpack.c.l.b16 %v778
        %v1217 = vunpack.c.h.b16 %v778
        %v1218 = vunpack.c.l.b16 %v779
        %v1219 = vunpack.c.h.b16 %v779
        %v1220 = vunpack.c.l.b16 %v780
        %v1221 = vunpack.c.h.b16 %v780
        %v1222 = vunpack.c.l.b16 %v781
        %v1223 = vunpack.c.h.b16 %v781
        %v1224 = vunpack.c.l.b16 %v782
        %v1225 = vunpack.c.h.b16 %v782
        %v1226 = vunpack.c.l.b16 %v783
        %v1227 = vunpack.c.h.b16 %v783
        %v1228 = vunpack.c.l.b16 %v784
        %v1229 = vunpack.c.h.b16 %v784
        %v1230 = vunpack.c.l.b16 %v785
        %v1231 = vunpack.c.h.b16 %v785
        %v1232 = vunpack.c.l.b16 %v786
        %v1233 = vunpack.c.h.b16 %v786
        %v1234 = vunpack.c.l.b16 %v787
        %v1235 = vunpack.c.h.b16 %v787
        %v1236 = vpack.c.b16 %v984, %v980
        %v1237 = vpack.c.b16 %v985, %v981
        %v1238 = vpack.c.b16 %v986, %v982
        %v1239 = vpack.c.b16 %v987, %v983
        %v1240 = vpack.c.b16 %v992, %v988
        %v1241 = vpack.c.b16 %v993, %v989
        %v1242 = vpack.c.b16 %v994, %v990
        %v1243 = vpack.c.b16 %v995, %v991
        %v1244 = vpack.c.b16 %v1000, %v996
        %v1245 = vpack.c.b16 %v1001, %v997
        %v1246 = vpack.c.b16 %v1002, %v998
        %v1247 = vpack.c.b16 %v1003, %v999
        %v1248 = vpack.c.b16 %v1008, %v1004
        %v1249 = vpack.c.b16 %v1009, %v1005
        %v1250 = vpack.c.b16 %v1010, %v1006
        %v1251 = vpack.c.b16 %v1011, %v1007
        %v1252 = vpack.c.b16 %v1016, %v1012
        %v1253 = vpack.c.b16 %v1017, %v1013
        %v1254 = vpack.c.b16 %v1018, %v1014
        %v1255 = vpack.c.b16 %v1019, %v1015
        %v1256 = vpack.c.b16 %v1024, %v1020
        %v1257 = vpack.c.b16 %v1025, %v1021
        %v1258 = vpack.c.b16 %v1026, %v1022
        %v1259 = vpack.c.b16 %v1027, %v1023
        %v1260 = vpack.c.b16 %v1032, %v1028
        %v1261 = vpack.c.b16 %v1033, %v1029
        %v1262 = vpack.c.b16 %v1034, %v1030
        %v1263 = vpack.c.b16 %v1035, %v1031
        %v1264 = vpack.c.b16 %v1040, %v1036
        %v1265 = vpack.c.b16 %v1041, %v1037
        %v1266 = vpack.c.b16 %v1042, %v1038
        %v1267 = vpack.c.b16 %v1043, %v1039
        %v1268 = vpack.c.b16 %v1048, %v1044
        %v1269 = vpack.c.b16 %v1049, %v1045
        %v1270 = vpack.c.b16 %v1050, %v1046
        %v1271 = vpack.c.b16 %v1051, %v1047
        %v1272 = vpack.c.b16 %v1056, %v1052
        %v1273 = vpack.c.b16 %v1057, %v1053
        %v1274 = vpack.c.b16 %v1058, %v1054
        %v1275 = vpack.c.b16 %v1059, %v1055
        %v1276 = vpack.c.b16 %v1064, %v1060
        %v1277 = vpack.c.b16 %v1065, %v1061
        %v1278 = vpack.c.b16 %v1066, %v1062
        %v1279 = vpack.c.b16 %v1067, %v1063
        %v1280 = vpack.c.b16 %v1072, %v1068
        %v1281 = vpack.c.b16 %v1073, %v1069
        %v1282 = vpack.c.b16 %v1074, %v1070
        %v1283 = vpack.c.b16 %v1075, %v1071
        %v1284 = vpack.c.b16 %v1080, %v1076
        %v1285 = vpack.c.b16 %v1081, %v1077
        %v1286 = vpack.c.b16 %v1082, %v1078
        %v1287 = vpack.c.b16 %v1083, %v1079
        %v1288 = vpack.c.b16 %v1088, %v1084
        %v1289 = vpack.c.b16 %v1089, %v1085
        %v1290 = vpack.c.b16 %v1090, %v1086
        %v1291 = vpack.c.b16 %v1091, %v1087
        %v1292 = vpack.c.b16 %v1096, %v1092
        %v1293 = vpack.c.b16 %v1097, %v1093
        %v1294 = vpack.c.b16 %v1098, %v1094
        %v1295 = vpack.c.b16 %v1099, %v1095
        %v1296 = vpack.c.b16 %v1104, %v1100
        %v1297 = vpack.c.b16 %v1105, %v1101
        %v1298 = vpack.c.b16 %v1106, %v1102
        %v1299 = vpack.c.b16 %v1107, %v1103
        %v1300 = vpack.c.b16 %v1112, %v1108
        %v1301 = vpack.c.b16 %v1113, %v1109
        %v1302 = vpack.c.b16 %v1114, %v1110
        %v1303 = vpack.c.b16 %v1115, %v1111
        %v1304 = vpack.c.b16 %v1120, %v1116
        %v1305 = vpack.c.b16 %v1121, %v1117
        %v1306 = vpack.c.b16 %v1122, %v1118
        %v1307 = vpack.c.b16 %v1123, %v1119
        %v1308 = vpack.c.b16 %v1128, %v1124
        %v1309 = vpack.c.b16 %v1129, %v1125
        %v1310 = vpack.c.b16 %v1130, %v1126
        %v1311 = vpack.c.b16 %v1131, %v1127
        %v1312 = vpack.c.b16 %v1136, %v1132
        %v1313 = vpack.c.b16 %v1137, %v1133
        %v1314 = vpack.c.b16 %v1138, %v1134
        %v1315 = vpack.c.b16 %v1139, %v1135
        %v1316 = vpack.c.b16 %v1144, %v1140
        %v1317 = vpack.c.b16 %v1145, %v1141
        %v1318 = vpack.c.b16 %v1146, %v1142
        %v1319 = vpack.c.b16 %v1147, %v1143
        %v1320 = vpack.c.b16 %v1152, %v1148
        %v1321 = vpack.c.b16 %v1153, %v1149
        %v1322 = vpack.c.b16 %v1154, %v1150
        %v1323 = vpack.c.b16 %v1155, %v1151
        %v1324 = vpack.c.b16 %v1160, %v1156
        %v1325 = vpack.c.b16 %v1161, %v1157
        %v1326 = vpack.c.b16 %v1162, %v1158
        %v1327 = vpack.c.b16 %v1163, %v1159
        %v1328 = vpack.c.b16 %v1168, %v1164
        %v1329 = vpack.c.b16 %v1169, %v1165
        %v1330 = vpack.c.b16 %v1170, %v1166
        %v1331 = vpack.c.b16 %v1171, %v1167
        %v1332 = vpack.c.b16 %v1176, %v1172
        %v1333 = vpack.c.b16 %v1177, %v1173
        %v1334 = vpack.c.b16 %v1178, %v1174
        %v1335 = vpack.c.b16 %v1179, %v1175
        %v1336 = vpack.c.b16 %v1184, %v1180
        %v1337 = vpack.c.b16 %v1185, %v1181
        %v1338 = vpack.c.b16 %v1186, %v1182
        %v1339 = vpack.c.b16 %v1187, %v1183
        %v1340 = vpack.c.b16 %v1192, %v1188
        %v1341 = vpack.c.b16 %v1193, %v1189
        %v1342 = vpack.c.b16 %v1194, %v1190
        %v1343 = vpack.c.b16 %v1195, %v1191
        %v1344 = vpack.c.b16 %v1200, %v1196
        %v1345 = vpack.c.b16 %v1201, %v1197
        %v1346 = vpack.c.b16 %v1202, %v1198
        %v1347 = vpack.c.b16 %v1203, %v1199
        %v1348 = vpack.c.b16 %v1208, %v1204
        %v1349 = vpack.c.b16 %v1209, %v1205
        %v1350 = vpack.c.b16 %v1210, %v1206
        %v1351 = vpack.c.b16 %v1211, %v1207
        %v1352 = vpack.c.b16 %v1216, %v1212
        %v1353 = vpack.c.b16 %v1217, %v1213
        %v1354 = vpack.c.b16 %v1218, %v1214
        %v1355 = vpack.c.b16 %v1219, %v1215
        %v1356 = vpack.c.b16 %v1224, %v1220
        %v1357 = vpack.c.b16 %v1225, %v1221
        %v1358 = vpack.c.b16 %v1226, %v1222
        %v1359 = vpack.c.b16 %v1227, %v1223
        %v1360 = vpack.c.b16 %v1232, %v1228
        %v1361 = vpack.c.b16 %v1233, %v1229
        %v1362 = vpack.c.b16 %v1234, %v1230
        %v1363 = vpack.c.b16 %v1235, %v1231
        %v1556 = vunpack.c.l.b16 %v788
        %v1557 = vunpack.c.l.b16 %v789
        %v1558 = vunpack.c.l.b16 %v790
        %v1559 = vunpack.c.l.b16 %v791
        %v1560 = vunpack.c.l.b16 %v792
        %v1561 = vunpack.c.l.b16 %v793
        %v1562 = vunpack.c.l.b16 %v794
        %v1563 = vunpack.c.l.b16 %v795
        %v1564 = vunpack.c.l.b16 %v796
        %v1565 = vunpack.c.l.b16 %v797
        %v1566 = vunpack.c.l.b16 %v798
        %v1567 = vunpack.c.l.b16 %v799
        %v1568 = vunpack.c.l.b16 %v800
        %v1569 = vunpack.c.l.b16 %v801
        %v1570 = vunpack.c.l.b16 %v802
        %v1571 = vunpack.c.l.b16 %v803
        %v1572 = vunpack.c.l.b16 %v804
        %v1573 = vunpack.c.l.b16 %v805
        %v1574 = vunpack.c.l.b16 %v806
        %v1575 = vunpack.c.l.b16 %v807
        %v1576 = vunpack.c.l.b16 %v808
        %v1577 = vunpack.c.l.b16 %v809
        %v1578 = vunpack.c.l.b16 %v810
        %v1579 = vunpack.c.l.b16 %v811
        %v1580 = vunpack.c.l.b16 %v812
        %v1581 = vunpack.c.l.b16 %v813
        %v1582 = vunpack.c.l.b16 %v814
        %v1583 = vunpack.c.l.b16 %v815
        %v1584 = vunpack.c.l.b16 %v816
        %v1585 = vunpack.c.l.b16 %v817
        %v1586 = vunpack.c.l.b16 %v818
        %v1587 = vunpack.c.l.b16 %v819
        %v1588 = vunpack.c.l.b16 %v820
        %v1589 = vunpack.c.l.b16 %v821
        %v1590 = vunpack.c.l.b16 %v822
        %v1591 = vunpack.c.l.b16 %v823
        %v1592 = vunpack.c.l.b16 %v824
        %v1593 = vunpack.c.l.b16 %v825
        %v1594 = vunpack.c.l.b16 %v826
        %v1595 = vunpack.c.l.b16 %v827
        %v1596 = vunpack.c.l.b16 %v828
        %v1597 = vunpack.c.l.b16 %v829
        %v1598 = vunpack.c.l.b16 %v830
        %v1599 = vunpack.c.l.b16 %v831
        %v1600 = vunpack.c.l.b16 %v832
        %v1601 = vunpack.c.l.b16 %v833
        %v1602 = vunpack.c.l.b16 %v834
        %v1603 = vunpack.c.l.b16 %v835
        %v1604 = vunpack.c.l.b16 %v836
        %v1605 = vunpack.c.l.b16 %v837
        %v1606 = vunpack.c.l.b16 %v838
        %v1607 = vunpack.c.l.b16 %v839
        %v1608 = vunpack.c.l.b16 %v840
        %v1609 = vunpack.c.l.b16 %v841
        %v1610 = vunpack.c.l.b16 %v842
        %v1611 = vunpack.c.l.b16 %v843
        %v1612 = vunpack.c.l.b16 %v844
        %v1613 = vunpack.c.l.b16 %v845
        %v1614 = vunpack.c.l.b16 %v846
        %v1615 = vunpack.c.l.b16 %v847
        %v1616 = vunpack.c.l.b16 %v848
        %v1617 = vunpack.c.l.b16 %v849
        %v1618 = vunpack.c.l.b16 %v850
        %v1619 = vunpack.c.l.b16 %v851
        %v1620 = vpack.c.b16 %v1557, %v1556
        %v1621 = vpack.c.b16 %v1559, %v1558
        %v1622 = vpack.c.b16 %v1561, %v1560
        %v1623 = vpack.c.b16 %v1563, %v1562
        %v1624 = vpack.c.b16 %v1565, %v1564
        %v1625 = vpack.c.b16 %v1567, %v1566
        %v1626 = vpack.c.b16 %v1569, %v1568
        %v1627 = vpack.c.b16 %v1571, %v1570
        %v1628 = vpack.c.b16 %v1573, %v1572
        %v1629 = vpack.c.b16 %v1575, %v1574
        %v1630 = vpack.c.b16 %v1577, %v1576
        %v1631 = vpack.c.b16 %v1579, %v1578
        %v1632 = vpack.c.b16 %v1581, %v1580
        %v1633 = vpack.c.b16 %v1583, %v1582
        %v1634 = vpack.c.b16 %v1585, %v1584
        %v1635 = vpack.c.b16 %v1587, %v1586
        %v1636 = vpack.c.b16 %v1589, %v1588
        %v1637 = vpack.c.b16 %v1591, %v1590
        %v1638 = vpack.c.b16 %v1593, %v1592
        %v1639 = vpack.c.b16 %v1595, %v1594
        %v1640 = vpack.c.b16 %v1597, %v1596
        %v1641 = vpack.c.b16 %v1599, %v1598
        %v1642 = vpack.c.b16 %v1601, %v1600
        %v1643 = vpack.c.b16 %v1603, %v1602
        %v1644 = vpack.c.b16 %v1605, %v1604
        %v1645 = vpack.c.b16 %v1607, %v1606
        %v1646 = vpack.c.b16 %v1609, %v1608
        %v1647 = vpack.c.b16 %v1611, %v1610
        %v1648 = vpack.c.b16 %v1613, %v1612
        %v1649 = vpack.c.b16 %v1615, %v1614
        %v1650 = vpack.c.b16 %v1617, %v1616
        %v1651 = vpack.c.b16 %v1619, %v1618
        %1684 = vmatprep.subr.bf16.mxu0 0
        %1685 = vmatpush1.bf16.msra.mxu0 %v1620
        %1686 = vmatprep.subr.bf16.mxu0 0
        %1687 = vmatpush1.bf16.msra.mxu0 %v1621
        %1688 = vmatprep.subr.bf16.mxu0 0
        %1689 = vmatpush1.bf16.msra.mxu0 %v1622
        %1690 = vmatprep.subr.bf16.mxu0 0
        %1691 = vmatpush1.bf16.msra.mxu0 %v1623
        %1692 = vmatprep.subr.bf16.mxu0 0
        %1693 = vmatpush1.bf16.msra.mxu0 %v1624
        %1694 = vmatprep.subr.bf16.mxu0 0
        %1695 = vmatpush1.bf16.msra.mxu0 %v1625
        %1696 = vmatprep.subr.bf16.mxu0 0
        %1697 = vmatpush1.bf16.msra.mxu0 %v1626
        %1698 = vmatprep.subr.bf16.mxu0 0
        %1699 = vmatpush1.bf16.msra.mxu0 %v1627
        %1700 = vmatprep.subr.bf16.mxu0 0
        %1701 = vmatpush1.bf16.msra.mxu0 %v1628
        %1702 = vmatprep.subr.bf16.mxu0 0
        %1703 = vmatpush1.bf16.msra.mxu0 %v1629
        %1704 = vmatprep.subr.bf16.mxu0 0
        %1705 = vmatpush1.bf16.msra.mxu0 %v1630
        %1706 = vmatprep.subr.bf16.mxu0 0
        %1707 = vmatpush1.bf16.msra.mxu0 %v1631
        %1708 = vmatprep.subr.bf16.mxu0 0
        %1709 = vmatpush1.bf16.msra.mxu0 %v1632
        %1710 = vmatprep.subr.bf16.mxu0 0
        %1711 = vmatpush1.bf16.msra.mxu0 %v1633
        %1712 = vmatprep.subr.bf16.mxu0 0
        %1713 = vmatpush1.bf16.msra.mxu0 %v1634
        %1714 = vmatprep.subr.bf16.mxu0 0
        %1715 = vmatpush1.bf16.msra.mxu0 %v1635
        %1716 = vmatprep.mubr.bf16.mxu0 %v1237
        %1717 = vmatmul.mubr.bf16.gmra.mrb[0].mxu0 %v1236
        %v1718 = vpop.f32.mrb[0].mxu0
        %v1719 = vadd.f32 0.0, %v1718
        %v1720 = vpop.f32.mrb[0].mxu0
        %v1721 = vpop.f32.mrb[0].mxu0
        %v1722 = vadd.f32 0.0, %v1721
        %v1723 = vpop.f32.mrb[0].mxu0
        %1724 = vmatprep.mubr.bf16.mxu0 %v1241
        %1725 = vmatmul.mubr.bf16.gmra.mrb[0].mxu0 %v1240
        %v1726 = vpop.f32.mrb[0].mxu0
        %v1727 = vadd.f32 0.0, %v1726
        %v1728 = vpop.f32.mrb[0].mxu0
        %v1729 = vpop.f32.mrb[0].mxu0
        %v1730 = vadd.f32 0.0, %v1729
        %v1731 = vpop.f32.mrb[0].mxu0
        %1732 = vmatprep.mubr.bf16.mxu0 %v1245
        %1733 = vmatmul.mubr.bf16.gmra.mrb[0].mxu0 %v1244
        %v1734 = vpop.f32.mrb[0].mxu0
        %v1735 = vadd.f32 0.0, %v1734
        %v1736 = vpop.f32.mrb[0].mxu0
        %v1737 = vpop.f32.mrb[0].mxu0
        %v1738 = vadd.f32 0.0, %v1737
        %v1739 = vpop.f32.mrb[0].mxu0
        %1740 = vmatprep.mubr.bf16.mxu0 %v1249
        %1741 = vmatmul.mubr.bf16.gmra.mrb[0].mxu0 %v1248
        %v1742 = vpop.f32.mrb[0].mxu0
        %v1743 = vadd.f32 0.0, %v1742
        %v1744 = vpop.f32.mrb[0].mxu0
        %v1745 = vpop.f32.mrb[0].mxu0
        %v1746 = vadd.f32 0.0, %v1745
        %v1747 = vpop.f32.mrb[0].mxu0
        %1748 = vmatprep.mubr.bf16.mxu0 %v1253
        %1749 = vmatmul.mubr.bf16.gmra.mrb[0].mxu0 %v1252
        %v1750 = vpop.f32.mrb[0].mxu0
        %v1751 = vadd.f32 0.0, %v1750
        %v1752 = vpop.f32.mrb[0].mxu0
        %v1753 = vpop.f32.mrb[0].mxu0
        %v1754 = vadd.f32 0.0, %v1753
        %v1755 = vpop.f32.mrb[0].mxu0
        %1756 = vmatprep.mubr.bf16.mxu0 %v1257
        %1757 = vmatmul.mubr.bf16.gmra.mrb[0].mxu0 %v1256
        %v1758 = vpop.f32.mrb[0].mxu0
        %v1759 = vadd.f32 0.0, %v1758
        %v1760 = vpop.f32.mrb[0].mxu0
        %v1761 = vpop.f32.mrb[0].mxu0
        %v1762 = vadd.f32 0.0, %v1761
        %v1763 = vpop.f32.mrb[0].mxu0
        %1764 = vmatprep.mubr.bf16.mxu0 %v1261
        %1765 = vmatmul.mubr.bf16.gmra.mrb[0].mxu0 %v1260
        %v1766 = vpop.f32.mrb[0].mxu0
        %v1767 = vadd.f32 0.0, %v1766
        %v1768 = vpop.f32.mrb[0].mxu0
        %v1769 = vpop.f32.mrb[0].mxu0
        %v1770 = vadd.f32 0.0, %v1769
        %v1771 = vpop.f32.mrb[0].mxu0
        %1772 = vmatprep.mubr.bf16.mxu0 %v1265
        %1773 = vmatmul.mubr.bf16.gmra.mrb[0].mxu0 %v1264
        %v1774 = vpop.f32.mrb[0].mxu0
        %v1775 = vadd.f32 0.0, %v1774
        %v1776 = vpop.f32.mrb[0].mxu0
        %v1777 = vpop.f32.mrb[0].mxu0
        %v1778 = vadd.f32 0.0, %v1777
        %v1779 = vpop.f32.mrb[0].mxu0
        %1780 = vmatprep.mubr.bf16.mxu0 %v1269
        %1781 = vmatmul.mubr.bf16.gmra.mrb[0].mxu0 %v1268
        %v1782 = vpop.f32.mrb[0].mxu0
        %v1783 = vadd.f32 0.0, %v1782
        %v1784 = vpop.f32.mrb[0].mxu0
        %v1785 = vpop.f32.mrb[0].mxu0
        %v1786 = vadd.f32 0.0, %v1785
        %v1787 = vpop.f32.mrb[0].mxu0
        %1788 = vmatprep.mubr.bf16.mxu0 %v1273
        %1789 = vmatmul.mubr.bf16.gmra.mrb[0].mxu0 %v1272
        %v1790 = vpop.f32.mrb[0].mxu0
        %v1791 = vadd.f32 0.0, %v1790
        %v1792 = vpop.f32.mrb[0].mxu0
        %v1793 = vpop.f32.mrb[0].mxu0
        %v1794 = vadd.f32 0.0, %v1793
        %v1795 = vpop.f32.mrb[0].mxu0
        %1796 = vmatprep.mubr.bf16.mxu0 %v1277
        %1797 = vmatmul.mubr.bf16.gmra.mrb[0].mxu0 %v1276
        %v1798 = vpop.f32.mrb[0].mxu0
        %v1799 = vadd.f32 0.0, %v1798
        %v1800 = vpop.f32.mrb[0].mxu0
        %v1801 = vpop.f32.mrb[0].mxu0
        %v1802 = vadd.f32 0.0, %v1801
        %v1803 = vpop.f32.mrb[0].mxu0
        %1804 = vmatprep.mubr.bf16.mxu0 %v1281
        %1805 = vmatmul.mubr.bf16.gmra.mrb[0].mxu0 %v1280
        %v1806 = vpop.f32.mrb[0].mxu0
        %v1807 = vadd.f32 0.0, %v1806
        %v1808 = vpop.f32.mrb[0].mxu0
        %v1809 = vpop.f32.mrb[0].mxu0
        %v1810 = vadd.f32 0.0, %v1809
        %v1811 = vpop.f32.mrb[0].mxu0
        %1812 = vmatprep.mubr.bf16.mxu0 %v1285
        %1813 = vmatmul.mubr.bf16.gmra.mrb[0].mxu0 %v1284
        %v1814 = vpop.f32.mrb[0].mxu0
        %v1815 = vadd.f32 0.0, %v1814
        %v1816 = vpop.f32.mrb[0].mxu0
        %v1817 = vpop.f32.mrb[0].mxu0
        %v1818 = vadd.f32 0.0, %v1817
        %v1819 = vpop.f32.mrb[0].mxu0
        %1820 = vmatprep.mubr.bf16.mxu0 %v1289
        %1821 = vmatmul.mubr.bf16.gmra.mrb[0].mxu0 %v1288
        %v1822 = vpop.f32.mrb[0].mxu0
        %v1823 = vadd.f32 0.0, %v1822
        %v1824 = vpop.f32.mrb[0].mxu0
        %v1825 = vpop.f32.mrb[0].mxu0
        %v1826 = vadd.f32 0.0, %v1825
        %v1827 = vpop.f32.mrb[0].mxu0
        %1828 = vmatprep.mubr.bf16.mxu0 %v1293
        %1829 = vmatmul.mubr.bf16.gmra.mrb[0].mxu0 %v1292
        %v1830 = vpop.f32.mrb[0].mxu0
        %v1831 = vadd.f32 0.0, %v1830
        %v1832 = vpop.f32.mrb[0].mxu0
        %v1833 = vpop.f32.mrb[0].mxu0
        %v1834 = vadd.f32 0.0, %v1833
        %v1835 = vpop.f32.mrb[0].mxu0
        %1836 = vmatprep.mubr.bf16.mxu0 %v1297
        %1837 = vmatmul.mubr.bf16.gmra.mrb[0].mxu0 %v1296
        %v1838 = vpop.f32.mrb[0].mxu0
        %v1839 = vadd.f32 0.0, %v1838
        %v1840 = vpop.f32.mrb[0].mxu0
        %v1841 = vpop.f32.mrb[0].mxu0
        %v1842 = vadd.f32 0.0, %v1841
        %v1843 = vpop.f32.mrb[0].mxu0
        %1844 = vmatprep.mubr.bf16.mxu0 %v1301
        %1845 = vmatmul.mubr.bf16.gmra.mrb[0].mxu0 %v1300
        %v1846 = vpop.f32.mrb[0].mxu0
        %v1847 = vadd.f32 0.0, %v1846
        %v1848 = vpop.f32.mrb[0].mxu0
        %v1849 = vpop.f32.mrb[0].mxu0
        %v1850 = vadd.f32 0.0, %v1849
        %v1851 = vpop.f32.mrb[0].mxu0
        %1852 = vmatprep.mubr.bf16.mxu0 %v1305
        %1853 = vmatmul.mubr.bf16.gmra.mrb[0].mxu0 %v1304
        %v1854 = vpop.f32.mrb[0].mxu0
        %v1855 = vadd.f32 0.0, %v1854
        %v1856 = vpop.f32.mrb[0].mxu0
        %v1857 = vpop.f32.mrb[0].mxu0
        %v1858 = vadd.f32 0.0, %v1857
        %v1859 = vpop.f32.mrb[0].mxu0
        %1860 = vmatprep.mubr.bf16.mxu0 %v1309
        %1861 = vmatmul.mubr.bf16.gmra.mrb[0].mxu0 %v1308
        %v1862 = vpop.f32.mrb[0].mxu0
        %v1863 = vadd.f32 0.0, %v1862
        %v1864 = vpop.f32.mrb[0].mxu0
        %v1865 = vpop.f32.mrb[0].mxu0
        %v1866 = vadd.f32 0.0, %v1865
        %v1867 = vpop.f32.mrb[0].mxu0
        %1868 = vmatprep.mubr.bf16.mxu0 %v1313
        %1869 = vmatmul.mubr.bf16.gmra.mrb[0].mxu0 %v1312
        %v1870 = vpop.f32.mrb[0].mxu0
        %v1871 = vadd.f32 0.0, %v1870
        %v1872 = vpop.f32.mrb[0].mxu0
        %v1873 = vpop.f32.mrb[0].mxu0
        %v1874 = vadd.f32 0.0, %v1873
        %v1875 = vpop.f32.mrb[0].mxu0
        %1876 = vmatprep.mubr.bf16.mxu0 %v1317
        %1877 = vmatmul.mubr.bf16.gmra.mrb[0].mxu0 %v1316
        %v1878 = vpop.f32.mrb[0].mxu0
        %v1879 = vadd.f32 0.0, %v1878
        %v1880 = vpop.f32.mrb[0].mxu0
        %v1881 = vpop.f32.mrb[0].mxu0
        %v1882 = vadd.f32 0.0, %v1881
        %v1883 = vpop.f32.mrb[0].mxu0
        %1884 = vmatprep.mubr.bf16.mxu0 %v1321
        %1885 = vmatmul.mubr.bf16.gmra.mrb[0].mxu0 %v1320
        %v1886 = vpop.f32.mrb[0].mxu0
        %v1887 = vadd.f32 0.0, %v1886
        %v1888 = vpop.f32.mrb[0].mxu0
        %v1889 = vpop.f32.mrb[0].mxu0
        %v1890 = vadd.f32 0.0, %v1889
        %v1891 = vpop.f32.mrb[0].mxu0
        %1892 = vmatprep.mubr.bf16.mxu0 %v1325
        %1893 = vmatmul.mubr.bf16.gmra.mrb[0].mxu0 %v1324
        %v1894 = vpop.f32.mrb[0].mxu0
        %v1895 = vadd.f32 0.0, %v1894
        %v1896 = vpop.f32.mrb[0].mxu0
        %v1897 = vpop.f32.mrb[0].mxu0
        %v1898 = vadd.f32 0.0, %v1897
        %v1899 = vpop.f32.mrb[0].mxu0
        %1900 = vmatprep.mubr.bf16.mxu0 %v1329
        %1901 = vmatmul.mubr.bf16.gmra.mrb[0].mxu0 %v1328
        %v1902 = vpop.f32.mrb[0].mxu0
        %v1903 = vadd.f32 0.0, %v1902
        %v1904 = vpop.f32.mrb[0].mxu0
        %v1905 = vpop.f32.mrb[0].mxu0
        %v1906 = vadd.f32 0.0, %v1905
        %v1907 = vpop.f32.mrb[0].mxu0
        %1908 = vmatprep.mubr.bf16.mxu0 %v1333
        %1909 = vmatmul.mubr.bf16.gmra.mrb[0].mxu0 %v1332
        %v1910 = vpop.f32.mrb[0].mxu0
        %v1911 = vadd.f32 0.0, %v1910
        %v1912 = vpop.f32.mrb[0].mxu0
        %v1913 = vpop.f32.mrb[0].mxu0
        %v1914 = vadd.f32 0.0, %v1913
        %v1915 = vpop.f32.mrb[0].mxu0
        %1916 = vmatprep.mubr.bf16.mxu0 %v1337
        %1917 = vmatmul.mubr.bf16.gmra.mrb[0].mxu0 %v1336
        %v1918 = vpop.f32.mrb[0].mxu0
        %v1919 = vadd.f32 0.0, %v1918
        %v1920 = vpop.f32.mrb[0].mxu0
        %v1921 = vpop.f32.mrb[0].mxu0
        %v1922 = vadd.f32 0.0, %v1921
        %v1923 = vpop.f32.mrb[0].mxu0
        %1924 = vmatprep.mubr.bf16.mxu0 %v1341
        %1925 = vmatmul.mubr.bf16.gmra.mrb[0].mxu0 %v1340
        %v1926 = vpop.f32.mrb[0].mxu0
        %v1927 = vadd.f32 0.0, %v1926
        %v1928 = vpop.f32.mrb[0].mxu0
        %v1929 = vpop.f32.mrb[0].mxu0
        %v1930 = vadd.f32 0.0, %v1929
        %v1931 = vpop.f32.mrb[0].mxu0
        %1932 = vmatprep.mubr.bf16.mxu0 %v1345
        %1933 = vmatmul.mubr.bf16.gmra.mrb[0].mxu0 %v1344
        %v1934 = vpop.f32.mrb[0].mxu0
        %v1935 = vadd.f32 0.0, %v1934
        %v1936 = vpop.f32.mrb[0].mxu0
        %v1937 = vpop.f32.mrb[0].mxu0
        %v1938 = vadd.f32 0.0, %v1937
        %v1939 = vpop.f32.mrb[0].mxu0
        %1940 = vmatprep.mubr.bf16.mxu0 %v1349
        %1941 = vmatmul.mubr.bf16.gmra.mrb[0].mxu0 %v1348
        %v1942 = vpop.f32.mrb[0].mxu0
        %v1943 = vadd.f32 0.0, %v1942
        %v1944 = vpop.f32.mrb[0].mxu0
        %v1945 = vpop.f32.mrb[0].mxu0
        %v1946 = vadd.f32 0.0, %v1945
        %v1947 = vpop.f32.mrb[0].mxu0
        %1948 = vmatprep.mubr.bf16.mxu0 %v1353
        %1949 = vmatmul.mubr.bf16.gmra.mrb[0].mxu0 %v1352
        %v1950 = vpop.f32.mrb[0].mxu0
        %v1951 = vadd.f32 0.0, %v1950
        %v1952 = vpop.f32.mrb[0].mxu0
        %v1953 = vpop.f32.mrb[0].mxu0
        %v1954 = vadd.f32 0.0, %v1953
        %v1955 = vpop.f32.mrb[0].mxu0
        %1956 = vmatprep.mubr.bf16.mxu0 %v1357
        %1957 = vmatmul.mubr.bf16.gmra.mrb[0].mxu0 %v1356
        %v1958 = vpop.f32.mrb[0].mxu0
        %v1959 = vadd.f32 0.0, %v1958
        %v1960 = vpop.f32.mrb[0].mxu0
        %v1961 = vpop.f32.mrb[0].mxu0
        %v1962 = vadd.f32 0.0, %v1961
        %v1963 = vpop.f32.mrb[0].mxu0
        %1964 = vmatprep.mubr.bf16.mxu0 %v1361
        %1965 = vmatmul.mubr.bf16.gmra.mrb[0].mxu0 %v1360
        %v1966 = vpop.f32.mrb[0].mxu0
        %v1967 = vadd.f32 0.0, %v1966
        %v1968 = vpop.f32.mrb[0].mxu0
        %v1969 = vpop.f32.mrb[0].mxu0
        %v1970 = vadd.f32 0.0, %v1969
        %v1971 = vpop.f32.mrb[0].mxu0
        %1972 = vdwg.mxu0
        %1973 = vmatprep.subr.bf16.mxu0 0
        %1974 = vmatpush1.bf16.msra.mxu0 %v1636
        %1975 = vmatprep.subr.bf16.mxu0 0
        %1976 = vmatpush1.bf16.msra.mxu0 %v1637
        %1977 = vmatprep.subr.bf16.mxu0 0
        %1978 = vmatpush1.bf16.msra.mxu0 %v1638
        %1979 = vmatprep.subr.bf16.mxu0 0
        %1980 = vmatpush1.bf16.msra.mxu0 %v1639
        %1981 = vmatprep.subr.bf16.mxu0 0
        %1982 = vmatpush1.bf16.msra.mxu0 %v1640
        %1983 = vmatprep.subr.bf16.mxu0 0
        %1984 = vmatpush1.bf16.msra.mxu0 %v1641
        %1985 = vmatprep.subr.bf16.mxu0 0
        %1986 = vmatpush1.bf16.msra.mxu0 %v1642
        %1987 = vmatprep.subr.bf16.mxu0 0
        %1988 = vmatpush1.bf16.msra.mxu0 %v1643
        %1989 = vmatprep.subr.bf16.mxu0 0
        %1990 = vmatpush1.bf16.msra.mxu0 %v1644
        %1991 = vmatprep.subr.bf16.mxu0 0
        %1992 = vmatpush1.bf16.msra.mxu0 %v1645
        %1993 = vmatprep.subr.bf16.mxu0 0
        %1994 = vmatpush1.bf16.msra.mxu0 %v1646
        %1995 = vmatprep.subr.bf16.mxu0 0
        %1996 = vmatpush1.bf16.msra.mxu0 %v1647
        %1997 = vmatprep.subr.bf16.mxu0 0
        %1998 = vmatpush1.bf16.msra.mxu0 %v1648
        %1999 = vmatprep.subr.bf16.mxu0 0
        %2000 = vmatpush1.bf16.msra.mxu0 %v1649
        %2001 = vmatprep.subr.bf16.mxu0 0
        %2002 = vmatpush1.bf16.msra.mxu0 %v1650
        %2003 = vmatprep.subr.bf16.mxu0 0
        %2004 = vmatpush1.bf16.msra.mxu0 %v1651
        %2005 = vmatprep.mubr.bf16.mxu0 %v1239
        %2006 = vmatmul.mubr.bf16.gmra.mrb[0].mxu0 %v1238
        %v2007 = vpop.f32.mrb[0].mxu0
        %v2008 = vadd.f32 %v1719, %v2007
        %v2009 = vpop.f32.mrb[0].mxu0
        %v2010 = vpop.f32.mrb[0].mxu0
        %v2011 = vadd.f32 %v1722, %v2010
        %v2012 = vpop.f32.mrb[0].mxu0
        %2013 = vmatprep.mubr.bf16.mxu0 %v1243
        %2014 = vmatmul.mubr.bf16.gmra.mrb[0].mxu0 %v1242
        %v2015 = vpop.f32.mrb[0].mxu0
        %v2016 = vadd.f32 %v1727, %v2015
        %v2017 = vpop.f32.mrb[0].mxu0
        %v2018 = vpop.f32.mrb[0].mxu0
        %v2019 = vadd.f32 %v1730, %v2018
        %v2020 = vpop.f32.mrb[0].mxu0
        %2021 = vmatprep.mubr.bf16.mxu0 %v1247
        %2022 = vmatmul.mubr.bf16.gmra.mrb[0].mxu0 %v1246
        %v2023 = vpop.f32.mrb[0].mxu0
        %v2024 = vadd.f32 %v1735, %v2023
        %v2025 = vpop.f32.mrb[0].mxu0
        %v2026 = vpop.f32.mrb[0].mxu0
        %v2027 = vadd.f32 %v1738, %v2026
        %v2028 = vpop.f32.mrb[0].mxu0
        %2029 = vmatprep.mubr.bf16.mxu0 %v1251
        %2030 = vmatmul.mubr.bf16.gmra.mrb[0].mxu0 %v1250
        %v2031 = vpop.f32.mrb[0].mxu0
        %v2032 = vadd.f32 %v1743, %v2031
        %v2033 = vpop.f32.mrb[0].mxu0
        %v2034 = vpop.f32.mrb[0].mxu0
        %v2035 = vadd.f32 %v1746, %v2034
        %v2036 = vpop.f32.mrb[0].mxu0
        %2037 = vmatprep.mubr.bf16.mxu0 %v1255
        %2038 = vmatmul.mubr.bf16.gmra.mrb[0].mxu0 %v1254
        %v2039 = vpop.f32.mrb[0].mxu0
        %v2040 = vadd.f32 %v1751, %v2039
        %v2041 = vpop.f32.mrb[0].mxu0
        %v2042 = vpop.f32.mrb[0].mxu0
        %v2043 = vadd.f32 %v1754, %v2042
        %v2044 = vpop.f32.mrb[0].mxu0
        %2045 = vmatprep.mubr.bf16.mxu0 %v1259
        %2046 = vmatmul.mubr.bf16.gmra.mrb[0].mxu0 %v1258
        %v2047 = vpop.f32.mrb[0].mxu0
        %v2048 = vadd.f32 %v1759, %v2047
        %v2049 = vpop.f32.mrb[0].mxu0
        %v2050 = vpop.f32.mrb[0].mxu0
        %v2051 = vadd.f32 %v1762, %v2050
        %v2052 = vpop.f32.mrb[0].mxu0
        %2053 = vmatprep.mubr.bf16.mxu0 %v1263
        %2054 = vmatmul.mubr.bf16.gmra.mrb[0].mxu0 %v1262
        %v2055 = vpop.f32.mrb[0].mxu0
        %v2056 = vadd.f32 %v1767, %v2055
        %v2057 = vpop.f32.mrb[0].mxu0
        %v2058 = vpop.f32.mrb[0].mxu0
        %v2059 = vadd.f32 %v1770, %v2058
        %v2060 = vpop.f32.mrb[0].mxu0
        %2061 = vmatprep.mubr.bf16.mxu0 %v1267
        %2062 = vmatmul.mubr.bf16.gmra.mrb[0].mxu0 %v1266
        %v2063 = vpop.f32.mrb[0].mxu0
        %v2064 = vadd.f32 %v1775, %v2063
        %v2065 = vpop.f32.mrb[0].mxu0
        %v2066 = vpop.f32.mrb[0].mxu0
        %v2067 = vadd.f32 %v1778, %v2066
        %v2068 = vpop.f32.mrb[0].mxu0
        %2069 = vmatprep.mubr.bf16.mxu0 %v1271
        %2070 = vmatmul.mubr.bf16.gmra.mrb[0].mxu0 %v1270
        %v2071 = vpop.f32.mrb[0].mxu0
        %v2072 = vadd.f32 %v1783, %v2071
        %v2073 = vpop.f32.mrb[0].mxu0
        %v2074 = vpop.f32.mrb[0].mxu0
        %v2075 = vadd.f32 %v1786, %v2074
        %v2076 = vpop.f32.mrb[0].mxu0
        %2077 = vmatprep.mubr.bf16.mxu0 %v1275
        %2078 = vmatmul.mubr.bf16.gmra.mrb[0].mxu0 %v1274
        %v2079 = vpop.f32.mrb[0].mxu0
        %v2080 = vadd.f32 %v1791, %v2079
        %v2081 = vpop.f32.mrb[0].mxu0
        %v2082 = vpop.f32.mrb[0].mxu0
        %v2083 = vadd.f32 %v1794, %v2082
        %v2084 = vpop.f32.mrb[0].mxu0
        %2085 = vmatprep.mubr.bf16.mxu0 %v1279
        %2086 = vmatmul.mubr.bf16.gmra.mrb[0].mxu0 %v1278
        %v2087 = vpop.f32.mrb[0].mxu0
        %v2088 = vadd.f32 %v1799, %v2087
        %v2089 = vpop.f32.mrb[0].mxu0
        %v2090 = vpop.f32.mrb[0].mxu0
        %v2091 = vadd.f32 %v1802, %v2090
        %v2092 = vpop.f32.mrb[0].mxu0
        %2093 = vmatprep.mubr.bf16.mxu0 %v1283
        %2094 = vmatmul.mubr.bf16.gmra.mrb[0].mxu0 %v1282
        %v2095 = vpop.f32.mrb[0].mxu0
        %v2096 = vadd.f32 %v1807, %v2095
        %v2097 = vpop.f32.mrb[0].mxu0
        %v2098 = vpop.f32.mrb[0].mxu0
        %v2099 = vadd.f32 %v1810, %v2098
        %v2100 = vpop.f32.mrb[0].mxu0
        %2101 = vmatprep.mubr.bf16.mxu0 %v1287
        %2102 = vmatmul.mubr.bf16.gmra.mrb[0].mxu0 %v1286
        %v2103 = vpop.f32.mrb[0].mxu0
        %v2104 = vadd.f32 %v1815, %v2103
        %v2105 = vpop.f32.mrb[0].mxu0
        %v2106 = vpop.f32.mrb[0].mxu0
        %v2107 = vadd.f32 %v1818, %v2106
        %v2108 = vpop.f32.mrb[0].mxu0
        %2109 = vmatprep.mubr.bf16.mxu0 %v1291
        %2110 = vmatmul.mubr.bf16.gmra.mrb[0].mxu0 %v1290
        %v2111 = vpop.f32.mrb[0].mxu0
        %v2112 = vadd.f32 %v1823, %v2111
        %v2113 = vpop.f32.mrb[0].mxu0
        %v2114 = vpop.f32.mrb[0].mxu0
        %v2115 = vadd.f32 %v1826, %v2114
        %v2116 = vpop.f32.mrb[0].mxu0
        %2117 = vmatprep.mubr.bf16.mxu0 %v1295
        %2118 = vmatmul.mubr.bf16.gmra.mrb[0].mxu0 %v1294
        %v2119 = vpop.f32.mrb[0].mxu0
        %v2120 = vadd.f32 %v1831, %v2119
        %v2121 = vpop.f32.mrb[0].mxu0
        %v2122 = vpop.f32.mrb[0].mxu0
        %v2123 = vadd.f32 %v1834, %v2122
        %v2124 = vpop.f32.mrb[0].mxu0
        %2125 = vmatprep.mubr.bf16.mxu0 %v1299
        %2126 = vmatmul.mubr.bf16.gmra.mrb[0].mxu0 %v1298
        %v2127 = vpop.f32.mrb[0].mxu0
        %v2128 = vadd.f32 %v1839, %v2127
        %v2129 = vpop.f32.mrb[0].mxu0
        %v2130 = vpop.f32.mrb[0].mxu0
        %v2131 = vadd.f32 %v1842, %v2130
        %v2132 = vpop.f32.mrb[0].mxu0
        %2133 = vmatprep.mubr.bf16.mxu0 %v1303
        %2134 = vmatmul.mubr.bf16.gmra.mrb[0].mxu0 %v1302
        %v2135 = vpop.f32.mrb[0].mxu0
        %v2136 = vadd.f32 %v1847, %v2135
        %v2137 = vpop.f32.mrb[0].mxu0
        %v2138 = vpop.f32.mrb[0].mxu0
        %v2139 = vadd.f32 %v1850, %v2138
        %v2140 = vpop.f32.mrb[0].mxu0
        %2141 = vmatprep.mubr.bf16.mxu0 %v1307
        %2142 = vmatmul.mubr.bf16.gmra.mrb[0].mxu0 %v1306
        %v2143 = vpop.f32.mrb[0].mxu0
        %v2144 = vadd.f32 %v1855, %v2143
        %v2145 = vpop.f32.mrb[0].mxu0
        %v2146 = vpop.f32.mrb[0].mxu0
        %v2147 = vadd.f32 %v1858, %v2146
        %v2148 = vpop.f32.mrb[0].mxu0
        %2149 = vmatprep.mubr.bf16.mxu0 %v1311
        %2150 = vmatmul.mubr.bf16.gmra.mrb[0].mxu0 %v1310
        %v2151 = vpop.f32.mrb[0].mxu0
        %v2152 = vadd.f32 %v1863, %v2151
        %v2153 = vpop.f32.mrb[0].mxu0
        %v2154 = vpop.f32.mrb[0].mxu0
        %v2155 = vadd.f32 %v1866, %v2154
        %v2156 = vpop.f32.mrb[0].mxu0
        %2157 = vmatprep.mubr.bf16.mxu0 %v1315
        %2158 = vmatmul.mubr.bf16.gmra.mrb[0].mxu0 %v1314
        %v2159 = vpop.f32.mrb[0].mxu0
        %v2160 = vadd.f32 %v1871, %v2159
        %v2161 = vpop.f32.mrb[0].mxu0
        %v2162 = vpop.f32.mrb[0].mxu0
        %v2163 = vadd.f32 %v1874, %v2162
        %v2164 = vpop.f32.mrb[0].mxu0
        %2165 = vmatprep.mubr.bf16.mxu0 %v1319
        %2166 = vmatmul.mubr.bf16.gmra.mrb[0].mxu0 %v1318
        %v2167 = vpop.f32.mrb[0].mxu0
        %v2168 = vadd.f32 %v1879, %v2167
        %v2169 = vpop.f32.mrb[0].mxu0
        %v2170 = vpop.f32.mrb[0].mxu0
        %v2171 = vadd.f32 %v1882, %v2170
        %v2172 = vpop.f32.mrb[0].mxu0
        %2173 = vmatprep.mubr.bf16.mxu0 %v1323
        %2174 = vmatmul.mubr.bf16.gmra.mrb[0].mxu0 %v1322
        %v2175 = vpop.f32.mrb[0].mxu0
        %v2176 = vadd.f32 %v1887, %v2175
        %v2177 = vpop.f32.mrb[0].mxu0
        %v2178 = vpop.f32.mrb[0].mxu0
        %v2179 = vadd.f32 %v1890, %v2178
        %v2180 = vpop.f32.mrb[0].mxu0
        %2181 = vmatprep.mubr.bf16.mxu0 %v1327
        %2182 = vmatmul.mubr.bf16.gmra.mrb[0].mxu0 %v1326
        %v2183 = vpop.f32.mrb[0].mxu0
        %v2184 = vadd.f32 %v1895, %v2183
        %v2185 = vpop.f32.mrb[0].mxu0
        %v2186 = vpop.f32.mrb[0].mxu0
        %v2187 = vadd.f32 %v1898, %v2186
        %v2188 = vpop.f32.mrb[0].mxu0
        %2189 = vmatprep.mubr.bf16.mxu0 %v1331
        %2190 = vmatmul.mubr.bf16.gmra.mrb[0].mxu0 %v1330
        %v2191 = vpop.f32.mrb[0].mxu0
        %v2192 = vadd.f32 %v1903, %v2191
        %v2193 = vpop.f32.mrb[0].mxu0
        %v2194 = vpop.f32.mrb[0].mxu0
        %v2195 = vadd.f32 %v1906, %v2194
        %v2196 = vpop.f32.mrb[0].mxu0
        %2197 = vmatprep.mubr.bf16.mxu0 %v1335
        %2198 = vmatmul.mubr.bf16.gmra.mrb[0].mxu0 %v1334
        %v2199 = vpop.f32.mrb[0].mxu0
        %v2200 = vadd.f32 %v1911, %v2199
        %v2201 = vpop.f32.mrb[0].mxu0
        %v2202 = vpop.f32.mrb[0].mxu0
        %v2203 = vadd.f32 %v1914, %v2202
        %v2204 = vpop.f32.mrb[0].mxu0
        %2205 = vmatprep.mubr.bf16.mxu0 %v1339
        %2206 = vmatmul.mubr.bf16.gmra.mrb[0].mxu0 %v1338
        %v2207 = vpop.f32.mrb[0].mxu0
        %v2208 = vadd.f32 %v1919, %v2207
        %v2209 = vpop.f32.mrb[0].mxu0
        %v2210 = vpop.f32.mrb[0].mxu0
        %v2211 = vadd.f32 %v1922, %v2210
        %v2212 = vpop.f32.mrb[0].mxu0
        %2213 = vmatprep.mubr.bf16.mxu0 %v1343
        %2214 = vmatmul.mubr.bf16.gmra.mrb[0].mxu0 %v1342
        %v2215 = vpop.f32.mrb[0].mxu0
        %v2216 = vadd.f32 %v1927, %v2215
        %v2217 = vpop.f32.mrb[0].mxu0
        %v2218 = vpop.f32.mrb[0].mxu0
        %v2219 = vadd.f32 %v1930, %v2218
        %v2220 = vpop.f32.mrb[0].mxu0
        %2221 = vmatprep.mubr.bf16.mxu0 %v1347
        %2222 = vmatmul.mubr.bf16.gmra.mrb[0].mxu0 %v1346
        %v2223 = vpop.f32.mrb[0].mxu0
        %v2224 = vadd.f32 %v1935, %v2223
        %v2225 = vpop.f32.mrb[0].mxu0
        %v2226 = vpop.f32.mrb[0].mxu0
        %v2227 = vadd.f32 %v1938, %v2226
        %v2228 = vpop.f32.mrb[0].mxu0
        %2229 = vmatprep.mubr.bf16.mxu0 %v1351
        %2230 = vmatmul.mubr.bf16.gmra.mrb[0].mxu0 %v1350
        %v2231 = vpop.f32.mrb[0].mxu0
        %v2232 = vadd.f32 %v1943, %v2231
        %v2233 = vpop.f32.mrb[0].mxu0
        %v2234 = vpop.f32.mrb[0].mxu0
        %v2235 = vadd.f32 %v1946, %v2234
        %v2236 = vpop.f32.mrb[0].mxu0
        %2237 = vmatprep.mubr.bf16.mxu0 %v1355
        %2238 = vmatmul.mubr.bf16.gmra.mrb[0].mxu0 %v1354
        %v2239 = vpop.f32.mrb[0].mxu0
        %v2240 = vadd.f32 %v1951, %v2239
        %v2241 = vpop.f32.mrb[0].mxu0
        %v2242 = vpop.f32.mrb[0].mxu0
        %v2243 = vadd.f32 %v1954, %v2242
        %v2244 = vpop.f32.mrb[0].mxu0
        %2245 = vmatprep.mubr.bf16.mxu0 %v1359
        %2246 = vmatmul.mubr.bf16.gmra.mrb[0].mxu0 %v1358
        %v2247 = vpop.f32.mrb[0].mxu0
        %v2248 = vadd.f32 %v1959, %v2247
        %v2249 = vpop.f32.mrb[0].mxu0
        %v2250 = vpop.f32.mrb[0].mxu0
        %v2251 = vadd.f32 %v1962, %v2250
        %v2252 = vpop.f32.mrb[0].mxu0
        %2253 = vmatprep.mubr.bf16.mxu0 %v1363
        %2254 = vmatmul.mubr.bf16.gmra.mrb[0].mxu0 %v1362
        %v2255 = vpop.f32.mrb[0].mxu0
        %v2256 = vadd.f32 %v1967, %v2255
        %v2257 = vpop.f32.mrb[0].mxu0
        %v2258 = vpop.f32.mrb[0].mxu0
        %v2259 = vadd.f32 %v1970, %v2258
        %v2260 = vpop.f32.mrb[0].mxu0
        %2261 = vdwg.mxu0
        %v2262 = vadd.f32 %v596, %v2008
        %v2263 = vadd.f32 %v597, %v2011
        %v2264 = vadd.f32 %v598, %v2016
        %v2265 = vadd.f32 %v599, %v2019
        %v2266 = vadd.f32 %v600, %v2024
        %v2267 = vadd.f32 %v601, %v2027
        %v2268 = vadd.f32 %v602, %v2032
        %v2269 = vadd.f32 %v603, %v2035
        %v2270 = vadd.f32 %v604, %v2040
        %v2271 = vadd.f32 %v605, %v2043
        %v2272 = vadd.f32 %v606, %v2048
        %v2273 = vadd.f32 %v607, %v2051
        %v2274 = vadd.f32 %v608, %v2056
        %v2275 = vadd.f32 %v609, %v2059
        %v2276 = vadd.f32 %v610, %v2064
        %v2277 = vadd.f32 %v611, %v2067
        %v2278 = vadd.f32 %v612, %v2072
        %v2279 = vadd.f32 %v613, %v2075
        %v2280 = vadd.f32 %v614, %v2080
        %v2281 = vadd.f32 %v615, %v2083
        %v2282 = vadd.f32 %v616, %v2088
        %v2283 = vadd.f32 %v617, %v2091
        %v2284 = vadd.f32 %v618, %v2096
        %v2285 = vadd.f32 %v619, %v2099
        %v2286 = vadd.f32 %v620, %v2104
        %v2287 = vadd.f32 %v621, %v2107
        %v2288 = vadd.f32 %v622, %v2112
        %v2289 = vadd.f32 %v623, %v2115
        %v2290 = vadd.f32 %v624, %v2120
        %v2291 = vadd.f32 %v625, %v2123
        %v2292 = vadd.f32 %v626, %v2128
        %v2293 = vadd.f32 %v627, %v2131
        %v2294 = vadd.f32 %v628, %v2136
        %v2295 = vadd.f32 %v629, %v2139
        %v2296 = vadd.f32 %v630, %v2144
        %v2297 = vadd.f32 %v631, %v2147
        %v2298 = vadd.f32 %v632, %v2152
        %v2299 = vadd.f32 %v633, %v2155
        %v2300 = vadd.f32 %v634, %v2160
        %v2301 = vadd.f32 %v635, %v2163
        %v2302 = vadd.f32 %v636, %v2168
        %v2303 = vadd.f32 %v637, %v2171
        %v2304 = vadd.f32 %v638, %v2176
        %v2305 = vadd.f32 %v639, %v2179
        %v2306 = vadd.f32 %v640, %v2184
        %v2307 = vadd.f32 %v641, %v2187
        %v2308 = vadd.f32 %v642, %v2192
        %v2309 = vadd.f32 %v643, %v2195
        %v2310 = vadd.f32 %v644, %v2200
        %v2311 = vadd.f32 %v645, %v2203
        %v2312 = vadd.f32 %v646, %v2208
        %v2313 = vadd.f32 %v647, %v2211
        %v2314 = vadd.f32 %v648, %v2216
        %v2315 = vadd.f32 %v649, %v2219
        %v2316 = vadd.f32 %v650, %v2224
        %v2317 = vadd.f32 %v651, %v2227
        %v2318 = vadd.f32 %v652, %v2232
        %v2319 = vadd.f32 %v653, %v2235
        %v2320 = vadd.f32 %v654, %v2240
        %v2321 = vadd.f32 %v655, %v2243
        %v2322 = vadd.f32 %v656, %v2248
        %v2323 = vadd.f32 %v657, %v2251
        %v2324 = vadd.f32 %v658, %v2256
        %v2325 = vadd.f32 %v659, %v2259
        %2326 = vst [vmem:[#allocation2] sm:$0xff] %v2262
        %2327 = vst [vmem:[#allocation2 + $0x8] sm:$0xff] %v2263
        %2328 = vst [vmem:[#allocation2 + $0x10] sm:$0xff] %v2264
        %2329 = vst [vmem:[#allocation2 + $0x18] sm:$0xff] %v2265
        %2330 = vst [vmem:[#allocation2 + $0x20] sm:$0xff] %v2266
        %2331 = vst [vmem:[#allocation2 + $0x28] sm:$0xff] %v2267
        %2332 = vst [vmem:[#allocation2 + $0x30] sm:$0xff] %v2268
        %2333 = vst [vmem:[#allocation2 + $0x38] sm:$0xff] %v2269
        %2334 = vst [vmem:[#allocation2 + $0x40] sm:$0xff] %v2270
        %2335 = vst [vmem:[#allocation2 + $0x48] sm:$0xff] %v2271
        %2336 = vst [vmem:[#allocation2 + $0x50] sm:$0xff] %v2272
        %2337 = vst [vmem:[#allocation2 + $0x58] sm:$0xff] %v2273
        %2338 = vst [vmem:[#allocation2 + $0x60] sm:$0xff] %v2274
        %2339 = vst [vmem:[#allocation2 + $0x68] sm:$0xff] %v2275
        %2340 = vst [vmem:[#allocation2 + $0x70] sm:$0xff] %v2276
        %2341 = vst [vmem:[#allocation2 + $0x78] sm:$0xff] %v2277
        %2342 = vst [vmem:[#allocation2 + $0x80] sm:$0xff] %v2278
        %2343 = vst [vmem:[#allocation2 + $0x88] sm:$0xff] %v2279
        %2344 = vst [vmem:[#allocation2 + $0x90] sm:$0xff] %v2280
        %2345 = vst [vmem:[#allocation2 + $0x98] sm:$0xff] %v2281
        %2346 = vst [vmem:[#allocation2 + $0xa0] sm:$0xff] %v2282
        %2347 = vst [vmem:[#allocation2 + $0xa8] sm:$0xff] %v2283
        %2348 = vst [vmem:[#allocation2 + $0xb0] sm:$0xff] %v2284
        %2349 = vst [vmem:[#allocation2 + $0xb8] sm:$0xff] %v2285
        %2350 = vst [vmem:[#allocation2 + $0xc0] sm:$0xff] %v2286
        %2351 = vst [vmem:[#allocation2 + $0xc8] sm:$0xff] %v2287
        %2352 = vst [vmem:[#allocation2 + $0xd0] sm:$0xff] %v2288
        %2353 = vst [vmem:[#allocation2 + $0xd8] sm:$0xff] %v2289
        %2354 = vst [vmem:[#allocation2 + $0xe0] sm:$0xff] %v2290
        %2355 = vst [vmem:[#allocation2 + $0xe8] sm:$0xff] %v2291
        %2356 = vst [vmem:[#allocation2 + $0xf0] sm:$0xff] %v2292
        %2357 = vst [vmem:[#allocation2 + $0xf8] sm:$0xff] %v2293
        %2358 = vst [vmem:[#allocation2 + $0x100] sm:$0xff] %v2294
        %2359 = vst [vmem:[#allocation2 + $0x108] sm:$0xff] %v2295
        %2360 = vst [vmem:[#allocation2 + $0x110] sm:$0xff] %v2296
        %2361 = vst [vmem:[#allocation2 + $0x118] sm:$0xff] %v2297
        %2362 = vst [vmem:[#allocation2 + $0x120] sm:$0xff] %v2298
        %2363 = vst [vmem:[#allocation2 + $0x128] sm:$0xff] %v2299
        %2364 = vst [vmem:[#allocation2 + $0x130] sm:$0xff] %v2300
        %2365 = vst [vmem:[#allocation2 + $0x138] sm:$0xff] %v2301
        %2366 = vst [vmem:[#allocation2 + $0x140] sm:$0xff] %v2302
        %2367 = vst [vmem:[#allocation2 + $0x148] sm:$0xff] %v2303
        %2368 = vst [vmem:[#allocation2 + $0x150] sm:$0xff] %v2304
        %2369 = vst [vmem:[#allocation2 + $0x158] sm:$0xff] %v2305
        %2370 = vst [vmem:[#allocation2 + $0x160] sm:$0xff] %v2306
        %2371 = vst [vmem:[#allocation2 + $0x168] sm:$0xff] %v2307
        %2372 = vst [vmem:[#allocation2 + $0x170] sm:$0xff] %v2308
        %2373 = vst [vmem:[#allocation2 + $0x178] sm:$0xff] %v2309
        %2374 = vst [vmem:[#allocation2 + $0x180] sm:$0xff] %v2310
        %2375 = vst [vmem:[#allocation2 + $0x188] sm:$0xff] %v2311
        %2376 = vst [vmem:[#allocation2 + $0x190] sm:$0xff] %v2312
        %2377 = vst [vmem:[#allocation2 + $0x198] sm:$0xff] %v2313
        %2378 = vst [vmem:[#allocation2 + $0x1a0] sm:$0xff] %v2314
        %2379 = vst [vmem:[#allocation2 + $0x1a8] sm:$0xff] %v2315
        %2380 = vst [vmem:[#allocation2 + $0x1b0] sm:$0xff] %v2316
        %2381 = vst [vmem:[#allocation2 + $0x1b8] sm:$0xff] %v2317
        %2382 = vst [vmem:[#allocation2 + $0x1c0] sm:$0xff] %v2318
        %2383 = vst [vmem:[#allocation2 + $0x1c8] sm:$0xff] %v2319
        %2384 = vst [vmem:[#allocation2 + $0x1d0] sm:$0xff] %v2320
        %2385 = vst [vmem:[#allocation2 + $0x1d8] sm:$0xff] %v2321
        %2386 = vst [vmem:[#allocation2 + $0x1e0] sm:$0xff] %v2322
        %2387 = vst [vmem:[#allocation2 + $0x1e8] sm:$0xff] %v2323
        %2388 = vst [vmem:[#allocation2 + $0x1f0] sm:$0xff] %v2324
        %2389 = vst [vmem:[#allocation2 + $0x1f8] sm:$0xff] %v2325
        %p2390 = scmp.eq.s32.totalorder %s21, 1
        // Predicated region
        $region60: #{decoder_forward.46} parent=50 // pred_check
          %p2391 = pneg %p2390
        $region61: #{decoder_forward.46} parent=50 // pred_check_branch
          %2393 = sbr.rel (%p2391) target = $region63
        $region62: #{decoder_forward.46} parent=50 // pred_region
          %v2394 = vld [vmem:[#allocation2] sm:$0xff]
          %v2395 = vld [vmem:[#allocation2 + $0x8] sm:$0xff]
          %v2396 = vld [vmem:[#allocation2 + $0x10] sm:$0xff]
          %v2397 = vld [vmem:[#allocation2 + $0x18] sm:$0xff]
          %v2398 = vld [vmem:[#allocation2 + $0x20] sm:$0xff]
          %v2399 = vld [vmem:[#allocation2 + $0x28] sm:$0xff]
          %v2400 = vld [vmem:[#allocation2 + $0x30] sm:$0xff]
          %v2401 = vld [vmem:[#allocation2 + $0x38] sm:$0xff]
          %v2402 = vld [vmem:[#allocation2 + $0x40] sm:$0xff]
          %v2403 = vld [vmem:[#allocation2 + $0x48] sm:$0xff]
          %v2404 = vld [vmem:[#allocation2 + $0x50] sm:$0xff]
          %v2405 = vld [vmem:[#allocation2 + $0x58] sm:$0xff]
          %v2406 = vld [vmem:[#allocation2 + $0x60] sm:$0xff]
          %v2407 = vld [vmem:[#allocation2 + $0x68] sm:$0xff]
          %v2408 = vld [vmem:[#allocation2 + $0x70] sm:$0xff]
          %v2409 = vld [vmem:[#allocation2 + $0x78] sm:$0xff]
          %v2410 = vld [vmem:[#allocation2 + $0x80] sm:$0xff]
          %v2411 = vld [vmem:[#allocation2 + $0x88] sm:$0xff]
          %v2412 = vld [vmem:[#allocation2 + $0x90] sm:$0xff]
          %v2413 = vld [vmem:[#allocation2 + $0x98] sm:$0xff]
          %v2414 = vld [vmem:[#allocation2 + $0xa0] sm:$0xff]
          %v2415 = vld [vmem:[#allocation2 + $0xa8] sm:$0xff]
          %v2416 = vld [vmem:[#allocation2 + $0xb0] sm:$0xff]
          %v2417 = vld [vmem:[#allocation2 + $0xb8] sm:$0xff]
          %v2418 = vld [vmem:[#allocation2 + $0xc0] sm:$0xff]
          %v2419 = vld [vmem:[#allocation2 + $0xc8] sm:$0xff]
          %v2420 = vld [vmem:[#allocation2 + $0xd0] sm:$0xff]
          %v2421 = vld [vmem:[#allocation2 + $0xd8] sm:$0xff]
          %v2422 = vld [vmem:[#allocation2 + $0xe0] sm:$0xff]
          %v2423 = vld [vmem:[#allocation2 + $0xe8] sm:$0xff]
          %v2424 = vld [vmem:[#allocation2 + $0xf0] sm:$0xff]
          %v2425 = vld [vmem:[#allocation2 + $0xf8] sm:$0xff]
          %v2426 = vld [vmem:[#allocation2 + $0x100] sm:$0xff]
          %v2427 = vld [vmem:[#allocation2 + $0x108] sm:$0xff]
          %v2428 = vld [vmem:[#allocation2 + $0x110] sm:$0xff]
          %v2429 = vld [vmem:[#allocation2 + $0x118] sm:$0xff]
          %v2430 = vld [vmem:[#allocation2 + $0x120] sm:$0xff]
          %v2431 = vld [vmem:[#allocation2 + $0x128] sm:$0xff]
          %v2432 = vld [vmem:[#allocation2 + $0x130] sm:$0xff]
          %v2433 = vld [vmem:[#allocation2 + $0x138] sm:$0xff]
          %v2434 = vld [vmem:[#allocation2 + $0x140] sm:$0xff]
          %v2435 = vld [vmem:[#allocation2 + $0x148] sm:$0xff]
          %v2436 = vld [vmem:[#allocation2 + $0x150] sm:$0xff]
          %v2437 = vld [vmem:[#allocation2 + $0x158] sm:$0xff]
          %v2438 = vld [vmem:[#allocation2 + $0x160] sm:$0xff]
          %v2439 = vld [vmem:[#allocation2 + $0x168] sm:$0xff]
          %v2440 = vld [vmem:[#allocation2 + $0x170] sm:$0xff]
          %v2441 = vld [vmem:[#allocation2 + $0x178] sm:$0xff]
          %v2442 = vld [vmem:[#allocation2 + $0x180] sm:$0xff]
          %v2443 = vld [vmem:[#allocation2 + $0x188] sm:$0xff]
          %v2444 = vld [vmem:[#allocation2 + $0x190] sm:$0xff]
          %v2445 = vld [vmem:[#allocation2 + $0x198] sm:$0xff]
          %v2446 = vld [vmem:[#allocation2 + $0x1a0] sm:$0xff]
          %v2447 = vld [vmem:[#allocation2 + $0x1a8] sm:$0xff]
          %v2448 = vld [vmem:[#allocation2 + $0x1b0] sm:$0xff]
          %v2449 = vld [vmem:[#allocation2 + $0x1b8] sm:$0xff]
          %v2450 = vld [vmem:[#allocation2 + $0x1c0] sm:$0xff]
          %v2451 = vld [vmem:[#allocation2 + $0x1c8] sm:$0xff]
          %v2452 = vld [vmem:[#allocation2 + $0x1d0] sm:$0xff]
          %v2453 = vld [vmem:[#allocation2 + $0x1d8] sm:$0xff]
          %v2454 = vld [vmem:[#allocation2 + $0x1e0] sm:$0xff]
          %v2455 = vld [vmem:[#allocation2 + $0x1e8] sm:$0xff]
          %v2456 = vld [vmem:[#allocation2 + $0x1f0] sm:$0xff]
          %v2457 = vld [vmem:[#allocation2 + $0x1f8] sm:$0xff]
          %v2458 = vld [vmem:[%s517] sm:$0x1]
          %v2460 = vlaneseq
          %v2461 = vshrl.u32 %v2460, 7
          %v2462 = vsub.s32 0, %v2461
          %v2463 = vrot.slane %v2458, %v2462
          %v2465 = vadd.f32 %v2394, %v2463
          %v2466 = vadd.f32 %v2395, %v2463
          %v2467 = vadd.f32 %v2396, %v2463
          %v2468 = vadd.f32 %v2397, %v2463
          %v2469 = vadd.f32 %v2398, %v2463
          %v2470 = vadd.f32 %v2399, %v2463
          %v2471 = vadd.f32 %v2400, %v2463
          %v2472 = vadd.f32 %v2401, %v2463
          %v2473 = vadd.f32 %v2402, %v2463
          %v2474 = vadd.f32 %v2403, %v2463
          %v2475 = vadd.f32 %v2404, %v2463
          %v2476 = vadd.f32 %v2405, %v2463
          %v2477 = vadd.f32 %v2406, %v2463
          %v2478 = vadd.f32 %v2407, %v2463
          %v2479 = vadd.f32 %v2408, %v2463
          %v2480 = vadd.f32 %v2409, %v2463
          %v2481 = vadd.f32 %v2410, %v2463
          %v2482 = vadd.f32 %v2411, %v2463
          %v2483 = vadd.f32 %v2412, %v2463
          %v2484 = vadd.f32 %v2413, %v2463
          %v2485 = vadd.f32 %v2414, %v2463
          %v2486 = vadd.f32 %v2415, %v2463
          %v2487 = vadd.f32 %v2416, %v2463
          %v2488 = vadd.f32 %v2417, %v2463
          %v2489 = vadd.f32 %v2418, %v2463
          %v2490 = vadd.f32 %v2419, %v2463
          %v2491 = vadd.f32 %v2420, %v2463
          %v2492 = vadd.f32 %v2421, %v2463
          %v2493 = vadd.f32 %v2422, %v2463
          %v2494 = vadd.f32 %v2423, %v2463
          %v2495 = vadd.f32 %v2424, %v2463
          %v2496 = vadd.f32 %v2425, %v2463
          %v2497 = vadd.f32 %v2426, %v2463
          %v2498 = vadd.f32 %v2427, %v2463
          %v2499 = vadd.f32 %v2428, %v2463
          %v2500 = vadd.f32 %v2429, %v2463
          %v2501 = vadd.f32 %v2430, %v2463
          %v2502 = vadd.f32 %v2431, %v2463
          %v2503 = vadd.f32 %v2432, %v2463
          %v2504 = vadd.f32 %v2433, %v2463
          %v2505 = vadd.f32 %v2434, %v2463
          %v2506 = vadd.f32 %v2435, %v2463
          %v2507 = vadd.f32 %v2436, %v2463
          %v2508 = vadd.f32 %v2437, %v2463
          %v2509 = vadd.f32 %v2438, %v2463
          %v2510 = vadd.f32 %v2439, %v2463
          %v2511 = vadd.f32 %v2440, %v2463
          %v2512 = vadd.f32 %v2441, %v2463
          %v2513 = vadd.f32 %v2442, %v2463
          %v2514 = vadd.f32 %v2443, %v2463
          %v2515 = vadd.f32 %v2444, %v2463
          %v2516 = vadd.f32 %v2445, %v2463
          %v2517 = vadd.f32 %v2446, %v2463
          %v2518 = vadd.f32 %v2447, %v2463
          %v2519 = vadd.f32 %v2448, %v2463
          %v2520 = vadd.f32 %v2449, %v2463
          %v2521 = vadd.f32 %v2450, %v2463
          %v2522 = vadd.f32 %v2451, %v2463
          %v2523 = vadd.f32 %v2452, %v2463
          %v2524 = vadd.f32 %v2453, %v2463
          %v2525 = vadd.f32 %v2454, %v2463
          %v2526 = vadd.f32 %v2455, %v2463
          %v2527 = vadd.f32 %v2456, %v2463
          %v2528 = vadd.f32 %v2457, %v2463
          %2529 = vst [vmem:[%s525] sm:$0xff] %v2465
          %2530 = vst [vmem:[%s525 + $0x8] sm:$0xff] %v2466
          %2531 = vst [vmem:[%s525 + $0x10] sm:$0xff] %v2467
          %2532 = vst [vmem:[%s525 + $0x18] sm:$0xff] %v2468
          %2533 = vst [vmem:[%s525 + $0x20] sm:$0xff] %v2469
          %2534 = vst [vmem:[%s525 + $0x28] sm:$0xff] %v2470
          %2535 = vst [vmem:[%s525 + $0x30] sm:$0xff] %v2471
          %2536 = vst [vmem:[%s525 + $0x38] sm:$0xff] %v2472
          %2537 = vst [vmem:[%s525 + $0x40] sm:$0xff] %v2473
          %2538 = vst [vmem:[%s525 + $0x48] sm:$0xff] %v2474
          %2539 = vst [vmem:[%s525 + $0x50] sm:$0xff] %v2475
          %2540 = vst [vmem:[%s525 + $0x58] sm:$0xff] %v2476
          %2541 = vst [vmem:[%s525 + $0x60] sm:$0xff] %v2477
          %2542 = vst [vmem:[%s525 + $0x68] sm:$0xff] %v2478
          %2543 = vst [vmem:[%s525 + $0x70] sm:$0xff] %v2479
          %2544 = vst [vmem:[%s525 + $0x78] sm:$0xff] %v2480
          %2545 = vst [vmem:[%s525 + $0x80] sm:$0xff] %v2481
          %2546 = vst [vmem:[%s525 + $0x88] sm:$0xff] %v2482
          %2547 = vst [vmem:[%s525 + $0x90] sm:$0xff] %v2483
          %2548 = vst [vmem:[%s525 + $0x98] sm:$0xff] %v2484
          %2549 = vst [vmem:[%s525 + $0xa0] sm:$0xff] %v2485
          %2550 = vst [vmem:[%s525 + $0xa8] sm:$0xff] %v2486
          %2551 = vst [vmem:[%s525 + $0xb0] sm:$0xff] %v2487
          %2552 = vst [vmem:[%s525 + $0xb8] sm:$0xff] %v2488
          %2553 = vst [vmem:[%s525 + $0xc0] sm:$0xff] %v2489
          %2554 = vst [vmem:[%s525 + $0xc8] sm:$0xff] %v2490
          %2555 = vst [vmem:[%s525 + $0xd0] sm:$0xff] %v2491
          %2556 = vst [vmem:[%s525 + $0xd8] sm:$0xff] %v2492
          %2557 = vst [vmem:[%s525 + $0xe0] sm:$0xff] %v2493
          %2558 = vst [vmem:[%s525 + $0xe8] sm:$0xff] %v2494
          %2559 = vst [vmem:[%s525 + $0xf0] sm:$0xff] %v2495
          %2560 = vst [vmem:[%s525 + $0xf8] sm:$0xff] %v2496
          %2561 = vst [vmem:[%s525 + $0x100] sm:$0xff] %v2497
          %2562 = vst [vmem:[%s525 + $0x108] sm:$0xff] %v2498
          %2563 = vst [vmem:[%s525 + $0x110] sm:$0xff] %v2499
          %2564 = vst [vmem:[%s525 + $0x118] sm:$0xff] %v2500
          %2565 = vst [vmem:[%s525 + $0x120] sm:$0xff] %v2501
          %2566 = vst [vmem:[%s525 + $0x128] sm:$0xff] %v2502
          %2567 = vst [vmem:[%s525 + $0x130] sm:$0xff] %v2503
          %2568 = vst [vmem:[%s525 + $0x138] sm:$0xff] %v2504
          %2569 = vst [vmem:[%s525 + $0x140] sm:$0xff] %v2505
          %2570 = vst [vmem:[%s525 + $0x148] sm:$0xff] %v2506
          %2571 = vst [vmem:[%s525 + $0x150] sm:$0xff] %v2507
          %2572 = vst [vmem:[%s525 + $0x158] sm:$0xff] %v2508
          %2573 = vst [vmem:[%s525 + $0x160] sm:$0xff] %v2509
          %2574 = vst [vmem:[%s525 + $0x168] sm:$0xff] %v2510
          %2575 = vst [vmem:[%s525 + $0x170] sm:$0xff] %v2511
          %2576 = vst [vmem:[%s525 + $0x178] sm:$0xff] %v2512
          %2577 = vst [vmem:[%s525 + $0x180] sm:$0xff] %v2513
          %2578 = vst [vmem:[%s525 + $0x188] sm:$0xff] %v2514
          %2579 = vst [vmem:[%s525 + $0x190] sm:$0xff] %v2515
          %2580 = vst [vmem:[%s525 + $0x198] sm:$0xff] %v2516
          %2581 = vst [vmem:[%s525 + $0x1a0] sm:$0xff] %v2517
          %2582 = vst [vmem:[%s525 + $0x1a8] sm:$0xff] %v2518
          %2583 = vst [vmem:[%s525 + $0x1b0] sm:$0xff] %v2519
          %2584 = vst [vmem:[%s525 + $0x1b8] sm:$0xff] %v2520
          %2585 = vst [vmem:[%s525 + $0x1c0] sm:$0xff] %v2521
          %2586 = vst [vmem:[%s525 + $0x1c8] sm:$0xff] %v2522
          %2587 = vst [vmem:[%s525 + $0x1d0] sm:$0xff] %v2523
          %2588 = vst [vmem:[%s525 + $0x1d8] sm:$0xff] %v2524
          %2589 = vst [vmem:[%s525 + $0x1e0] sm:$0xff] %v2525
          %2590 = vst [vmem:[%s525 + $0x1e8] sm:$0xff] %v2526
          %2591 = vst [vmem:[%s525 + $0x1f0] sm:$0xff] %v2527
          %2592 = vst [vmem:[%s525 + $0x1f8] sm:$0xff] %v2528
        $region63: #{decoder_forward.46} parent=50 // pred_fallthru
          _
        %s2593 = smul.u32 64, %s19
        %p2594 = scmp.lt.s32.totalorder %s2593, 63
        %s2595 = scalar_select %p2594, %s2593, 63
        %p2596 = scmp.lt.s32.totalorder %s20, 0
        %s2597 = scalar_select %p2596, %s20, 0
        %s2598 = sadd.s32 %s2597, %s2595
        %s2599 = smul.addr %s2598, 8
        %s2600 = scalar_lea.vmem %s3, %s2599
        // Predicated region
        $region64: #{decoder_forward.46} parent=50 // pred_check
          %p2601 = pneg %p135
        $region65: #{decoder_forward.46} parent=50 // pred_check_branch
          %2603 = sbr.rel (%p2601) target = $region67
        $region66: #{decoder_forward.46} parent=50 // pred_region
          %s2604 = smul.u32 64, %s19
        $region67: #{decoder_forward.46} parent=50 // pred_fallthru
          _
        // Predicated region
        $region68: #{decoder_forward.46} parent=50 // pred_check
          %p2605 = pneg %p135
        $region69: #{decoder_forward.46} parent=50 // pred_check_branch
          %2607 = sbr.rel (%p2605) target = $region71
        $region70: #{decoder_forward.46} parent=50 // pred_region
          %s2608 = smul.u32 64, %s19
          %p2609 = scmp.lt.s32.totalorder %s2608, 63
          %s2610 = scalar_select %p2609, %s2608, 63
          %p2611 = scmp.lt.s32.totalorder %s20, 0
          %s2612 = scalar_select %p2611, %s20, 0
          %s2613 = sadd.s32 %s2612, %s2610
          %s2614 = smul.addr %s2613, 8
          %s2615 = scalar_lea.vmem %s3, %s2614
        $region71: #{decoder_forward.46} parent=50 // pred_fallthru
          _
      $region51: #{decoder_forward.46} parent=5 // pred_fallthru
        _
      %p2616 = scmp.le.s32.totalorder 2, %s9
      // Predicated region
      $region72: #{decoder_forward.46} parent=5 // pred_check
        %p2617 = pneg %p2616
      $region73: #{decoder_forward.46} parent=5 // pred_check_branch
        %2619 = sbr.rel (%p2617) target = $region75
      $region74: #{decoder_forward.46} parent=5 // pred_region
        %s2620 = ssub.s32 %s9, 2
      $region75: #{decoder_forward.46} parent=5 // pred_fallthru
        _
    $region6: #{decoder_forward.46} parent=1 // loop_footer
      %s13 = sadd.s32 1, %s9
    $region7: #{decoder_forward.46} parent=1 // loop_footer_branch
      %8 = sbr.rel target = $region3
    $region8: #{decoder_forward.46} parent=1 // loop_exit
      _

// kernel: decoder_forward.47
$region0: #{decoder_forward.47}
  #allocation0 [shape = 'u32[]', space=smem, size = 0x4, offset = 0x4, fixed_abs, tag = 'smem constant byte address 0x4 - core index']
  #allocation1 [shape = 'u32[144,128]{1,0:T(1,128)}', space=vmem, size = 0x12000, scoped, tag = 'internal scratch']
  #allocation2 [shape = 'f32[512,128]{1,0:T(8,128)}', space=vmem, size = 0x40000, scoped, tag = 'scratch operand']
  %s0 = inlined_call_operand.vmem [shape: bf16[512,640], index: 0, kind: input, shape index: {}]
  %s1 = inlined_call_operand.vmem [shape: bf16[640,128], index: 1, kind: input, shape index: {}]
  %s2 = inlined_call_operand.vmem [shape: f32[1,128], index: 2, kind: input, shape index: {}]
  %s3 = inlined_call_operand.vmem [shape: f32[512,128], index: 3, kind: output, shape index: {}]
  %s4 = sld [smem:[#allocation0]]
  $region94: #{decoder_forward.47} parent=0
    _
  %s6 = ssub.s32 1, %s4
  %s7 = scalar_select 0, %s6, %s4
  $region1: #{decoder_forward.47} parent=0
    #allocation3 [shape = 'u8[262144]{0}', space=vmem, size = 0x40000, scoped, tag = 'input window, operand 0']
    loop: start=0, step=1, limit=7
    $region2: #{decoder_forward.47} parent=1 // loop_pre_header
      _
    $region3: #{decoder_forward.47} parent=1 // loop_header
      %s9 = sphi 0, %s13
      %p10 = scmp.ge.s32.totalorder %s9, 7
      %s16 = sphi 0, %s35
      %s17 = sphi 0, %s31
      %s18 = sphi 0, %s27
      %s19 = sphi 0, %s16
      %s20 = sphi 0, %s17
      %s21 = sphi 0, %s18
      %s22 = sphi 0, %s19
      %s23 = sphi 0, %s20
      %s24 = sphi 0, %s21
      %s40 = sphi 0, %s42
      %s43 = sphi 0, %s40
      %s44 = sphi 0, %s43
      %s60 = sphi 0, %s44
      %s68 = sphi 0, %s70
      %s71 = sphi 0, %s68
      %s72 = sphi 0, %s71
      %s88 = sphi 0, %s72
      %s94 = sphi 0, %s96
      %s97 = sphi 0, %s94
      %s98 = sphi 0, %s97
      %s114 = sphi 0, %s98
      %s122 = sphi 0, %s124
      %s125 = sphi 0, %s122
      %s126 = sphi 0, %s125
      %s142 = sphi 0, %s126
    $region4: #{decoder_forward.47} parent=1 // loop_header_branch
      %12 = sbr.rel (%p10) target = $region8
    $region5: #{decoder_forward.47} parent=1 // loop_body
      %s14 = ssub.s32 %s9, 1
      %s15 = ssub.s32 %s9, 2
      %s25 = sadd.s32 1, %s18
      %p26 = scmp.ge.s32.totalorder %s25, 5
      %s27 = scalar_select %p26, 0, %s25
      %s28 = sadd.s32 1, %s17
      %s29 = scalar_select %p26, %s28, %s17
      %p30 = scmp.ge.s32.totalorder %s29, 1
      %s31 = scalar_select %p30, 0, %s29
      %s32 = sadd.s32 1, %s16
      %s33 = scalar_select %p30, %s32, %s16
      %p34 = scmp.ge.s32.totalorder %s33, 1
      %s35 = scalar_select %p34, 0, %s33
      %s36 = ssub.s32 %s16, %s35
      %s37 = ssub.s32 %s18, %s27
      %s38 = sor.u32 %s36, %s37
      %p39 = scmp.eq.s32.totalorder %s38, 0
      %s41 = sadd.s32 %s40, 1
      %s42 = scalar_select %p39, %s40, %s41
      %p45 = pneg %p39
      %p46 = scmp.eq.s32.totalorder %s9, 4
      %p47 = por %p45, %p46
      %p48 = scmp.ne.s32.totalorder %s40, %s43
      %p49 = scmp.eq.s32.totalorder %s9, 0
      %p50 = por %p48, %p49
      %p51 = scmp.ne.s32.totalorder %s40, %s43
      %p52 = scmp.eq.s32.totalorder %s14, 4
      %p53 = por %p51, %p52
      %p54 = scmp.ne.s32.totalorder %s43, %s44
      %p55 = scmp.eq.s32.totalorder %s14, 0
      %p56 = por %p54, %p55
      %p57 = scmp.ne.s32.totalorder %s43, %s44
      %p58 = scmp.eq.s32.totalorder %s15, 4
      %p59 = por %p57, %p58
      %p61 = scmp.ne.s32.totalorder %s44, %s60
      %p62 = scmp.eq.s32.totalorder %s15, 0
      %p63 = por %p61, %p62
      %s64 = ssub.s32 %s18, %s27
      %s65 = ssub.s32 %s17, %s31
      %s66 = sor.u32 %s64, %s65
      %p67 = scmp.eq.s32.totalorder %s66, 0
      %s69 = sadd.s32 %s68, 1
      %s70 = scalar_select %p67, %s68, %s69
      %p73 = pneg %p67
      %p74 = scmp.eq.s32.totalorder %s9, 4
      %p75 = por %p73, %p74
      %p76 = scmp.ne.s32.totalorder %s68, %s71
      %p77 = scmp.eq.s32.totalorder %s9, 0
      %p78 = por %p76, %p77
      %p79 = scmp.ne.s32.totalorder %s68, %s71
      %p80 = scmp.eq.s32.totalorder %s14, 4
      %p81 = por %p79, %p80
      %p82 = scmp.ne.s32.totalorder %s71, %s72
      %p83 = scmp.eq.s32.totalorder %s14, 0
      %p84 = por %p82, %p83
      %p85 = scmp.ne.s32.totalorder %s71, %s72
      %p86 = scmp.eq.s32.totalorder %s15, 4
      %p87 = por %p85, %p86
      %p89 = scmp.ne.s32.totalorder %s72, %s88
      %p90 = scmp.eq.s32.totalorder %s15, 0
      %p91 = por %p89, %p90
      %s92 = ssub.s32 %s17, %s31
      %p93 = scmp.eq.s32.totalorder %s92, 0
      %s95 = sadd.s32 %s94, 1
      %s96 = scalar_select %p93, %s94, %s95
      %p99 = pneg %p93
      %p100 = scmp.eq.s32.totalorder %s9, 4
      %p101 = por %p99, %p100
      %p102 = scmp.ne.s32.totalorder %s94, %s97
      %p103 = scmp.eq.s32.totalorder %s9, 0
      %p104 = por %p102, %p103
      %p105 = scmp.ne.s32.totalorder %s94, %s97
      %p106 = scmp.eq.s32.totalorder %s14, 4
      %p107 = por %p105, %p106
      %p108 = scmp.ne.s32.totalorder %s97, %s98
      %p109 = scmp.eq.s32.totalorder %s14, 0
      %p110 = por %p108, %p109
      %p111 = scmp.ne.s32.totalorder %s97, %s98
      %p112 = scmp.eq.s32.totalorder %s15, 4
      %p113 = por %p111, %p112
      %p115 = scmp.ne.s32.totalorder %s98, %s114
      %p116 = scmp.eq.s32.totalorder %s15, 0
      %p117 = por %p115, %p116
      %s118 = ssub.s32 %s16, %s35
      %s119 = ssub.s32 %s17, %s31
      %s120 = sor.u32 %s118, %s119
      %p121 = scmp.eq.s32.totalorder %s120, 0
      %s123 = sadd.s32 %s122, 1
      %s124 = scalar_select %p121, %s122, %s123
      %p127 = pneg %p121
      %p128 = scmp.eq.s32.totalorder %s9, 4
      %p129 = por %p127, %p128
      %p130 = scmp.ne.s32.totalorder %s122, %s125
      %p131 = scmp.eq.s32.totalorder %s9, 0
      %p132 = por %p130, %p131
      %p133 = scmp.ne.s32.totalorder %s122, %s125
      %p134 = scmp.eq.s32.totalorder %s14, 4
      %p135 = por %p133, %p134
      %p136 = scmp.ne.s32.totalorder %s125, %s126
      %p137 = scmp.eq.s32.totalorder %s14, 0
      %p138 = por %p136, %p137
      %p139 = scmp.ne.s32.totalorder %s125, %s126
      %p140 = scmp.eq.s32.totalorder %s15, 4
      %p141 = por %p139, %p140
      %p143 = scmp.ne.s32.totalorder %s126, %s142
      %p144 = scmp.eq.s32.totalorder %s15, 0
      %p145 = por %p143, %p144
      %p146 = scmp.le.s32.totalorder 1, %s9
      %p147 = scmp.lt.s32.totalorder %s9, 6
      %p148 = pnand %p146, %p147
      %p149 = pneg %p148
      // Predicated region
      $region9: #{decoder_forward.47} parent=5 // pred_check
        _
      $region10: #{decoder_forward.47} parent=5 // pred_check_branch
        %151 = sbr.rel (%p148) target = $region12
      $region11: #{decoder_forward.47} parent=5 // pred_region
        %s152 = ssub.s32 %s9, 1
        // Predicated region
        $region13: #{decoder_forward.47} parent=11 // pred_check
          %p153 = pneg %p110
        $region14: #{decoder_forward.47} parent=11 // pred_check_branch
          %155 = sbr.rel (%p153) target = $region16
        $region15: #{decoder_forward.47} parent=11 // pred_region
          %p156 = scmp.lt.s32.totalorder %s20, 0
          %s157 = scalar_select %p156, %s20, 0
          %s158 = scalar_lea.vmem %s2, %s157
        $region16: #{decoder_forward.47} parent=11 // pred_fallthru
          _
      $region12: #{decoder_forward.47} parent=5 // pred_fallthru
        _
      %p159 = scmp.lt.s32.totalorder %s9, 5
      // Predicated region
      $region17: #{decoder_forward.47} parent=5 // pred_check
        %p160 = pneg %p159
      $region18: #{decoder_forward.47} parent=5 // pred_check_branch
        %162 = sbr.rel (%p160) target = $region20
      $region19: #{decoder_forward.47} parent=5 // pred_region
        // Predicated region
        $region21: #{decoder_forward.47} parent=19 // pred_check
          %p163 = pneg %p50
        $region22: #{decoder_forward.47} parent=19 // pred_check_branch
          %165 = sbr.rel (%p163) target = $region24
        $region23: #{decoder_forward.47} parent=19 // pred_region
          %s166 = sand.u32 %s40, 1
          %s167 = sand.u32 %s40, 1
          %s168 = smul.addr %s167, 256
          %s169 = scalar_lea.vmem [#allocation3], %s168
          %s170 = smul.u32 64, %s16
          %s171 = smul.addr %s170, 5
          %s172 = sadd.s32 %s18, %s171
          %s173 = smul.addr %s172, 4
          %s174 = scalar_lea.vmem %s0, %s173
          // Predicated region
          $region25: #{decoder_forward.47} parent=23 // pred_check
            _
          $region26: #{decoder_forward.47} parent=23 // pred_check_branch
            %176 = sbr.rel (0) target = $region28
          $region27: #{decoder_forward.47} parent=23 // pred_region
            // Predicated region
            $region29: #{decoder_forward.47} parent=27 // pred_check
              _
            $region30: #{decoder_forward.47} parent=27 // pred_check_branch
              %178 = sbr.rel target = $region32
            $region31: #{decoder_forward.47} parent=27 // pred_region
              // Predicated region
              $region44: #{decoder_forward.47} parent=31 // pred_check
                _
              $region45: #{decoder_forward.47} parent=31 // pred_check_branch
                %319 = sbr.rel (0) target = $region47
              $region46: #{decoder_forward.47} parent=31 // pred_region
                loop: start=0, step=1, limit=1
                $region48: #{decoder_forward.47} parent=46 // loop_pre_header
                  _
                $region49: #{decoder_forward.47} parent=46 // loop_header
                  %s321 = sphi 0, %s325
                  %p322 = scmp.ge.s32.totalorder %s321, 1
                  %s326 = sphi %s174, %s174
                  %s327 = sphi %s169, %s169
                $region50: #{decoder_forward.47} parent=46 // loop_header_branch
                  %324 = sbr.rel (%p322) target = $region54
                $region51: #{decoder_forward.47} parent=46 // loop_body
                  _
                $region52: #{decoder_forward.47} parent=46 // loop_footer
                  %s325 = sadd.s32 1, %s321
                $region53: #{decoder_forward.47} parent=46 // loop_footer_branch
                  %320 = sbr.rel target = $region49
                $region54: #{decoder_forward.47} parent=46 // loop_exit
                  _
                loop: start=0, step=1, limit=1
                $region55: #{decoder_forward.47} parent=46 // loop_pre_header
                  _
                $region56: #{decoder_forward.47} parent=46 // loop_header
                  %s330 = sphi 0, %s334
                  %p331 = scmp.ge.s32.totalorder %s330, 1
                  %s335 = sphi %s174, %s174
                  %s336 = sphi %s169, %s169
                $region57: #{decoder_forward.47} parent=46 // loop_header_branch
                  %333 = sbr.rel (%p331) target = $region61
                $region58: #{decoder_forward.47} parent=46 // loop_body
                  %v337 = vld [vmem:[%s335] sm:$0xf]
                  %338 = vst [vmem:[%s336] sm:$0xf] %v337
                  %v339 = vld [vmem:[%s335 + $0x14] sm:$0xf]
                  %340 = vst [vmem:[%s336 + $0x4] sm:$0xf] %v339
                  %v341 = vld [vmem:[%s335 + $0x28] sm:$0xf]
                  %342 = vst [vmem:[%s336 + $0x8] sm:$0xf] %v341
                  %v343 = vld [vmem:[%s335 + $0x3c] sm:$0xf]
                  %344 = vst [vmem:[%s336 + $0xc] sm:$0xf] %v343
                  %v345 = vld [vmem:[%s335 + $0x50] sm:$0xf]
                  %346 = vst [vmem:[%s336 + $0x10] sm:$0xf] %v345
                  %v347 = vld [vmem:[%s335 + $0x64] sm:$0xf]
                  %348 = vst [vmem:[%s336 + $0x14] sm:$0xf] %v347
                  %v349 = vld [vmem:[%s335 + $0x78] sm:$0xf]
                  %350 = vst [vmem:[%s336 + $0x18] sm:$0xf] %v349
                  %v351 = vld [vmem:[%s335 + $0x8c] sm:$0xf]
                  %352 = vst [vmem:[%s336 + $0x1c] sm:$0xf] %v351
                  %v353 = vld [vmem:[%s335 + $0xa0] sm:$0xf]
                  %354 = vst [vmem:[%s336 + $0x20] sm:$0xf] %v353
                  %v355 = vld [vmem:[%s335 + $0xb4] sm:$0xf]
                  %356 = vst [vmem:[%s336 + $0x24] sm:$0xf] %v355
                  %v357 = vld [vmem:[%s335 + $0xc8] sm:$0xf]
                  %358 = vst [vmem:[%s336 + $0x28] sm:$0xf] %v357
                  %v359 = vld [vmem:[%s335 + $0xdc] sm:$0xf]
                  %360 = vst [vmem:[%s336 + $0x2c] sm:$0xf] %v359
                  %v361 = vld [vmem:[%s335 + $0xf0] sm:$0xf]
                  %362 = vst [vmem:[%s336 + $0x30] sm:$0xf] %v361
                  %v363 = vld [vmem:[%s335 + $0x104] sm:$0xf]
                  %364 = vst [vmem:[%s336 + $0x34] sm:$0xf] %v363
                  %v365 = vld [vmem:[%s335 + $0x118] sm:$0xf]
                  %366 = vst [vmem:[%s336 + $0x38] sm:$0xf] %v365
                  %v367 = vld [vmem:[%s335 + $0x12c] sm:$0xf]
                  %368 = vst [vmem:[%s336 + $0x3c] sm:$0xf] %v367
                  %v369 = vld [vmem:[%s335 + $0x140] sm:$0xf]
                  %370 = vst [vmem:[%s336 + $0x40] sm:$0xf] %v369
                  %v371 = vld [vmem:[%s335 + $0x154] sm:$0xf]
                  %372 = vst [vmem:[%s336 + $0x44] sm:$0xf] %v371
                  %v373 = vld [vmem:[%s335 + $0x168] sm:$0xf]
                  %374 = vst [vmem:[%s336 + $0x48] sm:$0xf] %v373
                  %v375 = vld [vmem:[%s335 + $0x17c] sm:$0xf]
                  %376 = vst [vmem:[%s336 + $0x4c] sm:$0xf] %v375
                  %v377 = vld [vmem:[%s335 + $0x190] sm:$0xf]
                  %378 = vst [vmem:[%s336 + $0x50] sm:$0xf] %v377
                  %v379 = vld [vmem:[%s335 + $0x1a4] sm:$0xf]
                  %380 = vst [vmem:[%s336 + $0x54] sm:$0xf] %v379
                  %v381 = vld [vmem:[%s335 + $0x1b8] sm:$0xf]
                  %382 = vst [vmem:[%s336 + $0x58] sm:$0xf] %v381
                  %v383 = vld [vmem:[%s335 + $0x1cc] sm:$0xf]
                  %384 = vst [vmem:[%s336 + $0x5c] sm:$0xf] %v383
                  %v385 = vld [vmem:[%s335 + $0x1e0] sm:$0xf]
                  %386 = vst [vmem:[%s336 + $0x60] sm:$0xf] %v385
                  %v387 = vld [vmem:[%s335 + $0x1f4] sm:$0xf]
                  %388 = vst [vmem:[%s336 + $0x64] sm:$0xf] %v387
                  %v389 = vld [vmem:[%s335 + $0x208] sm:$0xf]
                  %390 = vst [vmem:[%s336 + $0x68] sm:$0xf] %v389
                  %v391 = vld [vmem:[%s335 + $0x21c] sm:$0xf]
                  %392 = vst [vmem:[%s336 + $0x6c] sm:$0xf] %v391
                  %v393 = vld [vmem:[%s335 + $0x230] sm:$0xf]
                  %394 = vst [vmem:[%s336 + $0x70] sm:$0xf] %v393
                  %v395 = vld [vmem:[%s335 + $0x244] sm:$0xf]
                  %396 = vst [vmem:[%s336 + $0x74] sm:$0xf] %v395
                  %v397 = vld [vmem:[%s335 + $0x258] sm:$0xf]
                  %398 = vst [vmem:[%s336 + $0x78] sm:$0xf] %v397
                  %v399 = vld [vmem:[%s335 + $0x26c] sm:$0xf]
                  %400 = vst [vmem:[%s336 + $0x7c] sm:$0xf] %v399
                  %v401 = vld [vmem:[%s335 + $0x280] sm:$0xf]
                  %402 = vst [vmem:[%s336 + $0x80] sm:$0xf] %v401
                  %v403 = vld [vmem:[%s335 + $0x294] sm:$0xf]
                  %404 = vst [vmem:[%s336 + $0x84] sm:$0xf] %v403
                  %v405 = vld [vmem:[%s335 + $0x2a8] sm:$0xf]
                  %406 = vst [vmem:[%s336 + $0x88] sm:$0xf] %v405
                  %v407 = vld [vmem:[%s335 + $0x2bc] sm:$0xf]
                  %408 = vst [vmem:[%s336 + $0x8c] sm:$0xf] %v407
                  %v409 = vld [vmem:[%s335 + $0x2d0] sm:$0xf]
                  %410 = vst [vmem:[%s336 + $0x90] sm:$0xf] %v409
                  %v411 = vld [vmem:[%s335 + $0x2e4] sm:$0xf]
                  %412 = vst [vmem:[%s336 + $0x94] sm:$0xf] %v411
                  %v413 = vld [vmem:[%s335 + $0x2f8] sm:$0xf]
                  %414 = vst [vmem:[%s336 + $0x98] sm:$0xf] %v413
                  %v415 = vld [vmem:[%s335 + $0x30c] sm:$0xf]
                  %416 = vst [vmem:[%s336 + $0x9c] sm:$0xf] %v415
                  %v417 = vld [vmem:[%s335 + $0x320] sm:$0xf]
                  %418 = vst [vmem:[%s336 + $0xa0] sm:$0xf] %v417
                  %v419 = vld [vmem:[%s335 + $0x334] sm:$0xf]
                  %420 = vst [vmem:[%s336 + $0xa4] sm:$0xf] %v419
                  %v421 = vld [vmem:[%s335 + $0x348] sm:$0xf]
                  %422 = vst [vmem:[%s336 + $0xa8] sm:$0xf] %v421
                  %v423 = vld [vmem:[%s335 + $0x35c] sm:$0xf]
                  %424 = vst [vmem:[%s336 + $0xac] sm:$0xf] %v423
                  %v425 = vld [vmem:[%s335 + $0x370] sm:$0xf]
                  %426 = vst [vmem:[%s336 + $0xb0] sm:$0xf] %v425
                  %v427 = vld [vmem:[%s335 + $0x384] sm:$0xf]
                  %428 = vst [vmem:[%s336 + $0xb4] sm:$0xf] %v427
                  %v429 = vld [vmem:[%s335 + $0x398] sm:$0xf]
                  %430 = vst [vmem:[%s336 + $0xb8] sm:$0xf] %v429
                  %v431 = vld [vmem:[%s335 + $0x3ac] sm:$0xf]
                  %432 = vst [vmem:[%s336 + $0xbc] sm:$0xf] %v431
                  %v433 = vld [vmem:[%s335 + $0x3c0] sm:$0xf]
                  %434 = vst [vmem:[%s336 + $0xc0] sm:$0xf] %v433
                  %v435 = vld [vmem:[%s335 + $0x3d4] sm:$0xf]
                  %436 = vst [vmem:[%s336 + $0xc4] sm:$0xf] %v435
                  %v437 = vld [vmem:[%s335 + $0x3e8] sm:$0xf]
                  %438 = vst [vmem:[%s336 + $0xc8] sm:$0xf] %v437
                  %v439 = vld [vmem:[%s335 + $0x3fc] sm:$0xf]
                  %440 = vst [vmem:[%s336 + $0xcc] sm:$0xf] %v439
                  %v441 = vld [vmem:[%s335 + $0x410] sm:$0xf]
                  %442 = vst [vmem:[%s336 + $0xd0] sm:$0xf] %v441
                  %v443 = vld [vmem:[%s335 + $0x424] sm:$0xf]
                  %444 = vst [vmem:[%s336 + $0xd4] sm:$0xf] %v443
                  %v445 = vld [vmem:[%s335 + $0x438] sm:$0xf]
                  %446 = vst [vmem:[%s336 + $0xd8] sm:$0xf] %v445
                  %v447 = vld [vmem:[%s335 + $0x44c] sm:$0xf]
                  %448 = vst [vmem:[%s336 + $0xdc] sm:$0xf] %v447
                  %v449 = vld [vmem:[%s335 + $0x460] sm:$0xf]
                  %450 = vst [vmem:[%s336 + $0xe0] sm:$0xf] %v449
                  %v451 = vld [vmem:[%s335 + $0x474] sm:$0xf]
                  %452 = vst [vmem:[%s336 + $0xe4] sm:$0xf] %v451
                  %v453 = vld [vmem:[%s335 + $0x488] sm:$0xf]
                  %454 = vst [vmem:[%s336 + $0xe8] sm:$0xf] %v453
                  %v455 = vld [vmem:[%s335 + $0x49c] sm:$0xf]
                  %456 = vst [vmem:[%s336 + $0xec] sm:$0xf] %v455
                  %v457 = vld [vmem:[%s335 + $0x4b0] sm:$0xf]
                  %458 = vst [vmem:[%s336 + $0xf0] sm:$0xf] %v457
                  %v459 = vld [vmem:[%s335 + $0x4c4] sm:$0xf]
                  %460 = vst [vmem:[%s336 + $0xf4] sm:$0xf] %v459
                  %v461 = vld [vmem:[%s335 + $0x4d8] sm:$0xf]
                  %462 = vst [vmem:[%s336 + $0xf8] sm:$0xf] %v461
                  %v463 = vld [vmem:[%s335 + $0x4ec] sm:$0xf]
                  %464 = vst [vmem:[%s336 + $0xfc] sm:$0xf] %v463
                $region59: #{decoder_forward.47} parent=46 // loop_footer
                  %s334 = sadd.s32 1, %s330
                $region60: #{decoder_forward.47} parent=46 // loop_footer_branch
                  %329 = sbr.rel target = $region56
                $region61: #{decoder_forward.47} parent=46 // loop_exit
                  _
              $region47: #{decoder_forward.47} parent=31 // pred_fallthru
                _
            $region32: #{decoder_forward.47} parent=27 // pred_fallthru
              _
            // Predicated region
            $region33: #{decoder_forward.47} parent=27 // pred_check
              _
            $region34: #{decoder_forward.47} parent=27 // pred_check_branch
              %180 = sbr.rel (0) target = $region36
            $region35: #{decoder_forward.47} parent=27 // pred_region
              loop: start=0, step=1, limit=1
              $region37: #{decoder_forward.47} parent=35 // loop_pre_header
                _
              $region38: #{decoder_forward.47} parent=35 // loop_header
                %s183 = sphi 0, %s187
                %p184 = scmp.ge.s32.totalorder %s183, 1
                %s188 = sphi %s174, %s174
                %s189 = sphi %s169, %s169
              $region39: #{decoder_forward.47} parent=35 // loop_header_branch
                %186 = sbr.rel (%p184) target = $region43
              $region40: #{decoder_forward.47} parent=35 // loop_body
                %v190 = vld [vmem:[%s188] sm:$0xf]
                %191 = vst [vmem:[%s189] sm:$0xf] %v190
                %v192 = vld [vmem:[%s188 + $0x14] sm:$0xf]
                %193 = vst [vmem:[%s189 + $0x4] sm:$0xf] %v192
                %v194 = vld [vmem:[%s188 + $0x28] sm:$0xf]
                %195 = vst [vmem:[%s189 + $0x8] sm:$0xf] %v194
                %v196 = vld [vmem:[%s188 + $0x3c] sm:$0xf]
                %197 = vst [vmem:[%s189 + $0xc] sm:$0xf] %v196
                %v198 = vld [vmem:[%s188 + $0x50] sm:$0xf]
                %199 = vst [vmem:[%s189 + $0x10] sm:$0xf] %v198
                %v200 = vld [vmem:[%s188 + $0x64] sm:$0xf]
                %201 = vst [vmem:[%s189 + $0x14] sm:$0xf] %v200
                %v202 = vld [vmem:[%s188 + $0x78] sm:$0xf]
                %203 = vst [vmem:[%s189 + $0x18] sm:$0xf] %v202
                %v204 = vld [vmem:[%s188 + $0x8c] sm:$0xf]
                %205 = vst [vmem:[%s189 + $0x1c] sm:$0xf] %v204
                %v206 = vld [vmem:[%s188 + $0xa0] sm:$0xf]
                %207 = vst [vmem:[%s189 + $0x20] sm:$0xf] %v206
                %v208 = vld [vmem:[%s188 + $0xb4] sm:$0xf]
                %209 = vst [vmem:[%s189 + $0x24] sm:$0xf] %v208
                %v210 = vld [vmem:[%s188 + $0xc8] sm:$0xf]
                %211 = vst [vmem:[%s189 + $0x28] sm:$0xf] %v210
                %v212 = vld [vmem:[%s188 + $0xdc] sm:$0xf]
                %213 = vst [vmem:[%s189 + $0x2c] sm:$0xf] %v212
                %v214 = vld [vmem:[%s188 + $0xf0] sm:$0xf]
                %215 = vst [vmem:[%s189 + $0x30] sm:$0xf] %v214
                %v216 = vld [vmem:[%s188 + $0x104] sm:$0xf]
                %217 = vst [vmem:[%s189 + $0x34] sm:$0xf] %v216
                %v218 = vld [vmem:[%s188 + $0x118] sm:$0xf]
                %219 = vst [vmem:[%s189 + $0x38] sm:$0xf] %v218
                %v220 = vld [vmem:[%s188 + $0x12c] sm:$0xf]
                %221 = vst [vmem:[%s189 + $0x3c] sm:$0xf] %v220
                %v222 = vld [vmem:[%s188 + $0x140] sm:$0xf]
                %223 = vst [vmem:[%s189 + $0x40] sm:$0xf] %v222
                %v224 = vld [vmem:[%s188 + $0x154] sm:$0xf]
                %225 = vst [vmem:[%s189 + $0x44] sm:$0xf] %v224
                %v226 = vld [vmem:[%s188 + $0x168] sm:$0xf]
                %227 = vst [vmem:[%s189 + $0x48] sm:$0xf] %v226
                %v228 = vld [vmem:[%s188 + $0x17c] sm:$0xf]
                %229 = vst [vmem:[%s189 + $0x4c] sm:$0xf] %v228
                %v230 = vld [vmem:[%s188 + $0x190] sm:$0xf]
                %231 = vst [vmem:[%s189 + $0x50] sm:$0xf] %v230
                %v232 = vld [vmem:[%s188 + $0x1a4] sm:$0xf]
                %233 = vst [vmem:[%s189 + $0x54] sm:$0xf] %v232
                %v234 = vld [vmem:[%s188 + $0x1b8] sm:$0xf]
                %235 = vst [vmem:[%s189 + $0x58] sm:$0xf] %v234
                %v236 = vld [vmem:[%s188 + $0x1cc] sm:$0xf]
                %237 = vst [vmem:[%s189 + $0x5c] sm:$0xf] %v236
                %v238 = vld [vmem:[%s188 + $0x1e0] sm:$0xf]
                %239 = vst [vmem:[%s189 + $0x60] sm:$0xf] %v238
                %v240 = vld [vmem:[%s188 + $0x1f4] sm:$0xf]
                %241 = vst [vmem:[%s189 + $0x64] sm:$0xf] %v240
                %v242 = vld [vmem:[%s188 + $0x208] sm:$0xf]
                %243 = vst [vmem:[%s189 + $0x68] sm:$0xf] %v242
                %v244 = vld [vmem:[%s188 + $0x21c] sm:$0xf]
                %245 = vst [vmem:[%s189 + $0x6c] sm:$0xf] %v244
                %v246 = vld [vmem:[%s188 + $0x230] sm:$0xf]
                %247 = vst [vmem:[%s189 + $0x70] sm:$0xf] %v246
                %v248 = vld [vmem:[%s188 + $0x244] sm:$0xf]
                %249 = vst [vmem:[%s189 + $0x74] sm:$0xf] %v248
                %v250 = vld [vmem:[%s188 + $0x258] sm:$0xf]
                %251 = vst [vmem:[%s189 + $0x78] sm:$0xf] %v250
                %v252 = vld [vmem:[%s188 + $0x26c] sm:$0xf]
                %253 = vst [vmem:[%s189 + $0x7c] sm:$0xf] %v252
                %v254 = vld [vmem:[%s188 + $0x280] sm:$0xf]
                %255 = vst [vmem:[%s189 + $0x80] sm:$0xf] %v254
                %v256 = vld [vmem:[%s188 + $0x294] sm:$0xf]
                %257 = vst [vmem:[%s189 + $0x84] sm:$0xf] %v256
                %v258 = vld [vmem:[%s188 + $0x2a8] sm:$0xf]
                %259 = vst [vmem:[%s189 + $0x88] sm:$0xf] %v258
                %v260 = vld [vmem:[%s188 + $0x2bc] sm:$0xf]
                %261 = vst [vmem:[%s189 + $0x8c] sm:$0xf] %v260
                %v262 = vld [vmem:[%s188 + $0x2d0] sm:$0xf]
                %263 = vst [vmem:[%s189 + $0x90] sm:$0xf] %v262
                %v264 = vld [vmem:[%s188 + $0x2e4] sm:$0xf]
                %265 = vst [vmem:[%s189 + $0x94] sm:$0xf] %v264
                %v266 = vld [vmem:[%s188 + $0x2f8] sm:$0xf]
                %267 = vst [vmem:[%s189 + $0x98] sm:$0xf] %v266
                %v268 = vld [vmem:[%s188 + $0x30c] sm:$0xf]
                %269 = vst [vmem:[%s189 + $0x9c] sm:$0xf] %v268
                %v270 = vld [vmem:[%s188 + $0x320] sm:$0xf]
                %271 = vst [vmem:[%s189 + $0xa0] sm:$0xf] %v270
                %v272 = vld [vmem:[%s188 + $0x334] sm:$0xf]
                %273 = vst [vmem:[%s189 + $0xa4] sm:$0xf] %v272
                %v274 = vld [vmem:[%s188 + $0x348] sm:$0xf]
                %275 = vst [vmem:[%s189 + $0xa8] sm:$0xf] %v274
                %v276 = vld [vmem:[%s188 + $0x35c] sm:$0xf]
                %277 = vst [vmem:[%s189 + $0xac] sm:$0xf] %v276
                %v278 = vld [vmem:[%s188 + $0x370] sm:$0xf]
                %279 = vst [vmem:[%s189 + $0xb0] sm:$0xf] %v278
                %v280 = vld [vmem:[%s188 + $0x384] sm:$0xf]
                %281 = vst [vmem:[%s189 + $0xb4] sm:$0xf] %v280
                %v282 = vld [vmem:[%s188 + $0x398] sm:$0xf]
                %283 = vst [vmem:[%s189 + $0xb8] sm:$0xf] %v282
                %v284 = vld [vmem:[%s188 + $0x3ac] sm:$0xf]
                %285 = vst [vmem:[%s189 + $0xbc] sm:$0xf] %v284
                %v286 = vld [vmem:[%s188 + $0x3c0] sm:$0xf]
                %287 = vst [vmem:[%s189 + $0xc0] sm:$0xf] %v286
                %v288 = vld [vmem:[%s188 + $0x3d4] sm:$0xf]
                %289 = vst [vmem:[%s189 + $0xc4] sm:$0xf] %v288
                %v290 = vld [vmem:[%s188 + $0x3e8] sm:$0xf]
                %291 = vst [vmem:[%s189 + $0xc8] sm:$0xf] %v290
                %v292 = vld [vmem:[%s188 + $0x3fc] sm:$0xf]
                %293 = vst [vmem:[%s189 + $0xcc] sm:$0xf] %v292
                %v294 = vld [vmem:[%s188 + $0x410] sm:$0xf]
                %295 = vst [vmem:[%s189 + $0xd0] sm:$0xf] %v294
                %v296 = vld [vmem:[%s188 + $0x424] sm:$0xf]
                %297 = vst [vmem:[%s189 + $0xd4] sm:$0xf] %v296
                %v298 = vld [vmem:[%s188 + $0x438] sm:$0xf]
                %299 = vst [vmem:[%s189 + $0xd8] sm:$0xf] %v298
                %v300 = vld [vmem:[%s188 + $0x44c] sm:$0xf]
                %301 = vst [vmem:[%s189 + $0xdc] sm:$0xf] %v300
                %v302 = vld [vmem:[%s188 + $0x460] sm:$0xf]
                %303 = vst [vmem:[%s189 + $0xe0] sm:$0xf] %v302
                %v304 = vld [vmem:[%s188 + $0x474] sm:$0xf]
                %305 = vst [vmem:[%s189 + $0xe4] sm:$0xf] %v304
                %v306 = vld [vmem:[%s188 + $0x488] sm:$0xf]
                %307 = vst [vmem:[%s189 + $0xe8] sm:$0xf] %v306
                %v308 = vld [vmem:[%s188 + $0x49c] sm:$0xf]
                %309 = vst [vmem:[%s189 + $0xec] sm:$0xf] %v308
                %v310 = vld [vmem:[%s188 + $0x4b0] sm:$0xf]
                %311 = vst [vmem:[%s189 + $0xf0] sm:$0xf] %v310
                %v312 = vld [vmem:[%s188 + $0x4c4] sm:$0xf]
                %313 = vst [vmem:[%s189 + $0xf4] sm:$0xf] %v312
                %v314 = vld [vmem:[%s188 + $0x4d8] sm:$0xf]
                %315 = vst [vmem:[%s189 + $0xf8] sm:$0xf] %v314
                %v316 = vld [vmem:[%s188 + $0x4ec] sm:$0xf]
                %317 = vst [vmem:[%s189 + $0xfc] sm:$0xf] %v316
              $region41: #{decoder_forward.47} parent=35 // loop_footer
                %s187 = sadd.s32 1, %s183
              $region42: #{decoder_forward.47} parent=35 // loop_footer_branch
                %182 = sbr.rel target = $region38
              $region43: #{decoder_forward.47} parent=35 // loop_exit
                _
            $region36: #{decoder_forward.47} parent=27 // pred_fallthru
              _
          $region28: #{decoder_forward.47} parent=23 // pred_fallthru
            _
          %465 = vnop
        $region24: #{decoder_forward.47} parent=19 // pred_fallthru
          _
        // Predicated region
        $region62: #{decoder_forward.47} parent=19 // pred_check
          %p466 = pneg %p78
        $region63: #{decoder_forward.47} parent=19 // pred_check_branch
          %468 = sbr.rel (%p466) target = $region65
        $region64: #{decoder_forward.47} parent=19 // pred_region
          %s469 = smul.u32 16, %s18
          %p470 = scmp.lt.s32.totalorder %s469, 79
          %s471 = scalar_select %p470, %s469, 79
          %p472 = scmp.lt.s32.totalorder %s17, 0
          %s473 = scalar_select %p472, %s17, 0
          %s474 = sadd.s32 %s473, %s471
          %s475 = smul.addr %s474, 4
          %s476 = scalar_lea.vmem %s1, %s475
          %s477 = smul.u32 16, %s18
        $region65: #{decoder_forward.47} parent=19 // pred_fallthru
          _
      $region20: #{decoder_forward.47} parent=5 // pred_fallthru
        _
      %p478 = scmp.le.s32.totalorder 1, %s9
      %p479 = scmp.lt.s32.totalorder %s9, 6
      %p480 = pnand %p478, %p479
      %p481 = pneg %p480
      // Predicated region
      $region66: #{decoder_forward.47} parent=5 // pred_check
        _
      $region67: #{decoder_forward.47} parent=5 // pred_check_branch
        %483 = sbr.rel (%p480) target = $region69
      $region68: #{decoder_forward.47} parent=5 // pred_region
        %s484 = ssub.s32 %s9, 1
        %s485 = sand.u32 %s43, 1
        %s486 = sand.u32 %s43, 1
        %s487 = smul.addr %s486, 256
        %s488 = scalar_lea.vmem [#allocation3], %s487
        // Predicated region
        $region70: #{decoder_forward.47} parent=68 // pred_check
          %p489 = pneg %p56
        $region71: #{decoder_forward.47} parent=68 // pred_check_branch
          %491 = sbr.rel (%p489) target = $region73
        $region72: #{decoder_forward.47} parent=68 // pred_region
          _
        $region73: #{decoder_forward.47} parent=68 // pred_fallthru
          _
        %s492 = sand.u32 %s43, 1
        %s493 = sand.u32 %s43, 1
        %s494 = smul.addr %s493, 256
        %s495 = scalar_lea.vmem [#allocation3], %s494
        %p496 = pneg %p56
        %p497 = pneg %p53
        %s498 = smul.u32 16, %s21
        %p499 = scmp.lt.s32.totalorder %s498, 79
        %s500 = scalar_select %p499, %s498, 79
        %p501 = scmp.lt.s32.totalorder %s20, 0
        %s502 = scalar_select %p501, %s20, 0
        %s503 = sadd.s32 %s502, %s500
        %s504 = smul.addr %s503, 4
        %s505 = scalar_lea.vmem %s1, %s504
        %p506 = pneg %p84
        %p507 = pneg %p81
        %p508 = scmp.lt.s32.totalorder %s20, 0
        %s509 = scalar_select %p508, %s20, 0
        %s510 = scalar_lea.vmem %s2, %s509
        %p511 = pneg %p110
        %p512 = pneg %p107
        %p513 = pneg %p138
        %p514 = pneg %p135
        %s515 = smul.u32 64, %s19
        %p516 = scmp.lt.s32.totalorder %s515, 63
        %s517 = scalar_select %p516, %s515, 63
        %p518 = scmp.lt.s32.totalorder %s20, 0
        %s519 = scalar_select %p518, %s20, 0
        %s520 = sadd.s32 %s519, %s517
        %s521 = smul.addr %s520, 8
        %s522 = scalar_lea.vmem %s3, %s521
        %s523 = smul.u32 64, %s19
        %s524 = smul.u32 16, %s21
        %p525 = scmp.lt.s32.totalorder %s524, 79
        %s526 = scalar_select %p525, %s524, 79
        %p527 = scmp.lt.s32.totalorder %s20, 0
        %s528 = scalar_select %p527, %s20, 0
        %s529 = sadd.s32 %s528, %s526
        %s530 = smul.addr %s529, 4
        %s531 = scalar_lea.vmem %s1, %s530
        %s532 = smul.u32 16, %s21
        %p533 = scmp.lt.s32.totalorder %s20, 0
        %s534 = scalar_select %p533, %s20, 0
        %s535 = scalar_lea.vmem %s2, %s534
        %s536 = smul.u32 64, %s19
        %p537 = scmp.lt.s32.totalorder %s536, 63
        %s538 = scalar_select %p537, %s536, 63
        %p539 = scmp.lt.s32.totalorder %s20, 0
        %s540 = scalar_select %p539, %s20, 0
        %s541 = sadd.s32 %s540, %s538
        %s542 = smul.addr %s541, 8
        %s543 = scalar_lea.vmem %s3, %s542
        %s544 = smul.u32 64, %s19
        %p546 = scmp.eq.s32.totalorder %s21, 0
        // Predicated region
        $region74: #{decoder_forward.47} parent=68 // pred_check
          %p547 = pneg %p546
        $region75: #{decoder_forward.47} parent=68 // pred_check_branch
          %549 = sbr.rel (%p547) target = $region77
        $region76: #{decoder_forward.47} parent=68 // pred_region
          %550 = vst [vmem:[#allocation2] sm:$0xff] 0.0
          %551 = vst [vmem:[#allocation2 + $0x8] sm:$0xff] 0.0
          %552 = vst [vmem:[#allocation2 + $0x10] sm:$0xff] 0.0
          %553 = vst [vmem:[#allocation2 + $0x18] sm:$0xff] 0.0
          %554 = vst [vmem:[#allocation2 + $0x20] sm:$0xff] 0.0
          %555 = vst [vmem:[#allocation2 + $0x28] sm:$0xff] 0.0
          %556 = vst [vmem:[#allocation2 + $0x30] sm:$0xff] 0.0
          %557 = vst [vmem:[#allocation2 + $0x38] sm:$0xff] 0.0
          %558 = vst [vmem:[#allocation2 + $0x40] sm:$0xff] 0.0
          %559 = vst [vmem:[#allocation2 + $0x48] sm:$0xff] 0.0
          %560 = vst [vmem:[#allocation2 + $0x50] sm:$0xff] 0.0
          %561 = vst [vmem:[#allocation2 + $0x58] sm:$0xff] 0.0
          %562 = vst [vmem:[#allocation2 + $0x60] sm:$0xff] 0.0
          %563 = vst [vmem:[#allocation2 + $0x68] sm:$0xff] 0.0
          %564 = vst [vmem:[#allocation2 + $0x70] sm:$0xff] 0.0
          %565 = vst [vmem:[#allocation2 + $0x78] sm:$0xff] 0.0
          %566 = vst [vmem:[#allocation2 + $0x80] sm:$0xff] 0.0
          %567 = vst [vmem:[#allocation2 + $0x88] sm:$0xff] 0.0
          %568 = vst [vmem:[#allocation2 + $0x90] sm:$0xff] 0.0
          %569 = vst [vmem:[#allocation2 + $0x98] sm:$0xff] 0.0
          %570 = vst [vmem:[#allocation2 + $0xa0] sm:$0xff] 0.0
          %571 = vst [vmem:[#allocation2 + $0xa8] sm:$0xff] 0.0
          %572 = vst [vmem:[#allocation2 + $0xb0] sm:$0xff] 0.0
          %573 = vst [vmem:[#allocation2 + $0xb8] sm:$0xff] 0.0
          %574 = vst [vmem:[#allocation2 + $0xc0] sm:$0xff] 0.0
          %575 = vst [vmem:[#allocation2 + $0xc8] sm:$0xff] 0.0
          %576 = vst [vmem:[#allocation2 + $0xd0] sm:$0xff] 0.0
          %577 = vst [vmem:[#allocation2 + $0xd8] sm:$0xff] 0.0
          %578 = vst [vmem:[#allocation2 + $0xe0] sm:$0xff] 0.0
          %579 = vst [vmem:[#allocation2 + $0xe8] sm:$0xff] 0.0
          %580 = vst [vmem:[#allocation2 + $0xf0] sm:$0xff] 0.0
          %581 = vst [vmem:[#allocation2 + $0xf8] sm:$0xff] 0.0
          %582 = vst [vmem:[#allocation2 + $0x100] sm:$0xff] 0.0
          %583 = vst [vmem:[#allocation2 + $0x108] sm:$0xff] 0.0
          %584 = vst [vmem:[#allocation2 + $0x110] sm:$0xff] 0.0
          %585 = vst [vmem:[#allocation2 + $0x118] sm:$0xff] 0.0
          %586 = vst [vmem:[#allocation2 + $0x120] sm:$0xff] 0.0
          %587 = vst [vmem:[#allocation2 + $0x128] sm:$0xff] 0.0
          %588 = vst [vmem:[#allocation2 + $0x130] sm:$0xff] 0.0
          %589 = vst [vmem:[#allocation2 + $0x138] sm:$0xff] 0.0
          %590 = vst [vmem:[#allocation2 + $0x140] sm:$0xff] 0.0
          %591 = vst [vmem:[#allocation2 + $0x148] sm:$0xff] 0.0
          %592 = vst [vmem:[#allocation2 + $0x150] sm:$0xff] 0.0
          %593 = vst [vmem:[#allocation2 + $0x158] sm:$0xff] 0.0
          %594 = vst [vmem:[#allocation2 + $0x160] sm:$0xff] 0.0
          %595 = vst [vmem:[#allocation2 + $0x168] sm:$0xff] 0.0
          %596 = vst [vmem:[#allocation2 + $0x170] sm:$0xff] 0.0
          %597 = vst [vmem:[#allocation2 + $0x178] sm:$0xff] 0.0
          %598 = vst [vmem:[#allocation2 + $0x180] sm:$0xff] 0.0
          %599 = vst [vmem:[#allocation2 + $0x188] sm:$0xff] 0.0
          %600 = vst [vmem:[#allocation2 + $0x190] sm:$0xff] 0.0
          %601 = vst [vmem:[#allocation2 + $0x198] sm:$0xff] 0.0
          %602 = vst [vmem:[#allocation2 + $0x1a0] sm:$0xff] 0.0
          %603 = vst [vmem:[#allocation2 + $0x1a8] sm:$0xff] 0.0
          %604 = vst [vmem:[#allocation2 + $0x1b0] sm:$0xff] 0.0
          %605 = vst [vmem:[#allocation2 + $0x1b8] sm:$0xff] 0.0
          %606 = vst [vmem:[#allocation2 + $0x1c0] sm:$0xff] 0.0
          %607 = vst [vmem:[#allocation2 + $0x1c8] sm:$0xff] 0.0
          %608 = vst [vmem:[#allocation2 + $0x1d0] sm:$0xff] 0.0
          %609 = vst [vmem:[#allocation2 + $0x1d8] sm:$0xff] 0.0
          %610 = vst [vmem:[#allocation2 + $0x1e0] sm:$0xff] 0.0
          %611 = vst [vmem:[#allocation2 + $0x1e8] sm:$0xff] 0.0
          %612 = vst [vmem:[#allocation2 + $0x1f0] sm:$0xff] 0.0
          %613 = vst [vmem:[#allocation2 + $0x1f8] sm:$0xff] 0.0
        $region77: #{decoder_forward.47} parent=68 // pred_fallthru
          _
        %v614 = vld [vmem:[#allocation2] sm:$0xff]
        %v615 = vld [vmem:[#allocation2 + $0x8] sm:$0xff]
        %v616 = vld [vmem:[#allocation2 + $0x10] sm:$0xff]
        %v617 = vld [vmem:[#allocation2 + $0x18] sm:$0xff]
        %v618 = vld [vmem:[#allocation2 + $0x20] sm:$0xff]
        %v619 = vld [vmem:[#allocation2 + $0x28] sm:$0xff]
        %v620 = vld [vmem:[#allocation2 + $0x30] sm:$0xff]
        %v621 = vld [vmem:[#allocation2 + $0x38] sm:$0xff]
        %v622 = vld [vmem:[#allocation2 + $0x40] sm:$0xff]
        %v623 = vld [vmem:[#allocation2 + $0x48] sm:$0xff]
        %v624 = vld [vmem:[#allocation2 + $0x50] sm:$0xff]
        %v625 = vld [vmem:[#allocation2 + $0x58] sm:$0xff]
        %v626 = vld [vmem:[#allocation2 + $0x60] sm:$0xff]
        %v627 = vld [vmem:[#allocation2 + $0x68] sm:$0xff]
        %v628 = vld [vmem:[#allocation2 + $0x70] sm:$0xff]
        %v629 = vld [vmem:[#allocation2 + $0x78] sm:$0xff]
        %v630 = vld [vmem:[#allocation2 + $0x80] sm:$0xff]
        %v631 = vld [vmem:[#allocation2 + $0x88] sm:$0xff]
        %v632 = vld [vmem:[#allocation2 + $0x90] sm:$0xff]
        %v633 = vld [vmem:[#allocation2 + $0x98] sm:$0xff]
        %v634 = vld [vmem:[#allocation2 + $0xa0] sm:$0xff]
        %v635 = vld [vmem:[#allocation2 + $0xa8] sm:$0xff]
        %v636 = vld [vmem:[#allocation2 + $0xb0] sm:$0xff]
        %v637 = vld [vmem:[#allocation2 + $0xb8] sm:$0xff]
        %v638 = vld [vmem:[#allocation2 + $0xc0] sm:$0xff]
        %v639 = vld [vmem:[#allocation2 + $0xc8] sm:$0xff]
        %v640 = vld [vmem:[#allocation2 + $0xd0] sm:$0xff]
        %v641 = vld [vmem:[#allocation2 + $0xd8] sm:$0xff]
        %v642 = vld [vmem:[#allocation2 + $0xe0] sm:$0xff]
        %v643 = vld [vmem:[#allocation2 + $0xe8] sm:$0xff]
        %v644 = vld [vmem:[#allocation2 + $0xf0] sm:$0xff]
        %v645 = vld [vmem:[#allocation2 + $0xf8] sm:$0xff]
        %v646 = vld [vmem:[#allocation2 + $0x100] sm:$0xff]
        %v647 = vld [vmem:[#allocation2 + $0x108] sm:$0xff]
        %v648 = vld [vmem:[#allocation2 + $0x110] sm:$0xff]
        %v649 = vld [vmem:[#allocation2 + $0x118] sm:$0xff]
        %v650 = vld [vmem:[#allocation2 + $0x120] sm:$0xff]
        %v651 = vld [vmem:[#allocation2 + $0x128] sm:$0xff]
        %v652 = vld [vmem:[#allocation2 + $0x130] sm:$0xff]
        %v653 = vld [vmem:[#allocation2 + $0x138] sm:$0xff]
        %v654 = vld [vmem:[#allocation2 + $0x140] sm:$0xff]
        %v655 = vld [vmem:[#allocation2 + $0x148] sm:$0xff]
        %v656 = vld [vmem:[#allocation2 + $0x150] sm:$0xff]
        %v657 = vld [vmem:[#allocation2 + $0x158] sm:$0xff]
        %v658 = vld [vmem:[#allocation2 + $0x160] sm:$0xff]
        %v659 = vld [vmem:[#allocation2 + $0x168] sm:$0xff]
        %v660 = vld [vmem:[#allocation2 + $0x170] sm:$0xff]
        %v661 = vld [vmem:[#allocation2 + $0x178] sm:$0xff]
        %v662 = vld [vmem:[#allocation2 + $0x180] sm:$0xff]
        %v663 = vld [vmem:[#allocation2 + $0x188] sm:$0xff]
        %v664 = vld [vmem:[#allocation2 + $0x190] sm:$0xff]
        %v665 = vld [vmem:[#allocation2 + $0x198] sm:$0xff]
        %v666 = vld [vmem:[#allocation2 + $0x1a0] sm:$0xff]
        %v667 = vld [vmem:[#allocation2 + $0x1a8] sm:$0xff]
        %v668 = vld [vmem:[#allocation2 + $0x1b0] sm:$0xff]
        %v669 = vld [vmem:[#allocation2 + $0x1b8] sm:$0xff]
        %v670 = vld [vmem:[#allocation2 + $0x1c0] sm:$0xff]
        %v671 = vld [vmem:[#allocation2 + $0x1c8] sm:$0xff]
        %v672 = vld [vmem:[#allocation2 + $0x1d0] sm:$0xff]
        %v673 = vld [vmem:[#allocation2 + $0x1d8] sm:$0xff]
        %v674 = vld [vmem:[#allocation2 + $0x1e0] sm:$0xff]
        %v675 = vld [vmem:[#allocation2 + $0x1e8] sm:$0xff]
        %v676 = vld [vmem:[#allocation2 + $0x1f0] sm:$0xff]
        %v677 = vld [vmem:[#allocation2 + $0x1f8] sm:$0xff]
        %v678 = vld [vmem:[%s488] sm:$0xf]
        %v679 = vld [vmem:[%s488 + $0x4] sm:$0xf]
        %v680 = vld [vmem:[%s488 + $0x8] sm:$0xf]
        %v681 = vld [vmem:[%s488 + $0xc] sm:$0xf]
        %v682 = vld [vmem:[%s488 + $0x10] sm:$0xf]
        %v683 = vld [vmem:[%s488 + $0x14] sm:$0xf]
        %v684 = vld [vmem:[%s488 + $0x18] sm:$0xf]
        %v685 = vld [vmem:[%s488 + $0x1c] sm:$0xf]
        %v686 = vld [vmem:[%s488 + $0x20] sm:$0xf]
        %v687 = vld [vmem:[%s488 + $0x24] sm:$0xf]
        %v688 = vld [vmem:[%s488 + $0x28] sm:$0xf]
        %v689 = vld [vmem:[%s488 + $0x2c] sm:$0xf]
        %v690 = vld [vmem:[%s488 + $0x30] sm:$0xf]
        %v691 = vld [vmem:[%s488 + $0x34] sm:$0xf]
        %v692 = vld [vmem:[%s488 + $0x38] sm:$0xf]
        %v693 = vld [vmem:[%s488 + $0x3c] sm:$0xf]
        %v694 = vld [vmem:[%s488 + $0x40] sm:$0xf]
        %v695 = vld [vmem:[%s488 + $0x44] sm:$0xf]
        %v696 = vld [vmem:[%s488 + $0x48] sm:$0xf]
        %v697 = vld [vmem:[%s488 + $0x4c] sm:$0xf]
        %v698 = vld [vmem:[%s488 + $0x50] sm:$0xf]
        %v699 = vld [vmem:[%s488 + $0x54] sm:$0xf]
        %v700 = vld [vmem:[%s488 + $0x58] sm:$0xf]
        %v701 = vld [vmem:[%s488 + $0x5c] sm:$0xf]
        %v702 = vld [vmem:[%s488 + $0x60] sm:$0xf]
        %v703 = vld [vmem:[%s488 + $0x64] sm:$0xf]
        %v704 = vld [vmem:[%s488 + $0x68] sm:$0xf]
        %v705 = vld [vmem:[%s488 + $0x6c] sm:$0xf]
        %v706 = vld [vmem:[%s488 + $0x70] sm:$0xf]
        %v707 = vld [vmem:[%s488 + $0x74] sm:$0xf]
        %v708 = vld [vmem:[%s488 + $0x78] sm:$0xf]
        %v709 = vld [vmem:[%s488 + $0x7c] sm:$0xf]
        %v710 = vld [vmem:[%s488 + $0x80] sm:$0xf]
        %v711 = vld [vmem:[%s488 + $0x84] sm:$0xf]
        %v712 = vld [vmem:[%s488 + $0x88] sm:$0xf]
        %v713 = vld [vmem:[%s488 + $0x8c] sm:$0xf]
        %v714 = vld [vmem:[%s488 + $0x90] sm:$0xf]
        %v715 = vld [vmem:[%s488 + $0x94] sm:$0xf]
        %v716 = vld [vmem:[%s488 + $0x98] sm:$0xf]
        %v717 = vld [vmem:[%s488 + $0x9c] sm:$0xf]
        %v718 = vld [vmem:[%s488 + $0xa0] sm:$0xf]
        %v719 = vld [vmem:[%s488 + $0xa4] sm:$0xf]
        %v720 = vld [vmem:[%s488 + $0xa8] sm:$0xf]
        %v721 = vld [vmem:[%s488 + $0xac] sm:$0xf]
        %v722 = vld [vmem:[%s488 + $0xb0] sm:$0xf]
        %v723 = vld [vmem:[%s488 + $0xb4] sm:$0xf]
        %v724 = vld [vmem:[%s488 + $0xb8] sm:$0xf]
        %v725 = vld [vmem:[%s488 + $0xbc] sm:$0xf]
        %v726 = vld [vmem:[%s488 + $0xc0] sm:$0xf]
        %v727 = vld [vmem:[%s488 + $0xc4] sm:$0xf]
        %v728 = vld [vmem:[%s488 + $0xc8] sm:$0xf]
        %v729 = vld [vmem:[%s488 + $0xcc] sm:$0xf]
        %v730 = vld [vmem:[%s488 + $0xd0] sm:$0xf]
        %v731 = vld [vmem:[%s488 + $0xd4] sm:$0xf]
        %v732 = vld [vmem:[%s488 + $0xd8] sm:$0xf]
        %v733 = vld [vmem:[%s488 + $0xdc] sm:$0xf]
        %v734 = vld [vmem:[%s488 + $0xe0] sm:$0xf]
        %v735 = vld [vmem:[%s488 + $0xe4] sm:$0xf]
        %v736 = vld [vmem:[%s488 + $0xe8] sm:$0xf]
        %v737 = vld [vmem:[%s488 + $0xec] sm:$0xf]
        %v738 = vld [vmem:[%s488 + $0xf0] sm:$0xf]
        %v739 = vld [vmem:[%s488 + $0xf4] sm:$0xf]
        %v740 = vld [vmem:[%s488 + $0xf8] sm:$0xf]
        %v741 = vld [vmem:[%s488 + $0xfc] sm:$0xf]
        %v742 = vld [vmem:[%s531] sm:$0xf]
        %v743 = vld [vmem:[%s531 + $0x4] sm:$0xf]
        %v744 = vld [vmem:[%s531 + $0x8] sm:$0xf]
        %v745 = vld [vmem:[%s531 + $0xc] sm:$0xf]
        %v746 = vld [vmem:[%s531 + $0x10] sm:$0xf]
        %v747 = vld [vmem:[%s531 + $0x14] sm:$0xf]
        %v748 = vld [vmem:[%s531 + $0x18] sm:$0xf]
        %v749 = vld [vmem:[%s531 + $0x1c] sm:$0xf]
        %v750 = vld [vmem:[%s531 + $0x20] sm:$0xf]
        %v751 = vld [vmem:[%s531 + $0x24] sm:$0xf]
        %v752 = vld [vmem:[%s531 + $0x28] sm:$0xf]
        %v753 = vld [vmem:[%s531 + $0x2c] sm:$0xf]
        %v754 = vld [vmem:[%s531 + $0x30] sm:$0xf]
        %v755 = vld [vmem:[%s531 + $0x34] sm:$0xf]
        %v756 = vld [vmem:[%s531 + $0x38] sm:$0xf]
        %v757 = vld [vmem:[%s531 + $0x3c] sm:$0xf]
        %v822 = vunpack.c.l.b16 %v678
        %v823 = vunpack.c.l.b16 %v679
        %v824 = vunpack.c.l.b16 %v680
        %v825 = vunpack.c.l.b16 %v681
        %v826 = vunpack.c.l.b16 %v682
        %v827 = vunpack.c.l.b16 %v683
        %v828 = vunpack.c.l.b16 %v684
        %v829 = vunpack.c.l.b16 %v685
        %v830 = vunpack.c.l.b16 %v686
        %v831 = vunpack.c.l.b16 %v687
        %v832 = vunpack.c.l.b16 %v688
        %v833 = vunpack.c.l.b16 %v689
        %v834 = vunpack.c.l.b16 %v690
        %v835 = vunpack.c.l.b16 %v691
        %v836 = vunpack.c.l.b16 %v692
        %v837 = vunpack.c.l.b16 %v693
        %v838 = vunpack.c.l.b16 %v694
        %v839 = vunpack.c.l.b16 %v695
        %v840 = vunpack.c.l.b16 %v696
        %v841 = vunpack.c.l.b16 %v697
        %v842 = vunpack.c.l.b16 %v698
        %v843 = vunpack.c.l.b16 %v699
        %v844 = vunpack.c.l.b16 %v700
        %v845 = vunpack.c.l.b16 %v701
        %v846 = vunpack.c.l.b16 %v702
        %v847 = vunpack.c.l.b16 %v703
        %v848 = vunpack.c.l.b16 %v704
        %v849 = vunpack.c.l.b16 %v705
        %v850 = vunpack.c.l.b16 %v706
        %v851 = vunpack.c.l.b16 %v707
        %v852 = vunpack.c.l.b16 %v708
        %v853 = vunpack.c.l.b16 %v709
        %v854 = vunpack.c.l.b16 %v710
        %v855 = vunpack.c.l.b16 %v711
        %v856 = vunpack.c.l.b16 %v712
        %v857 = vunpack.c.l.b16 %v713
        %v858 = vunpack.c.l.b16 %v714
        %v859 = vunpack.c.l.b16 %v715
        %v860 = vunpack.c.l.b16 %v716
        %v861 = vunpack.c.l.b16 %v717
        %v862 = vunpack.c.l.b16 %v718
        %v863 = vunpack.c.l.b16 %v719
        %v864 = vunpack.c.l.b16 %v720
        %v865 = vunpack.c.l.b16 %v721
        %v866 = vunpack.c.l.b16 %v722
        %v867 = vunpack.c.l.b16 %v723
        %v868 = vunpack.c.l.b16 %v724
        %v869 = vunpack.c.l.b16 %v725
        %v870 = vunpack.c.l.b16 %v726
        %v871 = vunpack.c.l.b16 %v727
        %v872 = vunpack.c.l.b16 %v728
        %v873 = vunpack.c.l.b16 %v729
        %v874 = vunpack.c.l.b16 %v730
        %v875 = vunpack.c.l.b16 %v731
        %v876 = vunpack.c.l.b16 %v732
        %v877 = vunpack.c.l.b16 %v733
        %v878 = vunpack.c.l.b16 %v734
        %v879 = vunpack.c.l.b16 %v735
        %v880 = vunpack.c.l.b16 %v736
        %v881 = vunpack.c.l.b16 %v737
        %v882 = vunpack.c.l.b16 %v738
        %v883 = vunpack.c.l.b16 %v739
        %v884 = vunpack.c.l.b16 %v740
        %v885 = vunpack.c.l.b16 %v741
        %v886 = vpack.c.b16 %v823, %v822
        %v887 = vpack.c.b16 %v825, %v824
        %v888 = vpack.c.b16 %v827, %v826
        %v889 = vpack.c.b16 %v829, %v828
        %v890 = vpack.c.b16 %v831, %v830
        %v891 = vpack.c.b16 %v833, %v832
        %v892 = vpack.c.b16 %v835, %v834
        %v893 = vpack.c.b16 %v837, %v836
        %v894 = vpack.c.b16 %v839, %v838
        %v895 = vpack.c.b16 %v841, %v840
        %v896 = vpack.c.b16 %v843, %v842
        %v897 = vpack.c.b16 %v845, %v844
        %v898 = vpack.c.b16 %v847, %v846
        %v899 = vpack.c.b16 %v849, %v848
        %v900 = vpack.c.b16 %v851, %v850
        %v901 = vpack.c.b16 %v853, %v852
        %v902 = vpack.c.b16 %v855, %v854
        %v903 = vpack.c.b16 %v857, %v856
        %v904 = vpack.c.b16 %v859, %v858
        %v905 = vpack.c.b16 %v861, %v860
        %v906 = vpack.c.b16 %v863, %v862
        %v907 = vpack.c.b16 %v865, %v864
        %v908 = vpack.c.b16 %v867, %v866
        %v909 = vpack.c.b16 %v869, %v868
        %v910 = vpack.c.b16 %v871, %v870
        %v911 = vpack.c.b16 %v873, %v872
        %v912 = vpack.c.b16 %v875, %v874
        %v913 = vpack.c.b16 %v877, %v876
        %v914 = vpack.c.b16 %v879, %v878
        %v915 = vpack.c.b16 %v881, %v880
        %v916 = vpack.c.b16 %v883, %v882
        %v917 = vpack.c.b16 %v885, %v884
        %v966 = vunpack.c.l.b16 %v742
        %v967 = vunpack.c.l.b16 %v743
        %v968 = vunpack.c.l.b16 %v744
        %v969 = vunpack.c.l.b16 %v745
        %v970 = vunpack.c.l.b16 %v746
        %v971 = vunpack.c.l.b16 %v747
        %v972 = vunpack.c.l.b16 %v748
        %v973 = vunpack.c.l.b16 %v749
        %v974 = vunpack.c.l.b16 %v750
        %v975 = vunpack.c.l.b16 %v751
        %v976 = vunpack.c.l.b16 %v752
        %v977 = vunpack.c.l.b16 %v753
        %v978 = vunpack.c.l.b16 %v754
        %v979 = vunpack.c.l.b16 %v755
        %v980 = vunpack.c.l.b16 %v756
        %v981 = vunpack.c.l.b16 %v757
        %v982 = vpack.c.b16 %v967, %v966
        %v983 = vpack.c.b16 %v969, %v968
        %v984 = vpack.c.b16 %v971, %v970
        %v985 = vpack.c.b16 %v973, %v972
        %v986 = vpack.c.b16 %v975, %v974
        %v987 = vpack.c.b16 %v977, %v976
        %v988 = vpack.c.b16 %v979, %v978
        %v989 = vpack.c.b16 %v981, %v980
        %998 = vmatprep.subr.bf16.mxu0 0
        %999 = vmatpush1.bf16.msra.mxu0 %v982
        %1000 = vmatprep.subr.bf16.mxu0 0
        %1001 = vmatpush1.bf16.msra.mxu0 %v983
        %1002 = vmatprep.subr.bf16.mxu0 0
        %1003 = vmatpush1.bf16.msra.mxu0 %v984
        %1004 = vmatprep.subr.bf16.mxu0 0
        %1005 = vmatpush1.bf16.msra.mxu0 %v985
        %1006 = vmatprep.subr.bf16.mxu0 0
        %1007 = vmatpush1.bf16.msra.mxu0 %v986
        %1008 = vmatprep.subr.bf16.mxu0 0
        %1009 = vmatpush1.bf16.msra.mxu0 %v987
        %1010 = vmatprep.subr.bf16.mxu0 0
        %1011 = vmatpush1.bf16.msra.mxu0 %v988
        %1012 = vmatprep.subr.bf16.mxu0 0
        %1013 = vmatpush1.bf16.msra.mxu0 %v989
        %1014 = vmatprep.subr.bf16.mxu0 0
        %1015 = vmatpush1.bf16.msra.mxu0 0
        %1016 = vmatprep.subr.bf16.mxu0 0
        %1017 = vmatpush1.bf16.msra.mxu0 0
        %1018 = vmatprep.subr.bf16.mxu0 0
        %1019 = vmatpush1.bf16.msra.mxu0 0
        %1020 = vmatprep.subr.bf16.mxu0 0
        %1021 = vmatpush1.bf16.msra.mxu0 0
        %1022 = vmatprep.subr.bf16.mxu0 0
        %1023 = vmatpush1.bf16.msra.mxu0 0
        %1024 = vmatprep.subr.bf16.mxu0 0
        %1025 = vmatpush1.bf16.msra.mxu0 0
        %1026 = vmatprep.subr.bf16.mxu0 0
        %1027 = vmatpush1.bf16.msra.mxu0 0
        %1028 = vmatprep.subr.bf16.mxu0 0
        %1029 = vmatpush1.bf16.msra.mxu0 0
        %1030 = vmatprep.mubr.bf16.mxu0 0
        %1031 = vmatmul.mubr.bf16.gmra.mrb[0].mxu0 %v886
        %v1032 = vpop.f32.mrb[0].mxu0
        %v1033 = vadd.f32 0.0, %v1032
        %v1034 = vpop.f32.mrb[0].mxu0
        %v1035 = vpop.f32.mrb[0].mxu0
        %v1036 = vadd.f32 0.0, %v1035
        %v1037 = vpop.f32.mrb[0].mxu0
        %1038 = vmatprep.mubr.bf16.mxu0 0
        %1039 = vmatmul.mubr.bf16.gmra.mrb[0].mxu0 %v887
        %v1040 = vpop.f32.mrb[0].mxu0
        %v1041 = vadd.f32 0.0, %v1040
        %v1042 = vpop.f32.mrb[0].mxu0
        %v1043 = vpop.f32.mrb[0].mxu0
        %v1044 = vadd.f32 0.0, %v1043
        %v1045 = vpop.f32.mrb[0].mxu0
        %1046 = vmatprep.mubr.bf16.mxu0 0
        %1047 = vmatmul.mubr.bf16.gmra.mrb[0].mxu0 %v888
        %v1048 = vpop.f32.mrb[0].mxu0
        %v1049 = vadd.f32 0.0, %v1048
        %v1050 = vpop.f32.mrb[0].mxu0
        %v1051 = vpop.f32.mrb[0].mxu0
        %v1052 = vadd.f32 0.0, %v1051
        %v1053 = vpop.f32.mrb[0].mxu0
        %1054 = vmatprep.mubr.bf16.mxu0 0
        %1055 = vmatmul.mubr.bf16.gmra.mrb[0].mxu0 %v889
        %v1056 = vpop.f32.mrb[0].mxu0
        %v1057 = vadd.f32 0.0, %v1056
        %v1058 = vpop.f32.mrb[0].mxu0
        %v1059 = vpop.f32.mrb[0].mxu0
        %v1060 = vadd.f32 0.0, %v1059
        %v1061 = vpop.f32.mrb[0].mxu0
        %1062 = vmatprep.mubr.bf16.mxu0 0
        %1063 = vmatmul.mubr.bf16.gmra.mrb[0].mxu0 %v890
        %v1064 = vpop.f32.mrb[0].mxu0
        %v1065 = vadd.f32 0.0, %v1064
        %v1066 = vpop.f32.mrb[0].mxu0
        %v1067 = vpop.f32.mrb[0].mxu0
        %v1068 = vadd.f32 0.0, %v1067
        %v1069 = vpop.f32.mrb[0].mxu0
        %1070 = vmatprep.mubr.bf16.mxu0 0
        %1071 = vmatmul.mubr.bf16.gmra.mrb[0].mxu0 %v891
        %v1072 = vpop.f32.mrb[0].mxu0
        %v1073 = vadd.f32 0.0, %v1072
        %v1074 = vpop.f32.mrb[0].mxu0
        %v1075 = vpop.f32.mrb[0].mxu0
        %v1076 = vadd.f32 0.0, %v1075
        %v1077 = vpop.f32.mrb[0].mxu0
        %1078 = vmatprep.mubr.bf16.mxu0 0
        %1079 = vmatmul.mubr.bf16.gmra.mrb[0].mxu0 %v892
        %v1080 = vpop.f32.mrb[0].mxu0
        %v1081 = vadd.f32 0.0, %v1080
        %v1082 = vpop.f32.mrb[0].mxu0
        %v1083 = vpop.f32.mrb[0].mxu0
        %v1084 = vadd.f32 0.0, %v1083
        %v1085 = vpop.f32.mrb[0].mxu0
        %1086 = vmatprep.mubr.bf16.mxu0 0
        %1087 = vmatmul.mubr.bf16.gmra.mrb[0].mxu0 %v893
        %v1088 = vpop.f32.mrb[0].mxu0
        %v1089 = vadd.f32 0.0, %v1088
        %v1090 = vpop.f32.mrb[0].mxu0
        %v1091 = vpop.f32.mrb[0].mxu0
        %v1092 = vadd.f32 0.0, %v1091
        %v1093 = vpop.f32.mrb[0].mxu0
        %1094 = vmatprep.mubr.bf16.mxu0 0
        %1095 = vmatmul.mubr.bf16.gmra.mrb[0].mxu0 %v894
        %v1096 = vpop.f32.mrb[0].mxu0
        %v1097 = vadd.f32 0.0, %v1096
        %v1098 = vpop.f32.mrb[0].mxu0
        %v1099 = vpop.f32.mrb[0].mxu0
        %v1100 = vadd.f32 0.0, %v1099
        %v1101 = vpop.f32.mrb[0].mxu0
        %1102 = vmatprep.mubr.bf16.mxu0 0
        %1103 = vmatmul.mubr.bf16.gmra.mrb[0].mxu0 %v895
        %v1104 = vpop.f32.mrb[0].mxu0
        %v1105 = vadd.f32 0.0, %v1104
        %v1106 = vpop.f32.mrb[0].mxu0
        %v1107 = vpop.f32.mrb[0].mxu0
        %v1108 = vadd.f32 0.0, %v1107
        %v1109 = vpop.f32.mrb[0].mxu0
        %1110 = vmatprep.mubr.bf16.mxu0 0
        %1111 = vmatmul.mubr.bf16.gmra.mrb[0].mxu0 %v896
        %v1112 = vpop.f32.mrb[0].mxu0
        %v1113 = vadd.f32 0.0, %v1112
        %v1114 = vpop.f32.mrb[0].mxu0
        %v1115 = vpop.f32.mrb[0].mxu0
        %v1116 = vadd.f32 0.0, %v1115
        %v1117 = vpop.f32.mrb[0].mxu0
        %1118 = vmatprep.mubr.bf16.mxu0 0
        %1119 = vmatmul.mubr.bf16.gmra.mrb[0].mxu0 %v897
        %v1120 = vpop.f32.mrb[0].mxu0
        %v1121 = vadd.f32 0.0, %v1120
        %v1122 = vpop.f32.mrb[0].mxu0
        %v1123 = vpop.f32.mrb[0].mxu0
        %v1124 = vadd.f32 0.0, %v1123
        %v1125 = vpop.f32.mrb[0].mxu0
        %1126 = vmatprep.mubr.bf16.mxu0 0
        %1127 = vmatmul.mubr.bf16.gmra.mrb[0].mxu0 %v898
        %v1128 = vpop.f32.mrb[0].mxu0
        %v1129 = vadd.f32 0.0, %v1128
        %v1130 = vpop.f32.mrb[0].mxu0
        %v1131 = vpop.f32.mrb[0].mxu0
        %v1132 = vadd.f32 0.0, %v1131
        %v1133 = vpop.f32.mrb[0].mxu0
        %1134 = vmatprep.mubr.bf16.mxu0 0
        %1135 = vmatmul.mubr.bf16.gmra.mrb[0].mxu0 %v899
        %v1136 = vpop.f32.mrb[0].mxu0
        %v1137 = vadd.f32 0.0, %v1136
        %v1138 = vpop.f32.mrb[0].mxu0
        %v1139 = vpop.f32.mrb[0].mxu0
        %v1140 = vadd.f32 0.0, %v1139
        %v1141 = vpop.f32.mrb[0].mxu0
        %1142 = vmatprep.mubr.bf16.mxu0 0
        %1143 = vmatmul.mubr.bf16.gmra.mrb[0].mxu0 %v900
        %v1144 = vpop.f32.mrb[0].mxu0
        %v1145 = vadd.f32 0.0, %v1144
        %v1146 = vpop.f32.mrb[0].mxu0
        %v1147 = vpop.f32.mrb[0].mxu0
        %v1148 = vadd.f32 0.0, %v1147
        %v1149 = vpop.f32.mrb[0].mxu0
        %1150 = vmatprep.mubr.bf16.mxu0 0
        %1151 = vmatmul.mubr.bf16.gmra.mrb[0].mxu0 %v901
        %v1152 = vpop.f32.mrb[0].mxu0
        %v1153 = vadd.f32 0.0, %v1152
        %v1154 = vpop.f32.mrb[0].mxu0
        %v1155 = vpop.f32.mrb[0].mxu0
        %v1156 = vadd.f32 0.0, %v1155
        %v1157 = vpop.f32.mrb[0].mxu0
        %1158 = vmatprep.mubr.bf16.mxu0 0
        %1159 = vmatmul.mubr.bf16.gmra.mrb[0].mxu0 %v902
        %v1160 = vpop.f32.mrb[0].mxu0
        %v1161 = vadd.f32 0.0, %v1160
        %v1162 = vpop.f32.mrb[0].mxu0
        %v1163 = vpop.f32.mrb[0].mxu0
        %v1164 = vadd.f32 0.0, %v1163
        %v1165 = vpop.f32.mrb[0].mxu0
        %1166 = vmatprep.mubr.bf16.mxu0 0
        %1167 = vmatmul.mubr.bf16.gmra.mrb[0].mxu0 %v903
        %v1168 = vpop.f32.mrb[0].mxu0
        %v1169 = vadd.f32 0.0, %v1168
        %v1170 = vpop.f32.mrb[0].mxu0
        %v1171 = vpop.f32.mrb[0].mxu0
        %v1172 = vadd.f32 0.0, %v1171
        %v1173 = vpop.f32.mrb[0].mxu0
        %1174 = vmatprep.mubr.bf16.mxu0 0
        %1175 = vmatmul.mubr.bf16.gmra.mrb[0].mxu0 %v904
        %v1176 = vpop.f32.mrb[0].mxu0
        %v1177 = vadd.f32 0.0, %v1176
        %v1178 = vpop.f32.mrb[0].mxu0
        %v1179 = vpop.f32.mrb[0].mxu0
        %v1180 = vadd.f32 0.0, %v1179
        %v1181 = vpop.f32.mrb[0].mxu0
        %1182 = vmatprep.mubr.bf16.mxu0 0
        %1183 = vmatmul.mubr.bf16.gmra.mrb[0].mxu0 %v905
        %v1184 = vpop.f32.mrb[0].mxu0
        %v1185 = vadd.f32 0.0, %v1184
        %v1186 = vpop.f32.mrb[0].mxu0
        %v1187 = vpop.f32.mrb[0].mxu0
        %v1188 = vadd.f32 0.0, %v1187
        %v1189 = vpop.f32.mrb[0].mxu0
        %1190 = vmatprep.mubr.bf16.mxu0 0
        %1191 = vmatmul.mubr.bf16.gmra.mrb[0].mxu0 %v906
        %v1192 = vpop.f32.mrb[0].mxu0
        %v1193 = vadd.f32 0.0, %v1192
        %v1194 = vpop.f32.mrb[0].mxu0
        %v1195 = vpop.f32.mrb[0].mxu0
        %v1196 = vadd.f32 0.0, %v1195
        %v1197 = vpop.f32.mrb[0].mxu0
        %1198 = vmatprep.mubr.bf16.mxu0 0
        %1199 = vmatmul.mubr.bf16.gmra.mrb[0].mxu0 %v907
        %v1200 = vpop.f32.mrb[0].mxu0
        %v1201 = vadd.f32 0.0, %v1200
        %v1202 = vpop.f32.mrb[0].mxu0
        %v1203 = vpop.f32.mrb[0].mxu0
        %v1204 = vadd.f32 0.0, %v1203
        %v1205 = vpop.f32.mrb[0].mxu0
        %1206 = vmatprep.mubr.bf16.mxu0 0
        %1207 = vmatmul.mubr.bf16.gmra.mrb[0].mxu0 %v908
        %v1208 = vpop.f32.mrb[0].mxu0
        %v1209 = vadd.f32 0.0, %v1208
        %v1210 = vpop.f32.mrb[0].mxu0
        %v1211 = vpop.f32.mrb[0].mxu0
        %v1212 = vadd.f32 0.0, %v1211
        %v1213 = vpop.f32.mrb[0].mxu0
        %1214 = vmatprep.mubr.bf16.mxu0 0
        %1215 = vmatmul.mubr.bf16.gmra.mrb[0].mxu0 %v909
        %v1216 = vpop.f32.mrb[0].mxu0
        %v1217 = vadd.f32 0.0, %v1216
        %v1218 = vpop.f32.mrb[0].mxu0
        %v1219 = vpop.f32.mrb[0].mxu0
        %v1220 = vadd.f32 0.0, %v1219
        %v1221 = vpop.f32.mrb[0].mxu0
        %1222 = vmatprep.mubr.bf16.mxu0 0
        %1223 = vmatmul.mubr.bf16.gmra.mrb[0].mxu0 %v910
        %v1224 = vpop.f32.mrb[0].mxu0
        %v1225 = vadd.f32 0.0, %v1224
        %v1226 = vpop.f32.mrb[0].mxu0
        %v1227 = vpop.f32.mrb[0].mxu0
        %v1228 = vadd.f32 0.0, %v1227
        %v1229 = vpop.f32.mrb[0].mxu0
        %1230 = vmatprep.mubr.bf16.mxu0 0
        %1231 = vmatmul.mubr.bf16.gmra.mrb[0].mxu0 %v911
        %v1232 = vpop.f32.mrb[0].mxu0
        %v1233 = vadd.f32 0.0, %v1232
        %v1234 = vpop.f32.mrb[0].mxu0
        %v1235 = vpop.f32.mrb[0].mxu0
        %v1236 = vadd.f32 0.0, %v1235
        %v1237 = vpop.f32.mrb[0].mxu0
        %1238 = vmatprep.mubr.bf16.mxu0 0
        %1239 = vmatmul.mubr.bf16.gmra.mrb[0].mxu0 %v912
        %v1240 = vpop.f32.mrb[0].mxu0
        %v1241 = vadd.f32 0.0, %v1240
        %v1242 = vpop.f32.mrb[0].mxu0
        %v1243 = vpop.f32.mrb[0].mxu0
        %v1244 = vadd.f32 0.0, %v1243
        %v1245 = vpop.f32.mrb[0].mxu0
        %1246 = vmatprep.mubr.bf16.mxu0 0
        %1247 = vmatmul.mubr.bf16.gmra.mrb[0].mxu0 %v913
        %v1248 = vpop.f32.mrb[0].mxu0
        %v1249 = vadd.f32 0.0, %v1248
        %v1250 = vpop.f32.mrb[0].mxu0
        %v1251 = vpop.f32.mrb[0].mxu0
        %v1252 = vadd.f32 0.0, %v1251
        %v1253 = vpop.f32.mrb[0].mxu0
        %1254 = vmatprep.mubr.bf16.mxu0 0
        %1255 = vmatmul.mubr.bf16.gmra.mrb[0].mxu0 %v914
        %v1256 = vpop.f32.mrb[0].mxu0
        %v1257 = vadd.f32 0.0, %v1256
        %v1258 = vpop.f32.mrb[0].mxu0
        %v1259 = vpop.f32.mrb[0].mxu0
        %v1260 = vadd.f32 0.0, %v1259
        %v1261 = vpop.f32.mrb[0].mxu0
        %1262 = vmatprep.mubr.bf16.mxu0 0
        %1263 = vmatmul.mubr.bf16.gmra.mrb[0].mxu0 %v915
        %v1264 = vpop.f32.mrb[0].mxu0
        %v1265 = vadd.f32 0.0, %v1264
        %v1266 = vpop.f32.mrb[0].mxu0
        %v1267 = vpop.f32.mrb[0].mxu0
        %v1268 = vadd.f32 0.0, %v1267
        %v1269 = vpop.f32.mrb[0].mxu0
        %1270 = vmatprep.mubr.bf16.mxu0 0
        %1271 = vmatmul.mubr.bf16.gmra.mrb[0].mxu0 %v916
        %v1272 = vpop.f32.mrb[0].mxu0
        %v1273 = vadd.f32 0.0, %v1272
        %v1274 = vpop.f32.mrb[0].mxu0
        %v1275 = vpop.f32.mrb[0].mxu0
        %v1276 = vadd.f32 0.0, %v1275
        %v1277 = vpop.f32.mrb[0].mxu0
        %1278 = vmatprep.mubr.bf16.mxu0 0
        %1279 = vmatmul.mubr.bf16.gmra.mrb[0].mxu0 %v917
        %v1280 = vpop.f32.mrb[0].mxu0
        %v1281 = vadd.f32 0.0, %v1280
        %v1282 = vpop.f32.mrb[0].mxu0
        %v1283 = vpop.f32.mrb[0].mxu0
        %v1284 = vadd.f32 0.0, %v1283
        %v1285 = vpop.f32.mrb[0].mxu0
        %1286 = vdwg.mxu0
        %v1287 = vadd.f32 %v614, %v1033
        %v1288 = vadd.f32 %v615, %v1036
        %v1289 = vadd.f32 %v616, %v1041
        %v1290 = vadd.f32 %v617, %v1044
        %v1291 = vadd.f32 %v618, %v1049
        %v1292 = vadd.f32 %v619, %v1052
        %v1293 = vadd.f32 %v620, %v1057
        %v1294 = vadd.f32 %v621, %v1060
        %v1295 = vadd.f32 %v622, %v1065
        %v1296 = vadd.f32 %v623, %v1068
        %v1297 = vadd.f32 %v624, %v1073
        %v1298 = vadd.f32 %v625, %v1076
        %v1299 = vadd.f32 %v626, %v1081
        %v1300 = vadd.f32 %v627, %v1084
        %v1301 = vadd.f32 %v628, %v1089
        %v1302 = vadd.f32 %v629, %v1092
        %v1303 = vadd.f32 %v630, %v1097
        %v1304 = vadd.f32 %v631, %v1100
        %v1305 = vadd.f32 %v632, %v1105
        %v1306 = vadd.f32 %v633, %v1108
        %v1307 = vadd.f32 %v634, %v1113
        %v1308 = vadd.f32 %v635, %v1116
        %v1309 = vadd.f32 %v636, %v1121
        %v1310 = vadd.f32 %v637, %v1124
        %v1311 = vadd.f32 %v638, %v1129
        %v1312 = vadd.f32 %v639, %v1132
        %v1313 = vadd.f32 %v640, %v1137
        %v1314 = vadd.f32 %v641, %v1140
        %v1315 = vadd.f32 %v642, %v1145
        %v1316 = vadd.f32 %v643, %v1148
        %v1317 = vadd.f32 %v644, %v1153
        %v1318 = vadd.f32 %v645, %v1156
        %v1319 = vadd.f32 %v646, %v1161
        %v1320 = vadd.f32 %v647, %v1164
        %v1321 = vadd.f32 %v648, %v1169
        %v1322 = vadd.f32 %v649, %v1172
        %v1323 = vadd.f32 %v650, %v1177
        %v1324 = vadd.f32 %v651, %v1180
        %v1325 = vadd.f32 %v652, %v1185
        %v1326 = vadd.f32 %v653, %v1188
        %v1327 = vadd.f32 %v654, %v1193
        %v1328 = vadd.f32 %v655, %v1196
        %v1329 = vadd.f32 %v656, %v1201
        %v1330 = vadd.f32 %v657, %v1204
        %v1331 = vadd.f32 %v658, %v1209
        %v1332 = vadd.f32 %v659, %v1212
        %v1333 = vadd.f32 %v660, %v1217
        %v1334 = vadd.f32 %v661, %v1220
        %v1335 = vadd.f32 %v662, %v1225
        %v1336 = vadd.f32 %v663, %v1228
        %v1337 = vadd.f32 %v664, %v1233
        %v1338 = vadd.f32 %v665, %v1236
        %v1339 = vadd.f32 %v666, %v1241
        %v1340 = vadd.f32 %v667, %v1244
        %v1341 = vadd.f32 %v668, %v1249
        %v1342 = vadd.f32 %v669, %v1252
        %v1343 = vadd.f32 %v670, %v1257
        %v1344 = vadd.f32 %v671, %v1260
        %v1345 = vadd.f32 %v672, %v1265
        %v1346 = vadd.f32 %v673, %v1268
        %v1347 = vadd.f32 %v674, %v1273
        %v1348 = vadd.f32 %v675, %v1276
        %v1349 = vadd.f32 %v676, %v1281
        %v1350 = vadd.f32 %v677, %v1284
        %1351 = vst [vmem:[#allocation2] sm:$0xff] %v1287
        %1352 = vst [vmem:[#allocation2 + $0x8] sm:$0xff] %v1288
        %1353 = vst [vmem:[#allocation2 + $0x10] sm:$0xff] %v1289
        %1354 = vst [vmem:[#allocation2 + $0x18] sm:$0xff] %v1290
        %1355 = vst [vmem:[#allocation2 + $0x20] sm:$0xff] %v1291
        %1356 = vst [vmem:[#allocation2 + $0x28] sm:$0xff] %v1292
        %1357 = vst [vmem:[#allocation2 + $0x30] sm:$0xff] %v1293
        %1358 = vst [vmem:[#allocation2 + $0x38] sm:$0xff] %v1294
        %1359 = vst [vmem:[#allocation2 + $0x40] sm:$0xff] %v1295
        %1360 = vst [vmem:[#allocation2 + $0x48] sm:$0xff] %v1296
        %1361 = vst [vmem:[#allocation2 + $0x50] sm:$0xff] %v1297
        %1362 = vst [vmem:[#allocation2 + $0x58] sm:$0xff] %v1298
        %1363 = vst [vmem:[#allocation2 + $0x60] sm:$0xff] %v1299
        %1364 = vst [vmem:[#allocation2 + $0x68] sm:$0xff] %v1300
        %1365 = vst [vmem:[#allocation2 + $0x70] sm:$0xff] %v1301
        %1366 = vst [vmem:[#allocation2 + $0x78] sm:$0xff] %v1302
        %1367 = vst [vmem:[#allocation2 + $0x80] sm:$0xff] %v1303
        %1368 = vst [vmem:[#allocation2 + $0x88] sm:$0xff] %v1304
        %1369 = vst [vmem:[#allocation2 + $0x90] sm:$0xff] %v1305
        %1370 = vst [vmem:[#allocation2 + $0x98] sm:$0xff] %v1306
        %1371 = vst [vmem:[#allocation2 + $0xa0] sm:$0xff] %v1307
        %1372 = vst [vmem:[#allocation2 + $0xa8] sm:$0xff] %v1308
        %1373 = vst [vmem:[#allocation2 + $0xb0] sm:$0xff] %v1309
        %1374 = vst [vmem:[#allocation2 + $0xb8] sm:$0xff] %v1310
        %1375 = vst [vmem:[#allocation2 + $0xc0] sm:$0xff] %v1311
        %1376 = vst [vmem:[#allocation2 + $0xc8] sm:$0xff] %v1312
        %1377 = vst [vmem:[#allocation2 + $0xd0] sm:$0xff] %v1313
        %1378 = vst [vmem:[#allocation2 + $0xd8] sm:$0xff] %v1314
        %1379 = vst [vmem:[#allocation2 + $0xe0] sm:$0xff] %v1315
        %1380 = vst [vmem:[#allocation2 + $0xe8] sm:$0xff] %v1316
        %1381 = vst [vmem:[#allocation2 + $0xf0] sm:$0xff] %v1317
        %1382 = vst [vmem:[#allocation2 + $0xf8] sm:$0xff] %v1318
        %1383 = vst [vmem:[#allocation2 + $0x100] sm:$0xff] %v1319
        %1384 = vst [vmem:[#allocation2 + $0x108] sm:$0xff] %v1320
        %1385 = vst [vmem:[#allocation2 + $0x110] sm:$0xff] %v1321
        %1386 = vst [vmem:[#allocation2 + $0x118] sm:$0xff] %v1322
        %1387 = vst [vmem:[#allocation2 + $0x120] sm:$0xff] %v1323
        %1388 = vst [vmem:[#allocation2 + $0x128] sm:$0xff] %v1324
        %1389 = vst [vmem:[#allocation2 + $0x130] sm:$0xff] %v1325
        %1390 = vst [vmem:[#allocation2 + $0x138] sm:$0xff] %v1326
        %1391 = vst [vmem:[#allocation2 + $0x140] sm:$0xff] %v1327
        %1392 = vst [vmem:[#allocation2 + $0x148] sm:$0xff] %v1328
        %1393 = vst [vmem:[#allocation2 + $0x150] sm:$0xff] %v1329
        %1394 = vst [vmem:[#allocation2 + $0x158] sm:$0xff] %v1330
        %1395 = vst [vmem:[#allocation2 + $0x160] sm:$0xff] %v1331
        %1396 = vst [vmem:[#allocation2 + $0x168] sm:$0xff] %v1332
        %1397 = vst [vmem:[#allocation2 + $0x170] sm:$0xff] %v1333
        %1398 = vst [vmem:[#allocation2 + $0x178] sm:$0xff] %v1334
        %1399 = vst [vmem:[#allocation2 + $0x180] sm:$0xff] %v1335
        %1400 = vst [vmem:[#allocation2 + $0x188] sm:$0xff] %v1336
        %1401 = vst [vmem:[#allocation2 + $0x190] sm:$0xff] %v1337
        %1402 = vst [vmem:[#allocation2 + $0x198] sm:$0xff] %v1338
        %1403 = vst [vmem:[#allocation2 + $0x1a0] sm:$0xff] %v1339
        %1404 = vst [vmem:[#allocation2 + $0x1a8] sm:$0xff] %v1340
        %1405 = vst [vmem:[#allocation2 + $0x1b0] sm:$0xff] %v1341
        %1406 = vst [vmem:[#allocation2 + $0x1b8] sm:$0xff] %v1342
        %1407 = vst [vmem:[#allocation2 + $0x1c0] sm:$0xff] %v1343
        %1408 = vst [vmem:[#allocation2 + $0x1c8] sm:$0xff] %v1344
        %1409 = vst [vmem:[#allocation2 + $0x1d0] sm:$0xff] %v1345
        %1410 = vst [vmem:[#allocation2 + $0x1d8] sm:$0xff] %v1346
        %1411 = vst [vmem:[#allocation2 + $0x1e0] sm:$0xff] %v1347
        %1412 = vst [vmem:[#allocation2 + $0x1e8] sm:$0xff] %v1348
        %1413 = vst [vmem:[#allocation2 + $0x1f0] sm:$0xff] %v1349
        %1414 = vst [vmem:[#allocation2 + $0x1f8] sm:$0xff] %v1350
        %p1415 = scmp.eq.s32.totalorder %s21, 4
        // Predicated region
        $region78: #{decoder_forward.47} parent=68 // pred_check
          %p1416 = pneg %p1415
        $region79: #{decoder_forward.47} parent=68 // pred_check_branch
          %1418 = sbr.rel (%p1416) target = $region81
        $region80: #{decoder_forward.47} parent=68 // pred_region
          %v1419 = vld [vmem:[#allocation2] sm:$0xff]
          %v1420 = vld [vmem:[#allocation2 + $0x8] sm:$0xff]
          %v1421 = vld [vmem:[#allocation2 + $0x10] sm:$0xff]
          %v1422 = vld [vmem:[#allocation2 + $0x18] sm:$0xff]
          %v1423 = vld [vmem:[#allocation2 + $0x20] sm:$0xff]
          %v1424 = vld [vmem:[#allocation2 + $0x28] sm:$0xff]
          %v1425 = vld [vmem:[#allocation2 + $0x30] sm:$0xff]
          %v1426 = vld [vmem:[#allocation2 + $0x38] sm:$0xff]
          %v1427 = vld [vmem:[#allocation2 + $0x40] sm:$0xff]
          %v1428 = vld [vmem:[#allocation2 + $0x48] sm:$0xff]
          %v1429 = vld [vmem:[#allocation2 + $0x50] sm:$0xff]
          %v1430 = vld [vmem:[#allocation2 + $0x58] sm:$0xff]
          %v1431 = vld [vmem:[#allocation2 + $0x60] sm:$0xff]
          %v1432 = vld [vmem:[#allocation2 + $0x68] sm:$0xff]
          %v1433 = vld [vmem:[#allocation2 + $0x70] sm:$0xff]
          %v1434 = vld [vmem:[#allocation2 + $0x78] sm:$0xff]
          %v1435 = vld [vmem:[#allocation2 + $0x80] sm:$0xff]
          %v1436 = vld [vmem:[#allocation2 + $0x88] sm:$0xff]
          %v1437 = vld [vmem:[#allocation2 + $0x90] sm:$0xff]
          %v1438 = vld [vmem:[#allocation2 + $0x98] sm:$0xff]
          %v1439 = vld [vmem:[#allocation2 + $0xa0] sm:$0xff]
          %v1440 = vld [vmem:[#allocation2 + $0xa8] sm:$0xff]
          %v1441 = vld [vmem:[#allocation2 + $0xb0] sm:$0xff]
          %v1442 = vld [vmem:[#allocation2 + $0xb8] sm:$0xff]
          %v1443 = vld [vmem:[#allocation2 + $0xc0] sm:$0xff]
          %v1444 = vld [vmem:[#allocation2 + $0xc8] sm:$0xff]
          %v1445 = vld [vmem:[#allocation2 + $0xd0] sm:$0xff]
          %v1446 = vld [vmem:[#allocation2 + $0xd8] sm:$0xff]
          %v1447 = vld [vmem:[#allocation2 + $0xe0] sm:$0xff]
          %v1448 = vld [vmem:[#allocation2 + $0xe8] sm:$0xff]
          %v1449 = vld [vmem:[#allocation2 + $0xf0] sm:$0xff]
          %v1450 = vld [vmem:[#allocation2 + $0xf8] sm:$0xff]
          %v1451 = vld [vmem:[#allocation2 + $0x100] sm:$0xff]
          %v1452 = vld [vmem:[#allocation2 + $0x108] sm:$0xff]
          %v1453 = vld [vmem:[#allocation2 + $0x110] sm:$0xff]
          %v1454 = vld [vmem:[#allocation2 + $0x118] sm:$0xff]
          %v1455 = vld [vmem:[#allocation2 + $0x120] sm:$0xff]
          %v1456 = vld [vmem:[#allocation2 + $0x128] sm:$0xff]
          %v1457 = vld [vmem:[#allocation2 + $0x130] sm:$0xff]
          %v1458 = vld [vmem:[#allocation2 + $0x138] sm:$0xff]
          %v1459 = vld [vmem:[#allocation2 + $0x140] sm:$0xff]
          %v1460 = vld [vmem:[#allocation2 + $0x148] sm:$0xff]
          %v1461 = vld [vmem:[#allocation2 + $0x150] sm:$0xff]
          %v1462 = vld [vmem:[#allocation2 + $0x158] sm:$0xff]
          %v1463 = vld [vmem:[#allocation2 + $0x160] sm:$0xff]
          %v1464 = vld [vmem:[#allocation2 + $0x168] sm:$0xff]
          %v1465 = vld [vmem:[#allocation2 + $0x170] sm:$0xff]
          %v1466 = vld [vmem:[#allocation2 + $0x178] sm:$0xff]
          %v1467 = vld [vmem:[#allocation2 + $0x180] sm:$0xff]
          %v1468 = vld [vmem:[#allocation2 + $0x188] sm:$0xff]
          %v1469 = vld [vmem:[#allocation2 + $0x190] sm:$0xff]
          %v1470 = vld [vmem:[#allocation2 + $0x198] sm:$0xff]
          %v1471 = vld [vmem:[#allocation2 + $0x1a0] sm:$0xff]
          %v1472 = vld [vmem:[#allocation2 + $0x1a8] sm:$0xff]
          %v1473 = vld [vmem:[#allocation2 + $0x1b0] sm:$0xff]
          %v1474 = vld [vmem:[#allocation2 + $0x1b8] sm:$0xff]
          %v1475 = vld [vmem:[#allocation2 + $0x1c0] sm:$0xff]
          %v1476 = vld [vmem:[#allocation2 + $0x1c8] sm:$0xff]
          %v1477 = vld [vmem:[#allocation2 + $0x1d0] sm:$0xff]
          %v1478 = vld [vmem:[#allocation2 + $0x1d8] sm:$0xff]
          %v1479 = vld [vmem:[#allocation2 + $0x1e0] sm:$0xff]
          %v1480 = vld [vmem:[#allocation2 + $0x1e8] sm:$0xff]
          %v1481 = vld [vmem:[#allocation2 + $0x1f0] sm:$0xff]
          %v1482 = vld [vmem:[#allocation2 + $0x1f8] sm:$0xff]
          %v1483 = vld [vmem:[%s535] sm:$0x1]
          %v1485 = vlaneseq
          %v1486 = vshrl.u32 %v1485, 7
          %v1487 = vsub.s32 0, %v1486
          %v1488 = vrot.slane %v1483, %v1487
          %v1490 = vadd.f32 %v1419, %v1488
          %v1491 = vadd.f32 %v1420, %v1488
          %v1492 = vadd.f32 %v1421, %v1488
          %v1493 = vadd.f32 %v1422, %v1488
          %v1494 = vadd.f32 %v1423, %v1488
          %v1495 = vadd.f32 %v1424, %v1488
          %v1496 = vadd.f32 %v1425, %v1488
          %v1497 = vadd.f32 %v1426, %v1488
          %v1498 = vadd.f32 %v1427, %v1488
          %v1499 = vadd.f32 %v1428, %v1488
          %v1500 = vadd.f32 %v1429, %v1488
          %v1501 = vadd.f32 %v1430, %v1488
          %v1502 = vadd.f32 %v1431, %v1488
          %v1503 = vadd.f32 %v1432, %v1488
          %v1504 = vadd.f32 %v1433, %v1488
          %v1505 = vadd.f32 %v1434, %v1488
          %v1506 = vadd.f32 %v1435, %v1488
          %v1507 = vadd.f32 %v1436, %v1488
          %v1508 = vadd.f32 %v1437, %v1488
          %v1509 = vadd.f32 %v1438, %v1488
          %v1510 = vadd.f32 %v1439, %v1488
          %v1511 = vadd.f32 %v1440, %v1488
          %v1512 = vadd.f32 %v1441, %v1488
          %v1513 = vadd.f32 %v1442, %v1488
          %v1514 = vadd.f32 %v1443, %v1488
          %v1515 = vadd.f32 %v1444, %v1488
          %v1516 = vadd.f32 %v1445, %v1488
          %v1517 = vadd.f32 %v1446, %v1488
          %v1518 = vadd.f32 %v1447, %v1488
          %v1519 = vadd.f32 %v1448, %v1488
          %v1520 = vadd.f32 %v1449, %v1488
          %v1521 = vadd.f32 %v1450, %v1488
          %v1522 = vadd.f32 %v1451, %v1488
          %v1523 = vadd.f32 %v1452, %v1488
          %v1524 = vadd.f32 %v1453, %v1488
          %v1525 = vadd.f32 %v1454, %v1488
          %v1526 = vadd.f32 %v1455, %v1488
          %v1527 = vadd.f32 %v1456, %v1488
          %v1528 = vadd.f32 %v1457, %v1488
          %v1529 = vadd.f32 %v1458, %v1488
          %v1530 = vadd.f32 %v1459, %v1488
          %v1531 = vadd.f32 %v1460, %v1488
          %v1532 = vadd.f32 %v1461, %v1488
          %v1533 = vadd.f32 %v1462, %v1488
          %v1534 = vadd.f32 %v1463, %v1488
          %v1535 = vadd.f32 %v1464, %v1488
          %v1536 = vadd.f32 %v1465, %v1488
          %v1537 = vadd.f32 %v1466, %v1488
          %v1538 = vadd.f32 %v1467, %v1488
          %v1539 = vadd.f32 %v1468, %v1488
          %v1540 = vadd.f32 %v1469, %v1488
          %v1541 = vadd.f32 %v1470, %v1488
          %v1542 = vadd.f32 %v1471, %v1488
          %v1543 = vadd.f32 %v1472, %v1488
          %v1544 = vadd.f32 %v1473, %v1488
          %v1545 = vadd.f32 %v1474, %v1488
          %v1546 = vadd.f32 %v1475, %v1488
          %v1547 = vadd.f32 %v1476, %v1488
          %v1548 = vadd.f32 %v1477, %v1488
          %v1549 = vadd.f32 %v1478, %v1488
          %v1550 = vadd.f32 %v1479, %v1488
          %v1551 = vadd.f32 %v1480, %v1488
          %v1552 = vadd.f32 %v1481, %v1488
          %v1553 = vadd.f32 %v1482, %v1488
          %1554 = vst [vmem:[%s543] sm:$0xff] %v1490
          %1555 = vst [vmem:[%s543 + $0x8] sm:$0xff] %v1491
          %1556 = vst [vmem:[%s543 + $0x10] sm:$0xff] %v1492
          %1557 = vst [vmem:[%s543 + $0x18] sm:$0xff] %v1493
          %1558 = vst [vmem:[%s543 + $0x20] sm:$0xff] %v1494
          %1559 = vst [vmem:[%s543 + $0x28] sm:$0xff] %v1495
          %1560 = vst [vmem:[%s543 + $0x30] sm:$0xff] %v1496
          %1561 = vst [vmem:[%s543 + $0x38] sm:$0xff] %v1497
          %1562 = vst [vmem:[%s543 + $0x40] sm:$0xff] %v1498
          %1563 = vst [vmem:[%s543 + $0x48] sm:$0xff] %v1499
          %1564 = vst [vmem:[%s543 + $0x50] sm:$0xff] %v1500
          %1565 = vst [vmem:[%s543 + $0x58] sm:$0xff] %v1501
          %1566 = vst [vmem:[%s543 + $0x60] sm:$0xff] %v1502
          %1567 = vst [vmem:[%s543 + $0x68] sm:$0xff] %v1503
          %1568 = vst [vmem:[%s543 + $0x70] sm:$0xff] %v1504
          %1569 = vst [vmem:[%s543 + $0x78] sm:$0xff] %v1505
          %1570 = vst [vmem:[%s543 + $0x80] sm:$0xff] %v1506
          %1571 = vst [vmem:[%s543 + $0x88] sm:$0xff] %v1507
          %1572 = vst [vmem:[%s543 + $0x90] sm:$0xff] %v1508
          %1573 = vst [vmem:[%s543 + $0x98] sm:$0xff] %v1509
          %1574 = vst [vmem:[%s543 + $0xa0] sm:$0xff] %v1510
          %1575 = vst [vmem:[%s543 + $0xa8] sm:$0xff] %v1511
          %1576 = vst [vmem:[%s543 + $0xb0] sm:$0xff] %v1512
          %1577 = vst [vmem:[%s543 + $0xb8] sm:$0xff] %v1513
          %1578 = vst [vmem:[%s543 + $0xc0] sm:$0xff] %v1514
          %1579 = vst [vmem:[%s543 + $0xc8] sm:$0xff] %v1515
          %1580 = vst [vmem:[%s543 + $0xd0] sm:$0xff] %v1516
          %1581 = vst [vmem:[%s543 + $0xd8] sm:$0xff] %v1517
          %1582 = vst [vmem:[%s543 + $0xe0] sm:$0xff] %v1518
          %1583 = vst [vmem:[%s543 + $0xe8] sm:$0xff] %v1519
          %1584 = vst [vmem:[%s543 + $0xf0] sm:$0xff] %v1520
          %1585 = vst [vmem:[%s543 + $0xf8] sm:$0xff] %v1521
          %1586 = vst [vmem:[%s543 + $0x100] sm:$0xff] %v1522
          %1587 = vst [vmem:[%s543 + $0x108] sm:$0xff] %v1523
          %1588 = vst [vmem:[%s543 + $0x110] sm:$0xff] %v1524
          %1589 = vst [vmem:[%s543 + $0x118] sm:$0xff] %v1525
          %1590 = vst [vmem:[%s543 + $0x120] sm:$0xff] %v1526
          %1591 = vst [vmem:[%s543 + $0x128] sm:$0xff] %v1527
          %1592 = vst [vmem:[%s543 + $0x130] sm:$0xff] %v1528
          %1593 = vst [vmem:[%s543 + $0x138] sm:$0xff] %v1529
          %1594 = vst [vmem:[%s543 + $0x140] sm:$0xff] %v1530
          %1595 = vst [vmem:[%s543 + $0x148] sm:$0xff] %v1531
          %1596 = vst [vmem:[%s543 + $0x150] sm:$0xff] %v1532
          %1597 = vst [vmem:[%s543 + $0x158] sm:$0xff] %v1533
          %1598 = vst [vmem:[%s543 + $0x160] sm:$0xff] %v1534
          %1599 = vst [vmem:[%s543 + $0x168] sm:$0xff] %v1535
          %1600 = vst [vmem:[%s543 + $0x170] sm:$0xff] %v1536
          %1601 = vst [vmem:[%s543 + $0x178] sm:$0xff] %v1537
          %1602 = vst [vmem:[%s543 + $0x180] sm:$0xff] %v1538
          %1603 = vst [vmem:[%s543 + $0x188] sm:$0xff] %v1539
          %1604 = vst [vmem:[%s543 + $0x190] sm:$0xff] %v1540
          %1605 = vst [vmem:[%s543 + $0x198] sm:$0xff] %v1541
          %1606 = vst [vmem:[%s543 + $0x1a0] sm:$0xff] %v1542
          %1607 = vst [vmem:[%s543 + $0x1a8] sm:$0xff] %v1543
          %1608 = vst [vmem:[%s543 + $0x1b0] sm:$0xff] %v1544
          %1609 = vst [vmem:[%s543 + $0x1b8] sm:$0xff] %v1545
          %1610 = vst [vmem:[%s543 + $0x1c0] sm:$0xff] %v1546
          %1611 = vst [vmem:[%s543 + $0x1c8] sm:$0xff] %v1547
          %1612 = vst [vmem:[%s543 + $0x1d0] sm:$0xff] %v1548
          %1613 = vst [vmem:[%s543 + $0x1d8] sm:$0xff] %v1549
          %1614 = vst [vmem:[%s543 + $0x1e0] sm:$0xff] %v1550
          %1615 = vst [vmem:[%s543 + $0x1e8] sm:$0xff] %v1551
          %1616 = vst [vmem:[%s543 + $0x1f0] sm:$0xff] %v1552
          %1617 = vst [vmem:[%s543 + $0x1f8] sm:$0xff] %v1553
        $region81: #{decoder_forward.47} parent=68 // pred_fallthru
          _
        %s1618 = smul.u32 64, %s19
        %p1619 = scmp.lt.s32.totalorder %s1618, 63
        %s1620 = scalar_select %p1619, %s1618, 63
        %p1621 = scmp.lt.s32.totalorder %s20, 0
        %s1622 = scalar_select %p1621, %s20, 0
        %s1623 = sadd.s32 %s1622, %s1620
        %s1624 = smul.addr %s1623, 8
        %s1625 = scalar_lea.vmem %s3, %s1624
        // Predicated region
        $region82: #{decoder_forward.47} parent=68 // pred_check
          %p1626 = pneg %p135
        $region83: #{decoder_forward.47} parent=68 // pred_check_branch
          %1628 = sbr.rel (%p1626) target = $region85
        $region84: #{decoder_forward.47} parent=68 // pred_region
          %s1629 = smul.u32 64, %s19
        $region85: #{decoder_forward.47} parent=68 // pred_fallthru
          _
        // Predicated region
        $region86: #{decoder_forward.47} parent=68 // pred_check
          %p1630 = pneg %p135
        $region87: #{decoder_forward.47} parent=68 // pred_check_branch
          %1632 = sbr.rel (%p1630) target = $region89
        $region88: #{decoder_forward.47} parent=68 // pred_region
          %s1633 = smul.u32 64, %s19
          %p1634 = scmp.lt.s32.totalorder %s1633, 63
          %s1635 = scalar_select %p1634, %s1633, 63
          %p1636 = scmp.lt.s32.totalorder %s20, 0
          %s1637 = scalar_select %p1636, %s20, 0
          %s1638 = sadd.s32 %s1637, %s1635
          %s1639 = smul.addr %s1638, 8
          %s1640 = scalar_lea.vmem %s3, %s1639
        $region89: #{decoder_forward.47} parent=68 // pred_fallthru
          _
      $region69: #{decoder_forward.47} parent=5 // pred_fallthru
        _
      %p1641 = scmp.le.s32.totalorder 2, %s9
      // Predicated region
      $region90: #{decoder_forward.47} parent=5 // pred_check
        %p1642 = pneg %p1641
      $region91: #{decoder_forward.47} parent=5 // pred_check_branch
        %1644 = sbr.rel (%p1642) target = $region93
      $region92: #{decoder_forward.47} parent=5 // pred_region
        %s1645 = ssub.s32 %s9, 2
      $region93: #{decoder_forward.47} parent=5 // pred_fallthru
        _
    $region6: #{decoder_forward.47} parent=1 // loop_footer
      %s13 = sadd.s32 1, %s9
    $region7: #{decoder_forward.47} parent=1 // loop_footer_branch
      %8 = sbr.rel target = $region3
    $region8: #{decoder_forward.47} parent=1 // loop_exit
      _

</llo_original>
